<compile_context>
chip_gen: v6e
topology: v6e:2x2x1
jax: 0.10.0
libtpu: 0.0.40
codegen_flags: <defaults>
</compile_context>

<pallas_src>
import functools
import math

import jax
import jax.numpy as jnp
from jax.experimental import pallas as pl
from jax.experimental.pallas import tpu as pltpu


# ------------------------------ Fused kernel --------------------------------

def fused_forward_kernel(xr_ref, w1_ref, cw_ref, cb_ref, mw_ref, mb_ref,
                         out_ref, h2s_ref, h3s_ref,
                         *, TB, M1, P2, P3, L4):
    """One grid step == TB batch elements. All intermediates stay in VMEM.

    Shapes (per step):
      xr_ref : (TB, M1+1, 16) f32   x pre-reshaped into rows of 16 samples
      w1_ref : (32, 128)      bf16  widened conv1 weight (emits packed h1)
      cw_ref : (3, 256, 32)   bf16  conv2/3/4 weights, row = tap*32 + cin
      cb_ref : (4, 1, 128)    f32   conv biases (row0 tiled x4 for packed h1)
      mw_ref : (3, 32, 128)   bf16  MLP weights (lane-padded, l1 scaled by 1/L4)
      mb_ref : (3, 1, 128)    f32   MLP biases (lane-padded)
      out_ref: (TB, 128)      f32   lane-dense logits (cols >= 6 are zero-ish)
    """
    f32 = jnp.float32
    bf16 = jnp.bfloat16

    def mm(a, b):
        return jnp.dot(a, b, preferred_element_type=f32)

    # ---------------- conv1: emit 4-packed h1 rows directly -----------------
    # LHS row (item b, packed row m) = x[b, 16m : 16m+32]  (two 16-wide rows).
    # (lhs1 @ w1)[.., 32j+c] = conv1 output at position 4m+j, channel c.
    parts = []
    for b in range(TB):
        xb = xr_ref[b]                                        # (M1+1, 16) f32
        parts.append(jnp.concatenate([xb[:M1, :], xb[1:M1 + 1, :]], axis=-1))
    lhs1 = jnp.concatenate(parts, axis=0).astype(bf16)        # (TB*M1, 32)
    h1p = jnp.maximum(mm(lhs1, w1_ref[...]) + cb_ref[0], 0.0)  # (TB*M1, 128) f32
    # h1p row (b, m), lane 32j+c  ==  h1[b, 4m+j, c]

    # ---------------- conv2: two shifted slices -> one K=256 dot ------------
    parts = []
    for b in range(TB):
        base = b * M1
        lo = h1p[base:base + P2, :]                           # taps 0..3
        hi = h1p[base + 1:base + P2 + 1, :]                   # taps 4..7
        parts.append(jnp.concatenate([lo, hi], axis=-1))      # (P2, 256)
    lhs2 = jnp.concatenate(parts, axis=0).astype(bf16)        # (TB*P2, 256)
    h2 = jnp.maximum(mm(lhs2, cw_ref[0]) + cb_ref[1][:, :32], 0.0)
    h2s_ref[...] = h2                                         # (TB*P2, 32) f32

    # ---------- conv3 / conv4: strided-tap im2col from VMEM scratch ----------
    def conv_from_scratch(src_ref, item_rows, n_out, w, bias):
        pieces = []
        for b in range(TB):
            taps = [src_ref[pl.ds(b * item_rows + k, n_out, stride=4), :]
                    for k in range(8)]
            pieces.append(jnp.concatenate(taps, axis=-1))     # (n_out, 256)
        lhs = jnp.concatenate(pieces, axis=0).astype(bf16)    # (TB*n_out, 256)
        return jnp.maximum(mm(lhs, w) + bias, 0.0)

    h3 = conv_from_scratch(h2s_ref, P2, P3, cw_ref[1], cb_ref[2][:, :32])
    h3s_ref[...] = h3                                         # (TB*P3, 32) f32
    h4 = conv_from_scratch(h3s_ref, P3, L4, cw_ref[2], cb_ref[3][:, :32])
    # h4: (TB*L4, 32) f32

    # -------- mean over length (sum here; 1/L4 folded into mw[0]) -----------
    zs = [jnp.sum(h4[b * L4:(b + 1) * L4, :], axis=0, keepdims=True)
          for b in range(TB)]
    z = jnp.concatenate(zs, axis=0)                           # (TB, 32) f32

    # ---------------- MLP head (lane-padded to 128 outputs) -----------------
    t = jnp.maximum(mm(z.astype(bf16), mw_ref[0]) + mb_ref[0], 0.0)           # (TB,128)
    t = jnp.maximum(mm(t[:, :32].astype(bf16), mw_ref[1]) + mb_ref[1], 0.0)   # (TB,128)
    out_ref[...] = mm(t[:, :32].astype(bf16), mw_ref[2]) + mb_ref[2]          # (TB,128)


# ------------------------------- Wrapper -------------------------------------

def simple_model_forward(params, x, *, tile_b=8):
    """x: (B, 1, L) float32 (NCL, like PyTorch). Returns logits (B, 6).
    Dropout layers are identity (eval mode)."""
    B, Cin, L = x.shape
    assert Cin == 1
    assert tile_b % 8 == 0
    L1 = (L - 8) // 4 + 1
    L2 = (L1 - 8) // 4 + 1
    L3 = (L2 - 8) // 4 + 1
    L4 = (L3 - 8) // 4 + 1
    assert L4 >= 1, "input length too short for 4 conv layers"

    M1 = L2 + 1          # packed conv1 rows per item (4 positions x 32 ch each)
    P2 = 4 * (L3 + 1)    # conv2 output positions actually consumed downstream
    P3 = 4 * (L4 + 1)    # conv3 output positions actually consumed downstream

    TB = tile_b
    Bp = ((B + TB - 1) // TB) * TB

    # ---- input prep: zero-pad length to 16*(M1+1), reshape into rows of 16.
    #      Padded samples only ever multiply all-zero rows of the conv1 weight.
    Lp = 16 * (M1 + 1)
    xf = x[:, 0, :]
    xf = jnp.pad(xf, ((0, 0), (0, Lp - L))) if L < Lp else xf[:, :Lp]
    if Bp > B:
        xf = jnp.pad(xf, ((0, Bp - B), (0, 0)))
    xr = xf.reshape(Bp, M1 + 1, 16).astype(jnp.float32)

    # ---- conv1 widened weight: W1[4j+k, 32j+c] = w1[c, 0, k]  (j=0..3, k=0..7)
    w1ck = params["c1_w"][:, 0, :]                      # (32 cout, 8 k)
    W1 = jnp.zeros((32, 128), jnp.float32)
    for j in range(4):
        W1 = W1.at[4 * j:4 * j + 8, 32 * j:32 * (j + 1)].set(w1ck.T)
    W1 = W1.astype(jnp.bfloat16)

    def conv_wmat(w):   # (Cout, Cin, K) PyTorch layout -> (K*Cin, Cout)
        Cout, Ci, K = w.shape
        return jnp.transpose(w, (2, 1, 0)).reshape(K * Ci, Cout)

    cw = jnp.stack([conv_wmat(params["c2_w"]),
                    conv_wmat(params["c3_w"]),
                    conv_wmat(params["c4_w"])]).astype(jnp.bfloat16)   # (3,256,32)

    cb = jnp.zeros((4, 1, 128), jnp.float32)
    cb = cb.at[0, 0, :].set(jnp.tile(params["c1_b"], 4))
    cb = cb.at[1, 0, :32].set(params["c2_b"])
    cb = cb.at[2, 0, :32].set(params["c3_b"])
    cb = cb.at[3, 0, :32].set(params["c4_b"])

    # ---- MLP head: stack & lane-pad; fold the 1/L4 mean scale into layer 1.
    nc = params["l3_w"].shape[1]                        # 6
    mw = jnp.zeros((3, 32, 128), jnp.float32)
    mw = mw.at[0, :, :32].set(params["l1_w"] / float(L4))
    mw = mw.at[1, :, :32].set(params["l2_w"])
    mw = mw.at[2, :, :nc].set(params["l3_w"])
    mw = mw.astype(jnp.bfloat16)
    mb = jnp.zeros((3, 1, 128), jnp.float32)
    mb = mb.at[0, 0, :32].set(params["l1_b"].reshape(-1))
    mb = mb.at[1, 0, :32].set(params["l2_b"].reshape(-1))
    mb = mb.at[2, 0, :nc].set(params["l3_b"].reshape(-1))

    kernel = functools.partial(fused_forward_kernel,
                               TB=TB, M1=M1, P2=P2, P3=P3, L4=L4)

    out = pl.pallas_call(
        kernel,
        out_shape=jax.ShapeDtypeStruct((Bp, 128), jnp.float32),
        grid=(Bp // TB,),
        in_specs=[
            pl.BlockSpec((TB, M1 + 1, 16), lambda i: (i, 0, 0)),   # input rows
            pl.BlockSpec((32, 128), lambda i: (0, 0)),             # conv1 W
            pl.BlockSpec((3, 256, 32), lambda i: (0, 0, 0)),       # conv2-4 W
            pl.BlockSpec((4, 1, 128), lambda i: (0, 0, 0)),        # conv biases
            pl.BlockSpec((3, 32, 128), lambda i: (0, 0, 0)),       # MLP W
            pl.BlockSpec((3, 1, 128), lambda i: (0, 0, 0)),        # MLP biases
        ],
        out_specs=pl.BlockSpec((TB, 128), lambda i: (i, 0)),
        scratch_shapes=[
            pltpu.VMEM((TB * P2, 32), jnp.float32),   # h2 (natural layout)
            pltpu.VMEM((TB * P3, 32), jnp.float32),   # h3 (natural layout)
        ],
        compiler_params=pltpu.CompilerParams(
            dimension_semantics=("parallel",)),
    )(xr, W1, cw, cb, mw, mb)

    # TODO(synk): only the default forward path is implemented (get_latent=False);
    # training-mode dropout would need in-kernel pltpu.prng_* mask generation.
    return out[:B, :nc]


# --------------------------- Parameter init ----------------------------------

def xavier_uniform(key, shape, fan_in, fan_out):
    a = math.sqrt(6.0 / (fan_in + fan_out))
    return jax.random.uniform(key, shape, jnp.float32, minval=-a, maxval=a)


def init_params(key):
    ks = jax.random.split(key, 7)
    params = {}
    # Conv1d weights in PyTorch layout (Cout, Cin, K); xavier_uniform + zero bias
    params["c1_w"] = xavier_uniform(ks[0], (32, 1, 8), 1 * 8, 32 * 8)
    params["c1_b"] = jnp.zeros((32,), jnp.float32)
    params["c2_w"] = xavier_uniform(ks[1], (32, 32, 8), 32 * 8, 32 * 8)
    params["c2_b"] = jnp.zeros((32,), jnp.float32)
    params["c3_w"] = xavier_uniform(ks[2], (32, 32, 8), 32 * 8, 32 * 8)
    params["c3_b"] = jnp.zeros((32,), jnp.float32)
    params["c4_w"] = xavier_uniform(ks[3], (32, 32, 8), 32 * 8, 32 * 8)
    params["c4_b"] = jnp.zeros((32,), jnp.float32)
    # Linear weights stored already transposed: (in, out)
    params["l1_w"] = xavier_uniform(ks[4], (32, 32), 32, 32)
    params["l1_b"] = jnp.zeros((1, 32), jnp.float32)
    params["l2_w"] = xavier_uniform(ks[5], (32, 32), 32, 32)
    params["l2_b"] = jnp.zeros((1, 32), jnp.float32)
    params["l3_w"] = xavier_uniform(ks[6], (32, 6), 32, 6)
    params["l3_b"] = jnp.zeros((1, 6), jnp.float32)
    return params


# -------------------------------- Main ----------------------------------------

if __name__ == "__main__":
    key = jax.random.PRNGKey(0)
    pkey, xkey = jax.random.split(key)
    params = init_params(pkey)

    # (B, 1, L): L=1024 -> conv lengths 255 -> 62 -> 14 -> 2; B=16 -> grid of 2
    # steps with 8 batch elements per step.
    B, L = 16, 1024
    x = jax.random.normal(xkey, (B, 1, L), jnp.float32)

    fwd = jax.jit(simple_model_forward)
    logits = fwd(params, x)
    jax.block_until_ready(logits)

    assert logits.shape == (B, 6), logits.shape
    assert bool(jnp.all(jnp.isfinite(logits)))
    print("KERNEL_OK")
</pallas_src>

<mosaic_0001>
module attributes {stable_mosaic.version = 11 : i64} {
  func.func @fused_forward_kernel(%arg0: i32, %arg1: memref<8x64x16xf32, #tpu.memory_space<vmem>>, %arg2: memref<32x128xbf16, #tpu.memory_space<vmem>>, %arg3: memref<3x256x32xbf16, #tpu.memory_space<vmem>>, %arg4: memref<4x1x128xf32, #tpu.memory_space<vmem>>, %arg5: memref<3x32x128xbf16, #tpu.memory_space<vmem>>, %arg6: memref<3x1x128xf32, #tpu.memory_space<vmem>>, %arg7: memref<8x128xf32, #tpu.memory_space<vmem>>, %arg8: memref<480x32xf32, #tpu.memory_space<vmem>>, %arg9: memref<96x32xf32, #tpu.memory_space<vmem>>) attributes {dimension_semantics = [#tpu.dimension_semantics<parallel>], iteration_bounds = array<i64: 2>, scalar_prefetch = 0 : i64, scratch_operands = 2 : i64, tpu.core_type = #tpu.core_type<tc>, window_params = [{transform_indices = @transform_0, window_bounds = array<i64: 8, 64, 16>}, {pipeline_mode = #tpu.pipeline_mode<synchronous>, transform_indices = @transform_1, window_bounds = array<i64: 32, 128>}, {pipeline_mode = #tpu.pipeline_mode<synchronous>, transform_indices = @transform_2, window_bounds = array<i64: 3, 256, 32>}, {pipeline_mode = #tpu.pipeline_mode<synchronous>, transform_indices = @transform_3, window_bounds = array<i64: 4, 1, 128>}, {pipeline_mode = #tpu.pipeline_mode<synchronous>, transform_indices = @transform_4, window_bounds = array<i64: 3, 32, 128>}, {pipeline_mode = #tpu.pipeline_mode<synchronous>, transform_indices = @transform_5, window_bounds = array<i64: 3, 1, 128>}, {transform_indices = @transform_6, window_bounds = array<i64: 8, 128>}]} {
    %c0 = arith.constant 0 : index
    %c0_0 = arith.constant 0 : index
    %c0_1 = arith.constant 0 : index
    %0 = vector.load %arg1[%c0, %c0_0, %c0_1] : memref<8x64x16xf32, #tpu.memory_space<vmem>>, vector<1x64x16xf32>
    %1 = vector.shape_cast %0 : vector<1x64x16xf32> to vector<64x16xf32>
    %2 = vector.extract_strided_slice %1 {offsets = [0, 0], sizes = [63, 16], strides = [1, 1]} : vector<64x16xf32> to vector<63x16xf32>
    %3 = vector.extract_strided_slice %1 {offsets = [1, 0], sizes = [63, 16], strides = [1, 1]} : vector<64x16xf32> to vector<63x16xf32>
    %4 = tpu.concatenate %2, %3 in 1 : vector<63x16xf32>, vector<63x16xf32> -> vector<63x32xf32>
    %c1 = arith.constant 1 : index
    %c0_2 = arith.constant 0 : index
    %c0_3 = arith.constant 0 : index
    %5 = vector.load %arg1[%c1, %c0_2, %c0_3] : memref<8x64x16xf32, #tpu.memory_space<vmem>>, vector<1x64x16xf32>
    %6 = vector.shape_cast %5 : vector<1x64x16xf32> to vector<64x16xf32>
    %7 = vector.extract_strided_slice %6 {offsets = [0, 0], sizes = [63, 16], strides = [1, 1]} : vector<64x16xf32> to vector<63x16xf32>
    %8 = vector.extract_strided_slice %6 {offsets = [1, 0], sizes = [63, 16], strides = [1, 1]} : vector<64x16xf32> to vector<63x16xf32>
    %9 = tpu.concatenate %7, %8 in 1 : vector<63x16xf32>, vector<63x16xf32> -> vector<63x32xf32>
    %c2 = arith.constant 2 : index
    %c0_4 = arith.constant 0 : index
    %c0_5 = arith.constant 0 : index
    %10 = vector.load %arg1[%c2, %c0_4, %c0_5] : memref<8x64x16xf32, #tpu.memory_space<vmem>>, vector<1x64x16xf32>
    %11 = vector.shape_cast %10 : vector<1x64x16xf32> to vector<64x16xf32>
    %12 = vector.extract_strided_slice %11 {offsets = [0, 0], sizes = [63, 16], strides = [1, 1]} : vector<64x16xf32> to vector<63x16xf32>
    %13 = vector.extract_strided_slice %11 {offsets = [1, 0], sizes = [63, 16], strides = [1, 1]} : vector<64x16xf32> to vector<63x16xf32>
    %14 = tpu.concatenate %12, %13 in 1 : vector<63x16xf32>, vector<63x16xf32> -> vector<63x32xf32>
    %c3 = arith.constant 3 : index
    %c0_6 = arith.constant 0 : index
    %c0_7 = arith.constant 0 : index
    %15 = vector.load %arg1[%c3, %c0_6, %c0_7] : memref<8x64x16xf32, #tpu.memory_space<vmem>>, vector<1x64x16xf32>
    %16 = vector.shape_cast %15 : vector<1x64x16xf32> to vector<64x16xf32>
    %17 = vector.extract_strided_slice %16 {offsets = [0, 0], sizes = [63, 16], strides = [1, 1]} : vector<64x16xf32> to vector<63x16xf32>
    %18 = vector.extract_strided_slice %16 {offsets = [1, 0], sizes = [63, 16], strides = [1, 1]} : vector<64x16xf32> to vector<63x16xf32>
    %19 = tpu.concatenate %17, %18 in 1 : vector<63x16xf32>, vector<63x16xf32> -> vector<63x32xf32>
    %c4 = arith.constant 4 : index
    %c0_8 = arith.constant 0 : index
    %c0_9 = arith.constant 0 : index
    %20 = vector.load %arg1[%c4, %c0_8, %c0_9] : memref<8x64x16xf32, #tpu.memory_space<vmem>>, vector<1x64x16xf32>
    %21 = vector.shape_cast %20 : vector<1x64x16xf32> to vector<64x16xf32>
    %22 = vector.extract_strided_slice %21 {offsets = [0, 0], sizes = [63, 16], strides = [1, 1]} : vector<64x16xf32> to vector<63x16xf32>
    %23 = vector.extract_strided_slice %21 {offsets = [1, 0], sizes = [63, 16], strides = [1, 1]} : vector<64x16xf32> to vector<63x16xf32>
    %24 = tpu.concatenate %22, %23 in 1 : vector<63x16xf32>, vector<63x16xf32> -> vector<63x32xf32>
    %c5 = arith.constant 5 : index
    %c0_10 = arith.constant 0 : index
    %c0_11 = arith.constant 0 : index
    %25 = vector.load %arg1[%c5, %c0_10, %c0_11] : memref<8x64x16xf32, #tpu.memory_space<vmem>>, vector<1x64x16xf32>
    %26 = vector.shape_cast %25 : vector<1x64x16xf32> to vector<64x16xf32>
    %27 = vector.extract_strided_slice %26 {offsets = [0, 0], sizes = [63, 16], strides = [1, 1]} : vector<64x16xf32> to vector<63x16xf32>
    %28 = vector.extract_strided_slice %26 {offsets = [1, 0], sizes = [63, 16], strides = [1, 1]} : vector<64x16xf32> to vector<63x16xf32>
    %29 = tpu.concatenate %27, %28 in 1 : vector<63x16xf32>, vector<63x16xf32> -> vector<63x32xf32>
    %c6 = arith.constant 6 : index
    %c0_12 = arith.constant 0 : index
    %c0_13 = arith.constant 0 : index
    %30 = vector.load %arg1[%c6, %c0_12, %c0_13] : memref<8x64x16xf32, #tpu.memory_space<vmem>>, vector<1x64x16xf32>
    %31 = vector.shape_cast %30 : vector<1x64x16xf32> to vector<64x16xf32>
    %32 = vector.extract_strided_slice %31 {offsets = [0, 0], sizes = [63, 16], strides = [1, 1]} : vector<64x16xf32> to vector<63x16xf32>
    %33 = vector.extract_strided_slice %31 {offsets = [1, 0], sizes = [63, 16], strides = [1, 1]} : vector<64x16xf32> to vector<63x16xf32>
    %34 = tpu.concatenate %32, %33 in 1 : vector<63x16xf32>, vector<63x16xf32> -> vector<63x32xf32>
    %c7 = arith.constant 7 : index
    %c0_14 = arith.constant 0 : index
    %c0_15 = arith.constant 0 : index
    %35 = vector.load %arg1[%c7, %c0_14, %c0_15] : memref<8x64x16xf32, #tpu.memory_space<vmem>>, vector<1x64x16xf32>
    %36 = vector.shape_cast %35 : vector<1x64x16xf32> to vector<64x16xf32>
    %37 = vector.extract_strided_slice %36 {offsets = [0, 0], sizes = [63, 16], strides = [1, 1]} : vector<64x16xf32> to vector<63x16xf32>
    %38 = vector.extract_strided_slice %36 {offsets = [1, 0], sizes = [63, 16], strides = [1, 1]} : vector<64x16xf32> to vector<63x16xf32>
    %39 = tpu.concatenate %37, %38 in 1 : vector<63x16xf32>, vector<63x16xf32> -> vector<63x32xf32>
    %40 = tpu.concatenate %4, %9, %14, %19, %24, %29, %34, %39 in 0 : vector<63x32xf32>, vector<63x32xf32>, vector<63x32xf32>, vector<63x32xf32>, vector<63x32xf32>, vector<63x32xf32>, vector<63x32xf32>, vector<63x32xf32> -> vector<504x32xf32>
    %41 = arith.truncf %40 : vector<504x32xf32> to vector<504x32xbf16>
    %c0_16 = arith.constant 0 : index
    %c0_17 = arith.constant 0 : index
    %42 = vector.load %arg2[%c0_16, %c0_17] : memref<32x128xbf16, #tpu.memory_space<vmem>>, vector<32x128xbf16>
    %cst = arith.constant dense<0.000000e+00> : vector<504x128xf32>
    %43 = tpu.matmul %41, %42, %cst {dimension_numbers = #tpu.dot_dimension_numbers<[1], [0], [0], [1], [0, 0, 1, 1], [], []>} : vector<504x32xbf16>, vector<32x128xbf16>, vector<504x128xf32> -> vector<504x128xf32>
    %c0_18 = arith.constant 0 : index
    %c0_19 = arith.constant 0 : index
    %c0_20 = arith.constant 0 : index
    %44 = vector.load %arg4[%c0_18, %c0_19, %c0_20] : memref<4x1x128xf32, #tpu.memory_space<vmem>>, vector<1x1x128xf32>
    %45 = vector.shape_cast %44 : vector<1x1x128xf32> to vector<1x128xf32>
    %46 = vector.broadcast %45 : vector<1x128xf32> to vector<504x128xf32>
    %47 = arith.addf %43, %46 : vector<504x128xf32>
    %cst_21 = arith.constant 0.000000e+00 : f32
    %48 = vector.broadcast %cst_21 : f32 to vector<504x128xf32>
    %49 = arith.maximumf %47, %48 : vector<504x128xf32>
    %50 = vector.extract_strided_slice %49 {offsets = [0, 0], sizes = [60, 128], strides = [1, 1]} : vector<504x128xf32> to vector<60x128xf32>
    %51 = vector.extract_strided_slice %49 {offsets = [1, 0], sizes = [60, 128], strides = [1, 1]} : vector<504x128xf32> to vector<60x128xf32>
    %52 = tpu.concatenate %50, %51 in 1 : vector<60x128xf32>, vector<60x128xf32> -> vector<60x256xf32>
    %53 = vector.extract_strided_slice %49 {offsets = [63, 0], sizes = [60, 128], strides = [1, 1]} : vector<504x128xf32> to vector<60x128xf32>
    %54 = vector.extract_strided_slice %49 {offsets = [64, 0], sizes = [60, 128], strides = [1, 1]} : vector<504x128xf32> to vector<60x128xf32>
    %55 = tpu.concatenate %53, %54 in 1 : vector<60x128xf32>, vector<60x128xf32> -> vector<60x256xf32>
    %56 = vector.extract_strided_slice %49 {offsets = [126, 0], sizes = [60, 128], strides = [1, 1]} : vector<504x128xf32> to vector<60x128xf32>
    %57 = vector.extract_strided_slice %49 {offsets = [127, 0], sizes = [60, 128], strides = [1, 1]} : vector<504x128xf32> to vector<60x128xf32>
    %58 = tpu.concatenate %56, %57 in 1 : vector<60x128xf32>, vector<60x128xf32> -> vector<60x256xf32>
    %59 = vector.extract_strided_slice %49 {offsets = [189, 0], sizes = [60, 128], strides = [1, 1]} : vector<504x128xf32> to vector<60x128xf32>
    %60 = vector.extract_strided_slice %49 {offsets = [190, 0], sizes = [60, 128], strides = [1, 1]} : vector<504x128xf32> to vector<60x128xf32>
    %61 = tpu.concatenate %59, %60 in 1 : vector<60x128xf32>, vector<60x128xf32> -> vector<60x256xf32>
    %62 = vector.extract_strided_slice %49 {offsets = [252, 0], sizes = [60, 128], strides = [1, 1]} : vector<504x128xf32> to vector<60x128xf32>
    %63 = vector.extract_strided_slice %49 {offsets = [253, 0], sizes = [60, 128], strides = [1, 1]} : vector<504x128xf32> to vector<60x128xf32>
    %64 = tpu.concatenate %62, %63 in 1 : vector<60x128xf32>, vector<60x128xf32> -> vector<60x256xf32>
    %65 = vector.extract_strided_slice %49 {offsets = [315, 0], sizes = [60, 128], strides = [1, 1]} : vector<504x128xf32> to vector<60x128xf32>
    %66 = vector.extract_strided_slice %49 {offsets = [316, 0], sizes = [60, 128], strides = [1, 1]} : vector<504x128xf32> to vector<60x128xf32>
    %67 = tpu.concatenate %65, %66 in 1 : vector<60x128xf32>, vector<60x128xf32> -> vector<60x256xf32>
    %68 = vector.extract_strided_slice %49 {offsets = [378, 0], sizes = [60, 128], strides = [1, 1]} : vector<504x128xf32> to vector<60x128xf32>
    %69 = vector.extract_strided_slice %49 {offsets = [379, 0], sizes = [60, 128], strides = [1, 1]} : vector<504x128xf32> to vector<60x128xf32>
    %70 = tpu.concatenate %68, %69 in 1 : vector<60x128xf32>, vector<60x128xf32> -> vector<60x256xf32>
    %71 = vector.extract_strided_slice %49 {offsets = [441, 0], sizes = [60, 128], strides = [1, 1]} : vector<504x128xf32> to vector<60x128xf32>
    %72 = vector.extract_strided_slice %49 {offsets = [442, 0], sizes = [60, 128], strides = [1, 1]} : vector<504x128xf32> to vector<60x128xf32>
    %73 = tpu.concatenate %71, %72 in 1 : vector<60x128xf32>, vector<60x128xf32> -> vector<60x256xf32>
    %74 = tpu.concatenate %52, %55, %58, %61, %64, %67, %70, %73 in 0 : vector<60x256xf32>, vector<60x256xf32>, vector<60x256xf32>, vector<60x256xf32>, vector<60x256xf32>, vector<60x256xf32>, vector<60x256xf32>, vector<60x256xf32> -> vector<480x256xf32>
    %75 = arith.truncf %74 : vector<480x256xf32> to vector<480x256xbf16>
    %c0_22 = arith.constant 0 : index
    %c0_23 = arith.constant 0 : index
    %c0_24 = arith.constant 0 : index
    %76 = vector.load %arg3[%c0_22, %c0_23, %c0_24] : memref<3x256x32xbf16, #tpu.memory_space<vmem>>, vector<1x256x32xbf16>
    %77 = vector.shape_cast %76 : vector<1x256x32xbf16> to vector<256x32xbf16>
    %cst_25 = arith.constant dense<0.000000e+00> : vector<480x32xf32>
    %78 = tpu.matmul %75, %77, %cst_25 {dimension_numbers = #tpu.dot_dimension_numbers<[1], [0], [0], [1], [0, 0, 1, 1], [], []>} : vector<480x256xbf16>, vector<256x32xbf16>, vector<480x32xf32> -> vector<480x32xf32>
    %c1_26 = arith.constant 1 : index
    %c0_27 = arith.constant 0 : index
    %c0_28 = arith.constant 0 : index
    %79 = vector.load %arg4[%c1_26, %c0_27, %c0_28] : memref<4x1x128xf32, #tpu.memory_space<vmem>>, vector<1x1x128xf32>
    %80 = vector.shape_cast %79 : vector<1x1x128xf32> to vector<1x128xf32>
    %81 = vector.extract_strided_slice %80 {offsets = [0, 0], sizes = [1, 32], strides = [1, 1]} : vector<1x128xf32> to vector<1x32xf32>
    %82 = vector.broadcast %81 : vector<1x32xf32> to vector<480x32xf32>
    %83 = arith.addf %78, %82 : vector<480x32xf32>
    %cst_29 = arith.constant 0.000000e+00 : f32
    %84 = vector.broadcast %cst_29 : f32 to vector<480x32xf32>
    %85 = arith.maximumf %83, %84 : vector<480x32xf32>
    %c0_30 = arith.constant 0 : index
    %c0_31 = arith.constant 0 : index
    %86 = vector.load %arg8[%c0_30, %c0_31] : memref<480x32xf32, #tpu.memory_space<vmem>>, vector<480x32xf32>
    tpu.vector_store %arg8[%c0_30, %c0_31], %85 {strides = array<i32>} : memref<480x32xf32, #tpu.memory_space<vmem>>, vector<480x32xf32>,
    %c1_32 = arith.constant 1 : index
    %c0_33 = arith.constant 0 : index
    %c0_34 = arith.constant 0 : index
    %87 = vector.load %arg3[%c1_32, %c0_33, %c0_34] : memref<3x256x32xbf16, #tpu.memory_space<vmem>>, vector<1x256x32xbf16>
    %88 = vector.shape_cast %87 : vector<1x256x32xbf16> to vector<256x32xbf16>
    %c2_35 = arith.constant 2 : index
    %c0_36 = arith.constant 0 : index
    %c0_37 = arith.constant 0 : index
    %89 = vector.load %arg4[%c2_35, %c0_36, %c0_37] : memref<4x1x128xf32, #tpu.memory_space<vmem>>, vector<1x1x128xf32>
    %90 = vector.shape_cast %89 : vector<1x1x128xf32> to vector<1x128xf32>
    %91 = vector.extract_strided_slice %90 {offsets = [0, 0], sizes = [1, 32], strides = [1, 1]} : vector<1x128xf32> to vector<1x32xf32>
    %c0_38 = arith.constant 0 : index
    %c0_39 = arith.constant 0 : index
    %92 = tpu.strided_load %arg8[%c0_38, %c0_39] {strides = array<i32: 4, 1>} : memref<480x32xf32, #tpu.memory_space<vmem>>, vector<12x32xf32>
    %c1_40 = arith.constant 1 : index
    %c0_41 = arith.constant 0 : index
    %93 = tpu.strided_load %arg8[%c1_40, %c0_41] {strides = array<i32: 4, 1>} : memref<480x32xf32, #tpu.memory_space<vmem>>, vector<12x32xf32>
    %c2_42 = arith.constant 2 : index
    %c0_43 = arith.constant 0 : index
    %94 = tpu.strided_load %arg8[%c2_42, %c0_43] {strides = array<i32: 4, 1>} : memref<480x32xf32, #tpu.memory_space<vmem>>, vector<12x32xf32>
    %c3_44 = arith.constant 3 : index
    %c0_45 = arith.constant 0 : index
    %95 = tpu.strided_load %arg8[%c3_44, %c0_45] {strides = array<i32: 4, 1>} : memref<480x32xf32, #tpu.memory_space<vmem>>, vector<12x32xf32>
    %c4_46 = arith.constant 4 : index
    %c0_47 = arith.constant 0 : index
    %96 = tpu.strided_load %arg8[%c4_46, %c0_47] {strides = array<i32: 4, 1>} : memref<480x32xf32, #tpu.memory_space<vmem>>, vector<12x32xf32>
    %c5_48 = arith.constant 5 : index
    %c0_49 = arith.constant 0 : index
    %97 = tpu.strided_load %arg8[%c5_48, %c0_49] {strides = array<i32: 4, 1>} : memref<480x32xf32, #tpu.memory_space<vmem>>, vector<12x32xf32>
    %c6_50 = arith.constant 6 : index
    %c0_51 = arith.constant 0 : index
    %98 = tpu.strided_load %arg8[%c6_50, %c0_51] {strides = array<i32: 4, 1>} : memref<480x32xf32, #tpu.memory_space<vmem>>, vector<12x32xf32>
    %c7_52 = arith.constant 7 : index
    %c0_53 = arith.constant 0 : index
    %99 = tpu.strided_load %arg8[%c7_52, %c0_53] {strides = array<i32: 4, 1>} : memref<480x32xf32, #tpu.memory_space<vmem>>, vector<12x32xf32>
    %100 = tpu.concatenate %92, %93, %94, %95, %96, %97, %98, %99 in 1 : vector<12x32xf32>, vector<12x32xf32>, vector<12x32xf32>, vector<12x32xf32>, vector<12x32xf32>, vector<12x32xf32>, vector<12x32xf32>, vector<12x32xf32> -> vector<12x256xf32>
    %c60 = arith.constant 60 : index
    %c0_54 = arith.constant 0 : index
    %101 = tpu.strided_load %arg8[%c60, %c0_54] {strides = array<i32: 4, 1>} : memref<480x32xf32, #tpu.memory_space<vmem>>, vector<12x32xf32>
    %c61 = arith.constant 61 : index
    %c0_55 = arith.constant 0 : index
    %102 = tpu.strided_load %arg8[%c61, %c0_55] {strides = array<i32: 4, 1>} : memref<480x32xf32, #tpu.memory_space<vmem>>, vector<12x32xf32>
    %c62 = arith.constant 62 : index
    %c0_56 = arith.constant 0 : index
    %103 = tpu.strided_load %arg8[%c62, %c0_56] {strides = array<i32: 4, 1>} : memref<480x32xf32, #tpu.memory_space<vmem>>, vector<12x32xf32>
    %c63 = arith.constant 63 : index
    %c0_57 = arith.constant 0 : index
    %104 = tpu.strided_load %arg8[%c63, %c0_57] {strides = array<i32: 4, 1>} : memref<480x32xf32, #tpu.memory_space<vmem>>, vector<12x32xf32>
    %c64 = arith.constant 64 : index
    %c0_58 = arith.constant 0 : index
    %105 = tpu.strided_load %arg8[%c64, %c0_58] {strides = array<i32: 4, 1>} : memref<480x32xf32, #tpu.memory_space<vmem>>, vector<12x32xf32>
    %c65 = arith.constant 65 : index
    %c0_59 = arith.constant 0 : index
    %106 = tpu.strided_load %arg8[%c65, %c0_59] {strides = array<i32: 4, 1>} : memref<480x32xf32, #tpu.memory_space<vmem>>, vector<12x32xf32>
    %c66 = arith.constant 66 : index
    %c0_60 = arith.constant 0 : index
    %107 = tpu.strided_load %arg8[%c66, %c0_60] {strides = array<i32: 4, 1>} : memref<480x32xf32, #tpu.memory_space<vmem>>, vector<12x32xf32>
    %c67 = arith.constant 67 : index
    %c0_61 = arith.constant 0 : index
    %108 = tpu.strided_load %arg8[%c67, %c0_61] {strides = array<i32: 4, 1>} : memref<480x32xf32, #tpu.memory_space<vmem>>, vector<12x32xf32>
    %109 = tpu.concatenate %101, %102, %103, %104, %105, %106, %107, %108 in 1 : vector<12x32xf32>, vector<12x32xf32>, vector<12x32xf32>, vector<12x32xf32>, vector<12x32xf32>, vector<12x32xf32>, vector<12x32xf32>, vector<12x32xf32> -> vector<12x256xf32>
    %c120 = arith.constant 120 : index
    %c0_62 = arith.constant 0 : index
    %110 = tpu.strided_load %arg8[%c120, %c0_62] {strides = array<i32: 4, 1>} : memref<480x32xf32, #tpu.memory_space<vmem>>, vector<12x32xf32>
    %c121 = arith.constant 121 : index
    %c0_63 = arith.constant 0 : index
    %111 = tpu.strided_load %arg8[%c121, %c0_63] {strides = array<i32: 4, 1>} : memref<480x32xf32, #tpu.memory_space<vmem>>, vector<12x32xf32>
    %c122 = arith.constant 122 : index
    %c0_64 = arith.constant 0 : index
    %112 = tpu.strided_load %arg8[%c122, %c0_64] {strides = array<i32: 4, 1>} : memref<480x32xf32, #tpu.memory_space<vmem>>, vector<12x32xf32>
    %c123 = arith.constant 123 : index
    %c0_65 = arith.constant 0 : index
    %113 = tpu.strided_load %arg8[%c123, %c0_65] {strides = array<i32: 4, 1>} : memref<480x32xf32, #tpu.memory_space<vmem>>, vector<12x32xf32>
    %c124 = arith.constant 124 : index
    %c0_66 = arith.constant 0 : index
    %114 = tpu.strided_load %arg8[%c124, %c0_66] {strides = array<i32: 4, 1>} : memref<480x32xf32, #tpu.memory_space<vmem>>, vector<12x32xf32>
    %c125 = arith.constant 125 : index
    %c0_67 = arith.constant 0 : index
    %115 = tpu.strided_load %arg8[%c125, %c0_67] {strides = array<i32: 4, 1>} : memref<480x32xf32, #tpu.memory_space<vmem>>, vector<12x32xf32>
    %c126 = arith.constant 126 : index
    %c0_68 = arith.constant 0 : index
    %116 = tpu.strided_load %arg8[%c126, %c0_68] {strides = array<i32: 4, 1>} : memref<480x32xf32, #tpu.memory_space<vmem>>, vector<12x32xf32>
    %c127 = arith.constant 127 : index
    %c0_69 = arith.constant 0 : index
    %117 = tpu.strided_load %arg8[%c127, %c0_69] {strides = array<i32: 4, 1>} : memref<480x32xf32, #tpu.memory_space<vmem>>, vector<12x32xf32>
    %118 = tpu.concatenate %110, %111, %112, %113, %114, %115, %116, %117 in 1 : vector<12x32xf32>, vector<12x32xf32>, vector<12x32xf32>, vector<12x32xf32>, vector<12x32xf32>, vector<12x32xf32>, vector<12x32xf32>, vector<12x32xf32> -> vector<12x256xf32>
    %c180 = arith.constant 180 : index
    %c0_70 = arith.constant 0 : index
    %119 = tpu.strided_load %arg8[%c180, %c0_70] {strides = array<i32: 4, 1>} : memref<480x32xf32, #tpu.memory_space<vmem>>, vector<12x32xf32>
    %c181 = arith.constant 181 : index
    %c0_71 = arith.constant 0 : index
    %120 = tpu.strided_load %arg8[%c181, %c0_71] {strides = array<i32: 4, 1>} : memref<480x32xf32, #tpu.memory_space<vmem>>, vector<12x32xf32>
    %c182 = arith.constant 182 : index
    %c0_72 = arith.constant 0 : index
    %121 = tpu.strided_load %arg8[%c182, %c0_72] {strides = array<i32: 4, 1>} : memref<480x32xf32, #tpu.memory_space<vmem>>, vector<12x32xf32>
    %c183 = arith.constant 183 : index
    %c0_73 = arith.constant 0 : index
    %122 = tpu.strided_load %arg8[%c183, %c0_73] {strides = array<i32: 4, 1>} : memref<480x32xf32, #tpu.memory_space<vmem>>, vector<12x32xf32>
    %c184 = arith.constant 184 : index
    %c0_74 = arith.constant 0 : index
    %123 = tpu.strided_load %arg8[%c184, %c0_74] {strides = array<i32: 4, 1>} : memref<480x32xf32, #tpu.memory_space<vmem>>, vector<12x32xf32>
    %c185 = arith.constant 185 : index
    %c0_75 = arith.constant 0 : index
    %124 = tpu.strided_load %arg8[%c185, %c0_75] {strides = array<i32: 4, 1>} : memref<480x32xf32, #tpu.memory_space<vmem>>, vector<12x32xf32>
    %c186 = arith.constant 186 : index
    %c0_76 = arith.constant 0 : index
    %125 = tpu.strided_load %arg8[%c186, %c0_76] {strides = array<i32: 4, 1>} : memref<480x32xf32, #tpu.memory_space<vmem>>, vector<12x32xf32>
    %c187 = arith.constant 187 : index
    %c0_77 = arith.constant 0 : index
    %126 = tpu.strided_load %arg8[%c187, %c0_77] {strides = array<i32: 4, 1>} : memref<480x32xf32, #tpu.memory_space<vmem>>, vector<12x32xf32>
    %127 = tpu.concatenate %119, %120, %121, %122, %123, %124, %125, %126 in 1 : vector<12x32xf32>, vector<12x32xf32>, vector<12x32xf32>, vector<12x32xf32>, vector<12x32xf32>, vector<12x32xf32>, vector<12x32xf32>, vector<12x32xf32> -> vector<12x256xf32>
    %c240 = arith.constant 240 : index
    %c0_78 = arith.constant 0 : index
    %128 = tpu.strided_load %arg8[%c240, %c0_78] {strides = array<i32: 4, 1>} : memref<480x32xf32, #tpu.memory_space<vmem>>, vector<12x32xf32>
    %c241 = arith.constant 241 : index
    %c0_79 = arith.constant 0 : index
    %129 = tpu.strided_load %arg8[%c241, %c0_79] {strides = array<i32: 4, 1>} : memref<480x32xf32, #tpu.memory_space<vmem>>, vector<12x32xf32>
    %c242 = arith.constant 242 : index
    %c0_80 = arith.constant 0 : index
    %130 = tpu.strided_load %arg8[%c242, %c0_80] {strides = array<i32: 4, 1>} : memref<480x32xf32, #tpu.memory_space<vmem>>, vector<12x32xf32>
    %c243 = arith.constant 243 : index
    %c0_81 = arith.constant 0 : index
    %131 = tpu.strided_load %arg8[%c243, %c0_81] {strides = array<i32: 4, 1>} : memref<480x32xf32, #tpu.memory_space<vmem>>, vector<12x32xf32>
    %c244 = arith.constant 244 : index
    %c0_82 = arith.constant 0 : index
    %132 = tpu.strided_load %arg8[%c244, %c0_82] {strides = array<i32: 4, 1>} : memref<480x32xf32, #tpu.memory_space<vmem>>, vector<12x32xf32>
    %c245 = arith.constant 245 : index
    %c0_83 = arith.constant 0 : index
    %133 = tpu.strided_load %arg8[%c245, %c0_83] {strides = array<i32: 4, 1>} : memref<480x32xf32, #tpu.memory_space<vmem>>, vector<12x32xf32>
    %c246 = arith.constant 246 : index
    %c0_84 = arith.constant 0 : index
    %134 = tpu.strided_load %arg8[%c246, %c0_84] {strides = array<i32: 4, 1>} : memref<480x32xf32, #tpu.memory_space<vmem>>, vector<12x32xf32>
    %c247 = arith.constant 247 : index
    %c0_85 = arith.constant 0 : index
    %135 = tpu.strided_load %arg8[%c247, %c0_85] {strides = array<i32: 4, 1>} : memref<480x32xf32, #tpu.memory_space<vmem>>, vector<12x32xf32>
    %136 = tpu.concatenate %128, %129, %130, %131, %132, %133, %134, %135 in 1 : vector<12x32xf32>, vector<12x32xf32>, vector<12x32xf32>, vector<12x32xf32>, vector<12x32xf32>, vector<12x32xf32>, vector<12x32xf32>, vector<12x32xf32> -> vector<12x256xf32>
    %c300 = arith.constant 300 : index
    %c0_86 = arith.constant 0 : index
    %137 = tpu.strided_load %arg8[%c300, %c0_86] {strides = array<i32: 4, 1>} : memref<480x32xf32, #tpu.memory_space<vmem>>, vector<12x32xf32>
    %c301 = arith.constant 301 : index
    %c0_87 = arith.constant 0 : index
    %138 = tpu.strided_load %arg8[%c301, %c0_87] {strides = array<i32: 4, 1>} : memref<480x32xf32, #tpu.memory_space<vmem>>, vector<12x32xf32>
    %c302 = arith.constant 302 : index
    %c0_88 = arith.constant 0 : index
    %139 = tpu.strided_load %arg8[%c302, %c0_88] {strides = array<i32: 4, 1>} : memref<480x32xf32, #tpu.memory_space<vmem>>, vector<12x32xf32>
    %c303 = arith.constant 303 : index
    %c0_89 = arith.constant 0 : index
    %140 = tpu.strided_load %arg8[%c303, %c0_89] {strides = array<i32: 4, 1>} : memref<480x32xf32, #tpu.memory_space<vmem>>, vector<12x32xf32>
    %c304 = arith.constant 304 : index
    %c0_90 = arith.constant 0 : index
    %141 = tpu.strided_load %arg8[%c304, %c0_90] {strides = array<i32: 4, 1>} : memref<480x32xf32, #tpu.memory_space<vmem>>, vector<12x32xf32>
    %c305 = arith.constant 305 : index
    %c0_91 = arith.constant 0 : index
    %142 = tpu.strided_load %arg8[%c305, %c0_91] {strides = array<i32: 4, 1>} : memref<480x32xf32, #tpu.memory_space<vmem>>, vector<12x32xf32>
    %c306 = arith.constant 306 : index
    %c0_92 = arith.constant 0 : index
    %143 = tpu.strided_load %arg8[%c306, %c0_92] {strides = array<i32: 4, 1>} : memref<480x32xf32, #tpu.memory_space<vmem>>, vector<12x32xf32>
    %c307 = arith.constant 307 : index
    %c0_93 = arith.constant 0 : index
    %144 = tpu.strided_load %arg8[%c307, %c0_93] {strides = array<i32: 4, 1>} : memref<480x32xf32, #tpu.memory_space<vmem>>, vector<12x32xf32>
    %145 = tpu.concatenate %137, %138, %139, %140, %141, %142, %143, %144 in 1 : vector<12x32xf32>, vector<12x32xf32>, vector<12x32xf32>, vector<12x32xf32>, vector<12x32xf32>, vector<12x32xf32>, vector<12x32xf32>, vector<12x32xf32> -> vector<12x256xf32>
    %c360 = arith.constant 360 : index
    %c0_94 = arith.constant 0 : index
    %146 = tpu.strided_load %arg8[%c360, %c0_94] {strides = array<i32: 4, 1>} : memref<480x32xf32, #tpu.memory_space<vmem>>, vector<12x32xf32>
    %c361 = arith.constant 361 : index
    %c0_95 = arith.constant 0 : index
    %147 = tpu.strided_load %arg8[%c361, %c0_95] {strides = array<i32: 4, 1>} : memref<480x32xf32, #tpu.memory_space<vmem>>, vector<12x32xf32>
    %c362 = arith.constant 362 : index
    %c0_96 = arith.constant 0 : index
    %148 = tpu.strided_load %arg8[%c362, %c0_96] {strides = array<i32: 4, 1>} : memref<480x32xf32, #tpu.memory_space<vmem>>, vector<12x32xf32>
    %c363 = arith.constant 363 : index
    %c0_97 = arith.constant 0 : index
    %149 = tpu.strided_load %arg8[%c363, %c0_97] {strides = array<i32: 4, 1>} : memref<480x32xf32, #tpu.memory_space<vmem>>, vector<12x32xf32>
    %c364 = arith.constant 364 : index
    %c0_98 = arith.constant 0 : index
    %150 = tpu.strided_load %arg8[%c364, %c0_98] {strides = array<i32: 4, 1>} : memref<480x32xf32, #tpu.memory_space<vmem>>, vector<12x32xf32>
    %c365 = arith.constant 365 : index
    %c0_99 = arith.constant 0 : index
    %151 = tpu.strided_load %arg8[%c365, %c0_99] {strides = array<i32: 4, 1>} : memref<480x32xf32, #tpu.memory_space<vmem>>, vector<12x32xf32>
    %c366 = arith.constant 366 : index
    %c0_100 = arith.constant 0 : index
    %152 = tpu.strided_load %arg8[%c366, %c0_100] {strides = array<i32: 4, 1>} : memref<480x32xf32, #tpu.memory_space<vmem>>, vector<12x32xf32>
    %c367 = arith.constant 367 : index
    %c0_101 = arith.constant 0 : index
    %153 = tpu.strided_load %arg8[%c367, %c0_101] {strides = array<i32: 4, 1>} : memref<480x32xf32, #tpu.memory_space<vmem>>, vector<12x32xf32>
    %154 = tpu.concatenate %146, %147, %148, %149, %150, %151, %152, %153 in 1 : vector<12x32xf32>, vector<12x32xf32>, vector<12x32xf32>, vector<12x32xf32>, vector<12x32xf32>, vector<12x32xf32>, vector<12x32xf32>, vector<12x32xf32> -> vector<12x256xf32>
    %c420 = arith.constant 420 : index
    %c0_102 = arith.constant 0 : index
    %155 = tpu.strided_load %arg8[%c420, %c0_102] {strides = array<i32: 4, 1>} : memref<480x32xf32, #tpu.memory_space<vmem>>, vector<12x32xf32>
    %c421 = arith.constant 421 : index
    %c0_103 = arith.constant 0 : index
    %156 = tpu.strided_load %arg8[%c421, %c0_103] {strides = array<i32: 4, 1>} : memref<480x32xf32, #tpu.memory_space<vmem>>, vector<12x32xf32>
    %c422 = arith.constant 422 : index
    %c0_104 = arith.constant 0 : index
    %157 = tpu.strided_load %arg8[%c422, %c0_104] {strides = array<i32: 4, 1>} : memref<480x32xf32, #tpu.memory_space<vmem>>, vector<12x32xf32>
    %c423 = arith.constant 423 : index
    %c0_105 = arith.constant 0 : index
    %158 = tpu.strided_load %arg8[%c423, %c0_105] {strides = array<i32: 4, 1>} : memref<480x32xf32, #tpu.memory_space<vmem>>, vector<12x32xf32>
    %c424 = arith.constant 424 : index
    %c0_106 = arith.constant 0 : index
    %159 = tpu.strided_load %arg8[%c424, %c0_106] {strides = array<i32: 4, 1>} : memref<480x32xf32, #tpu.memory_space<vmem>>, vector<12x32xf32>
    %c425 = arith.constant 425 : index
    %c0_107 = arith.constant 0 : index
    %160 = tpu.strided_load %arg8[%c425, %c0_107] {strides = array<i32: 4, 1>} : memref<480x32xf32, #tpu.memory_space<vmem>>, vector<12x32xf32>
    %c426 = arith.constant 426 : index
    %c0_108 = arith.constant 0 : index
    %161 = tpu.strided_load %arg8[%c426, %c0_108] {strides = array<i32: 4, 1>} : memref<480x32xf32, #tpu.memory_space<vmem>>, vector<12x32xf32>
    %c427 = arith.constant 427 : index
    %c0_109 = arith.constant 0 : index
    %162 = tpu.strided_load %arg8[%c427, %c0_109] {strides = array<i32: 4, 1>} : memref<480x32xf32, #tpu.memory_space<vmem>>, vector<12x32xf32>
    %163 = tpu.concatenate %155, %156, %157, %158, %159, %160, %161, %162 in 1 : vector<12x32xf32>, vector<12x32xf32>, vector<12x32xf32>, vector<12x32xf32>, vector<12x32xf32>, vector<12x32xf32>, vector<12x32xf32>, vector<12x32xf32> -> vector<12x256xf32>
    %164 = tpu.concatenate %100, %109, %118, %127, %136, %145, %154, %163 in 0 : vector<12x256xf32>, vector<12x256xf32>, vector<12x256xf32>, vector<12x256xf32>, vector<12x256xf32>, vector<12x256xf32>, vector<12x256xf32>, vector<12x256xf32> -> vector<96x256xf32>
    %165 = arith.truncf %164 : vector<96x256xf32> to vector<96x256xbf16>
    %cst_110 = arith.constant dense<0.000000e+00> : vector<96x32xf32>
    %166 = tpu.matmul %165, %88, %cst_110 {dimension_numbers = #tpu.dot_dimension_numbers<[1], [0], [0], [1], [0, 0, 1, 1], [], []>} : vector<96x256xbf16>, vector<256x32xbf16>, vector<96x32xf32> -> vector<96x32xf32>
    %167 = vector.broadcast %91 : vector<1x32xf32> to vector<96x32xf32>
    %168 = arith.addf %166, %167 : vector<96x32xf32>
    %cst_111 = arith.constant 0.000000e+00 : f32
    %169 = vector.broadcast %cst_111 : f32 to vector<96x32xf32>
    %170 = arith.maximumf %168, %169 : vector<96x32xf32>
    %c0_112 = arith.constant 0 : index
    %c0_113 = arith.constant 0 : index
    %171 = vector.load %arg9[%c0_112, %c0_113] : memref<96x32xf32, #tpu.memory_space<vmem>>, vector<96x32xf32>
    tpu.vector_store %arg9[%c0_112, %c0_113], %170 {strides = array<i32>} : memref<96x32xf32, #tpu.memory_space<vmem>>, vector<96x32xf32>,
    %c2_114 = arith.constant 2 : index
    %c0_115 = arith.constant 0 : index
    %c0_116 = arith.constant 0 : index
    %172 = vector.load %arg3[%c2_114, %c0_115, %c0_116] : memref<3x256x32xbf16, #tpu.memory_space<vmem>>, vector<1x256x32xbf16>
    %173 = vector.shape_cast %172 : vector<1x256x32xbf16> to vector<256x32xbf16>
    %c3_117 = arith.constant 3 : index
    %c0_118 = arith.constant 0 : index
    %c0_119 = arith.constant 0 : index
    %174 = vector.load %arg4[%c3_117, %c0_118, %c0_119] : memref<4x1x128xf32, #tpu.memory_space<vmem>>, vector<1x1x128xf32>
    %175 = vector.shape_cast %174 : vector<1x1x128xf32> to vector<1x128xf32>
    %176 = vector.extract_strided_slice %175 {offsets = [0, 0], sizes = [1, 32], strides = [1, 1]} : vector<1x128xf32> to vector<1x32xf32>
    %c0_120 = arith.constant 0 : index
    %c0_121 = arith.constant 0 : index
    %177 = tpu.strided_load %arg9[%c0_120, %c0_121] {strides = array<i32: 4, 1>} : memref<96x32xf32, #tpu.memory_space<vmem>>, vector<2x32xf32>
    %c1_122 = arith.constant 1 : index
    %c0_123 = arith.constant 0 : index
    %178 = tpu.strided_load %arg9[%c1_122, %c0_123] {strides = array<i32: 4, 1>} : memref<96x32xf32, #tpu.memory_space<vmem>>, vector<2x32xf32>
    %c2_124 = arith.constant 2 : index
    %c0_125 = arith.constant 0 : index
    %179 = tpu.strided_load %arg9[%c2_124, %c0_125] {strides = array<i32: 4, 1>} : memref<96x32xf32, #tpu.memory_space<vmem>>, vector<2x32xf32>
    %c3_126 = arith.constant 3 : index
    %c0_127 = arith.constant 0 : index
    %180 = tpu.strided_load %arg9[%c3_126, %c0_127] {strides = array<i32: 4, 1>} : memref<96x32xf32, #tpu.memory_space<vmem>>, vector<2x32xf32>
    %c4_128 = arith.constant 4 : index
    %c0_129 = arith.constant 0 : index
    %181 = tpu.strided_load %arg9[%c4_128, %c0_129] {strides = array<i32: 4, 1>} : memref<96x32xf32, #tpu.memory_space<vmem>>, vector<2x32xf32>
    %c5_130 = arith.constant 5 : index
    %c0_131 = arith.constant 0 : index
    %182 = tpu.strided_load %arg9[%c5_130, %c0_131] {strides = array<i32: 4, 1>} : memref<96x32xf32, #tpu.memory_space<vmem>>, vector<2x32xf32>
    %c6_132 = arith.constant 6 : index
    %c0_133 = arith.constant 0 : index
    %183 = tpu.strided_load %arg9[%c6_132, %c0_133] {strides = array<i32: 4, 1>} : memref<96x32xf32, #tpu.memory_space<vmem>>, vector<2x32xf32>
    %c7_134 = arith.constant 7 : index
    %c0_135 = arith.constant 0 : index
    %184 = tpu.strided_load %arg9[%c7_134, %c0_135] {strides = array<i32: 4, 1>} : memref<96x32xf32, #tpu.memory_space<vmem>>, vector<2x32xf32>
    %185 = tpu.concatenate %177, %178, %179, %180, %181, %182, %183, %184 in 1 : vector<2x32xf32>, vector<2x32xf32>, vector<2x32xf32>, vector<2x32xf32>, vector<2x32xf32>, vector<2x32xf32>, vector<2x32xf32>, vector<2x32xf32> -> vector<2x256xf32>
    %c12 = arith.constant 12 : index
    %c0_136 = arith.constant 0 : index
    %186 = tpu.strided_load %arg9[%c12, %c0_136] {strides = array<i32: 4, 1>} : memref<96x32xf32, #tpu.memory_space<vmem>>, vector<2x32xf32>
    %c13 = arith.constant 13 : index
    %c0_137 = arith.constant 0 : index
    %187 = tpu.strided_load %arg9[%c13, %c0_137] {strides = array<i32: 4, 1>} : memref<96x32xf32, #tpu.memory_space<vmem>>, vector<2x32xf32>
    %c14 = arith.constant 14 : index
    %c0_138 = arith.constant 0 : index
    %188 = tpu.strided_load %arg9[%c14, %c0_138] {strides = array<i32: 4, 1>} : memref<96x32xf32, #tpu.memory_space<vmem>>, vector<2x32xf32>
    %c15 = arith.constant 15 : index
    %c0_139 = arith.constant 0 : index
    %189 = tpu.strided_load %arg9[%c15, %c0_139] {strides = array<i32: 4, 1>} : memref<96x32xf32, #tpu.memory_space<vmem>>, vector<2x32xf32>
    %c16 = arith.constant 16 : index
    %c0_140 = arith.constant 0 : index
    %190 = tpu.strided_load %arg9[%c16, %c0_140] {strides = array<i32: 4, 1>} : memref<96x32xf32, #tpu.memory_space<vmem>>, vector<2x32xf32>
    %c17 = arith.constant 17 : index
    %c0_141 = arith.constant 0 : index
    %191 = tpu.strided_load %arg9[%c17, %c0_141] {strides = array<i32: 4, 1>} : memref<96x32xf32, #tpu.memory_space<vmem>>, vector<2x32xf32>
    %c18 = arith.constant 18 : index
    %c0_142 = arith.constant 0 : index
    %192 = tpu.strided_load %arg9[%c18, %c0_142] {strides = array<i32: 4, 1>} : memref<96x32xf32, #tpu.memory_space<vmem>>, vector<2x32xf32>
    %c19 = arith.constant 19 : index
    %c0_143 = arith.constant 0 : index
    %193 = tpu.strided_load %arg9[%c19, %c0_143] {strides = array<i32: 4, 1>} : memref<96x32xf32, #tpu.memory_space<vmem>>, vector<2x32xf32>
    %194 = tpu.concatenate %186, %187, %188, %189, %190, %191, %192, %193 in 1 : vector<2x32xf32>, vector<2x32xf32>, vector<2x32xf32>, vector<2x32xf32>, vector<2x32xf32>, vector<2x32xf32>, vector<2x32xf32>, vector<2x32xf32> -> vector<2x256xf32>
    %c24 = arith.constant 24 : index
    %c0_144 = arith.constant 0 : index
    %195 = tpu.strided_load %arg9[%c24, %c0_144] {strides = array<i32: 4, 1>} : memref<96x32xf32, #tpu.memory_space<vmem>>, vector<2x32xf32>
    %c25 = arith.constant 25 : index
    %c0_145 = arith.constant 0 : index
    %196 = tpu.strided_load %arg9[%c25, %c0_145] {strides = array<i32: 4, 1>} : memref<96x32xf32, #tpu.memory_space<vmem>>, vector<2x32xf32>
    %c26 = arith.constant 26 : index
    %c0_146 = arith.constant 0 : index
    %197 = tpu.strided_load %arg9[%c26, %c0_146] {strides = array<i32: 4, 1>} : memref<96x32xf32, #tpu.memory_space<vmem>>, vector<2x32xf32>
    %c27 = arith.constant 27 : index
    %c0_147 = arith.constant 0 : index
    %198 = tpu.strided_load %arg9[%c27, %c0_147] {strides = array<i32: 4, 1>} : memref<96x32xf32, #tpu.memory_space<vmem>>, vector<2x32xf32>
    %c28 = arith.constant 28 : index
    %c0_148 = arith.constant 0 : index
    %199 = tpu.strided_load %arg9[%c28, %c0_148] {strides = array<i32: 4, 1>} : memref<96x32xf32, #tpu.memory_space<vmem>>, vector<2x32xf32>
    %c29 = arith.constant 29 : index
    %c0_149 = arith.constant 0 : index
    %200 = tpu.strided_load %arg9[%c29, %c0_149] {strides = array<i32: 4, 1>} : memref<96x32xf32, #tpu.memory_space<vmem>>, vector<2x32xf32>
    %c30 = arith.constant 30 : index
    %c0_150 = arith.constant 0 : index
    %201 = tpu.strided_load %arg9[%c30, %c0_150] {strides = array<i32: 4, 1>} : memref<96x32xf32, #tpu.memory_space<vmem>>, vector<2x32xf32>
    %c31 = arith.constant 31 : index
    %c0_151 = arith.constant 0 : index
    %202 = tpu.strided_load %arg9[%c31, %c0_151] {strides = array<i32: 4, 1>} : memref<96x32xf32, #tpu.memory_space<vmem>>, vector<2x32xf32>
    %203 = tpu.concatenate %195, %196, %197, %198, %199, %200, %201, %202 in 1 : vector<2x32xf32>, vector<2x32xf32>, vector<2x32xf32>, vector<2x32xf32>, vector<2x32xf32>, vector<2x32xf32>, vector<2x32xf32>, vector<2x32xf32> -> vector<2x256xf32>
    %c36 = arith.constant 36 : index
    %c0_152 = arith.constant 0 : index
    %204 = tpu.strided_load %arg9[%c36, %c0_152] {strides = array<i32: 4, 1>} : memref<96x32xf32, #tpu.memory_space<vmem>>, vector<2x32xf32>
    %c37 = arith.constant 37 : index
    %c0_153 = arith.constant 0 : index
    %205 = tpu.strided_load %arg9[%c37, %c0_153] {strides = array<i32: 4, 1>} : memref<96x32xf32, #tpu.memory_space<vmem>>, vector<2x32xf32>
    %c38 = arith.constant 38 : index
    %c0_154 = arith.constant 0 : index
    %206 = tpu.strided_load %arg9[%c38, %c0_154] {strides = array<i32: 4, 1>} : memref<96x32xf32, #tpu.memory_space<vmem>>, vector<2x32xf32>
    %c39 = arith.constant 39 : index
    %c0_155 = arith.constant 0 : index
    %207 = tpu.strided_load %arg9[%c39, %c0_155] {strides = array<i32: 4, 1>} : memref<96x32xf32, #tpu.memory_space<vmem>>, vector<2x32xf32>
    %c40 = arith.constant 40 : index
    %c0_156 = arith.constant 0 : index
    %208 = tpu.strided_load %arg9[%c40, %c0_156] {strides = array<i32: 4, 1>} : memref<96x32xf32, #tpu.memory_space<vmem>>, vector<2x32xf32>
    %c41 = arith.constant 41 : index
    %c0_157 = arith.constant 0 : index
    %209 = tpu.strided_load %arg9[%c41, %c0_157] {strides = array<i32: 4, 1>} : memref<96x32xf32, #tpu.memory_space<vmem>>, vector<2x32xf32>
    %c42 = arith.constant 42 : index
    %c0_158 = arith.constant 0 : index
    %210 = tpu.strided_load %arg9[%c42, %c0_158] {strides = array<i32: 4, 1>} : memref<96x32xf32, #tpu.memory_space<vmem>>, vector<2x32xf32>
    %c43 = arith.constant 43 : index
    %c0_159 = arith.constant 0 : index
    %211 = tpu.strided_load %arg9[%c43, %c0_159] {strides = array<i32: 4, 1>} : memref<96x32xf32, #tpu.memory_space<vmem>>, vector<2x32xf32>
    %212 = tpu.concatenate %204, %205, %206, %207, %208, %209, %210, %211 in 1 : vector<2x32xf32>, vector<2x32xf32>, vector<2x32xf32>, vector<2x32xf32>, vector<2x32xf32>, vector<2x32xf32>, vector<2x32xf32>, vector<2x32xf32> -> vector<2x256xf32>
    %c48 = arith.constant 48 : index
    %c0_160 = arith.constant 0 : index
    %213 = tpu.strided_load %arg9[%c48, %c0_160] {strides = array<i32: 4, 1>} : memref<96x32xf32, #tpu.memory_space<vmem>>, vector<2x32xf32>
    %c49 = arith.constant 49 : index
    %c0_161 = arith.constant 0 : index
    %214 = tpu.strided_load %arg9[%c49, %c0_161] {strides = array<i32: 4, 1>} : memref<96x32xf32, #tpu.memory_space<vmem>>, vector<2x32xf32>
    %c50 = arith.constant 50 : index
    %c0_162 = arith.constant 0 : index
    %215 = tpu.strided_load %arg9[%c50, %c0_162] {strides = array<i32: 4, 1>} : memref<96x32xf32, #tpu.memory_space<vmem>>, vector<2x32xf32>
    %c51 = arith.constant 51 : index
    %c0_163 = arith.constant 0 : index
    %216 = tpu.strided_load %arg9[%c51, %c0_163] {strides = array<i32: 4, 1>} : memref<96x32xf32, #tpu.memory_space<vmem>>, vector<2x32xf32>
    %c52 = arith.constant 52 : index
    %c0_164 = arith.constant 0 : index
    %217 = tpu.strided_load %arg9[%c52, %c0_164] {strides = array<i32: 4, 1>} : memref<96x32xf32, #tpu.memory_space<vmem>>, vector<2x32xf32>
    %c53 = arith.constant 53 : index
    %c0_165 = arith.constant 0 : index
    %218 = tpu.strided_load %arg9[%c53, %c0_165] {strides = array<i32: 4, 1>} : memref<96x32xf32, #tpu.memory_space<vmem>>, vector<2x32xf32>
    %c54 = arith.constant 54 : index
    %c0_166 = arith.constant 0 : index
    %219 = tpu.strided_load %arg9[%c54, %c0_166] {strides = array<i32: 4, 1>} : memref<96x32xf32, #tpu.memory_space<vmem>>, vector<2x32xf32>
    %c55 = arith.constant 55 : index
    %c0_167 = arith.constant 0 : index
    %220 = tpu.strided_load %arg9[%c55, %c0_167] {strides = array<i32: 4, 1>} : memref<96x32xf32, #tpu.memory_space<vmem>>, vector<2x32xf32>
    %221 = tpu.concatenate %213, %214, %215, %216, %217, %218, %219, %220 in 1 : vector<2x32xf32>, vector<2x32xf32>, vector<2x32xf32>, vector<2x32xf32>, vector<2x32xf32>, vector<2x32xf32>, vector<2x32xf32>, vector<2x32xf32> -> vector<2x256xf32>
    %c60_168 = arith.constant 60 : index
    %c0_169 = arith.constant 0 : index
    %222 = tpu.strided_load %arg9[%c60_168, %c0_169] {strides = array<i32: 4, 1>} : memref<96x32xf32, #tpu.memory_space<vmem>>, vector<2x32xf32>
    %c61_170 = arith.constant 61 : index
    %c0_171 = arith.constant 0 : index
    %223 = tpu.strided_load %arg9[%c61_170, %c0_171] {strides = array<i32: 4, 1>} : memref<96x32xf32, #tpu.memory_space<vmem>>, vector<2x32xf32>
    %c62_172 = arith.constant 62 : index
    %c0_173 = arith.constant 0 : index
    %224 = tpu.strided_load %arg9[%c62_172, %c0_173] {strides = array<i32: 4, 1>} : memref<96x32xf32, #tpu.memory_space<vmem>>, vector<2x32xf32>
    %c63_174 = arith.constant 63 : index
    %c0_175 = arith.constant 0 : index
    %225 = tpu.strided_load %arg9[%c63_174, %c0_175] {strides = array<i32: 4, 1>} : memref<96x32xf32, #tpu.memory_space<vmem>>, vector<2x32xf32>
    %c64_176 = arith.constant 64 : index
    %c0_177 = arith.constant 0 : index
    %226 = tpu.strided_load %arg9[%c64_176, %c0_177] {strides = array<i32: 4, 1>} : memref<96x32xf32, #tpu.memory_space<vmem>>, vector<2x32xf32>
    %c65_178 = arith.constant 65 : index
    %c0_179 = arith.constant 0 : index
    %227 = tpu.strided_load %arg9[%c65_178, %c0_179] {strides = array<i32: 4, 1>} : memref<96x32xf32, #tpu.memory_space<vmem>>, vector<2x32xf32>
    %c66_180 = arith.constant 66 : index
    %c0_181 = arith.constant 0 : index
    %228 = tpu.strided_load %arg9[%c66_180, %c0_181] {strides = array<i32: 4, 1>} : memref<96x32xf32, #tpu.memory_space<vmem>>, vector<2x32xf32>
    %c67_182 = arith.constant 67 : index
    %c0_183 = arith.constant 0 : index
    %229 = tpu.strided_load %arg9[%c67_182, %c0_183] {strides = array<i32: 4, 1>} : memref<96x32xf32, #tpu.memory_space<vmem>>, vector<2x32xf32>
    %230 = tpu.concatenate %222, %223, %224, %225, %226, %227, %228, %229 in 1 : vector<2x32xf32>, vector<2x32xf32>, vector<2x32xf32>, vector<2x32xf32>, vector<2x32xf32>, vector<2x32xf32>, vector<2x32xf32>, vector<2x32xf32> -> vector<2x256xf32>
    %c72 = arith.constant 72 : index
    %c0_184 = arith.constant 0 : index
    %231 = tpu.strided_load %arg9[%c72, %c0_184] {strides = array<i32: 4, 1>} : memref<96x32xf32, #tpu.memory_space<vmem>>, vector<2x32xf32>
    %c73 = arith.constant 73 : index
    %c0_185 = arith.constant 0 : index
    %232 = tpu.strided_load %arg9[%c73, %c0_185] {strides = array<i32: 4, 1>} : memref<96x32xf32, #tpu.memory_space<vmem>>, vector<2x32xf32>
    %c74 = arith.constant 74 : index
    %c0_186 = arith.constant 0 : index
    %233 = tpu.strided_load %arg9[%c74, %c0_186] {strides = array<i32: 4, 1>} : memref<96x32xf32, #tpu.memory_space<vmem>>, vector<2x32xf32>
    %c75 = arith.constant 75 : index
    %c0_187 = arith.constant 0 : index
    %234 = tpu.strided_load %arg9[%c75, %c0_187] {strides = array<i32: 4, 1>} : memref<96x32xf32, #tpu.memory_space<vmem>>, vector<2x32xf32>
    %c76 = arith.constant 76 : index
    %c0_188 = arith.constant 0 : index
    %235 = tpu.strided_load %arg9[%c76, %c0_188] {strides = array<i32: 4, 1>} : memref<96x32xf32, #tpu.memory_space<vmem>>, vector<2x32xf32>
    %c77 = arith.constant 77 : index
    %c0_189 = arith.constant 0 : index
    %236 = tpu.strided_load %arg9[%c77, %c0_189] {strides = array<i32: 4, 1>} : memref<96x32xf32, #tpu.memory_space<vmem>>, vector<2x32xf32>
    %c78 = arith.constant 78 : index
    %c0_190 = arith.constant 0 : index
    %237 = tpu.strided_load %arg9[%c78, %c0_190] {strides = array<i32: 4, 1>} : memref<96x32xf32, #tpu.memory_space<vmem>>, vector<2x32xf32>
    %c79 = arith.constant 79 : index
    %c0_191 = arith.constant 0 : index
    %238 = tpu.strided_load %arg9[%c79, %c0_191] {strides = array<i32: 4, 1>} : memref<96x32xf32, #tpu.memory_space<vmem>>, vector<2x32xf32>
    %239 = tpu.concatenate %231, %232, %233, %234, %235, %236, %237, %238 in 1 : vector<2x32xf32>, vector<2x32xf32>, vector<2x32xf32>, vector<2x32xf32>, vector<2x32xf32>, vector<2x32xf32>, vector<2x32xf32>, vector<2x32xf32> -> vector<2x256xf32>
    %c84 = arith.constant 84 : index
    %c0_192 = arith.constant 0 : index
    %240 = tpu.strided_load %arg9[%c84, %c0_192] {strides = array<i32: 4, 1>} : memref<96x32xf32, #tpu.memory_space<vmem>>, vector<2x32xf32>
    %c85 = arith.constant 85 : index
    %c0_193 = arith.constant 0 : index
    %241 = tpu.strided_load %arg9[%c85, %c0_193] {strides = array<i32: 4, 1>} : memref<96x32xf32, #tpu.memory_space<vmem>>, vector<2x32xf32>
    %c86 = arith.constant 86 : index
    %c0_194 = arith.constant 0 : index
    %242 = tpu.strided_load %arg9[%c86, %c0_194] {strides = array<i32: 4, 1>} : memref<96x32xf32, #tpu.memory_space<vmem>>, vector<2x32xf32>
    %c87 = arith.constant 87 : index
    %c0_195 = arith.constant 0 : index
    %243 = tpu.strided_load %arg9[%c87, %c0_195] {strides = array<i32: 4, 1>} : memref<96x32xf32, #tpu.memory_space<vmem>>, vector<2x32xf32>
    %c88 = arith.constant 88 : index
    %c0_196 = arith.constant 0 : index
    %244 = tpu.strided_load %arg9[%c88, %c0_196] {strides = array<i32: 4, 1>} : memref<96x32xf32, #tpu.memory_space<vmem>>, vector<2x32xf32>
    %c89 = arith.constant 89 : index
    %c0_197 = arith.constant 0 : index
    %245 = tpu.strided_load %arg9[%c89, %c0_197] {strides = array<i32: 4, 1>} : memref<96x32xf32, #tpu.memory_space<vmem>>, vector<2x32xf32>
    %c90 = arith.constant 90 : index
    %c0_198 = arith.constant 0 : index
    %246 = tpu.strided_load %arg9[%c90, %c0_198] {strides = array<i32: 4, 1>} : memref<96x32xf32, #tpu.memory_space<vmem>>, vector<2x32xf32>
    %c91 = arith.constant 91 : index
    %c0_199 = arith.constant 0 : index
    %247 = tpu.strided_load %arg9[%c91, %c0_199] {strides = array<i32: 4, 1>} : memref<96x32xf32, #tpu.memory_space<vmem>>, vector<2x32xf32>
    %248 = tpu.concatenate %240, %241, %242, %243, %244, %245, %246, %247 in 1 : vector<2x32xf32>, vector<2x32xf32>, vector<2x32xf32>, vector<2x32xf32>, vector<2x32xf32>, vector<2x32xf32>, vector<2x32xf32>, vector<2x32xf32> -> vector<2x256xf32>
    %249 = tpu.concatenate %185, %194, %203, %212, %221, %230, %239, %248 in 0 : vector<2x256xf32>, vector<2x256xf32>, vector<2x256xf32>, vector<2x256xf32>, vector<2x256xf32>, vector<2x256xf32>, vector<2x256xf32>, vector<2x256xf32> -> vector<16x256xf32>
    %250 = arith.truncf %249 : vector<16x256xf32> to vector<16x256xbf16>
    %cst_200 = arith.constant dense<0.000000e+00> : vector<16x32xf32>
    %251 = tpu.matmul %250, %173, %cst_200 {dimension_numbers = #tpu.dot_dimension_numbers<[1], [0], [0], [1], [0, 0, 1, 1], [], []>} : vector<16x256xbf16>, vector<256x32xbf16>, vector<16x32xf32> -> vector<16x32xf32>
    %252 = vector.broadcast %176 : vector<1x32xf32> to vector<16x32xf32>
    %253 = arith.addf %251, %252 : vector<16x32xf32>
    %cst_201 = arith.constant 0.000000e+00 : f32
    %254 = vector.broadcast %cst_201 : f32 to vector<16x32xf32>
    %255 = arith.maximumf %253, %254 : vector<16x32xf32>
    %256 = vector.extract_strided_slice %255 {offsets = [0, 0], sizes = [2, 32], strides = [1, 1]} : vector<16x32xf32> to vector<2x32xf32>
    %cst_202 = arith.constant dense<0.000000e+00> : vector<32xf32>
    %257 = vector.multi_reduction <add>, %256, %cst_202 [0] : vector<2x32xf32> to vector<32xf32>
    %258 = vector.shape_cast %257 : vector<32xf32> to vector<1x32xf32>
    %259 = vector.extract_strided_slice %255 {offsets = [2, 0], sizes = [2, 32], strides = [1, 1]} : vector<16x32xf32> to vector<2x32xf32>
    %cst_203 = arith.constant dense<0.000000e+00> : vector<32xf32>
    %260 = vector.multi_reduction <add>, %259, %cst_203 [0] : vector<2x32xf32> to vector<32xf32>
    %261 = vector.shape_cast %260 : vector<32xf32> to vector<1x32xf32>
    %262 = vector.extract_strided_slice %255 {offsets = [4, 0], sizes = [2, 32], strides = [1, 1]} : vector<16x32xf32> to vector<2x32xf32>
    %cst_204 = arith.constant dense<0.000000e+00> : vector<32xf32>
    %263 = vector.multi_reduction <add>, %262, %cst_204 [0] : vector<2x32xf32> to vector<32xf32>
    %264 = vector.shape_cast %263 : vector<32xf32> to vector<1x32xf32>
    %265 = vector.extract_strided_slice %255 {offsets = [6, 0], sizes = [2, 32], strides = [1, 1]} : vector<16x32xf32> to vector<2x32xf32>
    %cst_205 = arith.constant dense<0.000000e+00> : vector<32xf32>
    %266 = vector.multi_reduction <add>, %265, %cst_205 [0] : vector<2x32xf32> to vector<32xf32>
    %267 = vector.shape_cast %266 : vector<32xf32> to vector<1x32xf32>
    %268 = vector.extract_strided_slice %255 {offsets = [8, 0], sizes = [2, 32], strides = [1, 1]} : vector<16x32xf32> to vector<2x32xf32>
    %cst_206 = arith.constant dense<0.000000e+00> : vector<32xf32>
    %269 = vector.multi_reduction <add>, %268, %cst_206 [0] : vector<2x32xf32> to vector<32xf32>
    %270 = vector.shape_cast %269 : vector<32xf32> to vector<1x32xf32>
    %271 = vector.extract_strided_slice %255 {offsets = [10, 0], sizes = [2, 32], strides = [1, 1]} : vector<16x32xf32> to vector<2x32xf32>
    %cst_207 = arith.constant dense<0.000000e+00> : vector<32xf32>
    %272 = vector.multi_reduction <add>, %271, %cst_207 [0] : vector<2x32xf32> to vector<32xf32>
    %273 = vector.shape_cast %272 : vector<32xf32> to vector<1x32xf32>
    %274 = vector.extract_strided_slice %255 {offsets = [12, 0], sizes = [2, 32], strides = [1, 1]} : vector<16x32xf32> to vector<2x32xf32>
    %cst_208 = arith.constant dense<0.000000e+00> : vector<32xf32>
    %275 = vector.multi_reduction <add>, %274, %cst_208 [0] : vector<2x32xf32> to vector<32xf32>
    %276 = vector.shape_cast %275 : vector<32xf32> to vector<1x32xf32>
    %277 = vector.extract_strided_slice %255 {offsets = [14, 0], sizes = [2, 32], strides = [1, 1]} : vector<16x32xf32> to vector<2x32xf32>
    %cst_209 = arith.constant dense<0.000000e+00> : vector<32xf32>
    %278 = vector.multi_reduction <add>, %277, %cst_209 [0] : vector<2x32xf32> to vector<32xf32>
    %279 = vector.shape_cast %278 : vector<32xf32> to vector<1x32xf32>
    %280 = tpu.concatenate %258, %261, %264, %267, %270, %273, %276, %279 in 0 : vector<1x32xf32>, vector<1x32xf32>, vector<1x32xf32>, vector<1x32xf32>, vector<1x32xf32>, vector<1x32xf32>, vector<1x32xf32>, vector<1x32xf32> -> vector<8x32xf32>
    %281 = arith.truncf %280 : vector<8x32xf32> to vector<8x32xbf16>
    %c0_210 = arith.constant 0 : index
    %c0_211 = arith.constant 0 : index
    %c0_212 = arith.constant 0 : index
    %282 = vector.load %arg5[%c0_210, %c0_211, %c0_212] : memref<3x32x128xbf16, #tpu.memory_space<vmem>>, vector<1x32x128xbf16>
    %283 = vector.shape_cast %282 : vector<1x32x128xbf16> to vector<32x128xbf16>
    %cst_213 = arith.constant dense<0.000000e+00> : vector<8x128xf32>
    %284 = tpu.matmul %281, %283, %cst_213 {dimension_numbers = #tpu.dot_dimension_numbers<[1], [0], [0], [1], [0, 0, 1, 1], [], []>} : vector<8x32xbf16>, vector<32x128xbf16>, vector<8x128xf32> -> vector<8x128xf32>
    %c0_214 = arith.constant 0 : index
    %c0_215 = arith.constant 0 : index
    %c0_216 = arith.constant 0 : index
    %285 = vector.load %arg6[%c0_214, %c0_215, %c0_216] : memref<3x1x128xf32, #tpu.memory_space<vmem>>, vector<1x1x128xf32>
    %286 = vector.shape_cast %285 : vector<1x1x128xf32> to vector<1x128xf32>
    %287 = vector.broadcast %286 : vector<1x128xf32> to vector<8x128xf32>
    %288 = arith.addf %284, %287 : vector<8x128xf32>
    %cst_217 = arith.constant 0.000000e+00 : f32
    %289 = vector.broadcast %cst_217 : f32 to vector<8x128xf32>
    %290 = arith.maximumf %288, %289 : vector<8x128xf32>
    %291 = vector.extract_strided_slice %290 {offsets = [0, 0], sizes = [8, 32], strides = [1, 1]} : vector<8x128xf32> to vector<8x32xf32>
    %292 = arith.truncf %291 : vector<8x32xf32> to vector<8x32xbf16>
    %c1_218 = arith.constant 1 : index
    %c0_219 = arith.constant 0 : index
    %c0_220 = arith.constant 0 : index
    %293 = vector.load %arg5[%c1_218, %c0_219, %c0_220] : memref<3x32x128xbf16, #tpu.memory_space<vmem>>, vector<1x32x128xbf16>
    %294 = vector.shape_cast %293 : vector<1x32x128xbf16> to vector<32x128xbf16>
    %cst_221 = arith.constant dense<0.000000e+00> : vector<8x128xf32>
    %295 = tpu.matmul %292, %294, %cst_221 {dimension_numbers = #tpu.dot_dimension_numbers<[1], [0], [0], [1], [0, 0, 1, 1], [], []>} : vector<8x32xbf16>, vector<32x128xbf16>, vector<8x128xf32> -> vector<8x128xf32>
    %c1_222 = arith.constant 1 : index
    %c0_223 = arith.constant 0 : index
    %c0_224 = arith.constant 0 : index
    %296 = vector.load %arg6[%c1_222, %c0_223, %c0_224] : memref<3x1x128xf32, #tpu.memory_space<vmem>>, vector<1x1x128xf32>
    %297 = vector.shape_cast %296 : vector<1x1x128xf32> to vector<1x128xf32>
    %298 = vector.broadcast %297 : vector<1x128xf32> to vector<8x128xf32>
    %299 = arith.addf %295, %298 : vector<8x128xf32>
    %cst_225 = arith.constant 0.000000e+00 : f32
    %300 = vector.broadcast %cst_225 : f32 to vector<8x128xf32>
    %301 = arith.maximumf %299, %300 : vector<8x128xf32>
    %302 = vector.extract_strided_slice %301 {offsets = [0, 0], sizes = [8, 32], strides = [1, 1]} : vector<8x128xf32> to vector<8x32xf32>
    %303 = arith.truncf %302 : vector<8x32xf32> to vector<8x32xbf16>
    %c2_226 = arith.constant 2 : index
    %c0_227 = arith.constant 0 : index
    %c0_228 = arith.constant 0 : index
    %304 = vector.load %arg5[%c2_226, %c0_227, %c0_228] : memref<3x32x128xbf16, #tpu.memory_space<vmem>>, vector<1x32x128xbf16>
    %305 = vector.shape_cast %304 : vector<1x32x128xbf16> to vector<32x128xbf16>
    %cst_229 = arith.constant dense<0.000000e+00> : vector<8x128xf32>
    %306 = tpu.matmul %303, %305, %cst_229 {dimension_numbers = #tpu.dot_dimension_numbers<[1], [0], [0], [1], [0, 0, 1, 1], [], []>} : vector<8x32xbf16>, vector<32x128xbf16>, vector<8x128xf32> -> vector<8x128xf32>
    %c2_230 = arith.constant 2 : index
    %c0_231 = arith.constant 0 : index
    %c0_232 = arith.constant 0 : index
    %307 = vector.load %arg6[%c2_230, %c0_231, %c0_232] : memref<3x1x128xf32, #tpu.memory_space<vmem>>, vector<1x1x128xf32>
    %308 = vector.shape_cast %307 : vector<1x1x128xf32> to vector<1x128xf32>
    %309 = vector.broadcast %308 : vector<1x128xf32> to vector<8x128xf32>
    %310 = arith.addf %306, %309 : vector<8x128xf32>
    %c0_233 = arith.constant 0 : index
    %c0_234 = arith.constant 0 : index
    %311 = vector.load %arg7[%c0_233, %c0_234] : memref<8x128xf32, #tpu.memory_space<vmem>>, vector<8x128xf32>
    tpu.vector_store %arg7[%c0_233, %c0_234], %310 {strides = array<i32>} : memref<8x128xf32, #tpu.memory_space<vmem>>, vector<8x128xf32>,
    return
  }
  func.func @transform_0(%arg0: i32) -> (i32, i32, i32) {
    %c0_i32 = arith.constant 0 : i32
    %c0_i32_0 = arith.constant 0 : i32
    %c0_i32_1 = arith.constant 0 : i32
    return %arg0, %c0_i32, %c0_i32_0 : i32, i32, i32
  }
  func.func @transform_1(%arg0: i32) -> (i32, i32) {
    %c0_i32 = arith.constant 0 : i32
    %c0_i32_0 = arith.constant 0 : i32
    %c0_i32_1 = arith.constant 0 : i32
    return %c0_i32, %c0_i32_0 : i32, i32
  }
  func.func @transform_2(%arg0: i32) -> (i32, i32, i32) {
    %c0_i32 = arith.constant 0 : i32
    %c0_i32_0 = arith.constant 0 : i32
    %c0_i32_1 = arith.constant 0 : i32
    %c0_i32_2 = arith.constant 0 : i32
    return %c0_i32, %c0_i32_0, %c0_i32_1 : i32, i32, i32
  }
  func.func @transform_3(%arg0: i32) -> (i32, i32, i32) {
    %c0_i32 = arith.constant 0 : i32
    %c0_i32_0 = arith.constant 0 : i32
    %c0_i32_1 = arith.constant 0 : i32
    %c0_i32_2 = arith.constant 0 : i32
    return %c0_i32, %c0_i32_0, %c0_i32_1 : i32, i32, i32
  }
  func.func @transform_4(%arg0: i32) -> (i32, i32, i32) {
    %c0_i32 = arith.constant 0 : i32
    %c0_i32_0 = arith.constant 0 : i32
    %c0_i32_1 = arith.constant 0 : i32
    %c0_i32_2 = arith.constant 0 : i32
    return %c0_i32, %c0_i32_0, %c0_i32_1 : i32, i32, i32
  }
  func.func @transform_5(%arg0: i32) -> (i32, i32, i32) {
    %c0_i32 = arith.constant 0 : i32
    %c0_i32_0 = arith.constant 0 : i32
    %c0_i32_1 = arith.constant 0 : i32
    %c0_i32_2 = arith.constant 0 : i32
    return %c0_i32, %c0_i32_0, %c0_i32_1 : i32, i32, i32
  }
  func.func @transform_6(%arg0: i32) -> (i32, i32) {
    %c0_i32 = arith.constant 0 : i32
    %c0_i32_0 = arith.constant 0 : i32
    return %arg0, %c0_i32 : i32, i32
  }
}

</mosaic_0001>

<llo_original>
// kernel: squeeze.2
$region0: #{squeeze.2}
  %s0 = inlined_call_operand.vmem [shape: f32[16,1024], index: 0, kind: input, shape index: {}]
  %s1 = inlined_call_operand.vmem [shape: f32[16,64,16], index: 1, kind: output, shape index: {}]
  %v2 = vld [vmem:[%s0] sm:$0xff]
  %vm3 = vcmask 130048
  %4 = vst.msk [vmem:[%s1] sm:$0x1] %vm3, %v2
  %s5 = scalar_lea.vmem %s1, 63
  %6 = vst.msk [vmem:[%s5] sm:$0x2] %vm3, %v2
  %s7 = scalar_lea.vmem %s1, 126
  %8 = vst.msk [vmem:[%s7] sm:$0x4] %vm3, %v2
  %s9 = scalar_lea.vmem %s1, 189
  %10 = vst.msk [vmem:[%s9] sm:$0x8] %vm3, %v2
  %s11 = scalar_lea.vmem %s1, 252
  %12 = vst.msk [vmem:[%s11] sm:$0x10] %vm3, %v2
  %s13 = scalar_lea.vmem %s1, 315
  %14 = vst.msk [vmem:[%s13] sm:$0x20] %vm3, %v2
  %s15 = scalar_lea.vmem %s1, 378
  %16 = vst.msk [vmem:[%s15] sm:$0x40] %vm3, %v2
  %s17 = scalar_lea.vmem %s1, 441
  %18 = vst.msk [vmem:[%s17] sm:$0x80] %vm3, %v2
  %s19 = scalar_lea.vmem %s0, 8
  %v20 = vld [vmem:[%s19] sm:$0xff]
  %vm21 = vcmask 130048
  %s22 = scalar_lea.vmem %s1, 8
  %23 = vst.msk [vmem:[%s22] sm:$0x1] %vm21, %v20
  %s24 = scalar_lea.vmem %s1, 71
  %25 = vst.msk [vmem:[%s24] sm:$0x2] %vm21, %v20
  %s26 = scalar_lea.vmem %s1, 134
  %27 = vst.msk [vmem:[%s26] sm:$0x4] %vm21, %v20
  %s28 = scalar_lea.vmem %s1, 197
  %29 = vst.msk [vmem:[%s28] sm:$0x8] %vm21, %v20
  %s30 = scalar_lea.vmem %s1, 260
  %31 = vst.msk [vmem:[%s30] sm:$0x10] %vm21, %v20
  %s32 = scalar_lea.vmem %s1, 323
  %33 = vst.msk [vmem:[%s32] sm:$0x20] %vm21, %v20
  %s34 = scalar_lea.vmem %s1, 386
  %35 = vst.msk [vmem:[%s34] sm:$0x40] %vm21, %v20
  %s36 = scalar_lea.vmem %s1, 449
  %37 = vst.msk [vmem:[%s36] sm:$0x80] %vm21, %v20
  %s38 = scalar_lea.vmem %s0, 16
  %v39 = vld [vmem:[%s38] sm:$0xff]
  %vm40 = vcmask 130048
  %s41 = scalar_lea.vmem %s1, 16
  %42 = vst.msk [vmem:[%s41] sm:$0x1] %vm40, %v39
  %s43 = scalar_lea.vmem %s1, 79
  %44 = vst.msk [vmem:[%s43] sm:$0x2] %vm40, %v39
  %s45 = scalar_lea.vmem %s1, 142
  %46 = vst.msk [vmem:[%s45] sm:$0x4] %vm40, %v39
  %s47 = scalar_lea.vmem %s1, 205
  %48 = vst.msk [vmem:[%s47] sm:$0x8] %vm40, %v39
  %s49 = scalar_lea.vmem %s1, 268
  %50 = vst.msk [vmem:[%s49] sm:$0x10] %vm40, %v39
  %s51 = scalar_lea.vmem %s1, 331
  %52 = vst.msk [vmem:[%s51] sm:$0x20] %vm40, %v39
  %s53 = scalar_lea.vmem %s1, 394
  %54 = vst.msk [vmem:[%s53] sm:$0x40] %vm40, %v39
  %s55 = scalar_lea.vmem %s1, 457
  %56 = vst.msk [vmem:[%s55] sm:$0x80] %vm40, %v39
  %s57 = scalar_lea.vmem %s0, 24
  %v58 = vld [vmem:[%s57] sm:$0xff]
  %vm59 = vcmask 130048
  %s60 = scalar_lea.vmem %s1, 24
  %61 = vst.msk [vmem:[%s60] sm:$0x1] %vm59, %v58
  %s62 = scalar_lea.vmem %s1, 87
  %63 = vst.msk [vmem:[%s62] sm:$0x2] %vm59, %v58
  %s64 = scalar_lea.vmem %s1, 150
  %65 = vst.msk [vmem:[%s64] sm:$0x4] %vm59, %v58
  %s66 = scalar_lea.vmem %s1, 213
  %67 = vst.msk [vmem:[%s66] sm:$0x8] %vm59, %v58
  %s68 = scalar_lea.vmem %s1, 276
  %69 = vst.msk [vmem:[%s68] sm:$0x10] %vm59, %v58
  %s70 = scalar_lea.vmem %s1, 339
  %71 = vst.msk [vmem:[%s70] sm:$0x20] %vm59, %v58
  %s72 = scalar_lea.vmem %s1, 402
  %73 = vst.msk [vmem:[%s72] sm:$0x40] %vm59, %v58
  %s74 = scalar_lea.vmem %s1, 465
  %75 = vst.msk [vmem:[%s74] sm:$0x80] %vm59, %v58
  %s76 = scalar_lea.vmem %s0, 32
  %v77 = vld [vmem:[%s76] sm:$0xff]
  %vm78 = vcmask 130048
  %s79 = scalar_lea.vmem %s1, 32
  %80 = vst.msk [vmem:[%s79] sm:$0x1] %vm78, %v77
  %s81 = scalar_lea.vmem %s1, 95
  %82 = vst.msk [vmem:[%s81] sm:$0x2] %vm78, %v77
  %s83 = scalar_lea.vmem %s1, 158
  %84 = vst.msk [vmem:[%s83] sm:$0x4] %vm78, %v77
  %s85 = scalar_lea.vmem %s1, 221
  %86 = vst.msk [vmem:[%s85] sm:$0x8] %vm78, %v77
  %s87 = scalar_lea.vmem %s1, 284
  %88 = vst.msk [vmem:[%s87] sm:$0x10] %vm78, %v77
  %s89 = scalar_lea.vmem %s1, 347
  %90 = vst.msk [vmem:[%s89] sm:$0x20] %vm78, %v77
  %s91 = scalar_lea.vmem %s1, 410
  %92 = vst.msk [vmem:[%s91] sm:$0x40] %vm78, %v77
  %s93 = scalar_lea.vmem %s1, 473
  %94 = vst.msk [vmem:[%s93] sm:$0x80] %vm78, %v77
  %s95 = scalar_lea.vmem %s0, 40
  %v96 = vld [vmem:[%s95] sm:$0xff]
  %vm97 = vcmask 130048
  %s98 = scalar_lea.vmem %s1, 40
  %99 = vst.msk [vmem:[%s98] sm:$0x1] %vm97, %v96
  %s100 = scalar_lea.vmem %s1, 103
  %101 = vst.msk [vmem:[%s100] sm:$0x2] %vm97, %v96
  %s102 = scalar_lea.vmem %s1, 166
  %103 = vst.msk [vmem:[%s102] sm:$0x4] %vm97, %v96
  %s104 = scalar_lea.vmem %s1, 229
  %105 = vst.msk [vmem:[%s104] sm:$0x8] %vm97, %v96
  %s106 = scalar_lea.vmem %s1, 292
  %107 = vst.msk [vmem:[%s106] sm:$0x10] %vm97, %v96
  %s108 = scalar_lea.vmem %s1, 355
  %109 = vst.msk [vmem:[%s108] sm:$0x20] %vm97, %v96
  %s110 = scalar_lea.vmem %s1, 418
  %111 = vst.msk [vmem:[%s110] sm:$0x40] %vm97, %v96
  %s112 = scalar_lea.vmem %s1, 481
  %113 = vst.msk [vmem:[%s112] sm:$0x80] %vm97, %v96
  %s114 = scalar_lea.vmem %s0, 48
  %v115 = vld [vmem:[%s114] sm:$0xff]
  %vm116 = vcmask 130048
  %s117 = scalar_lea.vmem %s1, 48
  %118 = vst.msk [vmem:[%s117] sm:$0x1] %vm116, %v115
  %s119 = scalar_lea.vmem %s1, 111
  %120 = vst.msk [vmem:[%s119] sm:$0x2] %vm116, %v115
  %s121 = scalar_lea.vmem %s1, 174
  %122 = vst.msk [vmem:[%s121] sm:$0x4] %vm116, %v115
  %s123 = scalar_lea.vmem %s1, 237
  %124 = vst.msk [vmem:[%s123] sm:$0x8] %vm116, %v115
  %s125 = scalar_lea.vmem %s1, 300
  %126 = vst.msk [vmem:[%s125] sm:$0x10] %vm116, %v115
  %s127 = scalar_lea.vmem %s1, 363
  %128 = vst.msk [vmem:[%s127] sm:$0x20] %vm116, %v115
  %s129 = scalar_lea.vmem %s1, 426
  %130 = vst.msk [vmem:[%s129] sm:$0x40] %vm116, %v115
  %s131 = scalar_lea.vmem %s1, 489
  %132 = vst.msk [vmem:[%s131] sm:$0x80] %vm116, %v115
  %s133 = scalar_lea.vmem %s0, 56
  %v134 = vld [vmem:[%s133] sm:$0xff]
  %vm135 = vcmask 130048
  %s136 = scalar_lea.vmem %s1, 56
  %137 = vst.msk [vmem:[%s136] sm:$0x1] %vm135, %v134
  %s138 = scalar_lea.vmem %s1, 119
  %139 = vst.msk [vmem:[%s138] sm:$0x2] %vm135, %v134
  %s140 = scalar_lea.vmem %s1, 182
  %141 = vst.msk [vmem:[%s140] sm:$0x4] %vm135, %v134
  %s142 = scalar_lea.vmem %s1, 245
  %143 = vst.msk [vmem:[%s142] sm:$0x8] %vm135, %v134
  %s144 = scalar_lea.vmem %s1, 308
  %145 = vst.msk [vmem:[%s144] sm:$0x10] %vm135, %v134
  %s146 = scalar_lea.vmem %s1, 371
  %147 = vst.msk [vmem:[%s146] sm:$0x20] %vm135, %v134
  %s148 = scalar_lea.vmem %s1, 434
  %149 = vst.msk [vmem:[%s148] sm:$0x40] %vm135, %v134
  %s150 = scalar_lea.vmem %s1, 497
  %151 = vst.msk [vmem:[%s150] sm:$0x80] %vm135, %v134
  %s152 = scalar_lea.vmem %s0, 64
  %v153 = vld [vmem:[%s152] sm:$0xff]
  %vm154 = vcmask 130048
  %s155 = scalar_lea.vmem %s1, 512
  %156 = vst.msk [vmem:[%s155] sm:$0x1] %vm154, %v153
  %s157 = scalar_lea.vmem %s1, 575
  %158 = vst.msk [vmem:[%s157] sm:$0x2] %vm154, %v153
  %s159 = scalar_lea.vmem %s1, 638
  %160 = vst.msk [vmem:[%s159] sm:$0x4] %vm154, %v153
  %s161 = scalar_lea.vmem %s1, 701
  %162 = vst.msk [vmem:[%s161] sm:$0x8] %vm154, %v153
  %s163 = scalar_lea.vmem %s1, 764
  %164 = vst.msk [vmem:[%s163] sm:$0x10] %vm154, %v153
  %s165 = scalar_lea.vmem %s1, 827
  %166 = vst.msk [vmem:[%s165] sm:$0x20] %vm154, %v153
  %s167 = scalar_lea.vmem %s1, 890
  %168 = vst.msk [vmem:[%s167] sm:$0x40] %vm154, %v153
  %s169 = scalar_lea.vmem %s1, 953
  %170 = vst.msk [vmem:[%s169] sm:$0x80] %vm154, %v153
  %s171 = scalar_lea.vmem %s0, 72
  %v172 = vld [vmem:[%s171] sm:$0xff]
  %vm173 = vcmask 130048
  %s174 = scalar_lea.vmem %s1, 520
  %175 = vst.msk [vmem:[%s174] sm:$0x1] %vm173, %v172
  %s176 = scalar_lea.vmem %s1, 583
  %177 = vst.msk [vmem:[%s176] sm:$0x2] %vm173, %v172
  %s178 = scalar_lea.vmem %s1, 646
  %179 = vst.msk [vmem:[%s178] sm:$0x4] %vm173, %v172
  %s180 = scalar_lea.vmem %s1, 709
  %181 = vst.msk [vmem:[%s180] sm:$0x8] %vm173, %v172
  %s182 = scalar_lea.vmem %s1, 772
  %183 = vst.msk [vmem:[%s182] sm:$0x10] %vm173, %v172
  %s184 = scalar_lea.vmem %s1, 835
  %185 = vst.msk [vmem:[%s184] sm:$0x20] %vm173, %v172
  %s186 = scalar_lea.vmem %s1, 898
  %187 = vst.msk [vmem:[%s186] sm:$0x40] %vm173, %v172
  %s188 = scalar_lea.vmem %s1, 961
  %189 = vst.msk [vmem:[%s188] sm:$0x80] %vm173, %v172
  %s190 = scalar_lea.vmem %s0, 80
  %v191 = vld [vmem:[%s190] sm:$0xff]
  %vm192 = vcmask 130048
  %s193 = scalar_lea.vmem %s1, 528
  %194 = vst.msk [vmem:[%s193] sm:$0x1] %vm192, %v191
  %s195 = scalar_lea.vmem %s1, 591
  %196 = vst.msk [vmem:[%s195] sm:$0x2] %vm192, %v191
  %s197 = scalar_lea.vmem %s1, 654
  %198 = vst.msk [vmem:[%s197] sm:$0x4] %vm192, %v191
  %s199 = scalar_lea.vmem %s1, 717
  %200 = vst.msk [vmem:[%s199] sm:$0x8] %vm192, %v191
  %s201 = scalar_lea.vmem %s1, 780
  %202 = vst.msk [vmem:[%s201] sm:$0x10] %vm192, %v191
  %s203 = scalar_lea.vmem %s1, 843
  %204 = vst.msk [vmem:[%s203] sm:$0x20] %vm192, %v191
  %s205 = scalar_lea.vmem %s1, 906
  %206 = vst.msk [vmem:[%s205] sm:$0x40] %vm192, %v191
  %s207 = scalar_lea.vmem %s1, 969
  %208 = vst.msk [vmem:[%s207] sm:$0x80] %vm192, %v191
  %s209 = scalar_lea.vmem %s0, 88
  %v210 = vld [vmem:[%s209] sm:$0xff]
  %vm211 = vcmask 130048
  %s212 = scalar_lea.vmem %s1, 536
  %213 = vst.msk [vmem:[%s212] sm:$0x1] %vm211, %v210
  %s214 = scalar_lea.vmem %s1, 599
  %215 = vst.msk [vmem:[%s214] sm:$0x2] %vm211, %v210
  %s216 = scalar_lea.vmem %s1, 662
  %217 = vst.msk [vmem:[%s216] sm:$0x4] %vm211, %v210
  %s218 = scalar_lea.vmem %s1, 725
  %219 = vst.msk [vmem:[%s218] sm:$0x8] %vm211, %v210
  %s220 = scalar_lea.vmem %s1, 788
  %221 = vst.msk [vmem:[%s220] sm:$0x10] %vm211, %v210
  %s222 = scalar_lea.vmem %s1, 851
  %223 = vst.msk [vmem:[%s222] sm:$0x20] %vm211, %v210
  %s224 = scalar_lea.vmem %s1, 914
  %225 = vst.msk [vmem:[%s224] sm:$0x40] %vm211, %v210
  %s226 = scalar_lea.vmem %s1, 977
  %227 = vst.msk [vmem:[%s226] sm:$0x80] %vm211, %v210
  %s228 = scalar_lea.vmem %s0, 96
  %v229 = vld [vmem:[%s228] sm:$0xff]
  %vm230 = vcmask 130048
  %s231 = scalar_lea.vmem %s1, 544
  %232 = vst.msk [vmem:[%s231] sm:$0x1] %vm230, %v229
  %s233 = scalar_lea.vmem %s1, 607
  %234 = vst.msk [vmem:[%s233] sm:$0x2] %vm230, %v229
  %s235 = scalar_lea.vmem %s1, 670
  %236 = vst.msk [vmem:[%s235] sm:$0x4] %vm230, %v229
  %s237 = scalar_lea.vmem %s1, 733
  %238 = vst.msk [vmem:[%s237] sm:$0x8] %vm230, %v229
  %s239 = scalar_lea.vmem %s1, 796
  %240 = vst.msk [vmem:[%s239] sm:$0x10] %vm230, %v229
  %s241 = scalar_lea.vmem %s1, 859
  %242 = vst.msk [vmem:[%s241] sm:$0x20] %vm230, %v229
  %s243 = scalar_lea.vmem %s1, 922
  %244 = vst.msk [vmem:[%s243] sm:$0x40] %vm230, %v229
  %s245 = scalar_lea.vmem %s1, 985
  %246 = vst.msk [vmem:[%s245] sm:$0x80] %vm230, %v229
  %s247 = scalar_lea.vmem %s0, 104
  %v248 = vld [vmem:[%s247] sm:$0xff]
  %vm249 = vcmask 130048
  %s250 = scalar_lea.vmem %s1, 552
  %251 = vst.msk [vmem:[%s250] sm:$0x1] %vm249, %v248
  %s252 = scalar_lea.vmem %s1, 615
  %253 = vst.msk [vmem:[%s252] sm:$0x2] %vm249, %v248
  %s254 = scalar_lea.vmem %s1, 678
  %255 = vst.msk [vmem:[%s254] sm:$0x4] %vm249, %v248
  %s256 = scalar_lea.vmem %s1, 741
  %257 = vst.msk [vmem:[%s256] sm:$0x8] %vm249, %v248
  %s258 = scalar_lea.vmem %s1, 804
  %259 = vst.msk [vmem:[%s258] sm:$0x10] %vm249, %v248
  %s260 = scalar_lea.vmem %s1, 867
  %261 = vst.msk [vmem:[%s260] sm:$0x20] %vm249, %v248
  %s262 = scalar_lea.vmem %s1, 930
  %263 = vst.msk [vmem:[%s262] sm:$0x40] %vm249, %v248
  %s264 = scalar_lea.vmem %s1, 993
  %265 = vst.msk [vmem:[%s264] sm:$0x80] %vm249, %v248
  %s266 = scalar_lea.vmem %s0, 112
  %v267 = vld [vmem:[%s266] sm:$0xff]
  %vm268 = vcmask 130048
  %s269 = scalar_lea.vmem %s1, 560
  %270 = vst.msk [vmem:[%s269] sm:$0x1] %vm268, %v267
  %s271 = scalar_lea.vmem %s1, 623
  %272 = vst.msk [vmem:[%s271] sm:$0x2] %vm268, %v267
  %s273 = scalar_lea.vmem %s1, 686
  %274 = vst.msk [vmem:[%s273] sm:$0x4] %vm268, %v267
  %s275 = scalar_lea.vmem %s1, 749
  %276 = vst.msk [vmem:[%s275] sm:$0x8] %vm268, %v267
  %s277 = scalar_lea.vmem %s1, 812
  %278 = vst.msk [vmem:[%s277] sm:$0x10] %vm268, %v267
  %s279 = scalar_lea.vmem %s1, 875
  %280 = vst.msk [vmem:[%s279] sm:$0x20] %vm268, %v267
  %s281 = scalar_lea.vmem %s1, 938
  %282 = vst.msk [vmem:[%s281] sm:$0x40] %vm268, %v267
  %s283 = scalar_lea.vmem %s1, 1001
  %284 = vst.msk [vmem:[%s283] sm:$0x80] %vm268, %v267
  %s285 = scalar_lea.vmem %s0, 120
  %v286 = vld [vmem:[%s285] sm:$0xff]
  %vm287 = vcmask 130048
  %s288 = scalar_lea.vmem %s1, 568
  %289 = vst.msk [vmem:[%s288] sm:$0x1] %vm287, %v286
  %s290 = scalar_lea.vmem %s1, 631
  %291 = vst.msk [vmem:[%s290] sm:$0x2] %vm287, %v286
  %s292 = scalar_lea.vmem %s1, 694
  %293 = vst.msk [vmem:[%s292] sm:$0x4] %vm287, %v286
  %s294 = scalar_lea.vmem %s1, 757
  %295 = vst.msk [vmem:[%s294] sm:$0x8] %vm287, %v286
  %s296 = scalar_lea.vmem %s1, 820
  %297 = vst.msk [vmem:[%s296] sm:$0x10] %vm287, %v286
  %s298 = scalar_lea.vmem %s1, 883
  %299 = vst.msk [vmem:[%s298] sm:$0x20] %vm287, %v286
  %s300 = scalar_lea.vmem %s1, 946
  %301 = vst.msk [vmem:[%s300] sm:$0x40] %vm287, %v286
  %s302 = scalar_lea.vmem %s1, 1009
  %303 = vst.msk [vmem:[%s302] sm:$0x80] %vm287, %v286
  %v304 = vld [vmem:[%s0] ss:$8 sm:$0xf]
  %s305 = scalar_lea.vmem %s0, 4294967265
  %v306 = vld [vmem:[%s305] ss:$8 sm:$0xf0]
  %vm307 = vcmask 1047556
  %v308 = vsel %vm307, %v306, %v304
  %309 = vrot.lane.b32.xlu0 %v308, 112
  %v310 = vpop.permute.xlu0 %309
  %vm311 = vcmask 130048
  %s312 = scalar_lea.vmem %s1, 1
  %313 = vst.msk [vmem:[%s312] ss:$8 sm:$0xf] %vm311, %v310
  %s314 = scalar_lea.vmem %s1, 33
  %315 = vst.msk [vmem:[%s314] ss:$8 sm:$0xf0] %vm311, %v310
  %s316 = scalar_lea.vmem %s0, 2
  %v317 = vld [vmem:[%s316] ss:$8 sm:$0xf]
  %s318 = scalar_lea.vmem %s0, 4294967267
  %v319 = vld [vmem:[%s318] ss:$8 sm:$0xf0]
  %vm320 = vcmask 1047556
  %v321 = vsel %vm320, %v319, %v317
  %322 = vrot.lane.b32.xlu0 %v321, 112
  %v323 = vpop.permute.xlu0 %322
  %vm324 = vcmask 130048
  %s325 = scalar_lea.vmem %s1, 129
  %326 = vst.msk [vmem:[%s325] ss:$8 sm:$0xf] %vm324, %v323
  %s327 = scalar_lea.vmem %s1, 161
  %328 = vst.msk [vmem:[%s327] ss:$8 sm:$0xf0] %vm324, %v323
  %s329 = scalar_lea.vmem %s0, 4
  %v330 = vld [vmem:[%s329] ss:$8 sm:$0xf]
  %s331 = scalar_lea.vmem %s0, 4294967269
  %v332 = vld [vmem:[%s331] ss:$8 sm:$0xf0]
  %vm333 = vcmask 1047556
  %v334 = vsel %vm333, %v332, %v330
  %335 = vrot.lane.b32.xlu0 %v334, 112
  %v336 = vpop.permute.xlu0 %335
  %vm337 = vcmask 130048
  %s338 = scalar_lea.vmem %s1, 257
  %339 = vst.msk [vmem:[%s338] ss:$8 sm:$0xf] %vm337, %v336
  %s340 = scalar_lea.vmem %s1, 289
  %341 = vst.msk [vmem:[%s340] ss:$8 sm:$0xf0] %vm337, %v336
  %s342 = scalar_lea.vmem %s0, 6
  %v343 = vld [vmem:[%s342] ss:$8 sm:$0xf]
  %s344 = scalar_lea.vmem %s0, 4294967271
  %v345 = vld [vmem:[%s344] ss:$8 sm:$0xf0]
  %vm346 = vcmask 1047556
  %v347 = vsel %vm346, %v345, %v343
  %348 = vrot.lane.b32.xlu0 %v347, 112
  %v349 = vpop.permute.xlu0 %348
  %vm350 = vcmask 130048
  %s351 = scalar_lea.vmem %s1, 385
  %352 = vst.msk [vmem:[%s351] ss:$8 sm:$0xf] %vm350, %v349
  %s353 = scalar_lea.vmem %s1, 417
  %354 = vst.msk [vmem:[%s353] ss:$8 sm:$0xf0] %vm350, %v349
  %s355 = scalar_lea.vmem %s0, 32
  %v356 = vld [vmem:[%s355] ss:$8 sm:$0xf]
  %s357 = scalar_lea.vmem %s0, 1
  %v358 = vld [vmem:[%s357] ss:$8 sm:$0xf0]
  %vm359 = vcmask 1047556
  %v360 = vsel %vm359, %v358, %v356
  %361 = vrot.lane.b32.xlu0 %v360, 112
  %v362 = vpop.permute.xlu0 %361
  %vm363 = vcmask 130048
  %s364 = scalar_lea.vmem %s1, 33
  %365 = vst.msk [vmem:[%s364] ss:$8 sm:$0xf] %vm363, %v362
  %s366 = scalar_lea.vmem %s1, 65
  %367 = vst.msk [vmem:[%s366] ss:$8 sm:$0xf0] %vm363, %v362
  %s368 = scalar_lea.vmem %s0, 34
  %v369 = vld [vmem:[%s368] ss:$8 sm:$0xf]
  %s370 = scalar_lea.vmem %s0, 3
  %v371 = vld [vmem:[%s370] ss:$8 sm:$0xf0]
  %vm372 = vcmask 1047556
  %v373 = vsel %vm372, %v371, %v369
  %374 = vrot.lane.b32.xlu0 %v373, 112
  %v375 = vpop.permute.xlu0 %374
  %vm376 = vcmask 130048
  %s377 = scalar_lea.vmem %s1, 161
  %378 = vst.msk [vmem:[%s377] ss:$8 sm:$0xf] %vm376, %v375
  %s379 = scalar_lea.vmem %s1, 193
  %380 = vst.msk [vmem:[%s379] ss:$8 sm:$0xf0] %vm376, %v375
  %s381 = scalar_lea.vmem %s0, 36
  %v382 = vld [vmem:[%s381] ss:$8 sm:$0xf]
  %s383 = scalar_lea.vmem %s0, 5
  %v384 = vld [vmem:[%s383] ss:$8 sm:$0xf0]
  %vm385 = vcmask 1047556
  %v386 = vsel %vm385, %v384, %v382
  %387 = vrot.lane.b32.xlu0 %v386, 112
  %v388 = vpop.permute.xlu0 %387
  %vm389 = vcmask 130048
  %s390 = scalar_lea.vmem %s1, 289
  %391 = vst.msk [vmem:[%s390] ss:$8 sm:$0xf] %vm389, %v388
  %s392 = scalar_lea.vmem %s1, 321
  %393 = vst.msk [vmem:[%s392] ss:$8 sm:$0xf0] %vm389, %v388
  %s394 = scalar_lea.vmem %s0, 38
  %v395 = vld [vmem:[%s394] ss:$8 sm:$0xf]
  %s396 = scalar_lea.vmem %s0, 7
  %v397 = vld [vmem:[%s396] ss:$8 sm:$0xf0]
  %vm398 = vcmask 1047556
  %v399 = vsel %vm398, %v397, %v395
  %400 = vrot.lane.b32.xlu0 %v399, 112
  %v401 = vpop.permute.xlu0 %400
  %vm402 = vcmask 130048
  %s403 = scalar_lea.vmem %s1, 417
  %404 = vst.msk [vmem:[%s403] ss:$8 sm:$0xf] %vm402, %v401
  %s405 = scalar_lea.vmem %s1, 449
  %406 = vst.msk [vmem:[%s405] ss:$8 sm:$0xf0] %vm402, %v401
  %s407 = scalar_lea.vmem %s0, 64
  %v408 = vld [vmem:[%s407] ss:$8 sm:$0xf]
  %s409 = scalar_lea.vmem %s0, 33
  %v410 = vld [vmem:[%s409] ss:$8 sm:$0xf0]
  %vm411 = vcmask 1047556
  %v412 = vsel %vm411, %v410, %v408
  %413 = vrot.lane.b32.xlu0 %v412, 112
  %v414 = vpop.permute.xlu0 %413
  %vm415 = vcmask 130048
  %s416 = scalar_lea.vmem %s1, 513
  %417 = vst.msk [vmem:[%s416] ss:$8 sm:$0xf] %vm415, %v414
  %s418 = scalar_lea.vmem %s1, 545
  %419 = vst.msk [vmem:[%s418] ss:$8 sm:$0xf0] %vm415, %v414
  %s420 = scalar_lea.vmem %s0, 66
  %v421 = vld [vmem:[%s420] ss:$8 sm:$0xf]
  %s422 = scalar_lea.vmem %s0, 35
  %v423 = vld [vmem:[%s422] ss:$8 sm:$0xf0]
  %vm424 = vcmask 1047556
  %v425 = vsel %vm424, %v423, %v421
  %426 = vrot.lane.b32.xlu0 %v425, 112
  %v427 = vpop.permute.xlu0 %426
  %vm428 = vcmask 130048
  %s429 = scalar_lea.vmem %s1, 641
  %430 = vst.msk [vmem:[%s429] ss:$8 sm:$0xf] %vm428, %v427
  %s431 = scalar_lea.vmem %s1, 673
  %432 = vst.msk [vmem:[%s431] ss:$8 sm:$0xf0] %vm428, %v427
  %s433 = scalar_lea.vmem %s0, 68
  %v434 = vld [vmem:[%s433] ss:$8 sm:$0xf]
  %s435 = scalar_lea.vmem %s0, 37
  %v436 = vld [vmem:[%s435] ss:$8 sm:$0xf0]
  %vm437 = vcmask 1047556
  %v438 = vsel %vm437, %v436, %v434
  %439 = vrot.lane.b32.xlu0 %v438, 112
  %v440 = vpop.permute.xlu0 %439
  %vm441 = vcmask 130048
  %s442 = scalar_lea.vmem %s1, 769
  %443 = vst.msk [vmem:[%s442] ss:$8 sm:$0xf] %vm441, %v440
  %s444 = scalar_lea.vmem %s1, 801
  %445 = vst.msk [vmem:[%s444] ss:$8 sm:$0xf0] %vm441, %v440
  %s446 = scalar_lea.vmem %s0, 70
  %v447 = vld [vmem:[%s446] ss:$8 sm:$0xf]
  %s448 = scalar_lea.vmem %s0, 39
  %v449 = vld [vmem:[%s448] ss:$8 sm:$0xf0]
  %vm450 = vcmask 1047556
  %v451 = vsel %vm450, %v449, %v447
  %452 = vrot.lane.b32.xlu0 %v451, 112
  %v453 = vpop.permute.xlu0 %452
  %vm454 = vcmask 130048
  %s455 = scalar_lea.vmem %s1, 897
  %456 = vst.msk [vmem:[%s455] ss:$8 sm:$0xf] %vm454, %v453
  %s457 = scalar_lea.vmem %s1, 929
  %458 = vst.msk [vmem:[%s457] ss:$8 sm:$0xf0] %vm454, %v453
  %s459 = scalar_lea.vmem %s0, 96
  %v460 = vld [vmem:[%s459] ss:$8 sm:$0xf]
  %s461 = scalar_lea.vmem %s0, 65
  %v462 = vld [vmem:[%s461] ss:$8 sm:$0xf0]
  %vm463 = vcmask 1047556
  %v464 = vsel %vm463, %v462, %v460
  %465 = vrot.lane.b32.xlu0 %v464, 112
  %v466 = vpop.permute.xlu0 %465
  %vm467 = vcmask 130048
  %s468 = scalar_lea.vmem %s1, 545
  %469 = vst.msk [vmem:[%s468] ss:$8 sm:$0xf] %vm467, %v466
  %s470 = scalar_lea.vmem %s1, 577
  %471 = vst.msk [vmem:[%s470] ss:$8 sm:$0xf0] %vm467, %v466
  %s472 = scalar_lea.vmem %s0, 98
  %v473 = vld [vmem:[%s472] ss:$8 sm:$0xf]
  %s474 = scalar_lea.vmem %s0, 67
  %v475 = vld [vmem:[%s474] ss:$8 sm:$0xf0]
  %vm476 = vcmask 1047556
  %v477 = vsel %vm476, %v475, %v473
  %478 = vrot.lane.b32.xlu0 %v477, 112
  %v479 = vpop.permute.xlu0 %478
  %vm480 = vcmask 130048
  %s481 = scalar_lea.vmem %s1, 673
  %482 = vst.msk [vmem:[%s481] ss:$8 sm:$0xf] %vm480, %v479
  %s483 = scalar_lea.vmem %s1, 705
  %484 = vst.msk [vmem:[%s483] ss:$8 sm:$0xf0] %vm480, %v479
  %s485 = scalar_lea.vmem %s0, 100
  %v486 = vld [vmem:[%s485] ss:$8 sm:$0xf]
  %s487 = scalar_lea.vmem %s0, 69
  %v488 = vld [vmem:[%s487] ss:$8 sm:$0xf0]
  %vm489 = vcmask 1047556
  %v490 = vsel %vm489, %v488, %v486
  %491 = vrot.lane.b32.xlu0 %v490, 112
  %v492 = vpop.permute.xlu0 %491
  %vm493 = vcmask 130048
  %s494 = scalar_lea.vmem %s1, 801
  %495 = vst.msk [vmem:[%s494] ss:$8 sm:$0xf] %vm493, %v492
  %s496 = scalar_lea.vmem %s1, 833
  %497 = vst.msk [vmem:[%s496] ss:$8 sm:$0xf0] %vm493, %v492
  %s498 = scalar_lea.vmem %s0, 102
  %v499 = vld [vmem:[%s498] ss:$8 sm:$0xf]
  %s500 = scalar_lea.vmem %s0, 71
  %v501 = vld [vmem:[%s500] ss:$8 sm:$0xf0]
  %vm502 = vcmask 1047556
  %v503 = vsel %vm502, %v501, %v499
  %504 = vrot.lane.b32.xlu0 %v503, 112
  %v505 = vpop.permute.xlu0 %504
  %vm506 = vcmask 130048
  %s507 = scalar_lea.vmem %s1, 929
  %508 = vst.msk [vmem:[%s507] ss:$8 sm:$0xf] %vm506, %v505
  %s509 = scalar_lea.vmem %s1, 961
  %510 = vst.msk [vmem:[%s509] ss:$8 sm:$0xf0] %vm506, %v505
  %v511 = vld [vmem:[%s0] ss:$8 sm:$0xf]
  %s512 = scalar_lea.vmem %s0, 4294967265
  %v513 = vld [vmem:[%s512] ss:$8 sm:$0xf0]
  %vm514 = vcmask 1047556
  %v515 = vsel %vm514, %v513, %v511
  %516 = vrot.lane.b32.xlu0 %v515, 96
  %v517 = vpop.permute.xlu0 %516
  %vm518 = vcmask 130048
  %s519 = scalar_lea.vmem %s1, 2
  %520 = vst.msk [vmem:[%s519] ss:$8 sm:$0xf] %vm518, %v517
  %s521 = scalar_lea.vmem %s1, 34
  %522 = vst.msk [vmem:[%s521] ss:$8 sm:$0xf0] %vm518, %v517
  %s523 = scalar_lea.vmem %s0, 2
  %v524 = vld [vmem:[%s523] ss:$8 sm:$0xf]
  %s525 = scalar_lea.vmem %s0, 4294967267
  %v526 = vld [vmem:[%s525] ss:$8 sm:$0xf0]
  %vm527 = vcmask 1047556
  %v528 = vsel %vm527, %v526, %v524
  %529 = vrot.lane.b32.xlu0 %v528, 96
  %v530 = vpop.permute.xlu0 %529
  %vm531 = vcmask 130048
  %s532 = scalar_lea.vmem %s1, 130
  %533 = vst.msk [vmem:[%s532] ss:$8 sm:$0xf] %vm531, %v530
  %s534 = scalar_lea.vmem %s1, 162
  %535 = vst.msk [vmem:[%s534] ss:$8 sm:$0xf0] %vm531, %v530
  %s536 = scalar_lea.vmem %s0, 4
  %v537 = vld [vmem:[%s536] ss:$8 sm:$0xf]
  %s538 = scalar_lea.vmem %s0, 4294967269
  %v539 = vld [vmem:[%s538] ss:$8 sm:$0xf0]
  %vm540 = vcmask 1047556
  %v541 = vsel %vm540, %v539, %v537
  %542 = vrot.lane.b32.xlu0 %v541, 96
  %v543 = vpop.permute.xlu0 %542
  %vm544 = vcmask 130048
  %s545 = scalar_lea.vmem %s1, 258
  %546 = vst.msk [vmem:[%s545] ss:$8 sm:$0xf] %vm544, %v543
  %s547 = scalar_lea.vmem %s1, 290
  %548 = vst.msk [vmem:[%s547] ss:$8 sm:$0xf0] %vm544, %v543
  %s549 = scalar_lea.vmem %s0, 6
  %v550 = vld [vmem:[%s549] ss:$8 sm:$0xf]
  %s551 = scalar_lea.vmem %s0, 4294967271
  %v552 = vld [vmem:[%s551] ss:$8 sm:$0xf0]
  %vm553 = vcmask 1047556
  %v554 = vsel %vm553, %v552, %v550
  %555 = vrot.lane.b32.xlu0 %v554, 96
  %v556 = vpop.permute.xlu0 %555
  %vm557 = vcmask 130048
  %s558 = scalar_lea.vmem %s1, 386
  %559 = vst.msk [vmem:[%s558] ss:$8 sm:$0xf] %vm557, %v556
  %s560 = scalar_lea.vmem %s1, 418
  %561 = vst.msk [vmem:[%s560] ss:$8 sm:$0xf0] %vm557, %v556
  %s562 = scalar_lea.vmem %s0, 32
  %v563 = vld [vmem:[%s562] ss:$8 sm:$0xf]
  %s564 = scalar_lea.vmem %s0, 1
  %v565 = vld [vmem:[%s564] ss:$8 sm:$0xf0]
  %vm566 = vcmask 1047556
  %v567 = vsel %vm566, %v565, %v563
  %568 = vrot.lane.b32.xlu0 %v567, 96
  %v569 = vpop.permute.xlu0 %568
  %vm570 = vcmask 130048
  %s571 = scalar_lea.vmem %s1, 34
  %572 = vst.msk [vmem:[%s571] ss:$8 sm:$0xf] %vm570, %v569
  %s573 = scalar_lea.vmem %s1, 66
  %574 = vst.msk [vmem:[%s573] ss:$8 sm:$0xf0] %vm570, %v569
  %s575 = scalar_lea.vmem %s0, 34
  %v576 = vld [vmem:[%s575] ss:$8 sm:$0xf]
  %s577 = scalar_lea.vmem %s0, 3
  %v578 = vld [vmem:[%s577] ss:$8 sm:$0xf0]
  %vm579 = vcmask 1047556
  %v580 = vsel %vm579, %v578, %v576
  %581 = vrot.lane.b32.xlu0 %v580, 96
  %v582 = vpop.permute.xlu0 %581
  %vm583 = vcmask 130048
  %s584 = scalar_lea.vmem %s1, 162
  %585 = vst.msk [vmem:[%s584] ss:$8 sm:$0xf] %vm583, %v582
  %s586 = scalar_lea.vmem %s1, 194
  %587 = vst.msk [vmem:[%s586] ss:$8 sm:$0xf0] %vm583, %v582
  %s588 = scalar_lea.vmem %s0, 36
  %v589 = vld [vmem:[%s588] ss:$8 sm:$0xf]
  %s590 = scalar_lea.vmem %s0, 5
  %v591 = vld [vmem:[%s590] ss:$8 sm:$0xf0]
  %vm592 = vcmask 1047556
  %v593 = vsel %vm592, %v591, %v589
  %594 = vrot.lane.b32.xlu0 %v593, 96
  %v595 = vpop.permute.xlu0 %594
  %vm596 = vcmask 130048
  %s597 = scalar_lea.vmem %s1, 290
  %598 = vst.msk [vmem:[%s597] ss:$8 sm:$0xf] %vm596, %v595
  %s599 = scalar_lea.vmem %s1, 322
  %600 = vst.msk [vmem:[%s599] ss:$8 sm:$0xf0] %vm596, %v595
  %s601 = scalar_lea.vmem %s0, 38
  %v602 = vld [vmem:[%s601] ss:$8 sm:$0xf]
  %s603 = scalar_lea.vmem %s0, 7
  %v604 = vld [vmem:[%s603] ss:$8 sm:$0xf0]
  %vm605 = vcmask 1047556
  %v606 = vsel %vm605, %v604, %v602
  %607 = vrot.lane.b32.xlu0 %v606, 96
  %v608 = vpop.permute.xlu0 %607
  %vm609 = vcmask 130048
  %s610 = scalar_lea.vmem %s1, 418
  %611 = vst.msk [vmem:[%s610] ss:$8 sm:$0xf] %vm609, %v608
  %s612 = scalar_lea.vmem %s1, 450
  %613 = vst.msk [vmem:[%s612] ss:$8 sm:$0xf0] %vm609, %v608
  %s614 = scalar_lea.vmem %s0, 64
  %v615 = vld [vmem:[%s614] ss:$8 sm:$0xf]
  %s616 = scalar_lea.vmem %s0, 33
  %v617 = vld [vmem:[%s616] ss:$8 sm:$0xf0]
  %vm618 = vcmask 1047556
  %v619 = vsel %vm618, %v617, %v615
  %620 = vrot.lane.b32.xlu0 %v619, 96
  %v621 = vpop.permute.xlu0 %620
  %vm622 = vcmask 130048
  %s623 = scalar_lea.vmem %s1, 514
  %624 = vst.msk [vmem:[%s623] ss:$8 sm:$0xf] %vm622, %v621
  %s625 = scalar_lea.vmem %s1, 546
  %626 = vst.msk [vmem:[%s625] ss:$8 sm:$0xf0] %vm622, %v621
  %s627 = scalar_lea.vmem %s0, 66
  %v628 = vld [vmem:[%s627] ss:$8 sm:$0xf]
  %s629 = scalar_lea.vmem %s0, 35
  %v630 = vld [vmem:[%s629] ss:$8 sm:$0xf0]
  %vm631 = vcmask 1047556
  %v632 = vsel %vm631, %v630, %v628
  %633 = vrot.lane.b32.xlu0 %v632, 96
  %v634 = vpop.permute.xlu0 %633
  %vm635 = vcmask 130048
  %s636 = scalar_lea.vmem %s1, 642
  %637 = vst.msk [vmem:[%s636] ss:$8 sm:$0xf] %vm635, %v634
  %s638 = scalar_lea.vmem %s1, 674
  %639 = vst.msk [vmem:[%s638] ss:$8 sm:$0xf0] %vm635, %v634
  %s640 = scalar_lea.vmem %s0, 68
  %v641 = vld [vmem:[%s640] ss:$8 sm:$0xf]
  %s642 = scalar_lea.vmem %s0, 37
  %v643 = vld [vmem:[%s642] ss:$8 sm:$0xf0]
  %vm644 = vcmask 1047556
  %v645 = vsel %vm644, %v643, %v641
  %646 = vrot.lane.b32.xlu0 %v645, 96
  %v647 = vpop.permute.xlu0 %646
  %vm648 = vcmask 130048
  %s649 = scalar_lea.vmem %s1, 770
  %650 = vst.msk [vmem:[%s649] ss:$8 sm:$0xf] %vm648, %v647
  %s651 = scalar_lea.vmem %s1, 802
  %652 = vst.msk [vmem:[%s651] ss:$8 sm:$0xf0] %vm648, %v647
  %s653 = scalar_lea.vmem %s0, 70
  %v654 = vld [vmem:[%s653] ss:$8 sm:$0xf]
  %s655 = scalar_lea.vmem %s0, 39
  %v656 = vld [vmem:[%s655] ss:$8 sm:$0xf0]
  %vm657 = vcmask 1047556
  %v658 = vsel %vm657, %v656, %v654
  %659 = vrot.lane.b32.xlu0 %v658, 96
  %v660 = vpop.permute.xlu0 %659
  %vm661 = vcmask 130048
  %s662 = scalar_lea.vmem %s1, 898
  %663 = vst.msk [vmem:[%s662] ss:$8 sm:$0xf] %vm661, %v660
  %s664 = scalar_lea.vmem %s1, 930
  %665 = vst.msk [vmem:[%s664] ss:$8 sm:$0xf0] %vm661, %v660
  %s666 = scalar_lea.vmem %s0, 96
  %v667 = vld [vmem:[%s666] ss:$8 sm:$0xf]
  %s668 = scalar_lea.vmem %s0, 65
  %v669 = vld [vmem:[%s668] ss:$8 sm:$0xf0]
  %vm670 = vcmask 1047556
  %v671 = vsel %vm670, %v669, %v667
  %672 = vrot.lane.b32.xlu0 %v671, 96
  %v673 = vpop.permute.xlu0 %672
  %vm674 = vcmask 130048
  %s675 = scalar_lea.vmem %s1, 546
  %676 = vst.msk [vmem:[%s675] ss:$8 sm:$0xf] %vm674, %v673
  %s677 = scalar_lea.vmem %s1, 578
  %678 = vst.msk [vmem:[%s677] ss:$8 sm:$0xf0] %vm674, %v673
  %s679 = scalar_lea.vmem %s0, 98
  %v680 = vld [vmem:[%s679] ss:$8 sm:$0xf]
  %s681 = scalar_lea.vmem %s0, 67
  %v682 = vld [vmem:[%s681] ss:$8 sm:$0xf0]
  %vm683 = vcmask 1047556
  %v684 = vsel %vm683, %v682, %v680
  %685 = vrot.lane.b32.xlu0 %v684, 96
  %v686 = vpop.permute.xlu0 %685
  %vm687 = vcmask 130048
  %s688 = scalar_lea.vmem %s1, 674
  %689 = vst.msk [vmem:[%s688] ss:$8 sm:$0xf] %vm687, %v686
  %s690 = scalar_lea.vmem %s1, 706
  %691 = vst.msk [vmem:[%s690] ss:$8 sm:$0xf0] %vm687, %v686
  %s692 = scalar_lea.vmem %s0, 100
  %v693 = vld [vmem:[%s692] ss:$8 sm:$0xf]
  %s694 = scalar_lea.vmem %s0, 69
  %v695 = vld [vmem:[%s694] ss:$8 sm:$0xf0]
  %vm696 = vcmask 1047556
  %v697 = vsel %vm696, %v695, %v693
  %698 = vrot.lane.b32.xlu0 %v697, 96
  %v699 = vpop.permute.xlu0 %698
  %vm700 = vcmask 130048
  %s701 = scalar_lea.vmem %s1, 802
  %702 = vst.msk [vmem:[%s701] ss:$8 sm:$0xf] %vm700, %v699
  %s703 = scalar_lea.vmem %s1, 834
  %704 = vst.msk [vmem:[%s703] ss:$8 sm:$0xf0] %vm700, %v699
  %s705 = scalar_lea.vmem %s0, 102
  %v706 = vld [vmem:[%s705] ss:$8 sm:$0xf]
  %s707 = scalar_lea.vmem %s0, 71
  %v708 = vld [vmem:[%s707] ss:$8 sm:$0xf0]
  %vm709 = vcmask 1047556
  %v710 = vsel %vm709, %v708, %v706
  %711 = vrot.lane.b32.xlu0 %v710, 96
  %v712 = vpop.permute.xlu0 %711
  %vm713 = vcmask 130048
  %s714 = scalar_lea.vmem %s1, 930
  %715 = vst.msk [vmem:[%s714] ss:$8 sm:$0xf] %vm713, %v712
  %s716 = scalar_lea.vmem %s1, 962
  %717 = vst.msk [vmem:[%s716] ss:$8 sm:$0xf0] %vm713, %v712
  %v718 = vld [vmem:[%s0] ss:$8 sm:$0xf]
  %s719 = scalar_lea.vmem %s0, 4294967265
  %v720 = vld [vmem:[%s719] ss:$8 sm:$0xf0]
  %vm721 = vcmask 1047556
  %v722 = vsel %vm721, %v720, %v718
  %723 = vrot.lane.b32.xlu0 %v722, 80
  %v724 = vpop.permute.xlu0 %723
  %vm725 = vcmask 130048
  %s726 = scalar_lea.vmem %s1, 3
  %727 = vst.msk [vmem:[%s726] ss:$8 sm:$0xf] %vm725, %v724
  %s728 = scalar_lea.vmem %s1, 35
  %729 = vst.msk [vmem:[%s728] ss:$8 sm:$0xf0] %vm725, %v724
  %s730 = scalar_lea.vmem %s0, 2
  %v731 = vld [vmem:[%s730] ss:$8 sm:$0xf]
  %s732 = scalar_lea.vmem %s0, 4294967267
  %v733 = vld [vmem:[%s732] ss:$8 sm:$0xf0]
  %vm734 = vcmask 1047556
  %v735 = vsel %vm734, %v733, %v731
  %736 = vrot.lane.b32.xlu0 %v735, 80
  %v737 = vpop.permute.xlu0 %736
  %vm738 = vcmask 130048
  %s739 = scalar_lea.vmem %s1, 131
  %740 = vst.msk [vmem:[%s739] ss:$8 sm:$0xf] %vm738, %v737
  %s741 = scalar_lea.vmem %s1, 163
  %742 = vst.msk [vmem:[%s741] ss:$8 sm:$0xf0] %vm738, %v737
  %s743 = scalar_lea.vmem %s0, 4
  %v744 = vld [vmem:[%s743] ss:$8 sm:$0xf]
  %s745 = scalar_lea.vmem %s0, 4294967269
  %v746 = vld [vmem:[%s745] ss:$8 sm:$0xf0]
  %vm747 = vcmask 1047556
  %v748 = vsel %vm747, %v746, %v744
  %749 = vrot.lane.b32.xlu0 %v748, 80
  %v750 = vpop.permute.xlu0 %749
  %vm751 = vcmask 130048
  %s752 = scalar_lea.vmem %s1, 259
  %753 = vst.msk [vmem:[%s752] ss:$8 sm:$0xf] %vm751, %v750
  %s754 = scalar_lea.vmem %s1, 291
  %755 = vst.msk [vmem:[%s754] ss:$8 sm:$0xf0] %vm751, %v750
  %s756 = scalar_lea.vmem %s0, 6
  %v757 = vld [vmem:[%s756] ss:$8 sm:$0xf]
  %s758 = scalar_lea.vmem %s0, 4294967271
  %v759 = vld [vmem:[%s758] ss:$8 sm:$0xf0]
  %vm760 = vcmask 1047556
  %v761 = vsel %vm760, %v759, %v757
  %762 = vrot.lane.b32.xlu0 %v761, 80
  %v763 = vpop.permute.xlu0 %762
  %vm764 = vcmask 130048
  %s765 = scalar_lea.vmem %s1, 387
  %766 = vst.msk [vmem:[%s765] ss:$8 sm:$0xf] %vm764, %v763
  %s767 = scalar_lea.vmem %s1, 419
  %768 = vst.msk [vmem:[%s767] ss:$8 sm:$0xf0] %vm764, %v763
  %s769 = scalar_lea.vmem %s0, 32
  %v770 = vld [vmem:[%s769] ss:$8 sm:$0xf]
  %s771 = scalar_lea.vmem %s0, 1
  %v772 = vld [vmem:[%s771] ss:$8 sm:$0xf0]
  %vm773 = vcmask 1047556
  %v774 = vsel %vm773, %v772, %v770
  %775 = vrot.lane.b32.xlu0 %v774, 80
  %v776 = vpop.permute.xlu0 %775
  %vm777 = vcmask 130048
  %s778 = scalar_lea.vmem %s1, 35
  %779 = vst.msk [vmem:[%s778] ss:$8 sm:$0xf] %vm777, %v776
  %s780 = scalar_lea.vmem %s1, 67
  %781 = vst.msk [vmem:[%s780] ss:$8 sm:$0xf0] %vm777, %v776
  %s782 = scalar_lea.vmem %s0, 34
  %v783 = vld [vmem:[%s782] ss:$8 sm:$0xf]
  %s784 = scalar_lea.vmem %s0, 3
  %v785 = vld [vmem:[%s784] ss:$8 sm:$0xf0]
  %vm786 = vcmask 1047556
  %v787 = vsel %vm786, %v785, %v783
  %788 = vrot.lane.b32.xlu0 %v787, 80
  %v789 = vpop.permute.xlu0 %788
  %vm790 = vcmask 130048
  %s791 = scalar_lea.vmem %s1, 163
  %792 = vst.msk [vmem:[%s791] ss:$8 sm:$0xf] %vm790, %v789
  %s793 = scalar_lea.vmem %s1, 195
  %794 = vst.msk [vmem:[%s793] ss:$8 sm:$0xf0] %vm790, %v789
  %s795 = scalar_lea.vmem %s0, 36
  %v796 = vld [vmem:[%s795] ss:$8 sm:$0xf]
  %s797 = scalar_lea.vmem %s0, 5
  %v798 = vld [vmem:[%s797] ss:$8 sm:$0xf0]
  %vm799 = vcmask 1047556
  %v800 = vsel %vm799, %v798, %v796
  %801 = vrot.lane.b32.xlu0 %v800, 80
  %v802 = vpop.permute.xlu0 %801
  %vm803 = vcmask 130048
  %s804 = scalar_lea.vmem %s1, 291
  %805 = vst.msk [vmem:[%s804] ss:$8 sm:$0xf] %vm803, %v802
  %s806 = scalar_lea.vmem %s1, 323
  %807 = vst.msk [vmem:[%s806] ss:$8 sm:$0xf0] %vm803, %v802
  %s808 = scalar_lea.vmem %s0, 38
  %v809 = vld [vmem:[%s808] ss:$8 sm:$0xf]
  %s810 = scalar_lea.vmem %s0, 7
  %v811 = vld [vmem:[%s810] ss:$8 sm:$0xf0]
  %vm812 = vcmask 1047556
  %v813 = vsel %vm812, %v811, %v809
  %814 = vrot.lane.b32.xlu0 %v813, 80
  %v815 = vpop.permute.xlu0 %814
  %vm816 = vcmask 130048
  %s817 = scalar_lea.vmem %s1, 419
  %818 = vst.msk [vmem:[%s817] ss:$8 sm:$0xf] %vm816, %v815
  %s819 = scalar_lea.vmem %s1, 451
  %820 = vst.msk [vmem:[%s819] ss:$8 sm:$0xf0] %vm816, %v815
  %s821 = scalar_lea.vmem %s0, 64
  %v822 = vld [vmem:[%s821] ss:$8 sm:$0xf]
  %s823 = scalar_lea.vmem %s0, 33
  %v824 = vld [vmem:[%s823] ss:$8 sm:$0xf0]
  %vm825 = vcmask 1047556
  %v826 = vsel %vm825, %v824, %v822
  %827 = vrot.lane.b32.xlu0 %v826, 80
  %v828 = vpop.permute.xlu0 %827
  %vm829 = vcmask 130048
  %s830 = scalar_lea.vmem %s1, 515
  %831 = vst.msk [vmem:[%s830] ss:$8 sm:$0xf] %vm829, %v828
  %s832 = scalar_lea.vmem %s1, 547
  %833 = vst.msk [vmem:[%s832] ss:$8 sm:$0xf0] %vm829, %v828
  %s834 = scalar_lea.vmem %s0, 66
  %v835 = vld [vmem:[%s834] ss:$8 sm:$0xf]
  %s836 = scalar_lea.vmem %s0, 35
  %v837 = vld [vmem:[%s836] ss:$8 sm:$0xf0]
  %vm838 = vcmask 1047556
  %v839 = vsel %vm838, %v837, %v835
  %840 = vrot.lane.b32.xlu0 %v839, 80
  %v841 = vpop.permute.xlu0 %840
  %vm842 = vcmask 130048
  %s843 = scalar_lea.vmem %s1, 643
  %844 = vst.msk [vmem:[%s843] ss:$8 sm:$0xf] %vm842, %v841
  %s845 = scalar_lea.vmem %s1, 675
  %846 = vst.msk [vmem:[%s845] ss:$8 sm:$0xf0] %vm842, %v841
  %s847 = scalar_lea.vmem %s0, 68
  %v848 = vld [vmem:[%s847] ss:$8 sm:$0xf]
  %s849 = scalar_lea.vmem %s0, 37
  %v850 = vld [vmem:[%s849] ss:$8 sm:$0xf0]
  %vm851 = vcmask 1047556
  %v852 = vsel %vm851, %v850, %v848
  %853 = vrot.lane.b32.xlu0 %v852, 80
  %v854 = vpop.permute.xlu0 %853
  %vm855 = vcmask 130048
  %s856 = scalar_lea.vmem %s1, 771
  %857 = vst.msk [vmem:[%s856] ss:$8 sm:$0xf] %vm855, %v854
  %s858 = scalar_lea.vmem %s1, 803
  %859 = vst.msk [vmem:[%s858] ss:$8 sm:$0xf0] %vm855, %v854
  %s860 = scalar_lea.vmem %s0, 70
  %v861 = vld [vmem:[%s860] ss:$8 sm:$0xf]
  %s862 = scalar_lea.vmem %s0, 39
  %v863 = vld [vmem:[%s862] ss:$8 sm:$0xf0]
  %vm864 = vcmask 1047556
  %v865 = vsel %vm864, %v863, %v861
  %866 = vrot.lane.b32.xlu0 %v865, 80
  %v867 = vpop.permute.xlu0 %866
  %vm868 = vcmask 130048
  %s869 = scalar_lea.vmem %s1, 899
  %870 = vst.msk [vmem:[%s869] ss:$8 sm:$0xf] %vm868, %v867
  %s871 = scalar_lea.vmem %s1, 931
  %872 = vst.msk [vmem:[%s871] ss:$8 sm:$0xf0] %vm868, %v867
  %s873 = scalar_lea.vmem %s0, 96
  %v874 = vld [vmem:[%s873] ss:$8 sm:$0xf]
  %s875 = scalar_lea.vmem %s0, 65
  %v876 = vld [vmem:[%s875] ss:$8 sm:$0xf0]
  %vm877 = vcmask 1047556
  %v878 = vsel %vm877, %v876, %v874
  %879 = vrot.lane.b32.xlu0 %v878, 80
  %v880 = vpop.permute.xlu0 %879
  %vm881 = vcmask 130048
  %s882 = scalar_lea.vmem %s1, 547
  %883 = vst.msk [vmem:[%s882] ss:$8 sm:$0xf] %vm881, %v880
  %s884 = scalar_lea.vmem %s1, 579
  %885 = vst.msk [vmem:[%s884] ss:$8 sm:$0xf0] %vm881, %v880
  %s886 = scalar_lea.vmem %s0, 98
  %v887 = vld [vmem:[%s886] ss:$8 sm:$0xf]
  %s888 = scalar_lea.vmem %s0, 67
  %v889 = vld [vmem:[%s888] ss:$8 sm:$0xf0]
  %vm890 = vcmask 1047556
  %v891 = vsel %vm890, %v889, %v887
  %892 = vrot.lane.b32.xlu0 %v891, 80
  %v893 = vpop.permute.xlu0 %892
  %vm894 = vcmask 130048
  %s895 = scalar_lea.vmem %s1, 675
  %896 = vst.msk [vmem:[%s895] ss:$8 sm:$0xf] %vm894, %v893
  %s897 = scalar_lea.vmem %s1, 707
  %898 = vst.msk [vmem:[%s897] ss:$8 sm:$0xf0] %vm894, %v893
  %s899 = scalar_lea.vmem %s0, 100
  %v900 = vld [vmem:[%s899] ss:$8 sm:$0xf]
  %s901 = scalar_lea.vmem %s0, 69
  %v902 = vld [vmem:[%s901] ss:$8 sm:$0xf0]
  %vm903 = vcmask 1047556
  %v904 = vsel %vm903, %v902, %v900
  %905 = vrot.lane.b32.xlu0 %v904, 80
  %v906 = vpop.permute.xlu0 %905
  %vm907 = vcmask 130048
  %s908 = scalar_lea.vmem %s1, 803
  %909 = vst.msk [vmem:[%s908] ss:$8 sm:$0xf] %vm907, %v906
  %s910 = scalar_lea.vmem %s1, 835
  %911 = vst.msk [vmem:[%s910] ss:$8 sm:$0xf0] %vm907, %v906
  %s912 = scalar_lea.vmem %s0, 102
  %v913 = vld [vmem:[%s912] ss:$8 sm:$0xf]
  %s914 = scalar_lea.vmem %s0, 71
  %v915 = vld [vmem:[%s914] ss:$8 sm:$0xf0]
  %vm916 = vcmask 1047556
  %v917 = vsel %vm916, %v915, %v913
  %918 = vrot.lane.b32.xlu0 %v917, 80
  %v919 = vpop.permute.xlu0 %918
  %vm920 = vcmask 130048
  %s921 = scalar_lea.vmem %s1, 931
  %922 = vst.msk [vmem:[%s921] ss:$8 sm:$0xf] %vm920, %v919
  %s923 = scalar_lea.vmem %s1, 963
  %924 = vst.msk [vmem:[%s923] ss:$8 sm:$0xf0] %vm920, %v919
  %v925 = vld [vmem:[%s0] ss:$8 sm:$0xf]
  %s926 = scalar_lea.vmem %s0, 4294967265
  %v927 = vld [vmem:[%s926] ss:$8 sm:$0xf0]
  %vm928 = vcmask 1047556
  %v929 = vsel %vm928, %v927, %v925
  %930 = vrot.lane.b32.xlu0 %v929, 64
  %v931 = vpop.permute.xlu0 %930
  %vm932 = vcmask 130048
  %s933 = scalar_lea.vmem %s1, 4
  %934 = vst.msk [vmem:[%s933] ss:$8 sm:$0xf] %vm932, %v931
  %s935 = scalar_lea.vmem %s1, 36
  %936 = vst.msk [vmem:[%s935] ss:$8 sm:$0xf0] %vm932, %v931
  %s937 = scalar_lea.vmem %s0, 2
  %v938 = vld [vmem:[%s937] ss:$8 sm:$0xf]
  %s939 = scalar_lea.vmem %s0, 4294967267
  %v940 = vld [vmem:[%s939] ss:$8 sm:$0xf0]
  %vm941 = vcmask 1047556
  %v942 = vsel %vm941, %v940, %v938
  %943 = vrot.lane.b32.xlu0 %v942, 64
  %v944 = vpop.permute.xlu0 %943
  %vm945 = vcmask 130048
  %s946 = scalar_lea.vmem %s1, 132
  %947 = vst.msk [vmem:[%s946] ss:$8 sm:$0xf] %vm945, %v944
  %s948 = scalar_lea.vmem %s1, 164
  %949 = vst.msk [vmem:[%s948] ss:$8 sm:$0xf0] %vm945, %v944
  %s950 = scalar_lea.vmem %s0, 4
  %v951 = vld [vmem:[%s950] ss:$8 sm:$0xf]
  %s952 = scalar_lea.vmem %s0, 4294967269
  %v953 = vld [vmem:[%s952] ss:$8 sm:$0xf0]
  %vm954 = vcmask 1047556
  %v955 = vsel %vm954, %v953, %v951
  %956 = vrot.lane.b32.xlu0 %v955, 64
  %v957 = vpop.permute.xlu0 %956
  %vm958 = vcmask 130048
  %s959 = scalar_lea.vmem %s1, 260
  %960 = vst.msk [vmem:[%s959] ss:$8 sm:$0xf] %vm958, %v957
  %s961 = scalar_lea.vmem %s1, 292
  %962 = vst.msk [vmem:[%s961] ss:$8 sm:$0xf0] %vm958, %v957
  %s963 = scalar_lea.vmem %s0, 6
  %v964 = vld [vmem:[%s963] ss:$8 sm:$0xf]
  %s965 = scalar_lea.vmem %s0, 4294967271
  %v966 = vld [vmem:[%s965] ss:$8 sm:$0xf0]
  %vm967 = vcmask 1047556
  %v968 = vsel %vm967, %v966, %v964
  %969 = vrot.lane.b32.xlu0 %v968, 64
  %v970 = vpop.permute.xlu0 %969
  %vm971 = vcmask 130048
  %s972 = scalar_lea.vmem %s1, 388
  %973 = vst.msk [vmem:[%s972] ss:$8 sm:$0xf] %vm971, %v970
  %s974 = scalar_lea.vmem %s1, 420
  %975 = vst.msk [vmem:[%s974] ss:$8 sm:$0xf0] %vm971, %v970
  %s976 = scalar_lea.vmem %s0, 32
  %v977 = vld [vmem:[%s976] ss:$8 sm:$0xf]
  %s978 = scalar_lea.vmem %s0, 1
  %v979 = vld [vmem:[%s978] ss:$8 sm:$0xf0]
  %vm980 = vcmask 1047556
  %v981 = vsel %vm980, %v979, %v977
  %982 = vrot.lane.b32.xlu0 %v981, 64
  %v983 = vpop.permute.xlu0 %982
  %vm984 = vcmask 130048
  %s985 = scalar_lea.vmem %s1, 36
  %986 = vst.msk [vmem:[%s985] ss:$8 sm:$0xf] %vm984, %v983
  %s987 = scalar_lea.vmem %s1, 68
  %988 = vst.msk [vmem:[%s987] ss:$8 sm:$0xf0] %vm984, %v983
  %s989 = scalar_lea.vmem %s0, 34
  %v990 = vld [vmem:[%s989] ss:$8 sm:$0xf]
  %s991 = scalar_lea.vmem %s0, 3
  %v992 = vld [vmem:[%s991] ss:$8 sm:$0xf0]
  %vm993 = vcmask 1047556
  %v994 = vsel %vm993, %v992, %v990
  %995 = vrot.lane.b32.xlu0 %v994, 64
  %v996 = vpop.permute.xlu0 %995
  %vm997 = vcmask 130048
  %s998 = scalar_lea.vmem %s1, 164
  %999 = vst.msk [vmem:[%s998] ss:$8 sm:$0xf] %vm997, %v996
  %s1000 = scalar_lea.vmem %s1, 196
  %1001 = vst.msk [vmem:[%s1000] ss:$8 sm:$0xf0] %vm997, %v996
  %s1002 = scalar_lea.vmem %s0, 36
  %v1003 = vld [vmem:[%s1002] ss:$8 sm:$0xf]
  %s1004 = scalar_lea.vmem %s0, 5
  %v1005 = vld [vmem:[%s1004] ss:$8 sm:$0xf0]
  %vm1006 = vcmask 1047556
  %v1007 = vsel %vm1006, %v1005, %v1003
  %1008 = vrot.lane.b32.xlu0 %v1007, 64
  %v1009 = vpop.permute.xlu0 %1008
  %vm1010 = vcmask 130048
  %s1011 = scalar_lea.vmem %s1, 292
  %1012 = vst.msk [vmem:[%s1011] ss:$8 sm:$0xf] %vm1010, %v1009
  %s1013 = scalar_lea.vmem %s1, 324
  %1014 = vst.msk [vmem:[%s1013] ss:$8 sm:$0xf0] %vm1010, %v1009
  %s1015 = scalar_lea.vmem %s0, 38
  %v1016 = vld [vmem:[%s1015] ss:$8 sm:$0xf]
  %s1017 = scalar_lea.vmem %s0, 7
  %v1018 = vld [vmem:[%s1017] ss:$8 sm:$0xf0]
  %vm1019 = vcmask 1047556
  %v1020 = vsel %vm1019, %v1018, %v1016
  %1021 = vrot.lane.b32.xlu0 %v1020, 64
  %v1022 = vpop.permute.xlu0 %1021
  %vm1023 = vcmask 130048
  %s1024 = scalar_lea.vmem %s1, 420
  %1025 = vst.msk [vmem:[%s1024] ss:$8 sm:$0xf] %vm1023, %v1022
  %s1026 = scalar_lea.vmem %s1, 452
  %1027 = vst.msk [vmem:[%s1026] ss:$8 sm:$0xf0] %vm1023, %v1022
  %s1028 = scalar_lea.vmem %s0, 64
  %v1029 = vld [vmem:[%s1028] ss:$8 sm:$0xf]
  %s1030 = scalar_lea.vmem %s0, 33
  %v1031 = vld [vmem:[%s1030] ss:$8 sm:$0xf0]
  %vm1032 = vcmask 1047556
  %v1033 = vsel %vm1032, %v1031, %v1029
  %1034 = vrot.lane.b32.xlu0 %v1033, 64
  %v1035 = vpop.permute.xlu0 %1034
  %vm1036 = vcmask 130048
  %s1037 = scalar_lea.vmem %s1, 516
  %1038 = vst.msk [vmem:[%s1037] ss:$8 sm:$0xf] %vm1036, %v1035
  %s1039 = scalar_lea.vmem %s1, 548
  %1040 = vst.msk [vmem:[%s1039] ss:$8 sm:$0xf0] %vm1036, %v1035
  %s1041 = scalar_lea.vmem %s0, 66
  %v1042 = vld [vmem:[%s1041] ss:$8 sm:$0xf]
  %s1043 = scalar_lea.vmem %s0, 35
  %v1044 = vld [vmem:[%s1043] ss:$8 sm:$0xf0]
  %vm1045 = vcmask 1047556
  %v1046 = vsel %vm1045, %v1044, %v1042
  %1047 = vrot.lane.b32.xlu0 %v1046, 64
  %v1048 = vpop.permute.xlu0 %1047
  %vm1049 = vcmask 130048
  %s1050 = scalar_lea.vmem %s1, 644
  %1051 = vst.msk [vmem:[%s1050] ss:$8 sm:$0xf] %vm1049, %v1048
  %s1052 = scalar_lea.vmem %s1, 676
  %1053 = vst.msk [vmem:[%s1052] ss:$8 sm:$0xf0] %vm1049, %v1048
  %s1054 = scalar_lea.vmem %s0, 68
  %v1055 = vld [vmem:[%s1054] ss:$8 sm:$0xf]
  %s1056 = scalar_lea.vmem %s0, 37
  %v1057 = vld [vmem:[%s1056] ss:$8 sm:$0xf0]
  %vm1058 = vcmask 1047556
  %v1059 = vsel %vm1058, %v1057, %v1055
  %1060 = vrot.lane.b32.xlu0 %v1059, 64
  %v1061 = vpop.permute.xlu0 %1060
  %vm1062 = vcmask 130048
  %s1063 = scalar_lea.vmem %s1, 772
  %1064 = vst.msk [vmem:[%s1063] ss:$8 sm:$0xf] %vm1062, %v1061
  %s1065 = scalar_lea.vmem %s1, 804
  %1066 = vst.msk [vmem:[%s1065] ss:$8 sm:$0xf0] %vm1062, %v1061
  %s1067 = scalar_lea.vmem %s0, 70
  %v1068 = vld [vmem:[%s1067] ss:$8 sm:$0xf]
  %s1069 = scalar_lea.vmem %s0, 39
  %v1070 = vld [vmem:[%s1069] ss:$8 sm:$0xf0]
  %vm1071 = vcmask 1047556
  %v1072 = vsel %vm1071, %v1070, %v1068
  %1073 = vrot.lane.b32.xlu0 %v1072, 64
  %v1074 = vpop.permute.xlu0 %1073
  %vm1075 = vcmask 130048
  %s1076 = scalar_lea.vmem %s1, 900
  %1077 = vst.msk [vmem:[%s1076] ss:$8 sm:$0xf] %vm1075, %v1074
  %s1078 = scalar_lea.vmem %s1, 932
  %1079 = vst.msk [vmem:[%s1078] ss:$8 sm:$0xf0] %vm1075, %v1074
  %s1080 = scalar_lea.vmem %s0, 96
  %v1081 = vld [vmem:[%s1080] ss:$8 sm:$0xf]
  %s1082 = scalar_lea.vmem %s0, 65
  %v1083 = vld [vmem:[%s1082] ss:$8 sm:$0xf0]
  %vm1084 = vcmask 1047556
  %v1085 = vsel %vm1084, %v1083, %v1081
  %1086 = vrot.lane.b32.xlu0 %v1085, 64
  %v1087 = vpop.permute.xlu0 %1086
  %vm1088 = vcmask 130048
  %s1089 = scalar_lea.vmem %s1, 548
  %1090 = vst.msk [vmem:[%s1089] ss:$8 sm:$0xf] %vm1088, %v1087
  %s1091 = scalar_lea.vmem %s1, 580
  %1092 = vst.msk [vmem:[%s1091] ss:$8 sm:$0xf0] %vm1088, %v1087
  %s1093 = scalar_lea.vmem %s0, 98
  %v1094 = vld [vmem:[%s1093] ss:$8 sm:$0xf]
  %s1095 = scalar_lea.vmem %s0, 67
  %v1096 = vld [vmem:[%s1095] ss:$8 sm:$0xf0]
  %vm1097 = vcmask 1047556
  %v1098 = vsel %vm1097, %v1096, %v1094
  %1099 = vrot.lane.b32.xlu0 %v1098, 64
  %v1100 = vpop.permute.xlu0 %1099
  %vm1101 = vcmask 130048
  %s1102 = scalar_lea.vmem %s1, 676
  %1103 = vst.msk [vmem:[%s1102] ss:$8 sm:$0xf] %vm1101, %v1100
  %s1104 = scalar_lea.vmem %s1, 708
  %1105 = vst.msk [vmem:[%s1104] ss:$8 sm:$0xf0] %vm1101, %v1100
  %s1106 = scalar_lea.vmem %s0, 100
  %v1107 = vld [vmem:[%s1106] ss:$8 sm:$0xf]
  %s1108 = scalar_lea.vmem %s0, 69
  %v1109 = vld [vmem:[%s1108] ss:$8 sm:$0xf0]
  %vm1110 = vcmask 1047556
  %v1111 = vsel %vm1110, %v1109, %v1107
  %1112 = vrot.lane.b32.xlu0 %v1111, 64
  %v1113 = vpop.permute.xlu0 %1112
  %vm1114 = vcmask 130048
  %s1115 = scalar_lea.vmem %s1, 804
  %1116 = vst.msk [vmem:[%s1115] ss:$8 sm:$0xf] %vm1114, %v1113
  %s1117 = scalar_lea.vmem %s1, 836
  %1118 = vst.msk [vmem:[%s1117] ss:$8 sm:$0xf0] %vm1114, %v1113
  %s1119 = scalar_lea.vmem %s0, 102
  %v1120 = vld [vmem:[%s1119] ss:$8 sm:$0xf]
  %s1121 = scalar_lea.vmem %s0, 71
  %v1122 = vld [vmem:[%s1121] ss:$8 sm:$0xf0]
  %vm1123 = vcmask 1047556
  %v1124 = vsel %vm1123, %v1122, %v1120
  %1125 = vrot.lane.b32.xlu0 %v1124, 64
  %v1126 = vpop.permute.xlu0 %1125
  %vm1127 = vcmask 130048
  %s1128 = scalar_lea.vmem %s1, 932
  %1129 = vst.msk [vmem:[%s1128] ss:$8 sm:$0xf] %vm1127, %v1126
  %s1130 = scalar_lea.vmem %s1, 964
  %1131 = vst.msk [vmem:[%s1130] ss:$8 sm:$0xf0] %vm1127, %v1126
  %v1132 = vld [vmem:[%s0] ss:$8 sm:$0xf]
  %s1133 = scalar_lea.vmem %s0, 4294967265
  %v1134 = vld [vmem:[%s1133] ss:$8 sm:$0xf0]
  %vm1135 = vcmask 1047556
  %v1136 = vsel %vm1135, %v1134, %v1132
  %1137 = vrot.lane.b32.xlu0 %v1136, 48
  %v1138 = vpop.permute.xlu0 %1137
  %vm1139 = vcmask 130048
  %s1140 = scalar_lea.vmem %s1, 5
  %1141 = vst.msk [vmem:[%s1140] ss:$8 sm:$0xf] %vm1139, %v1138
  %s1142 = scalar_lea.vmem %s1, 37
  %1143 = vst.msk [vmem:[%s1142] ss:$8 sm:$0xf0] %vm1139, %v1138
  %s1144 = scalar_lea.vmem %s0, 2
  %v1145 = vld [vmem:[%s1144] ss:$8 sm:$0xf]
  %s1146 = scalar_lea.vmem %s0, 4294967267
  %v1147 = vld [vmem:[%s1146] ss:$8 sm:$0xf0]
  %vm1148 = vcmask 1047556
  %v1149 = vsel %vm1148, %v1147, %v1145
  %1150 = vrot.lane.b32.xlu0 %v1149, 48
  %v1151 = vpop.permute.xlu0 %1150
  %vm1152 = vcmask 130048
  %s1153 = scalar_lea.vmem %s1, 133
  %1154 = vst.msk [vmem:[%s1153] ss:$8 sm:$0xf] %vm1152, %v1151
  %s1155 = scalar_lea.vmem %s1, 165
  %1156 = vst.msk [vmem:[%s1155] ss:$8 sm:$0xf0] %vm1152, %v1151
  %s1157 = scalar_lea.vmem %s0, 4
  %v1158 = vld [vmem:[%s1157] ss:$8 sm:$0xf]
  %s1159 = scalar_lea.vmem %s0, 4294967269
  %v1160 = vld [vmem:[%s1159] ss:$8 sm:$0xf0]
  %vm1161 = vcmask 1047556
  %v1162 = vsel %vm1161, %v1160, %v1158
  %1163 = vrot.lane.b32.xlu0 %v1162, 48
  %v1164 = vpop.permute.xlu0 %1163
  %vm1165 = vcmask 130048
  %s1166 = scalar_lea.vmem %s1, 261
  %1167 = vst.msk [vmem:[%s1166] ss:$8 sm:$0xf] %vm1165, %v1164
  %s1168 = scalar_lea.vmem %s1, 293
  %1169 = vst.msk [vmem:[%s1168] ss:$8 sm:$0xf0] %vm1165, %v1164
  %s1170 = scalar_lea.vmem %s0, 6
  %v1171 = vld [vmem:[%s1170] ss:$8 sm:$0xf]
  %s1172 = scalar_lea.vmem %s0, 4294967271
  %v1173 = vld [vmem:[%s1172] ss:$8 sm:$0xf0]
  %vm1174 = vcmask 1047556
  %v1175 = vsel %vm1174, %v1173, %v1171
  %1176 = vrot.lane.b32.xlu0 %v1175, 48
  %v1177 = vpop.permute.xlu0 %1176
  %vm1178 = vcmask 130048
  %s1179 = scalar_lea.vmem %s1, 389
  %1180 = vst.msk [vmem:[%s1179] ss:$8 sm:$0xf] %vm1178, %v1177
  %s1181 = scalar_lea.vmem %s1, 421
  %1182 = vst.msk [vmem:[%s1181] ss:$8 sm:$0xf0] %vm1178, %v1177
  %s1183 = scalar_lea.vmem %s0, 32
  %v1184 = vld [vmem:[%s1183] ss:$8 sm:$0xf]
  %s1185 = scalar_lea.vmem %s0, 1
  %v1186 = vld [vmem:[%s1185] ss:$8 sm:$0xf0]
  %vm1187 = vcmask 1047556
  %v1188 = vsel %vm1187, %v1186, %v1184
  %1189 = vrot.lane.b32.xlu0 %v1188, 48
  %v1190 = vpop.permute.xlu0 %1189
  %vm1191 = vcmask 130048
  %s1192 = scalar_lea.vmem %s1, 37
  %1193 = vst.msk [vmem:[%s1192] ss:$8 sm:$0xf] %vm1191, %v1190
  %s1194 = scalar_lea.vmem %s1, 69
  %1195 = vst.msk [vmem:[%s1194] ss:$8 sm:$0xf0] %vm1191, %v1190
  %s1196 = scalar_lea.vmem %s0, 34
  %v1197 = vld [vmem:[%s1196] ss:$8 sm:$0xf]
  %s1198 = scalar_lea.vmem %s0, 3
  %v1199 = vld [vmem:[%s1198] ss:$8 sm:$0xf0]
  %vm1200 = vcmask 1047556
  %v1201 = vsel %vm1200, %v1199, %v1197
  %1202 = vrot.lane.b32.xlu0 %v1201, 48
  %v1203 = vpop.permute.xlu0 %1202
  %vm1204 = vcmask 130048
  %s1205 = scalar_lea.vmem %s1, 165
  %1206 = vst.msk [vmem:[%s1205] ss:$8 sm:$0xf] %vm1204, %v1203
  %s1207 = scalar_lea.vmem %s1, 197
  %1208 = vst.msk [vmem:[%s1207] ss:$8 sm:$0xf0] %vm1204, %v1203
  %s1209 = scalar_lea.vmem %s0, 36
  %v1210 = vld [vmem:[%s1209] ss:$8 sm:$0xf]
  %s1211 = scalar_lea.vmem %s0, 5
  %v1212 = vld [vmem:[%s1211] ss:$8 sm:$0xf0]
  %vm1213 = vcmask 1047556
  %v1214 = vsel %vm1213, %v1212, %v1210
  %1215 = vrot.lane.b32.xlu0 %v1214, 48
  %v1216 = vpop.permute.xlu0 %1215
  %vm1217 = vcmask 130048
  %s1218 = scalar_lea.vmem %s1, 293
  %1219 = vst.msk [vmem:[%s1218] ss:$8 sm:$0xf] %vm1217, %v1216
  %s1220 = scalar_lea.vmem %s1, 325
  %1221 = vst.msk [vmem:[%s1220] ss:$8 sm:$0xf0] %vm1217, %v1216
  %s1222 = scalar_lea.vmem %s0, 38
  %v1223 = vld [vmem:[%s1222] ss:$8 sm:$0xf]
  %s1224 = scalar_lea.vmem %s0, 7
  %v1225 = vld [vmem:[%s1224] ss:$8 sm:$0xf0]
  %vm1226 = vcmask 1047556
  %v1227 = vsel %vm1226, %v1225, %v1223
  %1228 = vrot.lane.b32.xlu0 %v1227, 48
  %v1229 = vpop.permute.xlu0 %1228
  %vm1230 = vcmask 130048
  %s1231 = scalar_lea.vmem %s1, 421
  %1232 = vst.msk [vmem:[%s1231] ss:$8 sm:$0xf] %vm1230, %v1229
  %s1233 = scalar_lea.vmem %s1, 453
  %1234 = vst.msk [vmem:[%s1233] ss:$8 sm:$0xf0] %vm1230, %v1229
  %s1235 = scalar_lea.vmem %s0, 64
  %v1236 = vld [vmem:[%s1235] ss:$8 sm:$0xf]
  %s1237 = scalar_lea.vmem %s0, 33
  %v1238 = vld [vmem:[%s1237] ss:$8 sm:$0xf0]
  %vm1239 = vcmask 1047556
  %v1240 = vsel %vm1239, %v1238, %v1236
  %1241 = vrot.lane.b32.xlu0 %v1240, 48
  %v1242 = vpop.permute.xlu0 %1241
  %vm1243 = vcmask 130048
  %s1244 = scalar_lea.vmem %s1, 517
  %1245 = vst.msk [vmem:[%s1244] ss:$8 sm:$0xf] %vm1243, %v1242
  %s1246 = scalar_lea.vmem %s1, 549
  %1247 = vst.msk [vmem:[%s1246] ss:$8 sm:$0xf0] %vm1243, %v1242
  %s1248 = scalar_lea.vmem %s0, 66
  %v1249 = vld [vmem:[%s1248] ss:$8 sm:$0xf]
  %s1250 = scalar_lea.vmem %s0, 35
  %v1251 = vld [vmem:[%s1250] ss:$8 sm:$0xf0]
  %vm1252 = vcmask 1047556
  %v1253 = vsel %vm1252, %v1251, %v1249
  %1254 = vrot.lane.b32.xlu0 %v1253, 48
  %v1255 = vpop.permute.xlu0 %1254
  %vm1256 = vcmask 130048
  %s1257 = scalar_lea.vmem %s1, 645
  %1258 = vst.msk [vmem:[%s1257] ss:$8 sm:$0xf] %vm1256, %v1255
  %s1259 = scalar_lea.vmem %s1, 677
  %1260 = vst.msk [vmem:[%s1259] ss:$8 sm:$0xf0] %vm1256, %v1255
  %s1261 = scalar_lea.vmem %s0, 68
  %v1262 = vld [vmem:[%s1261] ss:$8 sm:$0xf]
  %s1263 = scalar_lea.vmem %s0, 37
  %v1264 = vld [vmem:[%s1263] ss:$8 sm:$0xf0]
  %vm1265 = vcmask 1047556
  %v1266 = vsel %vm1265, %v1264, %v1262
  %1267 = vrot.lane.b32.xlu0 %v1266, 48
  %v1268 = vpop.permute.xlu0 %1267
  %vm1269 = vcmask 130048
  %s1270 = scalar_lea.vmem %s1, 773
  %1271 = vst.msk [vmem:[%s1270] ss:$8 sm:$0xf] %vm1269, %v1268
  %s1272 = scalar_lea.vmem %s1, 805
  %1273 = vst.msk [vmem:[%s1272] ss:$8 sm:$0xf0] %vm1269, %v1268
  %s1274 = scalar_lea.vmem %s0, 70
  %v1275 = vld [vmem:[%s1274] ss:$8 sm:$0xf]
  %s1276 = scalar_lea.vmem %s0, 39
  %v1277 = vld [vmem:[%s1276] ss:$8 sm:$0xf0]
  %vm1278 = vcmask 1047556
  %v1279 = vsel %vm1278, %v1277, %v1275
  %1280 = vrot.lane.b32.xlu0 %v1279, 48
  %v1281 = vpop.permute.xlu0 %1280
  %vm1282 = vcmask 130048
  %s1283 = scalar_lea.vmem %s1, 901
  %1284 = vst.msk [vmem:[%s1283] ss:$8 sm:$0xf] %vm1282, %v1281
  %s1285 = scalar_lea.vmem %s1, 933
  %1286 = vst.msk [vmem:[%s1285] ss:$8 sm:$0xf0] %vm1282, %v1281
  %s1287 = scalar_lea.vmem %s0, 96
  %v1288 = vld [vmem:[%s1287] ss:$8 sm:$0xf]
  %s1289 = scalar_lea.vmem %s0, 65
  %v1290 = vld [vmem:[%s1289] ss:$8 sm:$0xf0]
  %vm1291 = vcmask 1047556
  %v1292 = vsel %vm1291, %v1290, %v1288
  %1293 = vrot.lane.b32.xlu0 %v1292, 48
  %v1294 = vpop.permute.xlu0 %1293
  %vm1295 = vcmask 130048
  %s1296 = scalar_lea.vmem %s1, 549
  %1297 = vst.msk [vmem:[%s1296] ss:$8 sm:$0xf] %vm1295, %v1294
  %s1298 = scalar_lea.vmem %s1, 581
  %1299 = vst.msk [vmem:[%s1298] ss:$8 sm:$0xf0] %vm1295, %v1294
  %s1300 = scalar_lea.vmem %s0, 98
  %v1301 = vld [vmem:[%s1300] ss:$8 sm:$0xf]
  %s1302 = scalar_lea.vmem %s0, 67
  %v1303 = vld [vmem:[%s1302] ss:$8 sm:$0xf0]
  %vm1304 = vcmask 1047556
  %v1305 = vsel %vm1304, %v1303, %v1301
  %1306 = vrot.lane.b32.xlu0 %v1305, 48
  %v1307 = vpop.permute.xlu0 %1306
  %vm1308 = vcmask 130048
  %s1309 = scalar_lea.vmem %s1, 677
  %1310 = vst.msk [vmem:[%s1309] ss:$8 sm:$0xf] %vm1308, %v1307
  %s1311 = scalar_lea.vmem %s1, 709
  %1312 = vst.msk [vmem:[%s1311] ss:$8 sm:$0xf0] %vm1308, %v1307
  %s1313 = scalar_lea.vmem %s0, 100
  %v1314 = vld [vmem:[%s1313] ss:$8 sm:$0xf]
  %s1315 = scalar_lea.vmem %s0, 69
  %v1316 = vld [vmem:[%s1315] ss:$8 sm:$0xf0]
  %vm1317 = vcmask 1047556
  %v1318 = vsel %vm1317, %v1316, %v1314
  %1319 = vrot.lane.b32.xlu0 %v1318, 48
  %v1320 = vpop.permute.xlu0 %1319
  %vm1321 = vcmask 130048
  %s1322 = scalar_lea.vmem %s1, 805
  %1323 = vst.msk [vmem:[%s1322] ss:$8 sm:$0xf] %vm1321, %v1320
  %s1324 = scalar_lea.vmem %s1, 837
  %1325 = vst.msk [vmem:[%s1324] ss:$8 sm:$0xf0] %vm1321, %v1320
  %s1326 = scalar_lea.vmem %s0, 102
  %v1327 = vld [vmem:[%s1326] ss:$8 sm:$0xf]
  %s1328 = scalar_lea.vmem %s0, 71
  %v1329 = vld [vmem:[%s1328] ss:$8 sm:$0xf0]
  %vm1330 = vcmask 1047556
  %v1331 = vsel %vm1330, %v1329, %v1327
  %1332 = vrot.lane.b32.xlu0 %v1331, 48
  %v1333 = vpop.permute.xlu0 %1332
  %vm1334 = vcmask 130048
  %s1335 = scalar_lea.vmem %s1, 933
  %1336 = vst.msk [vmem:[%s1335] ss:$8 sm:$0xf] %vm1334, %v1333
  %s1337 = scalar_lea.vmem %s1, 965
  %1338 = vst.msk [vmem:[%s1337] ss:$8 sm:$0xf0] %vm1334, %v1333
  %v1339 = vld [vmem:[%s0] ss:$8 sm:$0xf]
  %s1340 = scalar_lea.vmem %s0, 4294967265
  %v1341 = vld [vmem:[%s1340] ss:$8 sm:$0xf0]
  %vm1342 = vcmask 1047556
  %v1343 = vsel %vm1342, %v1341, %v1339
  %1344 = vrot.lane.b32.xlu0 %v1343, 32
  %v1345 = vpop.permute.xlu0 %1344
  %vm1346 = vcmask 130048
  %s1347 = scalar_lea.vmem %s1, 6
  %1348 = vst.msk [vmem:[%s1347] ss:$8 sm:$0xf] %vm1346, %v1345
  %s1349 = scalar_lea.vmem %s1, 38
  %1350 = vst.msk [vmem:[%s1349] ss:$8 sm:$0xf0] %vm1346, %v1345
  %s1351 = scalar_lea.vmem %s0, 2
  %v1352 = vld [vmem:[%s1351] ss:$8 sm:$0xf]
  %s1353 = scalar_lea.vmem %s0, 4294967267
  %v1354 = vld [vmem:[%s1353] ss:$8 sm:$0xf0]
  %vm1355 = vcmask 1047556
  %v1356 = vsel %vm1355, %v1354, %v1352
  %1357 = vrot.lane.b32.xlu0 %v1356, 32
  %v1358 = vpop.permute.xlu0 %1357
  %vm1359 = vcmask 130048
  %s1360 = scalar_lea.vmem %s1, 134
  %1361 = vst.msk [vmem:[%s1360] ss:$8 sm:$0xf] %vm1359, %v1358
  %s1362 = scalar_lea.vmem %s1, 166
  %1363 = vst.msk [vmem:[%s1362] ss:$8 sm:$0xf0] %vm1359, %v1358
  %s1364 = scalar_lea.vmem %s0, 4
  %v1365 = vld [vmem:[%s1364] ss:$8 sm:$0xf]
  %s1366 = scalar_lea.vmem %s0, 4294967269
  %v1367 = vld [vmem:[%s1366] ss:$8 sm:$0xf0]
  %vm1368 = vcmask 1047556
  %v1369 = vsel %vm1368, %v1367, %v1365
  %1370 = vrot.lane.b32.xlu0 %v1369, 32
  %v1371 = vpop.permute.xlu0 %1370
  %vm1372 = vcmask 130048
  %s1373 = scalar_lea.vmem %s1, 262
  %1374 = vst.msk [vmem:[%s1373] ss:$8 sm:$0xf] %vm1372, %v1371
  %s1375 = scalar_lea.vmem %s1, 294
  %1376 = vst.msk [vmem:[%s1375] ss:$8 sm:$0xf0] %vm1372, %v1371
  %s1377 = scalar_lea.vmem %s0, 6
  %v1378 = vld [vmem:[%s1377] ss:$8 sm:$0xf]
  %s1379 = scalar_lea.vmem %s0, 4294967271
  %v1380 = vld [vmem:[%s1379] ss:$8 sm:$0xf0]
  %vm1381 = vcmask 1047556
  %v1382 = vsel %vm1381, %v1380, %v1378
  %1383 = vrot.lane.b32.xlu0 %v1382, 32
  %v1384 = vpop.permute.xlu0 %1383
  %vm1385 = vcmask 130048
  %s1386 = scalar_lea.vmem %s1, 390
  %1387 = vst.msk [vmem:[%s1386] ss:$8 sm:$0xf] %vm1385, %v1384
  %s1388 = scalar_lea.vmem %s1, 422
  %1389 = vst.msk [vmem:[%s1388] ss:$8 sm:$0xf0] %vm1385, %v1384
  %s1390 = scalar_lea.vmem %s0, 32
  %v1391 = vld [vmem:[%s1390] ss:$8 sm:$0xf]
  %s1392 = scalar_lea.vmem %s0, 1
  %v1393 = vld [vmem:[%s1392] ss:$8 sm:$0xf0]
  %vm1394 = vcmask 1047556
  %v1395 = vsel %vm1394, %v1393, %v1391
  %1396 = vrot.lane.b32.xlu0 %v1395, 32
  %v1397 = vpop.permute.xlu0 %1396
  %vm1398 = vcmask 130048
  %s1399 = scalar_lea.vmem %s1, 38
  %1400 = vst.msk [vmem:[%s1399] ss:$8 sm:$0xf] %vm1398, %v1397
  %s1401 = scalar_lea.vmem %s1, 70
  %1402 = vst.msk [vmem:[%s1401] ss:$8 sm:$0xf0] %vm1398, %v1397
  %s1403 = scalar_lea.vmem %s0, 34
  %v1404 = vld [vmem:[%s1403] ss:$8 sm:$0xf]
  %s1405 = scalar_lea.vmem %s0, 3
  %v1406 = vld [vmem:[%s1405] ss:$8 sm:$0xf0]
  %vm1407 = vcmask 1047556
  %v1408 = vsel %vm1407, %v1406, %v1404
  %1409 = vrot.lane.b32.xlu0 %v1408, 32
  %v1410 = vpop.permute.xlu0 %1409
  %vm1411 = vcmask 130048
  %s1412 = scalar_lea.vmem %s1, 166
  %1413 = vst.msk [vmem:[%s1412] ss:$8 sm:$0xf] %vm1411, %v1410
  %s1414 = scalar_lea.vmem %s1, 198
  %1415 = vst.msk [vmem:[%s1414] ss:$8 sm:$0xf0] %vm1411, %v1410
  %s1416 = scalar_lea.vmem %s0, 36
  %v1417 = vld [vmem:[%s1416] ss:$8 sm:$0xf]
  %s1418 = scalar_lea.vmem %s0, 5
  %v1419 = vld [vmem:[%s1418] ss:$8 sm:$0xf0]
  %vm1420 = vcmask 1047556
  %v1421 = vsel %vm1420, %v1419, %v1417
  %1422 = vrot.lane.b32.xlu0 %v1421, 32
  %v1423 = vpop.permute.xlu0 %1422
  %vm1424 = vcmask 130048
  %s1425 = scalar_lea.vmem %s1, 294
  %1426 = vst.msk [vmem:[%s1425] ss:$8 sm:$0xf] %vm1424, %v1423
  %s1427 = scalar_lea.vmem %s1, 326
  %1428 = vst.msk [vmem:[%s1427] ss:$8 sm:$0xf0] %vm1424, %v1423
  %s1429 = scalar_lea.vmem %s0, 38
  %v1430 = vld [vmem:[%s1429] ss:$8 sm:$0xf]
  %s1431 = scalar_lea.vmem %s0, 7
  %v1432 = vld [vmem:[%s1431] ss:$8 sm:$0xf0]
  %vm1433 = vcmask 1047556
  %v1434 = vsel %vm1433, %v1432, %v1430
  %1435 = vrot.lane.b32.xlu0 %v1434, 32
  %v1436 = vpop.permute.xlu0 %1435
  %vm1437 = vcmask 130048
  %s1438 = scalar_lea.vmem %s1, 422
  %1439 = vst.msk [vmem:[%s1438] ss:$8 sm:$0xf] %vm1437, %v1436
  %s1440 = scalar_lea.vmem %s1, 454
  %1441 = vst.msk [vmem:[%s1440] ss:$8 sm:$0xf0] %vm1437, %v1436
  %s1442 = scalar_lea.vmem %s0, 64
  %v1443 = vld [vmem:[%s1442] ss:$8 sm:$0xf]
  %s1444 = scalar_lea.vmem %s0, 33
  %v1445 = vld [vmem:[%s1444] ss:$8 sm:$0xf0]
  %vm1446 = vcmask 1047556
  %v1447 = vsel %vm1446, %v1445, %v1443
  %1448 = vrot.lane.b32.xlu0 %v1447, 32
  %v1449 = vpop.permute.xlu0 %1448
  %vm1450 = vcmask 130048
  %s1451 = scalar_lea.vmem %s1, 518
  %1452 = vst.msk [vmem:[%s1451] ss:$8 sm:$0xf] %vm1450, %v1449
  %s1453 = scalar_lea.vmem %s1, 550
  %1454 = vst.msk [vmem:[%s1453] ss:$8 sm:$0xf0] %vm1450, %v1449
  %s1455 = scalar_lea.vmem %s0, 66
  %v1456 = vld [vmem:[%s1455] ss:$8 sm:$0xf]
  %s1457 = scalar_lea.vmem %s0, 35
  %v1458 = vld [vmem:[%s1457] ss:$8 sm:$0xf0]
  %vm1459 = vcmask 1047556
  %v1460 = vsel %vm1459, %v1458, %v1456
  %1461 = vrot.lane.b32.xlu0 %v1460, 32
  %v1462 = vpop.permute.xlu0 %1461
  %vm1463 = vcmask 130048
  %s1464 = scalar_lea.vmem %s1, 646
  %1465 = vst.msk [vmem:[%s1464] ss:$8 sm:$0xf] %vm1463, %v1462
  %s1466 = scalar_lea.vmem %s1, 678
  %1467 = vst.msk [vmem:[%s1466] ss:$8 sm:$0xf0] %vm1463, %v1462
  %s1468 = scalar_lea.vmem %s0, 68
  %v1469 = vld [vmem:[%s1468] ss:$8 sm:$0xf]
  %s1470 = scalar_lea.vmem %s0, 37
  %v1471 = vld [vmem:[%s1470] ss:$8 sm:$0xf0]
  %vm1472 = vcmask 1047556
  %v1473 = vsel %vm1472, %v1471, %v1469
  %1474 = vrot.lane.b32.xlu0 %v1473, 32
  %v1475 = vpop.permute.xlu0 %1474
  %vm1476 = vcmask 130048
  %s1477 = scalar_lea.vmem %s1, 774
  %1478 = vst.msk [vmem:[%s1477] ss:$8 sm:$0xf] %vm1476, %v1475
  %s1479 = scalar_lea.vmem %s1, 806
  %1480 = vst.msk [vmem:[%s1479] ss:$8 sm:$0xf0] %vm1476, %v1475
  %s1481 = scalar_lea.vmem %s0, 70
  %v1482 = vld [vmem:[%s1481] ss:$8 sm:$0xf]
  %s1483 = scalar_lea.vmem %s0, 39
  %v1484 = vld [vmem:[%s1483] ss:$8 sm:$0xf0]
  %vm1485 = vcmask 1047556
  %v1486 = vsel %vm1485, %v1484, %v1482
  %1487 = vrot.lane.b32.xlu0 %v1486, 32
  %v1488 = vpop.permute.xlu0 %1487
  %vm1489 = vcmask 130048
  %s1490 = scalar_lea.vmem %s1, 902
  %1491 = vst.msk [vmem:[%s1490] ss:$8 sm:$0xf] %vm1489, %v1488
  %s1492 = scalar_lea.vmem %s1, 934
  %1493 = vst.msk [vmem:[%s1492] ss:$8 sm:$0xf0] %vm1489, %v1488
  %s1494 = scalar_lea.vmem %s0, 96
  %v1495 = vld [vmem:[%s1494] ss:$8 sm:$0xf]
  %s1496 = scalar_lea.vmem %s0, 65
  %v1497 = vld [vmem:[%s1496] ss:$8 sm:$0xf0]
  %vm1498 = vcmask 1047556
  %v1499 = vsel %vm1498, %v1497, %v1495
  %1500 = vrot.lane.b32.xlu0 %v1499, 32
  %v1501 = vpop.permute.xlu0 %1500
  %vm1502 = vcmask 130048
  %s1503 = scalar_lea.vmem %s1, 550
  %1504 = vst.msk [vmem:[%s1503] ss:$8 sm:$0xf] %vm1502, %v1501
  %s1505 = scalar_lea.vmem %s1, 582
  %1506 = vst.msk [vmem:[%s1505] ss:$8 sm:$0xf0] %vm1502, %v1501
  %s1507 = scalar_lea.vmem %s0, 98
  %v1508 = vld [vmem:[%s1507] ss:$8 sm:$0xf]
  %s1509 = scalar_lea.vmem %s0, 67
  %v1510 = vld [vmem:[%s1509] ss:$8 sm:$0xf0]
  %vm1511 = vcmask 1047556
  %v1512 = vsel %vm1511, %v1510, %v1508
  %1513 = vrot.lane.b32.xlu0 %v1512, 32
  %v1514 = vpop.permute.xlu0 %1513
  %vm1515 = vcmask 130048
  %s1516 = scalar_lea.vmem %s1, 678
  %1517 = vst.msk [vmem:[%s1516] ss:$8 sm:$0xf] %vm1515, %v1514
  %s1518 = scalar_lea.vmem %s1, 710
  %1519 = vst.msk [vmem:[%s1518] ss:$8 sm:$0xf0] %vm1515, %v1514
  %s1520 = scalar_lea.vmem %s0, 100
  %v1521 = vld [vmem:[%s1520] ss:$8 sm:$0xf]
  %s1522 = scalar_lea.vmem %s0, 69
  %v1523 = vld [vmem:[%s1522] ss:$8 sm:$0xf0]
  %vm1524 = vcmask 1047556
  %v1525 = vsel %vm1524, %v1523, %v1521
  %1526 = vrot.lane.b32.xlu0 %v1525, 32
  %v1527 = vpop.permute.xlu0 %1526
  %vm1528 = vcmask 130048
  %s1529 = scalar_lea.vmem %s1, 806
  %1530 = vst.msk [vmem:[%s1529] ss:$8 sm:$0xf] %vm1528, %v1527
  %s1531 = scalar_lea.vmem %s1, 838
  %1532 = vst.msk [vmem:[%s1531] ss:$8 sm:$0xf0] %vm1528, %v1527
  %s1533 = scalar_lea.vmem %s0, 102
  %v1534 = vld [vmem:[%s1533] ss:$8 sm:$0xf]
  %s1535 = scalar_lea.vmem %s0, 71
  %v1536 = vld [vmem:[%s1535] ss:$8 sm:$0xf0]
  %vm1537 = vcmask 1047556
  %v1538 = vsel %vm1537, %v1536, %v1534
  %1539 = vrot.lane.b32.xlu0 %v1538, 32
  %v1540 = vpop.permute.xlu0 %1539
  %vm1541 = vcmask 130048
  %s1542 = scalar_lea.vmem %s1, 934
  %1543 = vst.msk [vmem:[%s1542] ss:$8 sm:$0xf] %vm1541, %v1540
  %s1544 = scalar_lea.vmem %s1, 966
  %1545 = vst.msk [vmem:[%s1544] ss:$8 sm:$0xf0] %vm1541, %v1540
  %v1546 = vld [vmem:[%s0] ss:$8 sm:$0xf]
  %s1547 = scalar_lea.vmem %s0, 4294967265
  %v1548 = vld [vmem:[%s1547] ss:$8 sm:$0xf0]
  %vm1549 = vcmask 1047556
  %v1550 = vsel %vm1549, %v1548, %v1546
  %1551 = vrot.lane.b32.xlu0 %v1550, 16
  %v1552 = vpop.permute.xlu0 %1551
  %vm1553 = vcmask 130048
  %s1554 = scalar_lea.vmem %s1, 7
  %1555 = vst.msk [vmem:[%s1554] ss:$8 sm:$0xf] %vm1553, %v1552
  %s1556 = scalar_lea.vmem %s1, 39
  %1557 = vst.msk [vmem:[%s1556] ss:$8 sm:$0xf0] %vm1553, %v1552
  %s1558 = scalar_lea.vmem %s0, 2
  %v1559 = vld [vmem:[%s1558] ss:$8 sm:$0xf]
  %s1560 = scalar_lea.vmem %s0, 4294967267
  %v1561 = vld [vmem:[%s1560] ss:$8 sm:$0xf0]
  %vm1562 = vcmask 1047556
  %v1563 = vsel %vm1562, %v1561, %v1559
  %1564 = vrot.lane.b32.xlu0 %v1563, 16
  %v1565 = vpop.permute.xlu0 %1564
  %vm1566 = vcmask 130048
  %s1567 = scalar_lea.vmem %s1, 135
  %1568 = vst.msk [vmem:[%s1567] ss:$8 sm:$0xf] %vm1566, %v1565
  %s1569 = scalar_lea.vmem %s1, 167
  %1570 = vst.msk [vmem:[%s1569] ss:$8 sm:$0xf0] %vm1566, %v1565
  %s1571 = scalar_lea.vmem %s0, 4
  %v1572 = vld [vmem:[%s1571] ss:$8 sm:$0xf]
  %s1573 = scalar_lea.vmem %s0, 4294967269
  %v1574 = vld [vmem:[%s1573] ss:$8 sm:$0xf0]
  %vm1575 = vcmask 1047556
  %v1576 = vsel %vm1575, %v1574, %v1572
  %1577 = vrot.lane.b32.xlu0 %v1576, 16
  %v1578 = vpop.permute.xlu0 %1577
  %vm1579 = vcmask 130048
  %s1580 = scalar_lea.vmem %s1, 263
  %1581 = vst.msk [vmem:[%s1580] ss:$8 sm:$0xf] %vm1579, %v1578
  %s1582 = scalar_lea.vmem %s1, 295
  %1583 = vst.msk [vmem:[%s1582] ss:$8 sm:$0xf0] %vm1579, %v1578
  %s1584 = scalar_lea.vmem %s0, 6
  %v1585 = vld [vmem:[%s1584] ss:$8 sm:$0xf]
  %s1586 = scalar_lea.vmem %s0, 4294967271
  %v1587 = vld [vmem:[%s1586] ss:$8 sm:$0xf0]
  %vm1588 = vcmask 1047556
  %v1589 = vsel %vm1588, %v1587, %v1585
  %1590 = vrot.lane.b32.xlu0 %v1589, 16
  %v1591 = vpop.permute.xlu0 %1590
  %vm1592 = vcmask 130048
  %s1593 = scalar_lea.vmem %s1, 391
  %1594 = vst.msk [vmem:[%s1593] ss:$8 sm:$0xf] %vm1592, %v1591
  %s1595 = scalar_lea.vmem %s1, 423
  %1596 = vst.msk [vmem:[%s1595] ss:$8 sm:$0xf0] %vm1592, %v1591
  %s1597 = scalar_lea.vmem %s0, 32
  %v1598 = vld [vmem:[%s1597] ss:$8 sm:$0xf]
  %s1599 = scalar_lea.vmem %s0, 1
  %v1600 = vld [vmem:[%s1599] ss:$8 sm:$0xf0]
  %vm1601 = vcmask 1047556
  %v1602 = vsel %vm1601, %v1600, %v1598
  %1603 = vrot.lane.b32.xlu0 %v1602, 16
  %v1604 = vpop.permute.xlu0 %1603
  %vm1605 = vcmask 130048
  %s1606 = scalar_lea.vmem %s1, 39
  %1607 = vst.msk [vmem:[%s1606] ss:$8 sm:$0xf] %vm1605, %v1604
  %s1608 = scalar_lea.vmem %s1, 71
  %1609 = vst.msk [vmem:[%s1608] ss:$8 sm:$0xf0] %vm1605, %v1604
  %s1610 = scalar_lea.vmem %s0, 34
  %v1611 = vld [vmem:[%s1610] ss:$8 sm:$0xf]
  %s1612 = scalar_lea.vmem %s0, 3
  %v1613 = vld [vmem:[%s1612] ss:$8 sm:$0xf0]
  %vm1614 = vcmask 1047556
  %v1615 = vsel %vm1614, %v1613, %v1611
  %1616 = vrot.lane.b32.xlu0 %v1615, 16
  %v1617 = vpop.permute.xlu0 %1616
  %vm1618 = vcmask 130048
  %s1619 = scalar_lea.vmem %s1, 167
  %1620 = vst.msk [vmem:[%s1619] ss:$8 sm:$0xf] %vm1618, %v1617
  %s1621 = scalar_lea.vmem %s1, 199
  %1622 = vst.msk [vmem:[%s1621] ss:$8 sm:$0xf0] %vm1618, %v1617
  %s1623 = scalar_lea.vmem %s0, 36
  %v1624 = vld [vmem:[%s1623] ss:$8 sm:$0xf]
  %s1625 = scalar_lea.vmem %s0, 5
  %v1626 = vld [vmem:[%s1625] ss:$8 sm:$0xf0]
  %vm1627 = vcmask 1047556
  %v1628 = vsel %vm1627, %v1626, %v1624
  %1629 = vrot.lane.b32.xlu0 %v1628, 16
  %v1630 = vpop.permute.xlu0 %1629
  %vm1631 = vcmask 130048
  %s1632 = scalar_lea.vmem %s1, 295
  %1633 = vst.msk [vmem:[%s1632] ss:$8 sm:$0xf] %vm1631, %v1630
  %s1634 = scalar_lea.vmem %s1, 327
  %1635 = vst.msk [vmem:[%s1634] ss:$8 sm:$0xf0] %vm1631, %v1630
  %s1636 = scalar_lea.vmem %s0, 38
  %v1637 = vld [vmem:[%s1636] ss:$8 sm:$0xf]
  %s1638 = scalar_lea.vmem %s0, 7
  %v1639 = vld [vmem:[%s1638] ss:$8 sm:$0xf0]
  %vm1640 = vcmask 1047556
  %v1641 = vsel %vm1640, %v1639, %v1637
  %1642 = vrot.lane.b32.xlu0 %v1641, 16
  %v1643 = vpop.permute.xlu0 %1642
  %vm1644 = vcmask 130048
  %s1645 = scalar_lea.vmem %s1, 423
  %1646 = vst.msk [vmem:[%s1645] ss:$8 sm:$0xf] %vm1644, %v1643
  %s1647 = scalar_lea.vmem %s1, 455
  %1648 = vst.msk [vmem:[%s1647] ss:$8 sm:$0xf0] %vm1644, %v1643
  %s1649 = scalar_lea.vmem %s0, 64
  %v1650 = vld [vmem:[%s1649] ss:$8 sm:$0xf]
  %s1651 = scalar_lea.vmem %s0, 33
  %v1652 = vld [vmem:[%s1651] ss:$8 sm:$0xf0]
  %vm1653 = vcmask 1047556
  %v1654 = vsel %vm1653, %v1652, %v1650
  %1655 = vrot.lane.b32.xlu0 %v1654, 16
  %v1656 = vpop.permute.xlu0 %1655
  %vm1657 = vcmask 130048
  %s1658 = scalar_lea.vmem %s1, 519
  %1659 = vst.msk [vmem:[%s1658] ss:$8 sm:$0xf] %vm1657, %v1656
  %s1660 = scalar_lea.vmem %s1, 551
  %1661 = vst.msk [vmem:[%s1660] ss:$8 sm:$0xf0] %vm1657, %v1656
  %s1662 = scalar_lea.vmem %s0, 66
  %v1663 = vld [vmem:[%s1662] ss:$8 sm:$0xf]
  %s1664 = scalar_lea.vmem %s0, 35
  %v1665 = vld [vmem:[%s1664] ss:$8 sm:$0xf0]
  %vm1666 = vcmask 1047556
  %v1667 = vsel %vm1666, %v1665, %v1663
  %1668 = vrot.lane.b32.xlu0 %v1667, 16
  %v1669 = vpop.permute.xlu0 %1668
  %vm1670 = vcmask 130048
  %s1671 = scalar_lea.vmem %s1, 647
  %1672 = vst.msk [vmem:[%s1671] ss:$8 sm:$0xf] %vm1670, %v1669
  %s1673 = scalar_lea.vmem %s1, 679
  %1674 = vst.msk [vmem:[%s1673] ss:$8 sm:$0xf0] %vm1670, %v1669
  %s1675 = scalar_lea.vmem %s0, 68
  %v1676 = vld [vmem:[%s1675] ss:$8 sm:$0xf]
  %s1677 = scalar_lea.vmem %s0, 37
  %v1678 = vld [vmem:[%s1677] ss:$8 sm:$0xf0]
  %vm1679 = vcmask 1047556
  %v1680 = vsel %vm1679, %v1678, %v1676
  %1681 = vrot.lane.b32.xlu0 %v1680, 16
  %v1682 = vpop.permute.xlu0 %1681
  %vm1683 = vcmask 130048
  %s1684 = scalar_lea.vmem %s1, 775
  %1685 = vst.msk [vmem:[%s1684] ss:$8 sm:$0xf] %vm1683, %v1682
  %s1686 = scalar_lea.vmem %s1, 807
  %1687 = vst.msk [vmem:[%s1686] ss:$8 sm:$0xf0] %vm1683, %v1682
  %s1688 = scalar_lea.vmem %s0, 70
  %v1689 = vld [vmem:[%s1688] ss:$8 sm:$0xf]
  %s1690 = scalar_lea.vmem %s0, 39
  %v1691 = vld [vmem:[%s1690] ss:$8 sm:$0xf0]
  %vm1692 = vcmask 1047556
  %v1693 = vsel %vm1692, %v1691, %v1689
  %1694 = vrot.lane.b32.xlu0 %v1693, 16
  %v1695 = vpop.permute.xlu0 %1694
  %vm1696 = vcmask 130048
  %s1697 = scalar_lea.vmem %s1, 903
  %1698 = vst.msk [vmem:[%s1697] ss:$8 sm:$0xf] %vm1696, %v1695
  %s1699 = scalar_lea.vmem %s1, 935
  %1700 = vst.msk [vmem:[%s1699] ss:$8 sm:$0xf0] %vm1696, %v1695
  %s1701 = scalar_lea.vmem %s0, 96
  %v1702 = vld [vmem:[%s1701] ss:$8 sm:$0xf]
  %s1703 = scalar_lea.vmem %s0, 65
  %v1704 = vld [vmem:[%s1703] ss:$8 sm:$0xf0]
  %vm1705 = vcmask 1047556
  %v1706 = vsel %vm1705, %v1704, %v1702
  %1707 = vrot.lane.b32.xlu0 %v1706, 16
  %v1708 = vpop.permute.xlu0 %1707
  %vm1709 = vcmask 130048
  %s1710 = scalar_lea.vmem %s1, 551
  %1711 = vst.msk [vmem:[%s1710] ss:$8 sm:$0xf] %vm1709, %v1708
  %s1712 = scalar_lea.vmem %s1, 583
  %1713 = vst.msk [vmem:[%s1712] ss:$8 sm:$0xf0] %vm1709, %v1708
  %s1714 = scalar_lea.vmem %s0, 98
  %v1715 = vld [vmem:[%s1714] ss:$8 sm:$0xf]
  %s1716 = scalar_lea.vmem %s0, 67
  %v1717 = vld [vmem:[%s1716] ss:$8 sm:$0xf0]
  %vm1718 = vcmask 1047556
  %v1719 = vsel %vm1718, %v1717, %v1715
  %1720 = vrot.lane.b32.xlu0 %v1719, 16
  %v1721 = vpop.permute.xlu0 %1720
  %vm1722 = vcmask 130048
  %s1723 = scalar_lea.vmem %s1, 679
  %1724 = vst.msk [vmem:[%s1723] ss:$8 sm:$0xf] %vm1722, %v1721
  %s1725 = scalar_lea.vmem %s1, 711
  %1726 = vst.msk [vmem:[%s1725] ss:$8 sm:$0xf0] %vm1722, %v1721
  %s1727 = scalar_lea.vmem %s0, 100
  %v1728 = vld [vmem:[%s1727] ss:$8 sm:$0xf]
  %s1729 = scalar_lea.vmem %s0, 69
  %v1730 = vld [vmem:[%s1729] ss:$8 sm:$0xf0]
  %vm1731 = vcmask 1047556
  %v1732 = vsel %vm1731, %v1730, %v1728
  %1733 = vrot.lane.b32.xlu0 %v1732, 16
  %v1734 = vpop.permute.xlu0 %1733
  %vm1735 = vcmask 130048
  %s1736 = scalar_lea.vmem %s1, 807
  %1737 = vst.msk [vmem:[%s1736] ss:$8 sm:$0xf] %vm1735, %v1734
  %s1738 = scalar_lea.vmem %s1, 839
  %1739 = vst.msk [vmem:[%s1738] ss:$8 sm:$0xf0] %vm1735, %v1734
  %s1740 = scalar_lea.vmem %s0, 102
  %v1741 = vld [vmem:[%s1740] ss:$8 sm:$0xf]
  %s1742 = scalar_lea.vmem %s0, 71
  %v1743 = vld [vmem:[%s1742] ss:$8 sm:$0xf0]
  %vm1744 = vcmask 1047556
  %v1745 = vsel %vm1744, %v1743, %v1741
  %1746 = vrot.lane.b32.xlu0 %v1745, 16
  %v1747 = vpop.permute.xlu0 %1746
  %vm1748 = vcmask 130048
  %s1749 = scalar_lea.vmem %s1, 935
  %1750 = vst.msk [vmem:[%s1749] ss:$8 sm:$0xf] %vm1748, %v1747
  %s1751 = scalar_lea.vmem %s1, 967
  %1752 = vst.msk [vmem:[%s1751] ss:$8 sm:$0xf0] %vm1748, %v1747

// kernel: tile.8
$region0: #{tile.8}
  #allocation0 [shape = 's32[1]{0}', space=sflag, size = 0x4, scoped, tag = 'scoped memory for tile.8']
  %s0 = inlined_call_operand.vmem [shape: f32[32], index: 0, kind: input, shape index: {}]
  %s1 = inlined_call_operand.vmem [shape: f32[4,32], index: 1, kind: output, shape index: {}]
  // Predicated region
  $region2: #{tile.8} parent=0 // pred_check
    _
  $region3: #{tile.8} parent=0 // pred_check_branch
    %3 = sbr.rel (0) target = $region5
  $region4: #{tile.8} parent=0 // pred_region
    _
  $region5: #{tile.8} parent=0 // pred_fallthru
    _
  %v4 = vld [vmem:[%s0] ss:$0 sm:$0xff]
  %5 = vst [vmem:[%s1] sm:$0xf] %v4

// kernel: simple_model_forward.1
$region0: #{simple_model_forward.1}
  #allocation0 [shape = 'u32[]', space=smem, size = 0x4, offset = 0x4, fixed_abs, tag = 'smem constant byte address 0x4 - core index']
  #allocation1 [shape = 'u32[144,128]{1,0:T(1,128)}', space=vmem, size = 0x12000, scoped, tag = 'internal scratch']
  #allocation2 [shape = 'f32[480,32]{1,0:T(8,128)}', space=vmem, size = 0x3c000, scoped, tag = 'scratch operand']
  #allocation3 [shape = 'f32[96,32]{1,0:T(8,128)}', space=vmem, size = 0xc000, scoped, tag = 'scratch operand']
  %s0 = inlined_call_operand.vmem [shape: f32[16,64,16], index: 0, kind: input, shape index: {}]
  %s1 = inlined_call_operand.vmem [shape: bf16[32,128], index: 1, kind: input, shape index: {}]
  %s2 = inlined_call_operand.vmem [shape: bf16[3,256,32], index: 2, kind: input, shape index: {}]
  %s3 = inlined_call_operand.vmem [shape: f32[4,1,128], index: 3, kind: input, shape index: {}]
  %s4 = inlined_call_operand.vmem [shape: bf16[3,32,128], index: 4, kind: input, shape index: {}]
  %s5 = inlined_call_operand.vmem [shape: f32[3,1,128], index: 5, kind: input, shape index: {}]
  %s6 = inlined_call_operand.vmem [shape: f32[16,128], index: 6, kind: output, shape index: {}]
  %s7 = sld [smem:[#allocation0]]
  $region57: #{simple_model_forward.1} parent=0
    _
  %s9 = ssub.s32 1, %s7
  %s10 = scalar_select 0, %s9, %s7
  loop: start=0, step=1, limit=4
  $region2: #{simple_model_forward.1} parent=0 // loop_pre_header
    _
  $region3: #{simple_model_forward.1} parent=0 // loop_header
    %s12 = sphi 0, %s16
    %p13 = scmp.ge.s32.totalorder %s12, 4
    %s22 = sphi 0, %s24
    %s25 = sphi 0, %s22
    %s26 = sphi 0, %s25
    %s42 = sphi 0, %s26
    %s46 = sphi 0, %s46
    %s48 = sphi 0, %s46
    %s49 = sphi 0, %s48
    %s63 = sphi 0, %s49
    %s67 = sphi 0, %s67
    %s69 = sphi 0, %s67
    %s70 = sphi 0, %s69
    %s84 = sphi 0, %s70
    %s88 = sphi 0, %s88
    %s90 = sphi 0, %s88
    %s91 = sphi 0, %s90
    %s105 = sphi 0, %s91
    %s109 = sphi 0, %s109
    %s111 = sphi 0, %s109
    %s112 = sphi 0, %s111
    %s126 = sphi 0, %s112
    %s130 = sphi 0, %s130
    %s132 = sphi 0, %s130
    %s133 = sphi 0, %s132
    %s147 = sphi 0, %s133
    %s153 = sphi 0, %s155
    %s156 = sphi 0, %s153
    %s157 = sphi 0, %s156
    %s173 = sphi 0, %s157
  $region4: #{simple_model_forward.1} parent=0 // loop_header_branch
    %15 = sbr.rel (%p13) target = $region8
  $region5: #{simple_model_forward.1} parent=0 // loop_body
    %s17 = ssub.s32 %s12, 1
    %s18 = ssub.s32 %s12, 2
    %s19 = sadd.s32 %s12, 1
    %s20 = ssub.s32 %s12, %s19
    %p21 = scmp.eq.s32.totalorder %s20, 0
    %s23 = sadd.s32 %s22, 1
    %s24 = scalar_select %p21, %s22, %s23
    %p27 = pneg %p21
    %p28 = scmp.eq.s32.totalorder %s12, 1
    %p29 = por %p27, %p28
    %p30 = scmp.ne.s32.totalorder %s22, %s25
    %p31 = scmp.eq.s32.totalorder %s12, 0
    %p32 = por %p30, %p31
    %p33 = scmp.ne.s32.totalorder %s22, %s25
    %p34 = scmp.eq.s32.totalorder %s17, 1
    %p35 = por %p33, %p34
    %p36 = scmp.ne.s32.totalorder %s25, %s26
    %p37 = scmp.eq.s32.totalorder %s17, 0
    %p38 = por %p36, %p37
    %p39 = scmp.ne.s32.totalorder %s25, %s26
    %p40 = scmp.eq.s32.totalorder %s18, 1
    %p41 = por %p39, %p40
    %p43 = scmp.ne.s32.totalorder %s26, %s42
    %p44 = scmp.eq.s32.totalorder %s18, 0
    %p45 = por %p43, %p44
    %s47 = sadd.s32 %s46, 1
    %p50 = scmp.eq.s32.totalorder %s12, 1
    %p51 = scmp.ne.s32.totalorder %s46, %s48
    %p52 = scmp.eq.s32.totalorder %s12, 0
    %p53 = por %p51, %p52
    %p54 = scmp.ne.s32.totalorder %s46, %s48
    %p55 = scmp.eq.s32.totalorder %s17, 1
    %p56 = por %p54, %p55
    %p57 = scmp.ne.s32.totalorder %s48, %s49
    %p58 = scmp.eq.s32.totalorder %s17, 0
    %p59 = por %p57, %p58
    %p60 = scmp.ne.s32.totalorder %s48, %s49
    %p61 = scmp.eq.s32.totalorder %s18, 1
    %p62 = por %p60, %p61
    %p64 = scmp.ne.s32.totalorder %s49, %s63
    %p65 = scmp.eq.s32.totalorder %s18, 0
    %p66 = por %p64, %p65
    %s68 = sadd.s32 %s67, 1
    %p71 = scmp.eq.s32.totalorder %s12, 1
    %p72 = scmp.ne.s32.totalorder %s67, %s69
    %p73 = scmp.eq.s32.totalorder %s12, 0
    %p74 = por %p72, %p73
    %p75 = scmp.ne.s32.totalorder %s67, %s69
    %p76 = scmp.eq.s32.totalorder %s17, 1
    %p77 = por %p75, %p76
    %p78 = scmp.ne.s32.totalorder %s69, %s70
    %p79 = scmp.eq.s32.totalorder %s17, 0
    %p80 = por %p78, %p79
    %p81 = scmp.ne.s32.totalorder %s69, %s70
    %p82 = scmp.eq.s32.totalorder %s18, 1
    %p83 = por %p81, %p82
    %p85 = scmp.ne.s32.totalorder %s70, %s84
    %p86 = scmp.eq.s32.totalorder %s18, 0
    %p87 = por %p85, %p86
    %s89 = sadd.s32 %s88, 1
    %p92 = scmp.eq.s32.totalorder %s12, 1
    %p93 = scmp.ne.s32.totalorder %s88, %s90
    %p94 = scmp.eq.s32.totalorder %s12, 0
    %p95 = por %p93, %p94
    %p96 = scmp.ne.s32.totalorder %s88, %s90
    %p97 = scmp.eq.s32.totalorder %s17, 1
    %p98 = por %p96, %p97
    %p99 = scmp.ne.s32.totalorder %s90, %s91
    %p100 = scmp.eq.s32.totalorder %s17, 0
    %p101 = por %p99, %p100
    %p102 = scmp.ne.s32.totalorder %s90, %s91
    %p103 = scmp.eq.s32.totalorder %s18, 1
    %p104 = por %p102, %p103
    %p106 = scmp.ne.s32.totalorder %s91, %s105
    %p107 = scmp.eq.s32.totalorder %s18, 0
    %p108 = por %p106, %p107
    %s110 = sadd.s32 %s109, 1
    %p113 = scmp.eq.s32.totalorder %s12, 1
    %p114 = scmp.ne.s32.totalorder %s109, %s111
    %p115 = scmp.eq.s32.totalorder %s12, 0
    %p116 = por %p114, %p115
    %p117 = scmp.ne.s32.totalorder %s109, %s111
    %p118 = scmp.eq.s32.totalorder %s17, 1
    %p119 = por %p117, %p118
    %p120 = scmp.ne.s32.totalorder %s111, %s112
    %p121 = scmp.eq.s32.totalorder %s17, 0
    %p122 = por %p120, %p121
    %p123 = scmp.ne.s32.totalorder %s111, %s112
    %p124 = scmp.eq.s32.totalorder %s18, 1
    %p125 = por %p123, %p124
    %p127 = scmp.ne.s32.totalorder %s112, %s126
    %p128 = scmp.eq.s32.totalorder %s18, 0
    %p129 = por %p127, %p128
    %s131 = sadd.s32 %s130, 1
    %p134 = scmp.eq.s32.totalorder %s12, 1
    %p135 = scmp.ne.s32.totalorder %s130, %s132
    %p136 = scmp.eq.s32.totalorder %s12, 0
    %p137 = por %p135, %p136
    %p138 = scmp.ne.s32.totalorder %s130, %s132
    %p139 = scmp.eq.s32.totalorder %s17, 1
    %p140 = por %p138, %p139
    %p141 = scmp.ne.s32.totalorder %s132, %s133
    %p142 = scmp.eq.s32.totalorder %s17, 0
    %p143 = por %p141, %p142
    %p144 = scmp.ne.s32.totalorder %s132, %s133
    %p145 = scmp.eq.s32.totalorder %s18, 1
    %p146 = por %p144, %p145
    %p148 = scmp.ne.s32.totalorder %s133, %s147
    %p149 = scmp.eq.s32.totalorder %s18, 0
    %p150 = por %p148, %p149
    %s151 = ssub.s32 %s12, %s19
    %p152 = scmp.eq.s32.totalorder %s151, 0
    %s154 = sadd.s32 %s153, 1
    %s155 = scalar_select %p152, %s153, %s154
    %p158 = pneg %p152
    %p159 = scmp.eq.s32.totalorder %s12, 1
    %p160 = por %p158, %p159
    %p161 = scmp.ne.s32.totalorder %s153, %s156
    %p162 = scmp.eq.s32.totalorder %s12, 0
    %p163 = por %p161, %p162
    %p164 = scmp.ne.s32.totalorder %s153, %s156
    %p165 = scmp.eq.s32.totalorder %s17, 1
    %p166 = por %p164, %p165
    %p167 = scmp.ne.s32.totalorder %s156, %s157
    %p168 = scmp.eq.s32.totalorder %s17, 0
    %p169 = por %p167, %p168
    %p170 = scmp.ne.s32.totalorder %s156, %s157
    %p171 = scmp.eq.s32.totalorder %s18, 1
    %p172 = por %p170, %p171
    %p174 = scmp.ne.s32.totalorder %s157, %s173
    %p175 = scmp.eq.s32.totalorder %s18, 0
    %p176 = por %p174, %p175
    %p177 = scmp.le.s32.totalorder 1, %s12
    %p178 = scmp.lt.s32.totalorder %s12, 3
    %p179 = pnand %p177, %p178
    %p180 = pneg %p179
    // Predicated region
    $region9: #{simple_model_forward.1} parent=5 // pred_check
      _
    $region10: #{simple_model_forward.1} parent=5 // pred_check_branch
      %182 = sbr.rel (%p179) target = $region12
    $region11: #{simple_model_forward.1} parent=5 // pred_region
      %s183 = ssub.s32 %s12, 1
      // Predicated region
      $region13: #{simple_model_forward.1} parent=11 // pred_check
        %p184 = pneg %p59
      $region14: #{simple_model_forward.1} parent=11 // pred_check_branch
        %186 = sbr.rel (%p184) target = $region16
      $region15: #{simple_model_forward.1} parent=11 // pred_region
        _
      $region16: #{simple_model_forward.1} parent=11 // pred_fallthru
        _
      // Predicated region
      $region17: #{simple_model_forward.1} parent=11 // pred_check
        %p187 = pneg %p80
      $region18: #{simple_model_forward.1} parent=11 // pred_check_branch
        %189 = sbr.rel (%p187) target = $region20
      $region19: #{simple_model_forward.1} parent=11 // pred_region
        _
      $region20: #{simple_model_forward.1} parent=11 // pred_fallthru
        _
      // Predicated region
      $region21: #{simple_model_forward.1} parent=11 // pred_check
        %p190 = pneg %p101
      $region22: #{simple_model_forward.1} parent=11 // pred_check_branch
        %192 = sbr.rel (%p190) target = $region24
      $region23: #{simple_model_forward.1} parent=11 // pred_region
        _
      $region24: #{simple_model_forward.1} parent=11 // pred_fallthru
        _
      // Predicated region
      $region25: #{simple_model_forward.1} parent=11 // pred_check
        %p193 = pneg %p122
      $region26: #{simple_model_forward.1} parent=11 // pred_check_branch
        %195 = sbr.rel (%p193) target = $region28
      $region27: #{simple_model_forward.1} parent=11 // pred_region
        _
      $region28: #{simple_model_forward.1} parent=11 // pred_fallthru
        _
      // Predicated region
      $region29: #{simple_model_forward.1} parent=11 // pred_check
        %p196 = pneg %p143
      $region30: #{simple_model_forward.1} parent=11 // pred_check_branch
        %198 = sbr.rel (%p196) target = $region32
      $region31: #{simple_model_forward.1} parent=11 // pred_region
        _
      $region32: #{simple_model_forward.1} parent=11 // pred_fallthru
        _
    $region12: #{simple_model_forward.1} parent=5 // pred_fallthru
      _
    %p199 = scmp.lt.s32.totalorder %s12, 2
    // Predicated region
    $region33: #{simple_model_forward.1} parent=5 // pred_check
      %p200 = pneg %p199
    $region34: #{simple_model_forward.1} parent=5 // pred_check_branch
      %202 = sbr.rel (%p200) target = $region36
    $region35: #{simple_model_forward.1} parent=5 // pred_region
      // Predicated region
      $region37: #{simple_model_forward.1} parent=35 // pred_check
        %p203 = pneg %p32
      $region38: #{simple_model_forward.1} parent=35 // pred_check_branch
        %205 = sbr.rel (%p203) target = $region40
      $region39: #{simple_model_forward.1} parent=35 // pred_region
        %s206 = smul.u32 8, %s12
        %p207 = scmp.lt.s32.totalorder %s206, 15
        %s208 = scalar_select %p207, %s206, 15
        %s209 = smul.addr %s208, 8
        %s210 = smul.addr %s209, 8
        %s211 = scalar_lea.vmem %s0, %s210
        %s212 = smul.u32 8, %s12
      $region40: #{simple_model_forward.1} parent=35 // pred_fallthru
        _
    $region36: #{simple_model_forward.1} parent=5 // pred_fallthru
      _
    %p213 = scmp.le.s32.totalorder 1, %s12
    %p214 = scmp.lt.s32.totalorder %s12, 3
    %p215 = pnand %p213, %p214
    %p216 = pneg %p215
    // Predicated region
    $region41: #{simple_model_forward.1} parent=5 // pred_check
      _
    $region42: #{simple_model_forward.1} parent=5 // pred_check_branch
      %218 = sbr.rel (%p215) target = $region44
    $region43: #{simple_model_forward.1} parent=5 // pred_region
      %s219 = ssub.s32 %s12, 1
      %s220 = smul.u32 8, %s17
      %p221 = scmp.lt.s32.totalorder %s220, 15
      %s222 = scalar_select %p221, %s220, 15
      %s223 = smul.addr %s222, 8
      %s224 = smul.addr %s223, 8
      %s225 = scalar_lea.vmem %s0, %s224
      %p226 = pneg %p38
      %p227 = pneg %p35
      %p228 = pneg %p59
      %p229 = pneg %p56
      %p230 = pneg %p80
      %p231 = pneg %p77
      %p232 = pneg %p101
      %p233 = pneg %p98
      %p234 = pneg %p122
      %p235 = pneg %p119
      %p236 = pneg %p143
      %p237 = pneg %p140
      %p238 = pneg %p169
      %p239 = pneg %p166
      %p240 = scmp.lt.s32.totalorder %s17, 1
      %s241 = scalar_select %p240, %s17, 1
      %s242 = smul.addr %s241, 8
      %s243 = scalar_lea.vmem %s6, %s242
      %s244 = smul.u32 8, %s17
      %p245 = scmp.lt.s32.totalorder %s244, 15
      %s246 = scalar_select %p245, %s244, 15
      %s247 = smul.addr %s246, 8
      %s248 = smul.addr %s247, 8
      %s249 = scalar_lea.vmem %s0, %s248
      %s250 = smul.u32 8, %s17
      %p251 = scmp.lt.s32.totalorder %s17, 1
      %s252 = scalar_select %p251, %s17, 1
      %s253 = smul.addr %s252, 8
      %s254 = scalar_lea.vmem %s6, %s253
      %v256 = vld [vmem:[%s249] sm:$0xff]
      %v257 = vld [vmem:[%s249 + $0x8] sm:$0xff]
      %v258 = vld [vmem:[%s249 + $0x10] sm:$0xff]
      %v259 = vld [vmem:[%s249 + $0x18] sm:$0xff]
      %v260 = vld [vmem:[%s249 + $0x20] sm:$0xff]
      %v261 = vld [vmem:[%s249 + $0x28] sm:$0xff]
      %v262 = vld [vmem:[%s249 + $0x30] sm:$0xff]
      %v263 = vld [vmem:[%s249 + $0x38] sm:$0xff]
      %vm272 = vcmask 1046528
      %v273 = vrot.slane %v256, 1
      %v274 = vrot.slane %v257, 1
      %v275 = vsel %vm272, %v273, %v274
      %v276 = vrot.slane %v258, 1
      %v277 = vsel %vm272, %v274, %v276
      %v278 = vrot.slane %v259, 1
      %v279 = vsel %vm272, %v276, %v278
      %v280 = vrot.slane %v260, 1
      %v281 = vsel %vm272, %v278, %v280
      %v282 = vrot.slane %v261, 1
      %v283 = vsel %vm272, %v280, %v282
      %v284 = vrot.slane %v262, 1
      %v285 = vsel %vm272, %v282, %v284
      %v286 = vrot.slane %v263, 1
      %v287 = vsel %vm272, %v284, %v286
      %288 = vrot.lane.b32.xlu0 %v275, 16
      %v289 = vpop.permute.xlu0 %288
      %290 = vrot.lane.b32.xlu0 %v277, 16
      %v291 = vpop.permute.xlu0 %290
      %292 = vrot.lane.b32.xlu0 %v279, 16
      %v293 = vpop.permute.xlu0 %292
      %294 = vrot.lane.b32.xlu0 %v281, 16
      %v295 = vpop.permute.xlu0 %294
      %296 = vrot.lane.b32.xlu0 %v283, 16
      %v297 = vpop.permute.xlu0 %296
      %298 = vrot.lane.b32.xlu0 %v285, 16
      %v299 = vpop.permute.xlu0 %298
      %300 = vrot.lane.b32.xlu0 %v287, 16
      %v301 = vpop.permute.xlu0 %300
      %302 = vrot.lane.b32.xlu0 %v286, 16
      %v303 = vpop.permute.xlu0 %302
      %vm312 = vcmask 130048
      %v313 = vsel %vm312, %v256, %v289
      %v314 = vsel %vm312, %v257, %v291
      %v315 = vsel %vm312, %v258, %v293
      %v316 = vsel %vm312, %v259, %v295
      %v317 = vsel %vm312, %v260, %v297
      %v318 = vsel %vm312, %v261, %v299
      %v319 = vsel %vm312, %v262, %v301
      %v320 = vsel %vm312, %v263, %v303
      %s321 = scalar_lea.vmem %s249, 64
      %v322 = vld [vmem:[%s321] sm:$0xff]
      %v323 = vld [vmem:[%s321 + $0x8] sm:$0xff]
      %v324 = vld [vmem:[%s321 + $0x10] sm:$0xff]
      %v325 = vld [vmem:[%s321 + $0x18] sm:$0xff]
      %v326 = vld [vmem:[%s321 + $0x20] sm:$0xff]
      %v327 = vld [vmem:[%s321 + $0x28] sm:$0xff]
      %v328 = vld [vmem:[%s321 + $0x30] sm:$0xff]
      %v329 = vld [vmem:[%s321 + $0x38] sm:$0xff]
      %v338 = vrot.slane %v322, 1
      %v339 = vrot.slane %v323, 1
      %v340 = vsel %vm272, %v338, %v339
      %v341 = vrot.slane %v324, 1
      %v342 = vsel %vm272, %v339, %v341
      %v343 = vrot.slane %v325, 1
      %v344 = vsel %vm272, %v341, %v343
      %v345 = vrot.slane %v326, 1
      %v346 = vsel %vm272, %v343, %v345
      %v347 = vrot.slane %v327, 1
      %v348 = vsel %vm272, %v345, %v347
      %v349 = vrot.slane %v328, 1
      %v350 = vsel %vm272, %v347, %v349
      %v351 = vrot.slane %v329, 1
      %v352 = vsel %vm272, %v349, %v351
      %353 = vrot.lane.b32.xlu0 %v340, 16
      %v354 = vpop.permute.xlu0 %353
      %355 = vrot.lane.b32.xlu0 %v342, 16
      %v356 = vpop.permute.xlu0 %355
      %357 = vrot.lane.b32.xlu0 %v344, 16
      %v358 = vpop.permute.xlu0 %357
      %359 = vrot.lane.b32.xlu0 %v346, 16
      %v360 = vpop.permute.xlu0 %359
      %361 = vrot.lane.b32.xlu0 %v348, 16
      %v362 = vpop.permute.xlu0 %361
      %363 = vrot.lane.b32.xlu0 %v350, 16
      %v364 = vpop.permute.xlu0 %363
      %365 = vrot.lane.b32.xlu0 %v352, 16
      %v366 = vpop.permute.xlu0 %365
      %367 = vrot.lane.b32.xlu0 %v351, 16
      %v368 = vpop.permute.xlu0 %367
      %v377 = vsel %vm312, %v322, %v354
      %v378 = vsel %vm312, %v323, %v356
      %v379 = vsel %vm312, %v324, %v358
      %v380 = vsel %vm312, %v325, %v360
      %v381 = vsel %vm312, %v326, %v362
      %v382 = vsel %vm312, %v327, %v364
      %v383 = vsel %vm312, %v328, %v366
      %v384 = vsel %vm312, %v329, %v368
      %s385 = scalar_lea.vmem %s249, 128
      %v386 = vld [vmem:[%s385] sm:$0xff]
      %v387 = vld [vmem:[%s385 + $0x8] sm:$0xff]
      %v388 = vld [vmem:[%s385 + $0x10] sm:$0xff]
      %v389 = vld [vmem:[%s385 + $0x18] sm:$0xff]
      %v390 = vld [vmem:[%s385 + $0x20] sm:$0xff]
      %v391 = vld [vmem:[%s385 + $0x28] sm:$0xff]
      %v392 = vld [vmem:[%s385 + $0x30] sm:$0xff]
      %v393 = vld [vmem:[%s385 + $0x38] sm:$0xff]
      %v402 = vrot.slane %v386, 1
      %v403 = vrot.slane %v387, 1
      %v404 = vsel %vm272, %v402, %v403
      %v405 = vrot.slane %v388, 1
      %v406 = vsel %vm272, %v403, %v405
      %v407 = vrot.slane %v389, 1
      %v408 = vsel %vm272, %v405, %v407
      %v409 = vrot.slane %v390, 1
      %v410 = vsel %vm272, %v407, %v409
      %v411 = vrot.slane %v391, 1
      %v412 = vsel %vm272, %v409, %v411
      %v413 = vrot.slane %v392, 1
      %v414 = vsel %vm272, %v411, %v413
      %v415 = vrot.slane %v393, 1
      %v416 = vsel %vm272, %v413, %v415
      %417 = vrot.lane.b32.xlu0 %v404, 16
      %v418 = vpop.permute.xlu0 %417
      %419 = vrot.lane.b32.xlu0 %v406, 16
      %v420 = vpop.permute.xlu0 %419
      %421 = vrot.lane.b32.xlu0 %v408, 16
      %v422 = vpop.permute.xlu0 %421
      %423 = vrot.lane.b32.xlu0 %v410, 16
      %v424 = vpop.permute.xlu0 %423
      %425 = vrot.lane.b32.xlu0 %v412, 16
      %v426 = vpop.permute.xlu0 %425
      %427 = vrot.lane.b32.xlu0 %v414, 16
      %v428 = vpop.permute.xlu0 %427
      %429 = vrot.lane.b32.xlu0 %v416, 16
      %v430 = vpop.permute.xlu0 %429
      %431 = vrot.lane.b32.xlu0 %v415, 16
      %v432 = vpop.permute.xlu0 %431
      %v441 = vsel %vm312, %v386, %v418
      %v442 = vsel %vm312, %v387, %v420
      %v443 = vsel %vm312, %v388, %v422
      %v444 = vsel %vm312, %v389, %v424
      %v445 = vsel %vm312, %v390, %v426
      %v446 = vsel %vm312, %v391, %v428
      %v447 = vsel %vm312, %v392, %v430
      %v448 = vsel %vm312, %v393, %v432
      %s449 = scalar_lea.vmem %s249, 192
      %v450 = vld [vmem:[%s449] sm:$0xff]
      %v451 = vld [vmem:[%s449 + $0x8] sm:$0xff]
      %v452 = vld [vmem:[%s449 + $0x10] sm:$0xff]
      %v453 = vld [vmem:[%s449 + $0x18] sm:$0xff]
      %v454 = vld [vmem:[%s449 + $0x20] sm:$0xff]
      %v455 = vld [vmem:[%s449 + $0x28] sm:$0xff]
      %v456 = vld [vmem:[%s449 + $0x30] sm:$0xff]
      %v457 = vld [vmem:[%s449 + $0x38] sm:$0xff]
      %v466 = vrot.slane %v450, 1
      %v467 = vrot.slane %v451, 1
      %v468 = vsel %vm272, %v466, %v467
      %v469 = vrot.slane %v452, 1
      %v470 = vsel %vm272, %v467, %v469
      %v471 = vrot.slane %v453, 1
      %v472 = vsel %vm272, %v469, %v471
      %v473 = vrot.slane %v454, 1
      %v474 = vsel %vm272, %v471, %v473
      %v475 = vrot.slane %v455, 1
      %v476 = vsel %vm272, %v473, %v475
      %v477 = vrot.slane %v456, 1
      %v478 = vsel %vm272, %v475, %v477
      %v479 = vrot.slane %v457, 1
      %v480 = vsel %vm272, %v477, %v479
      %481 = vrot.lane.b32.xlu0 %v468, 16
      %v482 = vpop.permute.xlu0 %481
      %483 = vrot.lane.b32.xlu0 %v470, 16
      %v484 = vpop.permute.xlu0 %483
      %485 = vrot.lane.b32.xlu0 %v472, 16
      %v486 = vpop.permute.xlu0 %485
      %487 = vrot.lane.b32.xlu0 %v474, 16
      %v488 = vpop.permute.xlu0 %487
      %489 = vrot.lane.b32.xlu0 %v476, 16
      %v490 = vpop.permute.xlu0 %489
      %491 = vrot.lane.b32.xlu0 %v478, 16
      %v492 = vpop.permute.xlu0 %491
      %493 = vrot.lane.b32.xlu0 %v480, 16
      %v494 = vpop.permute.xlu0 %493
      %495 = vrot.lane.b32.xlu0 %v479, 16
      %v496 = vpop.permute.xlu0 %495
      %v505 = vsel %vm312, %v450, %v482
      %v506 = vsel %vm312, %v451, %v484
      %v507 = vsel %vm312, %v452, %v486
      %v508 = vsel %vm312, %v453, %v488
      %v509 = vsel %vm312, %v454, %v490
      %v510 = vsel %vm312, %v455, %v492
      %v511 = vsel %vm312, %v456, %v494
      %v512 = vsel %vm312, %v457, %v496
      %s513 = scalar_lea.vmem %s249, 256
      %v514 = vld [vmem:[%s513] sm:$0xff]
      %v515 = vld [vmem:[%s513 + $0x8] sm:$0xff]
      %v516 = vld [vmem:[%s513 + $0x10] sm:$0xff]
      %v517 = vld [vmem:[%s513 + $0x18] sm:$0xff]
      %v518 = vld [vmem:[%s513 + $0x20] sm:$0xff]
      %v519 = vld [vmem:[%s513 + $0x28] sm:$0xff]
      %v520 = vld [vmem:[%s513 + $0x30] sm:$0xff]
      %v521 = vld [vmem:[%s513 + $0x38] sm:$0xff]
      %v530 = vrot.slane %v514, 1
      %v531 = vrot.slane %v515, 1
      %v532 = vsel %vm272, %v530, %v531
      %v533 = vrot.slane %v516, 1
      %v534 = vsel %vm272, %v531, %v533
      %v535 = vrot.slane %v517, 1
      %v536 = vsel %vm272, %v533, %v535
      %v537 = vrot.slane %v518, 1
      %v538 = vsel %vm272, %v535, %v537
      %v539 = vrot.slane %v519, 1
      %v540 = vsel %vm272, %v537, %v539
      %v541 = vrot.slane %v520, 1
      %v542 = vsel %vm272, %v539, %v541
      %v543 = vrot.slane %v521, 1
      %v544 = vsel %vm272, %v541, %v543
      %545 = vrot.lane.b32.xlu0 %v532, 16
      %v546 = vpop.permute.xlu0 %545
      %547 = vrot.lane.b32.xlu0 %v534, 16
      %v548 = vpop.permute.xlu0 %547
      %549 = vrot.lane.b32.xlu0 %v536, 16
      %v550 = vpop.permute.xlu0 %549
      %551 = vrot.lane.b32.xlu0 %v538, 16
      %v552 = vpop.permute.xlu0 %551
      %553 = vrot.lane.b32.xlu0 %v540, 16
      %v554 = vpop.permute.xlu0 %553
      %555 = vrot.lane.b32.xlu0 %v542, 16
      %v556 = vpop.permute.xlu0 %555
      %557 = vrot.lane.b32.xlu0 %v544, 16
      %v558 = vpop.permute.xlu0 %557
      %559 = vrot.lane.b32.xlu0 %v543, 16
      %v560 = vpop.permute.xlu0 %559
      %v569 = vsel %vm312, %v514, %v546
      %v570 = vsel %vm312, %v515, %v548
      %v571 = vsel %vm312, %v516, %v550
      %v572 = vsel %vm312, %v517, %v552
      %v573 = vsel %vm312, %v518, %v554
      %v574 = vsel %vm312, %v519, %v556
      %v575 = vsel %vm312, %v520, %v558
      %v576 = vsel %vm312, %v521, %v560
      %s577 = scalar_lea.vmem %s249, 320
      %v578 = vld [vmem:[%s577] sm:$0xff]
      %v579 = vld [vmem:[%s577 + $0x8] sm:$0xff]
      %v580 = vld [vmem:[%s577 + $0x10] sm:$0xff]
      %v581 = vld [vmem:[%s577 + $0x18] sm:$0xff]
      %v582 = vld [vmem:[%s577 + $0x20] sm:$0xff]
      %v583 = vld [vmem:[%s577 + $0x28] sm:$0xff]
      %v584 = vld [vmem:[%s577 + $0x30] sm:$0xff]
      %v585 = vld [vmem:[%s577 + $0x38] sm:$0xff]
      %v594 = vrot.slane %v578, 1
      %v595 = vrot.slane %v579, 1
      %v596 = vsel %vm272, %v594, %v595
      %v597 = vrot.slane %v580, 1
      %v598 = vsel %vm272, %v595, %v597
      %v599 = vrot.slane %v581, 1
      %v600 = vsel %vm272, %v597, %v599
      %v601 = vrot.slane %v582, 1
      %v602 = vsel %vm272, %v599, %v601
      %v603 = vrot.slane %v583, 1
      %v604 = vsel %vm272, %v601, %v603
      %v605 = vrot.slane %v584, 1
      %v606 = vsel %vm272, %v603, %v605
      %v607 = vrot.slane %v585, 1
      %v608 = vsel %vm272, %v605, %v607
      %609 = vrot.lane.b32.xlu0 %v596, 16
      %v610 = vpop.permute.xlu0 %609
      %611 = vrot.lane.b32.xlu0 %v598, 16
      %v612 = vpop.permute.xlu0 %611
      %613 = vrot.lane.b32.xlu0 %v600, 16
      %v614 = vpop.permute.xlu0 %613
      %615 = vrot.lane.b32.xlu0 %v602, 16
      %v616 = vpop.permute.xlu0 %615
      %617 = vrot.lane.b32.xlu0 %v604, 16
      %v618 = vpop.permute.xlu0 %617
      %619 = vrot.lane.b32.xlu0 %v606, 16
      %v620 = vpop.permute.xlu0 %619
      %621 = vrot.lane.b32.xlu0 %v608, 16
      %v622 = vpop.permute.xlu0 %621
      %623 = vrot.lane.b32.xlu0 %v607, 16
      %v624 = vpop.permute.xlu0 %623
      %v633 = vsel %vm312, %v578, %v610
      %v634 = vsel %vm312, %v579, %v612
      %v635 = vsel %vm312, %v580, %v614
      %v636 = vsel %vm312, %v581, %v616
      %v637 = vsel %vm312, %v582, %v618
      %v638 = vsel %vm312, %v583, %v620
      %v639 = vsel %vm312, %v584, %v622
      %v640 = vsel %vm312, %v585, %v624
      %s641 = scalar_lea.vmem %s249, 384
      %v642 = vld [vmem:[%s641] sm:$0xff]
      %v643 = vld [vmem:[%s641 + $0x8] sm:$0xff]
      %v644 = vld [vmem:[%s641 + $0x10] sm:$0xff]
      %v645 = vld [vmem:[%s641 + $0x18] sm:$0xff]
      %v646 = vld [vmem:[%s641 + $0x20] sm:$0xff]
      %v647 = vld [vmem:[%s641 + $0x28] sm:$0xff]
      %v648 = vld [vmem:[%s641 + $0x30] sm:$0xff]
      %v649 = vld [vmem:[%s641 + $0x38] sm:$0xff]
      %v658 = vrot.slane %v642, 1
      %v659 = vrot.slane %v643, 1
      %v660 = vsel %vm272, %v658, %v659
      %v661 = vrot.slane %v644, 1
      %v662 = vsel %vm272, %v659, %v661
      %v663 = vrot.slane %v645, 1
      %v664 = vsel %vm272, %v661, %v663
      %v665 = vrot.slane %v646, 1
      %v666 = vsel %vm272, %v663, %v665
      %v667 = vrot.slane %v647, 1
      %v668 = vsel %vm272, %v665, %v667
      %v669 = vrot.slane %v648, 1
      %v670 = vsel %vm272, %v667, %v669
      %v671 = vrot.slane %v649, 1
      %v672 = vsel %vm272, %v669, %v671
      %673 = vrot.lane.b32.xlu0 %v660, 16
      %v674 = vpop.permute.xlu0 %673
      %675 = vrot.lane.b32.xlu0 %v662, 16
      %v676 = vpop.permute.xlu0 %675
      %677 = vrot.lane.b32.xlu0 %v664, 16
      %v678 = vpop.permute.xlu0 %677
      %679 = vrot.lane.b32.xlu0 %v666, 16
      %v680 = vpop.permute.xlu0 %679
      %681 = vrot.lane.b32.xlu0 %v668, 16
      %v682 = vpop.permute.xlu0 %681
      %683 = vrot.lane.b32.xlu0 %v670, 16
      %v684 = vpop.permute.xlu0 %683
      %685 = vrot.lane.b32.xlu0 %v672, 16
      %v686 = vpop.permute.xlu0 %685
      %687 = vrot.lane.b32.xlu0 %v671, 16
      %v688 = vpop.permute.xlu0 %687
      %v697 = vsel %vm312, %v642, %v674
      %v698 = vsel %vm312, %v643, %v676
      %v699 = vsel %vm312, %v644, %v678
      %v700 = vsel %vm312, %v645, %v680
      %v701 = vsel %vm312, %v646, %v682
      %v702 = vsel %vm312, %v647, %v684
      %v703 = vsel %vm312, %v648, %v686
      %v704 = vsel %vm312, %v649, %v688
      %s705 = scalar_lea.vmem %s249, 448
      %v706 = vld [vmem:[%s705] sm:$0xff]
      %v707 = vld [vmem:[%s705 + $0x8] sm:$0xff]
      %v708 = vld [vmem:[%s705 + $0x10] sm:$0xff]
      %v709 = vld [vmem:[%s705 + $0x18] sm:$0xff]
      %v710 = vld [vmem:[%s705 + $0x20] sm:$0xff]
      %v711 = vld [vmem:[%s705 + $0x28] sm:$0xff]
      %v712 = vld [vmem:[%s705 + $0x30] sm:$0xff]
      %v713 = vld [vmem:[%s705 + $0x38] sm:$0xff]
      %v722 = vrot.slane %v706, 1
      %v723 = vrot.slane %v707, 1
      %v724 = vsel %vm272, %v722, %v723
      %v725 = vrot.slane %v708, 1
      %v726 = vsel %vm272, %v723, %v725
      %v727 = vrot.slane %v709, 1
      %v728 = vsel %vm272, %v725, %v727
      %v729 = vrot.slane %v710, 1
      %v730 = vsel %vm272, %v727, %v729
      %v731 = vrot.slane %v711, 1
      %v732 = vsel %vm272, %v729, %v731
      %v733 = vrot.slane %v712, 1
      %v734 = vsel %vm272, %v731, %v733
      %v735 = vrot.slane %v713, 1
      %v736 = vsel %vm272, %v733, %v735
      %737 = vrot.lane.b32.xlu0 %v724, 16
      %v738 = vpop.permute.xlu0 %737
      %739 = vrot.lane.b32.xlu0 %v726, 16
      %v740 = vpop.permute.xlu0 %739
      %741 = vrot.lane.b32.xlu0 %v728, 16
      %v742 = vpop.permute.xlu0 %741
      %743 = vrot.lane.b32.xlu0 %v730, 16
      %v744 = vpop.permute.xlu0 %743
      %745 = vrot.lane.b32.xlu0 %v732, 16
      %v746 = vpop.permute.xlu0 %745
      %747 = vrot.lane.b32.xlu0 %v734, 16
      %v748 = vpop.permute.xlu0 %747
      %749 = vrot.lane.b32.xlu0 %v736, 16
      %v750 = vpop.permute.xlu0 %749
      %751 = vrot.lane.b32.xlu0 %v735, 16
      %v752 = vpop.permute.xlu0 %751
      %v761 = vsel %vm312, %v706, %v738
      %v762 = vsel %vm312, %v707, %v740
      %v763 = vsel %vm312, %v708, %v742
      %v764 = vsel %vm312, %v709, %v744
      %v765 = vsel %vm312, %v710, %v746
      %v766 = vsel %vm312, %v711, %v748
      %v767 = vsel %vm312, %v712, %v750
      %v768 = vsel %vm312, %v713, %v752
      %v777 = vrot.slane %v377, 1
      %v778 = vrot.slane %v378, 1
      %v779 = vsel %vm272, %v777, %v778
      %v780 = vrot.slane %v379, 1
      %v781 = vsel %vm272, %v778, %v780
      %v782 = vrot.slane %v380, 1
      %v783 = vsel %vm272, %v780, %v782
      %v784 = vrot.slane %v381, 1
      %v785 = vsel %vm272, %v782, %v784
      %v786 = vrot.slane %v382, 1
      %v787 = vsel %vm272, %v784, %v786
      %v788 = vrot.slane %v383, 1
      %v789 = vsel %vm272, %v786, %v788
      %v790 = vrot.slane %v384, 1
      %v791 = vsel %vm272, %v788, %v790
      %vm809 = vcmask 1045504
      %v810 = vrot.slane %v441, 2
      %v811 = vrot.slane %v442, 2
      %v812 = vsel %vm809, %v810, %v811
      %v813 = vrot.slane %v443, 2
      %v814 = vsel %vm809, %v811, %v813
      %v815 = vrot.slane %v444, 2
      %v816 = vsel %vm809, %v813, %v815
      %v817 = vrot.slane %v445, 2
      %v818 = vsel %vm809, %v815, %v817
      %v819 = vrot.slane %v446, 2
      %v820 = vsel %vm809, %v817, %v819
      %v821 = vrot.slane %v447, 2
      %v822 = vsel %vm809, %v819, %v821
      %v823 = vrot.slane %v448, 2
      %v824 = vsel %vm809, %v821, %v823
      %vm842 = vcmask 1044480
      %v843 = vrot.slane %v505, 3
      %v844 = vrot.slane %v506, 3
      %v845 = vsel %vm842, %v843, %v844
      %v846 = vrot.slane %v507, 3
      %v847 = vsel %vm842, %v844, %v846
      %v848 = vrot.slane %v508, 3
      %v849 = vsel %vm842, %v846, %v848
      %v850 = vrot.slane %v509, 3
      %v851 = vsel %vm842, %v848, %v850
      %v852 = vrot.slane %v510, 3
      %v853 = vsel %vm842, %v850, %v852
      %v854 = vrot.slane %v511, 3
      %v855 = vsel %vm842, %v852, %v854
      %v856 = vrot.slane %v512, 3
      %v857 = vsel %vm842, %v854, %v856
      %vm875 = vcmask 1043456
      %v876 = vrot.slane %v569, 4
      %v877 = vrot.slane %v570, 4
      %v878 = vsel %vm875, %v876, %v877
      %v879 = vrot.slane %v571, 4
      %v880 = vsel %vm875, %v877, %v879
      %v881 = vrot.slane %v572, 4
      %v882 = vsel %vm875, %v879, %v881
      %v883 = vrot.slane %v573, 4
      %v884 = vsel %vm875, %v881, %v883
      %v885 = vrot.slane %v574, 4
      %v886 = vsel %vm875, %v883, %v885
      %v887 = vrot.slane %v575, 4
      %v888 = vsel %vm875, %v885, %v887
      %v889 = vrot.slane %v576, 4
      %v890 = vsel %vm875, %v887, %v889
      %vm908 = vcmask 1042432
      %v909 = vrot.slane %v633, 5
      %v910 = vrot.slane %v634, 5
      %v911 = vsel %vm908, %v909, %v910
      %v912 = vrot.slane %v635, 5
      %v913 = vsel %vm908, %v910, %v912
      %v914 = vrot.slane %v636, 5
      %v915 = vsel %vm908, %v912, %v914
      %v916 = vrot.slane %v637, 5
      %v917 = vsel %vm908, %v914, %v916
      %v918 = vrot.slane %v638, 5
      %v919 = vsel %vm908, %v916, %v918
      %v920 = vrot.slane %v639, 5
      %v921 = vsel %vm908, %v918, %v920
      %v922 = vrot.slane %v640, 5
      %v923 = vsel %vm908, %v920, %v922
      %vm941 = vcmask 1041408
      %v942 = vrot.slane %v697, 6
      %v943 = vrot.slane %v698, 6
      %v944 = vsel %vm941, %v942, %v943
      %v945 = vrot.slane %v699, 6
      %v946 = vsel %vm941, %v943, %v945
      %v947 = vrot.slane %v700, 6
      %v948 = vsel %vm941, %v945, %v947
      %v949 = vrot.slane %v701, 6
      %v950 = vsel %vm941, %v947, %v949
      %v951 = vrot.slane %v702, 6
      %v952 = vsel %vm941, %v949, %v951
      %v953 = vrot.slane %v703, 6
      %v954 = vsel %vm941, %v951, %v953
      %v955 = vrot.slane %v704, 6
      %v956 = vsel %vm941, %v953, %v955
      %vm974 = vcmask 1040384
      %v975 = vrot.slane %v761, 7
      %v976 = vrot.slane %v762, 7
      %v977 = vsel %vm974, %v975, %v976
      %v978 = vrot.slane %v763, 7
      %v979 = vsel %vm974, %v976, %v978
      %v980 = vrot.slane %v764, 7
      %v981 = vsel %vm974, %v978, %v980
      %v982 = vrot.slane %v765, 7
      %v983 = vsel %vm974, %v980, %v982
      %v984 = vrot.slane %v766, 7
      %v985 = vsel %vm974, %v982, %v984
      %v986 = vrot.slane %v767, 7
      %v987 = vsel %vm974, %v984, %v986
      %v988 = vrot.slane %v768, 7
      %v989 = vsel %vm974, %v986, %v988
      %v998 = vsel %vm272, %v320, %v777
      %v999 = vsel %vm809, %v790, %v810
      %v1000 = vsel %vm842, %v823, %v843
      %v1001 = vsel %vm875, %v856, %v876
      %v1002 = vsel %vm908, %v889, %v909
      %v1003 = vsel %vm941, %v922, %v942
      %v1004 = vsel %vm974, %v955, %v975
      %v1005 = vpack.c.bf16 %v314, %v313
      %v1006 = vpack.c.bf16 %v316, %v315
      %v1007 = vpack.c.bf16 %v318, %v317
      %v1008 = vpack.c.bf16 %v998, %v319
      %v1009 = vpack.c.bf16 %v781, %v779
      %v1010 = vpack.c.bf16 %v785, %v783
      %v1011 = vpack.c.bf16 %v789, %v787
      %v1012 = vpack.c.bf16 %v999, %v791
      %v1013 = vpack.c.bf16 %v814, %v812
      %v1014 = vpack.c.bf16 %v818, %v816
      %v1015 = vpack.c.bf16 %v822, %v820
      %v1016 = vpack.c.bf16 %v1000, %v824
      %v1017 = vpack.c.bf16 %v847, %v845
      %v1018 = vpack.c.bf16 %v851, %v849
      %v1019 = vpack.c.bf16 %v855, %v853
      %v1020 = vpack.c.bf16 %v1001, %v857
      %v1021 = vpack.c.bf16 %v880, %v878
      %v1022 = vpack.c.bf16 %v884, %v882
      %v1023 = vpack.c.bf16 %v888, %v886
      %v1024 = vpack.c.bf16 %v1002, %v890
      %v1025 = vpack.c.bf16 %v913, %v911
      %v1026 = vpack.c.bf16 %v917, %v915
      %v1027 = vpack.c.bf16 %v921, %v919
      %v1028 = vpack.c.bf16 %v1003, %v923
      %v1029 = vpack.c.bf16 %v946, %v944
      %v1030 = vpack.c.bf16 %v950, %v948
      %v1031 = vpack.c.bf16 %v954, %v952
      %v1032 = vpack.c.bf16 %v1004, %v956
      %v1033 = vpack.c.bf16 %v979, %v977
      %v1034 = vpack.c.bf16 %v983, %v981
      %v1035 = vpack.c.bf16 %v987, %v985
      %v1036 = vpack.c.bf16 %v989, %v989
      %v1037 = vld [vmem:[%s1] sm:$0xf]
      %v1038 = vld [vmem:[%s1 + $0x4] sm:$0xf]
      %v1039 = vld [vmem:[%s1 + $0x8] sm:$0xf]
      %v1040 = vld [vmem:[%s1 + $0xc] sm:$0xf]
      %v1041 = vld [vmem:[%s3] sm:$0x1]
      %v1043 = vlaneseq
      %v1044 = vshrl.u32 %v1043, 7
      %v1045 = vsub.s32 0, %v1044
      %v1046 = vrot.slane %v1041, %v1045
      %v1052 = vunpack.c.l.b16 %v1037
      %v1053 = vunpack.c.l.b16 %v1038
      %v1054 = vunpack.c.l.b16 %v1039
      %v1055 = vunpack.c.l.b16 %v1040
      %v1056 = vpack.c.b16 %v1053, %v1052
      %v1057 = vpack.c.b16 %v1055, %v1054
      %vm1060 = vcmask 261120
      %v1062 = vsel %vm1060, %v1005, 0
      %v1065 = vsel %vm1060, %v1006, 0
      %v1068 = vsel %vm1060, %v1007, 0
      %v1071 = vsel %vm1060, %v1008, 0
      %v1074 = vsel %vm1060, %v1009, 0
      %v1077 = vsel %vm1060, %v1010, 0
      %v1080 = vsel %vm1060, %v1011, 0
      %v1083 = vsel %vm1060, %v1012, 0
      %v1086 = vsel %vm1060, %v1013, 0
      %v1089 = vsel %vm1060, %v1014, 0
      %v1092 = vsel %vm1060, %v1015, 0
      %v1095 = vsel %vm1060, %v1016, 0
      %v1098 = vsel %vm1060, %v1017, 0
      %v1101 = vsel %vm1060, %v1018, 0
      %v1104 = vsel %vm1060, %v1019, 0
      %v1107 = vsel %vm1060, %v1020, 0
      %v1110 = vsel %vm1060, %v1021, 0
      %v1113 = vsel %vm1060, %v1022, 0
      %v1116 = vsel %vm1060, %v1023, 0
      %v1119 = vsel %vm1060, %v1024, 0
      %v1122 = vsel %vm1060, %v1025, 0
      %v1125 = vsel %vm1060, %v1026, 0
      %v1128 = vsel %vm1060, %v1027, 0
      %v1131 = vsel %vm1060, %v1028, 0
      %v1134 = vsel %vm1060, %v1029, 0
      %v1137 = vsel %vm1060, %v1030, 0
      %v1140 = vsel %vm1060, %v1031, 0
      %v1143 = vsel %vm1060, %v1032, 0
      %v1146 = vsel %vm1060, %v1033, 0
      %v1149 = vsel %vm1060, %v1034, 0
      %v1152 = vsel %vm1060, %v1035, 0
      %v1155 = vsel %vm1060, %v1036, 0
      %1157 = vmatprep.subr.bf16.mxu0 0
      %1158 = vmatpush1.bf16.msra.mxu0 0
      %1159 = vmatprep.subr.bf16.mxu0 0
      %1160 = vmatpush1.bf16.msra.mxu0 0
      %1161 = vmatprep.subr.bf16.mxu0 0
      %1162 = vmatpush1.bf16.msra.mxu0 0
      %1163 = vmatprep.subr.bf16.mxu0 0
      %1164 = vmatpush1.bf16.msra.mxu0 0
      %1165 = vmatprep.subr.bf16.mxu0 0
      %1166 = vmatpush1.bf16.msra.mxu0 0
      %1167 = vmatprep.subr.bf16.mxu0 0
      %1168 = vmatpush1.bf16.msra.mxu0 0
      %1169 = vmatprep.subr.bf16.mxu0 0
      %1170 = vmatpush1.bf16.msra.mxu0 %v1057
      %1171 = vmatprep.subr.bf16.mxu0 0
      %1172 = vmatpush1.bf16.msra.mxu0 %v1056
      %1173 = vmatprep.subr.bf16.mxu0 0
      %1174 = vmatpush2.bf16.msra.mxu0 0
      %1175 = vmatprep.subr.bf16.mxu0 0
      %1176 = vmatpush2.bf16.msra.mxu0 0
      %1177 = vmatprep.subr.bf16.mxu0 0
      %1178 = vmatpush2.bf16.msra.mxu0 0
      %1179 = vmatprep.subr.bf16.mxu0 0
      %1180 = vmatpush2.bf16.msra.mxu0 0
      %1181 = vmatprep.subr.bf16.mxu0 0
      %1182 = vmatpush2.bf16.msra.mxu0 0
      %1183 = vmatprep.subr.bf16.mxu0 0
      %1184 = vmatpush2.bf16.msra.mxu0 0
      %1185 = vmatprep.subr.bf16.mxu0 0
      %1186 = vmatpush2.bf16.msra.mxu0 0
      %1187 = vmatprep.subr.bf16.mxu0 0
      %1188 = vmatpush2.bf16.msra.mxu0 0
      %1189 = vmatprep.mubr.bf16.mxu0 0
      %1190 = vmatmul.mubr.bf16.gmra.mxu0 %v1062
      %v1191 = vpop.f32.mrf.mxu0
      %v1192 = vadd.f32 %v1046, %v1191
      %v1193 = vpop.f32.mrf.mxu0
      %v1194 = vpop.f32.mrf.mxu0
      %v1195 = vadd.f32 %v1046, %v1194
      %v1196 = vpop.f32.mrf.mxu0
      %1197 = vmatprep.mubr.bf16.mxu0 0
      %1198 = vmatmul.mubr.bf16.gmra.mxu0 %v1065
      %v1199 = vpop.f32.mrf.mxu0
      %v1200 = vadd.f32 %v1046, %v1199
      %v1201 = vpop.f32.mrf.mxu0
      %v1202 = vpop.f32.mrf.mxu0
      %v1203 = vadd.f32 %v1046, %v1202
      %v1204 = vpop.f32.mrf.mxu0
      %1205 = vmatprep.mubr.bf16.mxu0 0
      %1206 = vmatmul.mubr.bf16.gmra.mxu0 %v1068
      %v1207 = vpop.f32.mrf.mxu0
      %v1208 = vadd.f32 %v1046, %v1207
      %v1209 = vpop.f32.mrf.mxu0
      %v1210 = vpop.f32.mrf.mxu0
      %v1211 = vadd.f32 %v1046, %v1210
      %v1212 = vpop.f32.mrf.mxu0
      %1213 = vmatprep.mubr.bf16.mxu0 0
      %1214 = vmatmul.mubr.bf16.gmra.mxu0 %v1071
      %v1215 = vpop.f32.mrf.mxu0
      %v1216 = vadd.f32 %v1046, %v1215
      %v1217 = vpop.f32.mrf.mxu0
      %v1218 = vpop.f32.mrf.mxu0
      %v1219 = vadd.f32 %v1046, %v1218
      %v1220 = vpop.f32.mrf.mxu0
      %1221 = vmatprep.mubr.bf16.mxu0 0
      %1222 = vmatmul.mubr.bf16.gmra.mxu0 %v1074
      %v1223 = vpop.f32.mrf.mxu0
      %v1224 = vadd.f32 %v1046, %v1223
      %v1225 = vpop.f32.mrf.mxu0
      %v1226 = vpop.f32.mrf.mxu0
      %v1227 = vadd.f32 %v1046, %v1226
      %v1228 = vpop.f32.mrf.mxu0
      %1229 = vmatprep.mubr.bf16.mxu0 0
      %1230 = vmatmul.mubr.bf16.gmra.mxu0 %v1077
      %v1231 = vpop.f32.mrf.mxu0
      %v1232 = vadd.f32 %v1046, %v1231
      %v1233 = vpop.f32.mrf.mxu0
      %v1234 = vpop.f32.mrf.mxu0
      %v1235 = vadd.f32 %v1046, %v1234
      %v1236 = vpop.f32.mrf.mxu0
      %1237 = vmatprep.mubr.bf16.mxu0 0
      %1238 = vmatmul.mubr.bf16.gmra.mxu0 %v1080
      %v1239 = vpop.f32.mrf.mxu0
      %v1240 = vadd.f32 %v1046, %v1239
      %v1241 = vpop.f32.mrf.mxu0
      %v1242 = vpop.f32.mrf.mxu0
      %v1243 = vadd.f32 %v1046, %v1242
      %v1244 = vpop.f32.mrf.mxu0
      %1245 = vmatprep.mubr.bf16.mxu0 0
      %1246 = vmatmul.mubr.bf16.gmra.mxu0 %v1083
      %v1247 = vpop.f32.mrf.mxu0
      %v1248 = vadd.f32 %v1046, %v1247
      %v1249 = vpop.f32.mrf.mxu0
      %v1250 = vpop.f32.mrf.mxu0
      %v1251 = vadd.f32 %v1046, %v1250
      %v1252 = vpop.f32.mrf.mxu0
      %1253 = vmatprep.mubr.bf16.mxu0 0
      %1254 = vmatmul.mubr.bf16.gmra.mxu0 %v1086
      %v1255 = vpop.f32.mrf.mxu0
      %v1256 = vadd.f32 %v1046, %v1255
      %v1257 = vpop.f32.mrf.mxu0
      %v1258 = vpop.f32.mrf.mxu0
      %v1259 = vadd.f32 %v1046, %v1258
      %v1260 = vpop.f32.mrf.mxu0
      %1261 = vmatprep.mubr.bf16.mxu0 0
      %1262 = vmatmul.mubr.bf16.gmra.mxu0 %v1089
      %v1263 = vpop.f32.mrf.mxu0
      %v1264 = vadd.f32 %v1046, %v1263
      %v1265 = vpop.f32.mrf.mxu0
      %v1266 = vpop.f32.mrf.mxu0
      %v1267 = vadd.f32 %v1046, %v1266
      %v1268 = vpop.f32.mrf.mxu0
      %1269 = vmatprep.mubr.bf16.mxu0 0
      %1270 = vmatmul.mubr.bf16.gmra.mxu0 %v1092
      %v1271 = vpop.f32.mrf.mxu0
      %v1272 = vadd.f32 %v1046, %v1271
      %v1273 = vpop.f32.mrf.mxu0
      %v1274 = vpop.f32.mrf.mxu0
      %v1275 = vadd.f32 %v1046, %v1274
      %v1276 = vpop.f32.mrf.mxu0
      %1277 = vmatprep.mubr.bf16.mxu0 0
      %1278 = vmatmul.mubr.bf16.gmra.mxu0 %v1095
      %v1279 = vpop.f32.mrf.mxu0
      %v1280 = vadd.f32 %v1046, %v1279
      %v1281 = vpop.f32.mrf.mxu0
      %v1282 = vpop.f32.mrf.mxu0
      %v1283 = vadd.f32 %v1046, %v1282
      %v1284 = vpop.f32.mrf.mxu0
      %1285 = vmatprep.mubr.bf16.mxu0 0
      %1286 = vmatmul.mubr.bf16.gmra.mxu0 %v1098
      %v1287 = vpop.f32.mrf.mxu0
      %v1288 = vadd.f32 %v1046, %v1287
      %v1289 = vpop.f32.mrf.mxu0
      %v1290 = vpop.f32.mrf.mxu0
      %v1291 = vadd.f32 %v1046, %v1290
      %v1292 = vpop.f32.mrf.mxu0
      %1293 = vmatprep.mubr.bf16.mxu0 0
      %1294 = vmatmul.mubr.bf16.gmra.mxu0 %v1101
      %v1295 = vpop.f32.mrf.mxu0
      %v1296 = vadd.f32 %v1046, %v1295
      %v1297 = vpop.f32.mrf.mxu0
      %v1298 = vpop.f32.mrf.mxu0
      %v1299 = vadd.f32 %v1046, %v1298
      %v1300 = vpop.f32.mrf.mxu0
      %1301 = vmatprep.mubr.bf16.mxu0 0
      %1302 = vmatmul.mubr.bf16.gmra.mxu0 %v1104
      %v1303 = vpop.f32.mrf.mxu0
      %v1304 = vadd.f32 %v1046, %v1303
      %v1305 = vpop.f32.mrf.mxu0
      %v1306 = vpop.f32.mrf.mxu0
      %v1307 = vadd.f32 %v1046, %v1306
      %v1308 = vpop.f32.mrf.mxu0
      %1309 = vmatprep.mubr.bf16.mxu0 0
      %1310 = vmatmul.mubr.bf16.gmra.mxu0 %v1107
      %v1311 = vpop.f32.mrf.mxu0
      %v1312 = vadd.f32 %v1046, %v1311
      %v1313 = vpop.f32.mrf.mxu0
      %v1314 = vpop.f32.mrf.mxu0
      %v1315 = vadd.f32 %v1046, %v1314
      %v1316 = vpop.f32.mrf.mxu0
      %1317 = vmatprep.mubr.bf16.mxu0 0
      %1318 = vmatmul.mubr.bf16.gmra.mxu0 %v1110
      %v1319 = vpop.f32.mrf.mxu0
      %v1320 = vadd.f32 %v1046, %v1319
      %v1321 = vpop.f32.mrf.mxu0
      %v1322 = vpop.f32.mrf.mxu0
      %v1323 = vadd.f32 %v1046, %v1322
      %v1324 = vpop.f32.mrf.mxu0
      %1325 = vmatprep.mubr.bf16.mxu0 0
      %1326 = vmatmul.mubr.bf16.gmra.mxu0 %v1113
      %v1327 = vpop.f32.mrf.mxu0
      %v1328 = vadd.f32 %v1046, %v1327
      %v1329 = vpop.f32.mrf.mxu0
      %v1330 = vpop.f32.mrf.mxu0
      %v1331 = vadd.f32 %v1046, %v1330
      %v1332 = vpop.f32.mrf.mxu0
      %1333 = vmatprep.mubr.bf16.mxu0 0
      %1334 = vmatmul.mubr.bf16.gmra.mxu0 %v1116
      %v1335 = vpop.f32.mrf.mxu0
      %v1336 = vadd.f32 %v1046, %v1335
      %v1337 = vpop.f32.mrf.mxu0
      %v1338 = vpop.f32.mrf.mxu0
      %v1339 = vadd.f32 %v1046, %v1338
      %v1340 = vpop.f32.mrf.mxu0
      %1341 = vmatprep.mubr.bf16.mxu0 0
      %1342 = vmatmul.mubr.bf16.gmra.mxu0 %v1119
      %v1343 = vpop.f32.mrf.mxu0
      %v1344 = vadd.f32 %v1046, %v1343
      %v1345 = vpop.f32.mrf.mxu0
      %v1346 = vpop.f32.mrf.mxu0
      %v1347 = vadd.f32 %v1046, %v1346
      %v1348 = vpop.f32.mrf.mxu0
      %1349 = vmatprep.mubr.bf16.mxu0 0
      %1350 = vmatmul.mubr.bf16.gmra.mxu0 %v1122
      %v1351 = vpop.f32.mrf.mxu0
      %v1352 = vadd.f32 %v1046, %v1351
      %v1353 = vpop.f32.mrf.mxu0
      %v1354 = vpop.f32.mrf.mxu0
      %v1355 = vadd.f32 %v1046, %v1354
      %v1356 = vpop.f32.mrf.mxu0
      %1357 = vmatprep.mubr.bf16.mxu0 0
      %1358 = vmatmul.mubr.bf16.gmra.mxu0 %v1125
      %v1359 = vpop.f32.mrf.mxu0
      %v1360 = vadd.f32 %v1046, %v1359
      %v1361 = vpop.f32.mrf.mxu0
      %v1362 = vpop.f32.mrf.mxu0
      %v1363 = vadd.f32 %v1046, %v1362
      %v1364 = vpop.f32.mrf.mxu0
      %1365 = vmatprep.mubr.bf16.mxu0 0
      %1366 = vmatmul.mubr.bf16.gmra.mxu0 %v1128
      %v1367 = vpop.f32.mrf.mxu0
      %v1368 = vadd.f32 %v1046, %v1367
      %v1369 = vpop.f32.mrf.mxu0
      %v1370 = vpop.f32.mrf.mxu0
      %v1371 = vadd.f32 %v1046, %v1370
      %v1372 = vpop.f32.mrf.mxu0
      %1373 = vmatprep.mubr.bf16.mxu0 0
      %1374 = vmatmul.mubr.bf16.gmra.mxu0 %v1131
      %v1375 = vpop.f32.mrf.mxu0
      %v1376 = vadd.f32 %v1046, %v1375
      %v1377 = vpop.f32.mrf.mxu0
      %v1378 = vpop.f32.mrf.mxu0
      %v1379 = vadd.f32 %v1046, %v1378
      %v1380 = vpop.f32.mrf.mxu0
      %1381 = vmatprep.mubr.bf16.mxu0 0
      %1382 = vmatmul.mubr.bf16.gmra.mxu0 %v1134
      %v1383 = vpop.f32.mrf.mxu0
      %v1384 = vadd.f32 %v1046, %v1383
      %v1385 = vpop.f32.mrf.mxu0
      %v1386 = vpop.f32.mrf.mxu0
      %v1387 = vadd.f32 %v1046, %v1386
      %v1388 = vpop.f32.mrf.mxu0
      %1389 = vmatprep.mubr.bf16.mxu0 0
      %1390 = vmatmul.mubr.bf16.gmra.mxu0 %v1137
      %v1391 = vpop.f32.mrf.mxu0
      %v1392 = vadd.f32 %v1046, %v1391
      %v1393 = vpop.f32.mrf.mxu0
      %v1394 = vpop.f32.mrf.mxu0
      %v1395 = vadd.f32 %v1046, %v1394
      %v1396 = vpop.f32.mrf.mxu0
      %1397 = vmatprep.mubr.bf16.mxu0 0
      %1398 = vmatmul.mubr.bf16.gmra.mxu0 %v1140
      %v1399 = vpop.f32.mrf.mxu0
      %v1400 = vadd.f32 %v1046, %v1399
      %v1401 = vpop.f32.mrf.mxu0
      %v1402 = vpop.f32.mrf.mxu0
      %v1403 = vadd.f32 %v1046, %v1402
      %v1404 = vpop.f32.mrf.mxu0
      %1405 = vmatprep.mubr.bf16.mxu0 0
      %1406 = vmatmul.mubr.bf16.gmra.mxu0 %v1143
      %v1407 = vpop.f32.mrf.mxu0
      %v1408 = vadd.f32 %v1046, %v1407
      %v1409 = vpop.f32.mrf.mxu0
      %v1410 = vpop.f32.mrf.mxu0
      %v1411 = vadd.f32 %v1046, %v1410
      %v1412 = vpop.f32.mrf.mxu0
      %1413 = vmatprep.mubr.bf16.mxu0 0
      %1414 = vmatmul.mubr.bf16.gmra.mxu0 %v1146
      %v1415 = vpop.f32.mrf.mxu0
      %v1416 = vadd.f32 %v1046, %v1415
      %v1417 = vpop.f32.mrf.mxu0
      %v1418 = vpop.f32.mrf.mxu0
      %v1419 = vadd.f32 %v1046, %v1418
      %v1420 = vpop.f32.mrf.mxu0
      %1421 = vmatprep.mubr.bf16.mxu0 0
      %1422 = vmatmul.mubr.bf16.gmra.mxu0 %v1149
      %v1423 = vpop.f32.mrf.mxu0
      %v1424 = vadd.f32 %v1046, %v1423
      %v1425 = vpop.f32.mrf.mxu0
      %v1426 = vpop.f32.mrf.mxu0
      %v1427 = vadd.f32 %v1046, %v1426
      %v1428 = vpop.f32.mrf.mxu0
      %1429 = vmatprep.mubr.bf16.mxu0 0
      %1430 = vmatmul.mubr.bf16.gmra.mxu0 %v1152
      %v1431 = vpop.f32.mrf.mxu0
      %v1432 = vadd.f32 %v1046, %v1431
      %v1433 = vpop.f32.mrf.mxu0
      %v1434 = vpop.f32.mrf.mxu0
      %v1435 = vadd.f32 %v1046, %v1434
      %v1436 = vpop.f32.mrf.mxu0
      %1437 = vmatprep.mubr.bf16.mxu0 0
      %1438 = vmatmul.mubr.bf16.gmra.mxu0 %v1155
      %v1439 = vpop.f32.mrf.mxu0
      %v1440 = vadd.f32 %v1046, %v1439
      %v1441 = vpop.f32.mrf.mxu0
      %v1442 = vpop.f32.mrf.mxu0
      %v1443 = vpop.f32.mrf.mxu0
      %1444 = vdwg.mxu0
      %v1445 = vmax.f32 %v1192, 0.0
      %v1446 = vmax.f32 %v1195, 0.0
      %v1447 = vmax.f32 %v1200, 0.0
      %v1448 = vmax.f32 %v1203, 0.0
      %v1449 = vmax.f32 %v1208, 0.0
      %v1450 = vmax.f32 %v1211, 0.0
      %v1451 = vmax.f32 %v1216, 0.0
      %v1452 = vmax.f32 %v1219, 0.0
      %v1453 = vmax.f32 %v1224, 0.0
      %v1454 = vmax.f32 %v1227, 0.0
      %v1455 = vmax.f32 %v1232, 0.0
      %v1456 = vmax.f32 %v1235, 0.0
      %v1457 = vmax.f32 %v1240, 0.0
      %v1458 = vmax.f32 %v1243, 0.0
      %v1459 = vmax.f32 %v1248, 0.0
      %v1460 = vmax.f32 %v1251, 0.0
      %v1461 = vmax.f32 %v1256, 0.0
      %v1462 = vmax.f32 %v1259, 0.0
      %v1463 = vmax.f32 %v1264, 0.0
      %v1464 = vmax.f32 %v1267, 0.0
      %v1465 = vmax.f32 %v1272, 0.0
      %v1466 = vmax.f32 %v1275, 0.0
      %v1467 = vmax.f32 %v1280, 0.0
      %v1468 = vmax.f32 %v1283, 0.0
      %v1469 = vmax.f32 %v1288, 0.0
      %v1470 = vmax.f32 %v1291, 0.0
      %v1471 = vmax.f32 %v1296, 0.0
      %v1472 = vmax.f32 %v1299, 0.0
      %v1473 = vmax.f32 %v1304, 0.0
      %v1474 = vmax.f32 %v1307, 0.0
      %v1475 = vmax.f32 %v1312, 0.0
      %v1476 = vmax.f32 %v1315, 0.0
      %v1477 = vmax.f32 %v1320, 0.0
      %v1478 = vmax.f32 %v1323, 0.0
      %v1479 = vmax.f32 %v1328, 0.0
      %v1480 = vmax.f32 %v1331, 0.0
      %v1481 = vmax.f32 %v1336, 0.0
      %v1482 = vmax.f32 %v1339, 0.0
      %v1483 = vmax.f32 %v1344, 0.0
      %v1484 = vmax.f32 %v1347, 0.0
      %v1485 = vmax.f32 %v1352, 0.0
      %v1486 = vmax.f32 %v1355, 0.0
      %v1487 = vmax.f32 %v1360, 0.0
      %v1488 = vmax.f32 %v1363, 0.0
      %v1489 = vmax.f32 %v1368, 0.0
      %v1490 = vmax.f32 %v1371, 0.0
      %v1491 = vmax.f32 %v1376, 0.0
      %v1492 = vmax.f32 %v1379, 0.0
      %v1493 = vmax.f32 %v1384, 0.0
      %v1494 = vmax.f32 %v1387, 0.0
      %v1495 = vmax.f32 %v1392, 0.0
      %v1496 = vmax.f32 %v1395, 0.0
      %v1497 = vmax.f32 %v1400, 0.0
      %v1498 = vmax.f32 %v1403, 0.0
      %v1499 = vmax.f32 %v1408, 0.0
      %v1500 = vmax.f32 %v1411, 0.0
      %v1501 = vmax.f32 %v1416, 0.0
      %v1502 = vmax.f32 %v1419, 0.0
      %v1503 = vmax.f32 %v1424, 0.0
      %v1504 = vmax.f32 %v1427, 0.0
      %v1505 = vmax.f32 %v1432, 0.0
      %v1506 = vmax.f32 %v1435, 0.0
      %v1507 = vmax.f32 %v1440, 0.0
      %v1516 = vrot.slane %v1445, 1
      %v1517 = vrot.slane %v1446, 1
      %v1518 = vsel %vm272, %v1516, %v1517
      %v1519 = vrot.slane %v1447, 1
      %v1520 = vsel %vm272, %v1517, %v1519
      %v1521 = vrot.slane %v1448, 1
      %v1522 = vsel %vm272, %v1519, %v1521
      %v1523 = vrot.slane %v1449, 1
      %v1524 = vsel %vm272, %v1521, %v1523
      %v1525 = vrot.slane %v1450, 1
      %v1526 = vsel %vm272, %v1523, %v1525
      %v1527 = vrot.slane %v1451, 1
      %v1528 = vsel %vm272, %v1525, %v1527
      %v1529 = vrot.slane %v1452, 1
      %v1530 = vsel %vm272, %v1527, %v1529
      %v1547 = vrot.slane %v1453, 1
      %v1548 = vrot.slane %v1454, 1
      %v1549 = vsel %vm272, %v1547, %v1548
      %v1550 = vrot.slane %v1455, 1
      %v1551 = vsel %vm272, %v1548, %v1550
      %v1552 = vrot.slane %v1456, 1
      %v1553 = vsel %vm272, %v1550, %v1552
      %v1554 = vrot.slane %v1457, 1
      %v1555 = vsel %vm272, %v1552, %v1554
      %v1556 = vrot.slane %v1458, 1
      %v1557 = vsel %vm272, %v1554, %v1556
      %v1558 = vrot.slane %v1459, 1
      %v1559 = vsel %vm272, %v1556, %v1558
      %v1560 = vrot.slane %v1460, 1
      %v1561 = vsel %vm272, %v1558, %v1560
      %v1570 = vrot.slane %v1461, 1
      %v1571 = vsel %vm272, %v1560, %v1570
      %v1572 = vrot.slane %v1462, 1
      %v1573 = vsel %vm272, %v1570, %v1572
      %v1574 = vrot.slane %v1463, 1
      %v1575 = vsel %vm272, %v1572, %v1574
      %v1576 = vrot.slane %v1464, 1
      %v1577 = vsel %vm272, %v1574, %v1576
      %v1578 = vrot.slane %v1465, 1
      %v1579 = vsel %vm272, %v1576, %v1578
      %v1580 = vrot.slane %v1466, 1
      %v1581 = vsel %vm272, %v1578, %v1580
      %v1582 = vrot.slane %v1467, 1
      %v1583 = vsel %vm272, %v1580, %v1582
      %v1584 = vrot.slane %v1468, 1
      %v1585 = vsel %vm272, %v1582, %v1584
      %v1594 = vrot.slane %v1469, 1
      %v1595 = vsel %vm272, %v1584, %v1594
      %v1596 = vrot.slane %v1470, 1
      %v1597 = vsel %vm272, %v1594, %v1596
      %v1598 = vrot.slane %v1471, 1
      %v1599 = vsel %vm272, %v1596, %v1598
      %v1600 = vrot.slane %v1472, 1
      %v1601 = vsel %vm272, %v1598, %v1600
      %v1602 = vrot.slane %v1473, 1
      %v1603 = vsel %vm272, %v1600, %v1602
      %v1604 = vrot.slane %v1474, 1
      %v1605 = vsel %vm272, %v1602, %v1604
      %v1606 = vrot.slane %v1475, 1
      %v1607 = vsel %vm272, %v1604, %v1606
      %v1608 = vrot.slane %v1476, 1
      %v1609 = vsel %vm272, %v1606, %v1608
      %v1618 = vrot.slane %v1477, 1
      %v1619 = vsel %vm272, %v1608, %v1618
      %v1620 = vrot.slane %v1478, 1
      %v1621 = vsel %vm272, %v1618, %v1620
      %v1622 = vrot.slane %v1479, 1
      %v1623 = vsel %vm272, %v1620, %v1622
      %v1624 = vrot.slane %v1480, 1
      %v1625 = vsel %vm272, %v1622, %v1624
      %v1626 = vrot.slane %v1481, 1
      %v1627 = vsel %vm272, %v1624, %v1626
      %v1628 = vrot.slane %v1482, 1
      %v1629 = vsel %vm272, %v1626, %v1628
      %v1630 = vrot.slane %v1483, 1
      %v1631 = vsel %vm272, %v1628, %v1630
      %v1632 = vrot.slane %v1484, 1
      %v1633 = vsel %vm272, %v1630, %v1632
      %v1641 = vrot.slane %v1485, 1
      %v1642 = vsel %vm272, %v1632, %v1641
      %v1643 = vrot.slane %v1486, 1
      %v1644 = vsel %vm272, %v1641, %v1643
      %v1645 = vrot.slane %v1487, 1
      %v1646 = vsel %vm272, %v1643, %v1645
      %v1647 = vrot.slane %v1488, 1
      %v1648 = vsel %vm272, %v1645, %v1647
      %v1649 = vrot.slane %v1489, 1
      %v1650 = vsel %vm272, %v1647, %v1649
      %v1651 = vrot.slane %v1490, 1
      %v1652 = vsel %vm272, %v1649, %v1651
      %v1653 = vrot.slane %v1491, 1
      %v1654 = vsel %vm272, %v1651, %v1653
      %v1663 = vrot.slane %v1492, 1
      %v1664 = vrot.slane %v1493, 1
      %v1665 = vsel %vm272, %v1663, %v1664
      %v1666 = vrot.slane %v1494, 1
      %v1667 = vsel %vm272, %v1664, %v1666
      %v1668 = vrot.slane %v1495, 1
      %v1669 = vsel %vm272, %v1666, %v1668
      %v1670 = vrot.slane %v1496, 1
      %v1671 = vsel %vm272, %v1668, %v1670
      %v1672 = vrot.slane %v1497, 1
      %v1673 = vsel %vm272, %v1670, %v1672
      %v1674 = vrot.slane %v1498, 1
      %v1675 = vsel %vm272, %v1672, %v1674
      %v1676 = vrot.slane %v1499, 1
      %v1677 = vsel %vm272, %v1674, %v1676
      %v1686 = vrot.slane %v1500, 1
      %v1687 = vrot.slane %v1501, 1
      %v1688 = vsel %vm272, %v1686, %v1687
      %v1689 = vrot.slane %v1502, 1
      %v1690 = vsel %vm272, %v1687, %v1689
      %v1691 = vrot.slane %v1503, 1
      %v1692 = vsel %vm272, %v1689, %v1691
      %v1693 = vrot.slane %v1504, 1
      %v1694 = vsel %vm272, %v1691, %v1693
      %v1695 = vrot.slane %v1505, 1
      %v1696 = vsel %vm272, %v1693, %v1695
      %v1697 = vrot.slane %v1506, 1
      %v1698 = vsel %vm272, %v1695, %v1697
      %v1699 = vrot.slane %v1507, 1
      %v1700 = vsel %vm272, %v1697, %v1699
      %v1701 = vrot.slane %v1452, 3
      %v1702 = vrot.slane %v1453, 3
      %v1703 = vsel %vm842, %v1701, %v1702
      %v1704 = vrot.slane %v1547, 3
      %v1705 = vrot.slane %v1549, 3
      %v1706 = vsel %vm842, %v1704, %v1705
      %v1707 = vrot.slane %v1454, 3
      %v1708 = vsel %vm842, %v1702, %v1707
      %v1709 = vrot.slane %v1551, 3
      %v1710 = vsel %vm842, %v1705, %v1709
      %v1711 = vrot.slane %v1455, 3
      %v1712 = vsel %vm842, %v1707, %v1711
      %v1713 = vrot.slane %v1553, 3
      %v1714 = vsel %vm842, %v1709, %v1713
      %v1715 = vrot.slane %v1456, 3
      %v1716 = vsel %vm842, %v1711, %v1715
      %v1717 = vrot.slane %v1555, 3
      %v1718 = vsel %vm842, %v1713, %v1717
      %v1719 = vrot.slane %v1457, 3
      %v1720 = vsel %vm842, %v1715, %v1719
      %v1721 = vrot.slane %v1557, 3
      %v1722 = vsel %vm842, %v1717, %v1721
      %v1723 = vrot.slane %v1458, 3
      %v1724 = vsel %vm842, %v1719, %v1723
      %v1725 = vrot.slane %v1559, 3
      %v1726 = vsel %vm842, %v1721, %v1725
      %v1727 = vrot.slane %v1459, 3
      %v1728 = vsel %vm842, %v1723, %v1727
      %v1729 = vrot.slane %v1561, 3
      %v1730 = vsel %vm842, %v1725, %v1729
      %v1731 = vrot.slane %v1460, 3
      %v1732 = vsel %vm842, %v1727, %v1731
      %v1733 = vrot.slane %v1560, 3
      %v1734 = vsel %vm842, %v1729, %v1733
      %v1751 = vrot.slane %v1460, 6
      %v1752 = vrot.slane %v1461, 6
      %v1753 = vsel %vm941, %v1751, %v1752
      %v1754 = vrot.slane %v1571, 6
      %v1755 = vrot.slane %v1573, 6
      %v1756 = vsel %vm941, %v1754, %v1755
      %v1757 = vrot.slane %v1462, 6
      %v1758 = vsel %vm941, %v1752, %v1757
      %v1759 = vrot.slane %v1575, 6
      %v1760 = vsel %vm941, %v1755, %v1759
      %v1761 = vrot.slane %v1463, 6
      %v1762 = vsel %vm941, %v1757, %v1761
      %v1763 = vrot.slane %v1577, 6
      %v1764 = vsel %vm941, %v1759, %v1763
      %v1765 = vrot.slane %v1464, 6
      %v1766 = vsel %vm941, %v1761, %v1765
      %v1767 = vrot.slane %v1579, 6
      %v1768 = vsel %vm941, %v1763, %v1767
      %v1769 = vrot.slane %v1465, 6
      %v1770 = vsel %vm941, %v1765, %v1769
      %v1771 = vrot.slane %v1581, 6
      %v1772 = vsel %vm941, %v1767, %v1771
      %v1773 = vrot.slane %v1466, 6
      %v1774 = vsel %vm941, %v1769, %v1773
      %v1775 = vrot.slane %v1583, 6
      %v1776 = vsel %vm941, %v1771, %v1775
      %v1777 = vrot.slane %v1467, 6
      %v1778 = vsel %vm941, %v1773, %v1777
      %v1779 = vrot.slane %v1585, 6
      %v1780 = vsel %vm941, %v1775, %v1779
      %v1781 = vrot.slane %v1468, 6
      %v1782 = vsel %vm941, %v1777, %v1781
      %v1783 = vrot.slane %v1584, 6
      %v1784 = vsel %vm941, %v1779, %v1783
      %v1801 = vrot.slane %v1595, 1
      %v1802 = vrot.slane %v1597, 1
      %v1803 = vsel %vm272, %v1801, %v1802
      %v1804 = vrot.slane %v1599, 1
      %v1805 = vsel %vm272, %v1802, %v1804
      %v1806 = vrot.slane %v1601, 1
      %v1807 = vsel %vm272, %v1804, %v1806
      %v1808 = vrot.slane %v1603, 1
      %v1809 = vsel %vm272, %v1806, %v1808
      %v1810 = vrot.slane %v1605, 1
      %v1811 = vsel %vm272, %v1808, %v1810
      %v1812 = vrot.slane %v1607, 1
      %v1813 = vsel %vm272, %v1810, %v1812
      %v1814 = vrot.slane %v1609, 1
      %v1815 = vsel %vm272, %v1812, %v1814
      %v1816 = vrot.slane %v1608, 1
      %v1817 = vsel %vm272, %v1814, %v1816
      %v1834 = vrot.slane %v1476, 4
      %v1835 = vrot.slane %v1477, 4
      %v1836 = vsel %vm875, %v1834, %v1835
      %v1837 = vrot.slane %v1619, 4
      %v1838 = vrot.slane %v1621, 4
      %v1839 = vsel %vm875, %v1837, %v1838
      %v1840 = vrot.slane %v1478, 4
      %v1841 = vsel %vm875, %v1835, %v1840
      %v1842 = vrot.slane %v1623, 4
      %v1843 = vsel %vm875, %v1838, %v1842
      %v1844 = vrot.slane %v1479, 4
      %v1845 = vsel %vm875, %v1840, %v1844
      %v1846 = vrot.slane %v1625, 4
      %v1847 = vsel %vm875, %v1842, %v1846
      %v1848 = vrot.slane %v1480, 4
      %v1849 = vsel %vm875, %v1844, %v1848
      %v1850 = vrot.slane %v1627, 4
      %v1851 = vsel %vm875, %v1846, %v1850
      %v1852 = vrot.slane %v1481, 4
      %v1853 = vsel %vm875, %v1848, %v1852
      %v1854 = vrot.slane %v1629, 4
      %v1855 = vsel %vm875, %v1850, %v1854
      %v1856 = vrot.slane %v1482, 4
      %v1857 = vsel %vm875, %v1852, %v1856
      %v1858 = vrot.slane %v1631, 4
      %v1859 = vsel %vm875, %v1854, %v1858
      %v1860 = vrot.slane %v1483, 4
      %v1861 = vsel %vm875, %v1856, %v1860
      %v1862 = vrot.slane %v1633, 4
      %v1863 = vsel %vm875, %v1858, %v1862
      %v1880 = vrot.slane %v1484, 7
      %v1881 = vrot.slane %v1642, 7
      %v1882 = vrot.slane %v1485, 7
      %v1883 = vsel %vm974, %v1880, %v1882
      %v1884 = vrot.slane %v1644, 7
      %v1885 = vsel %vm974, %v1881, %v1884
      %v1886 = vrot.slane %v1486, 7
      %v1887 = vsel %vm974, %v1882, %v1886
      %v1888 = vrot.slane %v1646, 7
      %v1889 = vsel %vm974, %v1884, %v1888
      %v1890 = vrot.slane %v1487, 7
      %v1891 = vsel %vm974, %v1886, %v1890
      %v1892 = vrot.slane %v1648, 7
      %v1893 = vsel %vm974, %v1888, %v1892
      %v1894 = vrot.slane %v1488, 7
      %v1895 = vsel %vm974, %v1890, %v1894
      %v1896 = vrot.slane %v1650, 7
      %v1897 = vsel %vm974, %v1892, %v1896
      %v1898 = vrot.slane %v1489, 7
      %v1899 = vsel %vm974, %v1894, %v1898
      %v1900 = vrot.slane %v1652, 7
      %v1901 = vsel %vm974, %v1896, %v1900
      %v1902 = vrot.slane %v1490, 7
      %v1903 = vsel %vm974, %v1898, %v1902
      %v1904 = vrot.slane %v1654, 7
      %v1905 = vsel %vm974, %v1900, %v1904
      %v1906 = vrot.slane %v1491, 7
      %v1907 = vsel %vm974, %v1902, %v1906
      %v1908 = vrot.slane %v1653, 7
      %v1909 = vsel %vm974, %v1904, %v1908
      %v1926 = vrot.slane %v1492, 2
      %v1927 = vrot.slane %v1493, 2
      %v1928 = vsel %vm809, %v1926, %v1927
      %v1929 = vrot.slane %v1665, 2
      %v1930 = vrot.slane %v1667, 2
      %v1931 = vsel %vm809, %v1929, %v1930
      %v1932 = vrot.slane %v1494, 2
      %v1933 = vsel %vm809, %v1927, %v1932
      %v1934 = vrot.slane %v1669, 2
      %v1935 = vsel %vm809, %v1930, %v1934
      %v1936 = vrot.slane %v1495, 2
      %v1937 = vsel %vm809, %v1932, %v1936
      %v1938 = vrot.slane %v1671, 2
      %v1939 = vsel %vm809, %v1934, %v1938
      %v1940 = vrot.slane %v1496, 2
      %v1941 = vsel %vm809, %v1936, %v1940
      %v1942 = vrot.slane %v1673, 2
      %v1943 = vsel %vm809, %v1938, %v1942
      %v1944 = vrot.slane %v1497, 2
      %v1945 = vsel %vm809, %v1940, %v1944
      %v1946 = vrot.slane %v1675, 2
      %v1947 = vsel %vm809, %v1942, %v1946
      %v1948 = vrot.slane %v1498, 2
      %v1949 = vsel %vm809, %v1944, %v1948
      %v1950 = vrot.slane %v1677, 2
      %v1951 = vsel %vm809, %v1946, %v1950
      %v1952 = vrot.slane %v1499, 2
      %v1953 = vsel %vm809, %v1948, %v1952
      %v1954 = vrot.slane %v1676, 2
      %v1955 = vsel %vm809, %v1950, %v1954
      %v1972 = vrot.slane %v1500, 5
      %v1973 = vrot.slane %v1688, 5
      %v1974 = vrot.slane %v1501, 5
      %v1975 = vsel %vm908, %v1972, %v1974
      %v1976 = vrot.slane %v1690, 5
      %v1977 = vsel %vm908, %v1973, %v1976
      %v1978 = vrot.slane %v1502, 5
      %v1979 = vsel %vm908, %v1974, %v1978
      %v1980 = vrot.slane %v1692, 5
      %v1981 = vsel %vm908, %v1976, %v1980
      %v1982 = vrot.slane %v1503, 5
      %v1983 = vsel %vm908, %v1978, %v1982
      %v1984 = vrot.slane %v1694, 5
      %v1985 = vsel %vm908, %v1980, %v1984
      %v1986 = vrot.slane %v1504, 5
      %v1987 = vsel %vm908, %v1982, %v1986
      %v1988 = vrot.slane %v1696, 5
      %v1989 = vsel %vm908, %v1984, %v1988
      %v1990 = vrot.slane %v1505, 5
      %v1991 = vsel %vm908, %v1986, %v1990
      %v1992 = vrot.slane %v1698, 5
      %v1993 = vsel %vm908, %v1988, %v1992
      %v1994 = vrot.slane %v1506, 5
      %v1995 = vsel %vm908, %v1990, %v1994
      %v1996 = vrot.slane %v1700, 5
      %v1997 = vsel %vm908, %v1992, %v1996
      %v1998 = vrot.slane %v1507, 5
      %v1999 = vsel %vm908, %v1994, %v1998
      %v2000 = vrot.slane %v1699, 5
      %v2001 = vsel %vm908, %v1996, %v2000
      %v2018 = vsel %vm875, %v1452, %v1703
      %v2019 = vsel %vm875, %v1529, %v1706
      %v2020 = vsel %vm875, %v1782, %v1595
      %v2021 = vsel %vm875, %v1784, %v1803
      %v2022 = vsel %vm875, %v1860, %v1880
      %v2023 = vsel %vm875, %v1862, %v1881
      %v2024 = vsel %vm875, %v1952, %v1972
      %v2025 = vsel %vm875, %v1954, %v1973
      %v2026 = vpack.c.bf16 %v1446, %v1445
      %v2027 = vpack.c.bf16 %v1520, %v1518
      %v2028 = vpack.c.bf16 %v1448, %v1447
      %v2029 = vpack.c.bf16 %v1524, %v1522
      %v2030 = vpack.c.bf16 %v1450, %v1449
      %v2031 = vpack.c.bf16 %v1528, %v1526
      %v2032 = vpack.c.bf16 %v2018, %v1451
      %v2033 = vpack.c.bf16 %v2019, %v1530
      %v2034 = vpack.c.bf16 %v1712, %v1708
      %v2035 = vpack.c.bf16 %v1714, %v1710
      %v2036 = vpack.c.bf16 %v1720, %v1716
      %v2037 = vpack.c.bf16 %v1722, %v1718
      %v2038 = vpack.c.bf16 %v1728, %v1724
      %v2039 = vpack.c.bf16 %v1730, %v1726
      %v2040 = vpack.c.bf16 %v1753, %v1732
      %v2041 = vpack.c.bf16 %v1756, %v1734
      %v2042 = vpack.c.bf16 %v1762, %v1758
      %v2043 = vpack.c.bf16 %v1764, %v1760
      %v2044 = vpack.c.bf16 %v1770, %v1766
      %v2045 = vpack.c.bf16 %v1772, %v1768
      %v2046 = vpack.c.bf16 %v1778, %v1774
      %v2047 = vpack.c.bf16 %v1780, %v1776
      %v2048 = vpack.c.bf16 %v1597, %v2020
      %v2049 = vpack.c.bf16 %v1805, %v2021
      %v2050 = vpack.c.bf16 %v1601, %v1599
      %v2051 = vpack.c.bf16 %v1809, %v1807
      %v2052 = vpack.c.bf16 %v1605, %v1603
      %v2053 = vpack.c.bf16 %v1813, %v1811
      %v2054 = vpack.c.bf16 %v1609, %v1607
      %v2055 = vpack.c.bf16 %v1817, %v1815
      %v2056 = vpack.c.bf16 %v1841, %v1836
      %v2057 = vpack.c.bf16 %v1843, %v1839
      %v2058 = vpack.c.bf16 %v1849, %v1845
      %v2059 = vpack.c.bf16 %v1851, %v1847
      %v2060 = vpack.c.bf16 %v1857, %v1853
      %v2061 = vpack.c.bf16 %v1859, %v1855
      %v2062 = vpack.c.bf16 %v2022, %v1861
      %v2063 = vpack.c.bf16 %v2023, %v1863
      %v2064 = vpack.c.bf16 %v1887, %v1883
      %v2065 = vpack.c.bf16 %v1889, %v1885
      %v2066 = vpack.c.bf16 %v1895, %v1891
      %v2067 = vpack.c.bf16 %v1897, %v1893
      %v2068 = vpack.c.bf16 %v1903, %v1899
      %v2069 = vpack.c.bf16 %v1905, %v1901
      %v2070 = vpack.c.bf16 %v1928, %v1907
      %v2071 = vpack.c.bf16 %v1931, %v1909
      %v2072 = vpack.c.bf16 %v1937, %v1933
      %v2073 = vpack.c.bf16 %v1939, %v1935
      %v2074 = vpack.c.bf16 %v1945, %v1941
      %v2075 = vpack.c.bf16 %v1947, %v1943
      %v2076 = vpack.c.bf16 %v1953, %v1949
      %v2077 = vpack.c.bf16 %v1955, %v1951
      %v2078 = vpack.c.bf16 %v1975, %v2024
      %v2079 = vpack.c.bf16 %v1977, %v2025
      %v2080 = vpack.c.bf16 %v1983, %v1979
      %v2081 = vpack.c.bf16 %v1985, %v1981
      %v2082 = vpack.c.bf16 %v1991, %v1987
      %v2083 = vpack.c.bf16 %v1993, %v1989
      %v2084 = vpack.c.bf16 %v1999, %v1995
      %v2085 = vpack.c.bf16 %v2001, %v1997
      %v2086 = vld [vmem:[%s2] sm:$0xf]
      %v2087 = vld [vmem:[%s2 + $0x4] sm:$0xf]
      %v2088 = vld [vmem:[%s2 + $0x8] sm:$0xf]
      %v2089 = vld [vmem:[%s2 + $0xc] sm:$0xf]
      %v2090 = vld [vmem:[%s2 + $0x10] sm:$0xf]
      %v2091 = vld [vmem:[%s2 + $0x14] sm:$0xf]
      %v2092 = vld [vmem:[%s2 + $0x18] sm:$0xf]
      %v2093 = vld [vmem:[%s2 + $0x1c] sm:$0xf]
      %v2094 = vld [vmem:[%s2 + $0x20] sm:$0xf]
      %v2095 = vld [vmem:[%s2 + $0x24] sm:$0xf]
      %v2096 = vld [vmem:[%s2 + $0x28] sm:$0xf]
      %v2097 = vld [vmem:[%s2 + $0x2c] sm:$0xf]
      %v2098 = vld [vmem:[%s2 + $0x30] sm:$0xf]
      %v2099 = vld [vmem:[%s2 + $0x34] sm:$0xf]
      %v2100 = vld [vmem:[%s2 + $0x38] sm:$0xf]
      %v2101 = vld [vmem:[%s2 + $0x3c] sm:$0xf]
      %v2102 = vld [vmem:[%s2 + $0x40] sm:$0xf]
      %v2103 = vld [vmem:[%s2 + $0x44] sm:$0xf]
      %v2104 = vld [vmem:[%s2 + $0x48] sm:$0xf]
      %v2105 = vld [vmem:[%s2 + $0x4c] sm:$0xf]
      %v2106 = vld [vmem:[%s2 + $0x50] sm:$0xf]
      %v2107 = vld [vmem:[%s2 + $0x54] sm:$0xf]
      %v2108 = vld [vmem:[%s2 + $0x58] sm:$0xf]
      %v2109 = vld [vmem:[%s2 + $0x5c] sm:$0xf]
      %v2110 = vld [vmem:[%s2 + $0x60] sm:$0xf]
      %v2111 = vld [vmem:[%s2 + $0x64] sm:$0xf]
      %v2112 = vld [vmem:[%s2 + $0x68] sm:$0xf]
      %v2113 = vld [vmem:[%s2 + $0x6c] sm:$0xf]
      %v2114 = vld [vmem:[%s2 + $0x70] sm:$0xf]
      %v2115 = vld [vmem:[%s2 + $0x74] sm:$0xf]
      %v2116 = vld [vmem:[%s2 + $0x78] sm:$0xf]
      %v2117 = vld [vmem:[%s2 + $0x7c] sm:$0xf]
      %s2118 = scalar_lea.vmem %s3, 1
      %v2119 = vld [vmem:[%s2118] sm:$0x1]
      %v2121 = vlaneseq
      %v2122 = vshrl.u32 %v2121, 7
      %v2123 = vsub.s32 0, %v2122
      %v2124 = vrot.slane %v2119, %v2123
      %v2158 = vunpack.c.l.b16 %v2086
      %v2159 = vunpack.c.l.b16 %v2087
      %v2160 = vunpack.c.l.b16 %v2088
      %v2161 = vunpack.c.l.b16 %v2089
      %v2162 = vunpack.c.l.b16 %v2090
      %v2163 = vunpack.c.l.b16 %v2091
      %v2164 = vunpack.c.l.b16 %v2092
      %v2165 = vunpack.c.l.b16 %v2093
      %v2166 = vunpack.c.l.b16 %v2094
      %v2167 = vunpack.c.l.b16 %v2095
      %v2168 = vunpack.c.l.b16 %v2096
      %v2169 = vunpack.c.l.b16 %v2097
      %v2170 = vunpack.c.l.b16 %v2098
      %v2171 = vunpack.c.l.b16 %v2099
      %v2172 = vunpack.c.l.b16 %v2100
      %v2173 = vunpack.c.l.b16 %v2101
      %v2174 = vunpack.c.l.b16 %v2102
      %v2175 = vunpack.c.l.b16 %v2103
      %v2176 = vunpack.c.l.b16 %v2104
      %v2177 = vunpack.c.l.b16 %v2105
      %v2178 = vunpack.c.l.b16 %v2106
      %v2179 = vunpack.c.l.b16 %v2107
      %v2180 = vunpack.c.l.b16 %v2108
      %v2181 = vunpack.c.l.b16 %v2109
      %v2182 = vunpack.c.l.b16 %v2110
      %v2183 = vunpack.c.l.b16 %v2111
      %v2184 = vunpack.c.l.b16 %v2112
      %v2185 = vunpack.c.l.b16 %v2113
      %v2186 = vunpack.c.l.b16 %v2114
      %v2187 = vunpack.c.l.b16 %v2115
      %v2188 = vunpack.c.l.b16 %v2116
      %v2189 = vunpack.c.l.b16 %v2117
      %v2190 = vpack.c.b16 %v2159, %v2158
      %v2191 = vpack.c.b16 %v2161, %v2160
      %v2192 = vpack.c.b16 %v2163, %v2162
      %v2193 = vpack.c.b16 %v2165, %v2164
      %v2194 = vpack.c.b16 %v2167, %v2166
      %v2195 = vpack.c.b16 %v2169, %v2168
      %v2196 = vpack.c.b16 %v2171, %v2170
      %v2197 = vpack.c.b16 %v2173, %v2172
      %v2198 = vpack.c.b16 %v2175, %v2174
      %v2199 = vpack.c.b16 %v2177, %v2176
      %v2200 = vpack.c.b16 %v2179, %v2178
      %v2201 = vpack.c.b16 %v2181, %v2180
      %v2202 = vpack.c.b16 %v2183, %v2182
      %v2203 = vpack.c.b16 %v2185, %v2184
      %v2204 = vpack.c.b16 %v2187, %v2186
      %v2205 = vpack.c.b16 %v2189, %v2188
      %2222 = vmatprep.subr.bf16.mxu0 0
      %2223 = vmatpush1.bf16.msra.mxu0 %v2197
      %2224 = vmatprep.subr.bf16.mxu0 0
      %2225 = vmatpush1.bf16.msra.mxu0 %v2196
      %2226 = vmatprep.subr.bf16.mxu0 0
      %2227 = vmatpush1.bf16.msra.mxu0 %v2195
      %2228 = vmatprep.subr.bf16.mxu0 0
      %2229 = vmatpush1.bf16.msra.mxu0 %v2194
      %2230 = vmatprep.subr.bf16.mxu0 0
      %2231 = vmatpush1.bf16.msra.mxu0 %v2193
      %2232 = vmatprep.subr.bf16.mxu0 0
      %2233 = vmatpush1.bf16.msra.mxu0 %v2192
      %2234 = vmatprep.subr.bf16.mxu0 0
      %2235 = vmatpush1.bf16.msra.mxu0 %v2191
      %2236 = vmatprep.subr.bf16.mxu0 0
      %2237 = vmatpush1.bf16.msra.mxu0 %v2190
      %2238 = vmatprep.subr.bf16.mxu0 0
      %2239 = vmatpush2.bf16.msra.mxu0 %v2205
      %2240 = vmatprep.subr.bf16.mxu0 0
      %2241 = vmatpush2.bf16.msra.mxu0 %v2204
      %2242 = vmatprep.subr.bf16.mxu0 0
      %2243 = vmatpush2.bf16.msra.mxu0 %v2203
      %2244 = vmatprep.subr.bf16.mxu0 0
      %2245 = vmatpush2.bf16.msra.mxu0 %v2202
      %2246 = vmatprep.subr.bf16.mxu0 0
      %2247 = vmatpush2.bf16.msra.mxu0 %v2201
      %2248 = vmatprep.subr.bf16.mxu0 0
      %2249 = vmatpush2.bf16.msra.mxu0 %v2200
      %2250 = vmatprep.subr.bf16.mxu0 0
      %2251 = vmatpush2.bf16.msra.mxu0 %v2199
      %2252 = vmatprep.subr.bf16.mxu0 0
      %2253 = vmatpush2.bf16.msra.mxu0 %v2198
      %2254 = vmatprep.mubr.bf16.mxu0 %v2027
      %2255 = vmatmul.mubr.bf16.gmra.mxu0 %v2026
      %v2256 = vpop.f32.mrf.mxu0
      %v2257 = vadd.f32 %v2124, %v2256
      %v2258 = vpop.f32.mrf.mxu0
      %v2259 = vpop.f32.mrf.mxu0
      %v2260 = vadd.f32 %v2124, %v2259
      %v2261 = vpop.f32.mrf.mxu0
      %2262 = vmatprep.mubr.bf16.mxu0 %v2029
      %2263 = vmatmul.mubr.bf16.gmra.mxu0 %v2028
      %v2264 = vpop.f32.mrf.mxu0
      %v2265 = vadd.f32 %v2124, %v2264
      %v2266 = vpop.f32.mrf.mxu0
      %v2267 = vpop.f32.mrf.mxu0
      %v2268 = vadd.f32 %v2124, %v2267
      %v2269 = vpop.f32.mrf.mxu0
      %2270 = vmatprep.mubr.bf16.mxu0 %v2031
      %2271 = vmatmul.mubr.bf16.gmra.mxu0 %v2030
      %v2272 = vpop.f32.mrf.mxu0
      %v2273 = vadd.f32 %v2124, %v2272
      %v2274 = vpop.f32.mrf.mxu0
      %v2275 = vpop.f32.mrf.mxu0
      %v2276 = vadd.f32 %v2124, %v2275
      %v2277 = vpop.f32.mrf.mxu0
      %2278 = vmatprep.mubr.bf16.mxu0 %v2033
      %2279 = vmatmul.mubr.bf16.gmra.mxu0 %v2032
      %v2280 = vpop.f32.mrf.mxu0
      %v2281 = vadd.f32 %v2124, %v2280
      %v2282 = vpop.f32.mrf.mxu0
      %v2283 = vpop.f32.mrf.mxu0
      %v2284 = vadd.f32 %v2124, %v2283
      %v2285 = vpop.f32.mrf.mxu0
      %2286 = vmatprep.mubr.bf16.mxu0 %v2035
      %2287 = vmatmul.mubr.bf16.gmra.mxu0 %v2034
      %v2288 = vpop.f32.mrf.mxu0
      %v2289 = vadd.f32 %v2124, %v2288
      %v2290 = vpop.f32.mrf.mxu0
      %v2291 = vpop.f32.mrf.mxu0
      %v2292 = vadd.f32 %v2124, %v2291
      %v2293 = vpop.f32.mrf.mxu0
      %2294 = vmatprep.mubr.bf16.mxu0 %v2037
      %2295 = vmatmul.mubr.bf16.gmra.mxu0 %v2036
      %v2296 = vpop.f32.mrf.mxu0
      %v2297 = vadd.f32 %v2124, %v2296
      %v2298 = vpop.f32.mrf.mxu0
      %v2299 = vpop.f32.mrf.mxu0
      %v2300 = vadd.f32 %v2124, %v2299
      %v2301 = vpop.f32.mrf.mxu0
      %2302 = vmatprep.mubr.bf16.mxu0 %v2039
      %2303 = vmatmul.mubr.bf16.gmra.mxu0 %v2038
      %v2304 = vpop.f32.mrf.mxu0
      %v2305 = vadd.f32 %v2124, %v2304
      %v2306 = vpop.f32.mrf.mxu0
      %v2307 = vpop.f32.mrf.mxu0
      %v2308 = vadd.f32 %v2124, %v2307
      %v2309 = vpop.f32.mrf.mxu0
      %2310 = vmatprep.mubr.bf16.mxu0 %v2041
      %2311 = vmatmul.mubr.bf16.gmra.mxu0 %v2040
      %v2312 = vpop.f32.mrf.mxu0
      %v2313 = vadd.f32 %v2124, %v2312
      %v2314 = vpop.f32.mrf.mxu0
      %v2315 = vpop.f32.mrf.mxu0
      %v2316 = vadd.f32 %v2124, %v2315
      %v2317 = vpop.f32.mrf.mxu0
      %2318 = vmatprep.mubr.bf16.mxu0 %v2043
      %2319 = vmatmul.mubr.bf16.gmra.mxu0 %v2042
      %v2320 = vpop.f32.mrf.mxu0
      %v2321 = vadd.f32 %v2124, %v2320
      %v2322 = vpop.f32.mrf.mxu0
      %v2323 = vpop.f32.mrf.mxu0
      %v2324 = vadd.f32 %v2124, %v2323
      %v2325 = vpop.f32.mrf.mxu0
      %2326 = vmatprep.mubr.bf16.mxu0 %v2045
      %2327 = vmatmul.mubr.bf16.gmra.mxu0 %v2044
      %v2328 = vpop.f32.mrf.mxu0
      %v2329 = vadd.f32 %v2124, %v2328
      %v2330 = vpop.f32.mrf.mxu0
      %v2331 = vpop.f32.mrf.mxu0
      %v2332 = vadd.f32 %v2124, %v2331
      %v2333 = vpop.f32.mrf.mxu0
      %2334 = vmatprep.mubr.bf16.mxu0 %v2047
      %2335 = vmatmul.mubr.bf16.gmra.mxu0 %v2046
      %v2336 = vpop.f32.mrf.mxu0
      %v2337 = vadd.f32 %v2124, %v2336
      %v2338 = vpop.f32.mrf.mxu0
      %v2339 = vpop.f32.mrf.mxu0
      %v2340 = vadd.f32 %v2124, %v2339
      %v2341 = vpop.f32.mrf.mxu0
      %2342 = vmatprep.mubr.bf16.mxu0 %v2049
      %2343 = vmatmul.mubr.bf16.gmra.mxu0 %v2048
      %v2344 = vpop.f32.mrf.mxu0
      %v2345 = vadd.f32 %v2124, %v2344
      %v2346 = vpop.f32.mrf.mxu0
      %v2347 = vpop.f32.mrf.mxu0
      %v2348 = vadd.f32 %v2124, %v2347
      %v2349 = vpop.f32.mrf.mxu0
      %2350 = vmatprep.mubr.bf16.mxu0 %v2051
      %2351 = vmatmul.mubr.bf16.gmra.mxu0 %v2050
      %v2352 = vpop.f32.mrf.mxu0
      %v2353 = vadd.f32 %v2124, %v2352
      %v2354 = vpop.f32.mrf.mxu0
      %v2355 = vpop.f32.mrf.mxu0
      %v2356 = vadd.f32 %v2124, %v2355
      %v2357 = vpop.f32.mrf.mxu0
      %2358 = vmatprep.mubr.bf16.mxu0 %v2053
      %2359 = vmatmul.mubr.bf16.gmra.mxu0 %v2052
      %v2360 = vpop.f32.mrf.mxu0
      %v2361 = vadd.f32 %v2124, %v2360
      %v2362 = vpop.f32.mrf.mxu0
      %v2363 = vpop.f32.mrf.mxu0
      %v2364 = vadd.f32 %v2124, %v2363
      %v2365 = vpop.f32.mrf.mxu0
      %2366 = vmatprep.mubr.bf16.mxu0 %v2055
      %2367 = vmatmul.mubr.bf16.gmra.mxu0 %v2054
      %v2368 = vpop.f32.mrf.mxu0
      %v2369 = vadd.f32 %v2124, %v2368
      %v2370 = vpop.f32.mrf.mxu0
      %v2371 = vpop.f32.mrf.mxu0
      %v2372 = vadd.f32 %v2124, %v2371
      %v2373 = vpop.f32.mrf.mxu0
      %2374 = vmatprep.mubr.bf16.mxu0 %v2057
      %2375 = vmatmul.mubr.bf16.gmra.mxu0 %v2056
      %v2376 = vpop.f32.mrf.mxu0
      %v2377 = vadd.f32 %v2124, %v2376
      %v2378 = vpop.f32.mrf.mxu0
      %v2379 = vpop.f32.mrf.mxu0
      %v2380 = vadd.f32 %v2124, %v2379
      %v2381 = vpop.f32.mrf.mxu0
      %2382 = vmatprep.mubr.bf16.mxu0 %v2059
      %2383 = vmatmul.mubr.bf16.gmra.mxu0 %v2058
      %v2384 = vpop.f32.mrf.mxu0
      %v2385 = vadd.f32 %v2124, %v2384
      %v2386 = vpop.f32.mrf.mxu0
      %v2387 = vpop.f32.mrf.mxu0
      %v2388 = vadd.f32 %v2124, %v2387
      %v2389 = vpop.f32.mrf.mxu0
      %2390 = vmatprep.mubr.bf16.mxu0 %v2061
      %2391 = vmatmul.mubr.bf16.gmra.mxu0 %v2060
      %v2392 = vpop.f32.mrf.mxu0
      %v2393 = vadd.f32 %v2124, %v2392
      %v2394 = vpop.f32.mrf.mxu0
      %v2395 = vpop.f32.mrf.mxu0
      %v2396 = vadd.f32 %v2124, %v2395
      %v2397 = vpop.f32.mrf.mxu0
      %2398 = vmatprep.mubr.bf16.mxu0 %v2063
      %2399 = vmatmul.mubr.bf16.gmra.mxu0 %v2062
      %v2400 = vpop.f32.mrf.mxu0
      %v2401 = vadd.f32 %v2124, %v2400
      %v2402 = vpop.f32.mrf.mxu0
      %v2403 = vpop.f32.mrf.mxu0
      %v2404 = vadd.f32 %v2124, %v2403
      %v2405 = vpop.f32.mrf.mxu0
      %2406 = vmatprep.mubr.bf16.mxu0 %v2065
      %2407 = vmatmul.mubr.bf16.gmra.mxu0 %v2064
      %v2408 = vpop.f32.mrf.mxu0
      %v2409 = vadd.f32 %v2124, %v2408
      %v2410 = vpop.f32.mrf.mxu0
      %v2411 = vpop.f32.mrf.mxu0
      %v2412 = vadd.f32 %v2124, %v2411
      %v2413 = vpop.f32.mrf.mxu0
      %2414 = vmatprep.mubr.bf16.mxu0 %v2067
      %2415 = vmatmul.mubr.bf16.gmra.mxu0 %v2066
      %v2416 = vpop.f32.mrf.mxu0
      %v2417 = vadd.f32 %v2124, %v2416
      %v2418 = vpop.f32.mrf.mxu0
      %v2419 = vpop.f32.mrf.mxu0
      %v2420 = vadd.f32 %v2124, %v2419
      %v2421 = vpop.f32.mrf.mxu0
      %2422 = vmatprep.mubr.bf16.mxu0 %v2069
      %2423 = vmatmul.mubr.bf16.gmra.mxu0 %v2068
      %v2424 = vpop.f32.mrf.mxu0
      %v2425 = vadd.f32 %v2124, %v2424
      %v2426 = vpop.f32.mrf.mxu0
      %v2427 = vpop.f32.mrf.mxu0
      %v2428 = vadd.f32 %v2124, %v2427
      %v2429 = vpop.f32.mrf.mxu0
      %2430 = vmatprep.mubr.bf16.mxu0 %v2071
      %2431 = vmatmul.mubr.bf16.gmra.mxu0 %v2070
      %v2432 = vpop.f32.mrf.mxu0
      %v2433 = vadd.f32 %v2124, %v2432
      %v2434 = vpop.f32.mrf.mxu0
      %v2435 = vpop.f32.mrf.mxu0
      %v2436 = vadd.f32 %v2124, %v2435
      %v2437 = vpop.f32.mrf.mxu0
      %2438 = vmatprep.mubr.bf16.mxu0 %v2073
      %2439 = vmatmul.mubr.bf16.gmra.mxu0 %v2072
      %v2440 = vpop.f32.mrf.mxu0
      %v2441 = vadd.f32 %v2124, %v2440
      %v2442 = vpop.f32.mrf.mxu0
      %v2443 = vpop.f32.mrf.mxu0
      %v2444 = vadd.f32 %v2124, %v2443
      %v2445 = vpop.f32.mrf.mxu0
      %2446 = vmatprep.mubr.bf16.mxu0 %v2075
      %2447 = vmatmul.mubr.bf16.gmra.mxu0 %v2074
      %v2448 = vpop.f32.mrf.mxu0
      %v2449 = vadd.f32 %v2124, %v2448
      %v2450 = vpop.f32.mrf.mxu0
      %v2451 = vpop.f32.mrf.mxu0
      %v2452 = vadd.f32 %v2124, %v2451
      %v2453 = vpop.f32.mrf.mxu0
      %2454 = vmatprep.mubr.bf16.mxu0 %v2077
      %2455 = vmatmul.mubr.bf16.gmra.mxu0 %v2076
      %v2456 = vpop.f32.mrf.mxu0
      %v2457 = vadd.f32 %v2124, %v2456
      %v2458 = vpop.f32.mrf.mxu0
      %v2459 = vpop.f32.mrf.mxu0
      %v2460 = vadd.f32 %v2124, %v2459
      %v2461 = vpop.f32.mrf.mxu0
      %2462 = vmatprep.mubr.bf16.mxu0 %v2079
      %2463 = vmatmul.mubr.bf16.gmra.mxu0 %v2078
      %v2464 = vpop.f32.mrf.mxu0
      %v2465 = vadd.f32 %v2124, %v2464
      %v2466 = vpop.f32.mrf.mxu0
      %v2467 = vpop.f32.mrf.mxu0
      %v2468 = vadd.f32 %v2124, %v2467
      %v2469 = vpop.f32.mrf.mxu0
      %2470 = vmatprep.mubr.bf16.mxu0 %v2081
      %2471 = vmatmul.mubr.bf16.gmra.mxu0 %v2080
      %v2472 = vpop.f32.mrf.mxu0
      %v2473 = vadd.f32 %v2124, %v2472
      %v2474 = vpop.f32.mrf.mxu0
      %v2475 = vpop.f32.mrf.mxu0
      %v2476 = vadd.f32 %v2124, %v2475
      %v2477 = vpop.f32.mrf.mxu0
      %2478 = vmatprep.mubr.bf16.mxu0 %v2083
      %2479 = vmatmul.mubr.bf16.gmra.mxu0 %v2082
      %v2480 = vpop.f32.mrf.mxu0
      %v2481 = vadd.f32 %v2124, %v2480
      %v2482 = vpop.f32.mrf.mxu0
      %v2483 = vpop.f32.mrf.mxu0
      %v2484 = vadd.f32 %v2124, %v2483
      %v2485 = vpop.f32.mrf.mxu0
      %2486 = vmatprep.mubr.bf16.mxu0 %v2085
      %2487 = vmatmul.mubr.bf16.gmra.mxu0 %v2084
      %v2488 = vpop.f32.mrf.mxu0
      %v2489 = vadd.f32 %v2124, %v2488
      %v2490 = vpop.f32.mrf.mxu0
      %v2491 = vpop.f32.mrf.mxu0
      %v2492 = vadd.f32 %v2124, %v2491
      %v2493 = vpop.f32.mrf.mxu0
      %2494 = vdwg.mxu0
      %v2495 = vmax.f32 %v2257, 0.0
      %v2496 = vmax.f32 %v2260, 0.0
      %v2497 = vmax.f32 %v2265, 0.0
      %v2498 = vmax.f32 %v2268, 0.0
      %v2499 = vmax.f32 %v2273, 0.0
      %v2500 = vmax.f32 %v2276, 0.0
      %v2501 = vmax.f32 %v2281, 0.0
      %v2502 = vmax.f32 %v2284, 0.0
      %v2503 = vmax.f32 %v2289, 0.0
      %v2504 = vmax.f32 %v2292, 0.0
      %v2505 = vmax.f32 %v2297, 0.0
      %v2506 = vmax.f32 %v2300, 0.0
      %v2507 = vmax.f32 %v2305, 0.0
      %v2508 = vmax.f32 %v2308, 0.0
      %v2509 = vmax.f32 %v2313, 0.0
      %v2510 = vmax.f32 %v2316, 0.0
      %v2511 = vmax.f32 %v2321, 0.0
      %v2512 = vmax.f32 %v2324, 0.0
      %v2513 = vmax.f32 %v2329, 0.0
      %v2514 = vmax.f32 %v2332, 0.0
      %v2515 = vmax.f32 %v2337, 0.0
      %v2516 = vmax.f32 %v2340, 0.0
      %v2517 = vmax.f32 %v2345, 0.0
      %v2518 = vmax.f32 %v2348, 0.0
      %v2519 = vmax.f32 %v2353, 0.0
      %v2520 = vmax.f32 %v2356, 0.0
      %v2521 = vmax.f32 %v2361, 0.0
      %v2522 = vmax.f32 %v2364, 0.0
      %v2523 = vmax.f32 %v2369, 0.0
      %v2524 = vmax.f32 %v2372, 0.0
      %v2525 = vmax.f32 %v2377, 0.0
      %v2526 = vmax.f32 %v2380, 0.0
      %v2527 = vmax.f32 %v2385, 0.0
      %v2528 = vmax.f32 %v2388, 0.0
      %v2529 = vmax.f32 %v2393, 0.0
      %v2530 = vmax.f32 %v2396, 0.0
      %v2531 = vmax.f32 %v2401, 0.0
      %v2532 = vmax.f32 %v2404, 0.0
      %v2533 = vmax.f32 %v2409, 0.0
      %v2534 = vmax.f32 %v2412, 0.0
      %v2535 = vmax.f32 %v2417, 0.0
      %v2536 = vmax.f32 %v2420, 0.0
      %v2537 = vmax.f32 %v2425, 0.0
      %v2538 = vmax.f32 %v2428, 0.0
      %v2539 = vmax.f32 %v2433, 0.0
      %v2540 = vmax.f32 %v2436, 0.0
      %v2541 = vmax.f32 %v2441, 0.0
      %v2542 = vmax.f32 %v2444, 0.0
      %v2543 = vmax.f32 %v2449, 0.0
      %v2544 = vmax.f32 %v2452, 0.0
      %v2545 = vmax.f32 %v2457, 0.0
      %v2546 = vmax.f32 %v2460, 0.0
      %v2547 = vmax.f32 %v2465, 0.0
      %v2548 = vmax.f32 %v2468, 0.0
      %v2549 = vmax.f32 %v2473, 0.0
      %v2550 = vmax.f32 %v2476, 0.0
      %v2551 = vmax.f32 %v2481, 0.0
      %v2552 = vmax.f32 %v2484, 0.0
      %v2553 = vmax.f32 %v2489, 0.0
      %v2554 = vmax.f32 %v2492, 0.0
      %2555 = vst.msk [vmem:[#allocation2] sm:$0xff] %vm1060, %v2495
      %2556 = vst.msk [vmem:[#allocation2 + $0x8] sm:$0xff] %vm1060, %v2496
      %2557 = vst.msk [vmem:[#allocation2 + $0x10] sm:$0xff] %vm1060, %v2497
      %2558 = vst.msk [vmem:[#allocation2 + $0x18] sm:$0xff] %vm1060, %v2498
      %2559 = vst.msk [vmem:[#allocation2 + $0x20] sm:$0xff] %vm1060, %v2499
      %2560 = vst.msk [vmem:[#allocation2 + $0x28] sm:$0xff] %vm1060, %v2500
      %2561 = vst.msk [vmem:[#allocation2 + $0x30] sm:$0xff] %vm1060, %v2501
      %2562 = vst.msk [vmem:[#allocation2 + $0x38] sm:$0xff] %vm1060, %v2502
      %2563 = vst.msk [vmem:[#allocation2 + $0x40] sm:$0xff] %vm1060, %v2503
      %2564 = vst.msk [vmem:[#allocation2 + $0x48] sm:$0xff] %vm1060, %v2504
      %2565 = vst.msk [vmem:[#allocation2 + $0x50] sm:$0xff] %vm1060, %v2505
      %2566 = vst.msk [vmem:[#allocation2 + $0x58] sm:$0xff] %vm1060, %v2506
      %2567 = vst.msk [vmem:[#allocation2 + $0x60] sm:$0xff] %vm1060, %v2507
      %2568 = vst.msk [vmem:[#allocation2 + $0x68] sm:$0xff] %vm1060, %v2508
      %2569 = vst.msk [vmem:[#allocation2 + $0x70] sm:$0xff] %vm1060, %v2509
      %2570 = vst.msk [vmem:[#allocation2 + $0x78] sm:$0xff] %vm1060, %v2510
      %2571 = vst.msk [vmem:[#allocation2 + $0x80] sm:$0xff] %vm1060, %v2511
      %2572 = vst.msk [vmem:[#allocation2 + $0x88] sm:$0xff] %vm1060, %v2512
      %2573 = vst.msk [vmem:[#allocation2 + $0x90] sm:$0xff] %vm1060, %v2513
      %2574 = vst.msk [vmem:[#allocation2 + $0x98] sm:$0xff] %vm1060, %v2514
      %2575 = vst.msk [vmem:[#allocation2 + $0xa0] sm:$0xff] %vm1060, %v2515
      %2576 = vst.msk [vmem:[#allocation2 + $0xa8] sm:$0xff] %vm1060, %v2516
      %2577 = vst.msk [vmem:[#allocation2 + $0xb0] sm:$0xff] %vm1060, %v2517
      %2578 = vst.msk [vmem:[#allocation2 + $0xb8] sm:$0xff] %vm1060, %v2518
      %2579 = vst.msk [vmem:[#allocation2 + $0xc0] sm:$0xff] %vm1060, %v2519
      %2580 = vst.msk [vmem:[#allocation2 + $0xc8] sm:$0xff] %vm1060, %v2520
      %2581 = vst.msk [vmem:[#allocation2 + $0xd0] sm:$0xff] %vm1060, %v2521
      %2582 = vst.msk [vmem:[#allocation2 + $0xd8] sm:$0xff] %vm1060, %v2522
      %2583 = vst.msk [vmem:[#allocation2 + $0xe0] sm:$0xff] %vm1060, %v2523
      %2584 = vst.msk [vmem:[#allocation2 + $0xe8] sm:$0xff] %vm1060, %v2524
      %2585 = vst.msk [vmem:[#allocation2 + $0xf0] sm:$0xff] %vm1060, %v2525
      %2586 = vst.msk [vmem:[#allocation2 + $0xf8] sm:$0xff] %vm1060, %v2526
      %2587 = vst.msk [vmem:[#allocation2 + $0x100] sm:$0xff] %vm1060, %v2527
      %2588 = vst.msk [vmem:[#allocation2 + $0x108] sm:$0xff] %vm1060, %v2528
      %2589 = vst.msk [vmem:[#allocation2 + $0x110] sm:$0xff] %vm1060, %v2529
      %2590 = vst.msk [vmem:[#allocation2 + $0x118] sm:$0xff] %vm1060, %v2530
      %2591 = vst.msk [vmem:[#allocation2 + $0x120] sm:$0xff] %vm1060, %v2531
      %2592 = vst.msk [vmem:[#allocation2 + $0x128] sm:$0xff] %vm1060, %v2532
      %2593 = vst.msk [vmem:[#allocation2 + $0x130] sm:$0xff] %vm1060, %v2533
      %2594 = vst.msk [vmem:[#allocation2 + $0x138] sm:$0xff] %vm1060, %v2534
      %2595 = vst.msk [vmem:[#allocation2 + $0x140] sm:$0xff] %vm1060, %v2535
      %2596 = vst.msk [vmem:[#allocation2 + $0x148] sm:$0xff] %vm1060, %v2536
      %2597 = vst.msk [vmem:[#allocation2 + $0x150] sm:$0xff] %vm1060, %v2537
      %2598 = vst.msk [vmem:[#allocation2 + $0x158] sm:$0xff] %vm1060, %v2538
      %2599 = vst.msk [vmem:[#allocation2 + $0x160] sm:$0xff] %vm1060, %v2539
      %2600 = vst.msk [vmem:[#allocation2 + $0x168] sm:$0xff] %vm1060, %v2540
      %2601 = vst.msk [vmem:[#allocation2 + $0x170] sm:$0xff] %vm1060, %v2541
      %2602 = vst.msk [vmem:[#allocation2 + $0x178] sm:$0xff] %vm1060, %v2542
      %2603 = vst.msk [vmem:[#allocation2 + $0x180] sm:$0xff] %vm1060, %v2543
      %2604 = vst.msk [vmem:[#allocation2 + $0x188] sm:$0xff] %vm1060, %v2544
      %2605 = vst.msk [vmem:[#allocation2 + $0x190] sm:$0xff] %vm1060, %v2545
      %2606 = vst.msk [vmem:[#allocation2 + $0x198] sm:$0xff] %vm1060, %v2546
      %2607 = vst.msk [vmem:[#allocation2 + $0x1a0] sm:$0xff] %vm1060, %v2547
      %2608 = vst.msk [vmem:[#allocation2 + $0x1a8] sm:$0xff] %vm1060, %v2548
      %2609 = vst.msk [vmem:[#allocation2 + $0x1b0] sm:$0xff] %vm1060, %v2549
      %2610 = vst.msk [vmem:[#allocation2 + $0x1b8] sm:$0xff] %vm1060, %v2550
      %2611 = vst.msk [vmem:[#allocation2 + $0x1c0] sm:$0xff] %vm1060, %v2551
      %2612 = vst.msk [vmem:[#allocation2 + $0x1c8] sm:$0xff] %vm1060, %v2552
      %2613 = vst.msk [vmem:[#allocation2 + $0x1d0] sm:$0xff] %vm1060, %v2553
      %2614 = vst.msk [vmem:[#allocation2 + $0x1d8] sm:$0xff] %vm1060, %v2554
      %s2615 = scalar_lea.vmem %s2, 128
      %v2616 = vld [vmem:[%s2615] sm:$0xf]
      %v2617 = vld [vmem:[%s2615 + $0x4] sm:$0xf]
      %v2618 = vld [vmem:[%s2615 + $0x8] sm:$0xf]
      %v2619 = vld [vmem:[%s2615 + $0xc] sm:$0xf]
      %v2620 = vld [vmem:[%s2615 + $0x10] sm:$0xf]
      %v2621 = vld [vmem:[%s2615 + $0x14] sm:$0xf]
      %v2622 = vld [vmem:[%s2615 + $0x18] sm:$0xf]
      %v2623 = vld [vmem:[%s2615 + $0x1c] sm:$0xf]
      %v2624 = vld [vmem:[%s2615 + $0x20] sm:$0xf]
      %v2625 = vld [vmem:[%s2615 + $0x24] sm:$0xf]
      %v2626 = vld [vmem:[%s2615 + $0x28] sm:$0xf]
      %v2627 = vld [vmem:[%s2615 + $0x2c] sm:$0xf]
      %v2628 = vld [vmem:[%s2615 + $0x30] sm:$0xf]
      %v2629 = vld [vmem:[%s2615 + $0x34] sm:$0xf]
      %v2630 = vld [vmem:[%s2615 + $0x38] sm:$0xf]
      %v2631 = vld [vmem:[%s2615 + $0x3c] sm:$0xf]
      %v2632 = vld [vmem:[%s2615 + $0x40] sm:$0xf]
      %v2633 = vld [vmem:[%s2615 + $0x44] sm:$0xf]
      %v2634 = vld [vmem:[%s2615 + $0x48] sm:$0xf]
      %v2635 = vld [vmem:[%s2615 + $0x4c] sm:$0xf]
      %v2636 = vld [vmem:[%s2615 + $0x50] sm:$0xf]
      %v2637 = vld [vmem:[%s2615 + $0x54] sm:$0xf]
      %v2638 = vld [vmem:[%s2615 + $0x58] sm:$0xf]
      %v2639 = vld [vmem:[%s2615 + $0x5c] sm:$0xf]
      %v2640 = vld [vmem:[%s2615 + $0x60] sm:$0xf]
      %v2641 = vld [vmem:[%s2615 + $0x64] sm:$0xf]
      %v2642 = vld [vmem:[%s2615 + $0x68] sm:$0xf]
      %v2643 = vld [vmem:[%s2615 + $0x6c] sm:$0xf]
      %v2644 = vld [vmem:[%s2615 + $0x70] sm:$0xf]
      %v2645 = vld [vmem:[%s2615 + $0x74] sm:$0xf]
      %v2646 = vld [vmem:[%s2615 + $0x78] sm:$0xf]
      %v2647 = vld [vmem:[%s2615 + $0x7c] sm:$0xf]
      %s2648 = scalar_lea.vmem %s3, 2
      %v2649 = vld [vmem:[%s2648] sm:$0x1]
      %v2650 = vld [vmem:[#allocation2] ss:$4 sm:$0xff]
      %s2651 = scalar_lea.vmem [#allocation2], 32
      %v2652 = vld [vmem:[%s2651] ss:$4 sm:$0xf]
      %s2653 = scalar_lea.vmem [#allocation2], 1
      %v2654 = vld [vmem:[%s2653] ss:$4 sm:$0xff]
      %s2655 = scalar_lea.vmem [#allocation2], 33
      %v2656 = vld [vmem:[%s2655] ss:$4 sm:$0xf]
      %s2657 = scalar_lea.vmem [#allocation2], 2
      %v2658 = vld [vmem:[%s2657] ss:$4 sm:$0xff]
      %s2659 = scalar_lea.vmem [#allocation2], 34
      %v2660 = vld [vmem:[%s2659] ss:$4 sm:$0xf]
      %s2661 = scalar_lea.vmem [#allocation2], 3
      %v2662 = vld [vmem:[%s2661] ss:$4 sm:$0xff]
      %s2663 = scalar_lea.vmem [#allocation2], 35
      %v2664 = vld [vmem:[%s2663] ss:$4 sm:$0xf]
      %s2665 = scalar_lea.vmem [#allocation2], 4
      %v2666 = vld [vmem:[%s2665] ss:$4 sm:$0xff]
      %s2667 = scalar_lea.vmem [#allocation2], 36
      %v2668 = vld [vmem:[%s2667] ss:$4 sm:$0xf]
      %s2669 = scalar_lea.vmem [#allocation2], 5
      %v2670 = vld [vmem:[%s2669] ss:$4 sm:$0xff]
      %s2671 = scalar_lea.vmem [#allocation2], 37
      %v2672 = vld [vmem:[%s2671] ss:$4 sm:$0xf]
      %s2673 = scalar_lea.vmem [#allocation2], 6
      %v2674 = vld [vmem:[%s2673] ss:$4 sm:$0xff]
      %s2675 = scalar_lea.vmem [#allocation2], 38
      %v2676 = vld [vmem:[%s2675] ss:$4 sm:$0xf]
      %s2677 = scalar_lea.vmem [#allocation2], 7
      %v2678 = vld [vmem:[%s2677] ss:$4 sm:$0xff]
      %s2679 = scalar_lea.vmem [#allocation2], 39
      %v2680 = vld [vmem:[%s2679] ss:$4 sm:$0xf]
      %2683 = vrot.lane.b32.xlu0 %v2654, 32
      %v2684 = vpop.permute.xlu0 %2683
      %2685 = vrot.lane.b32.xlu0 %v2656, 32
      %v2686 = vpop.permute.xlu0 %2685
      %2691 = vrot.lane.b32.xlu0 %v2658, 64
      %v2692 = vpop.permute.xlu0 %2691
      %2693 = vrot.lane.b32.xlu0 %v2660, 64
      %v2694 = vpop.permute.xlu0 %2693
      %2699 = vrot.lane.b32.xlu0 %v2662, 96
      %v2700 = vpop.permute.xlu0 %2699
      %2701 = vrot.lane.b32.xlu0 %v2664, 96
      %v2702 = vpop.permute.xlu0 %2701
      %2707 = vrot.lane.b32.xlu0 %v2670, 32
      %v2708 = vpop.permute.xlu0 %2707
      %2709 = vrot.lane.b32.xlu0 %v2672, 32
      %v2710 = vpop.permute.xlu0 %2709
      %2715 = vrot.lane.b32.xlu0 %v2674, 64
      %v2716 = vpop.permute.xlu0 %2715
      %2717 = vrot.lane.b32.xlu0 %v2676, 64
      %v2718 = vpop.permute.xlu0 %2717
      %2723 = vrot.lane.b32.xlu0 %v2678, 96
      %v2724 = vpop.permute.xlu0 %2723
      %2725 = vrot.lane.b32.xlu0 %v2680, 96
      %v2726 = vpop.permute.xlu0 %2725
      %v2729 = vsel %vm1060, %v2650, %v2684
      %v2730 = vsel %vm1060, %v2652, %v2686
      %vm2731 = vcmask 523264
      %v2732 = vsel %vm2731, %v2729, %v2692
      %v2733 = vsel %vm2731, %v2730, %v2694
      %vm2734 = vcmask 785408
      %v2735 = vsel %vm2734, %v2732, %v2700
      %v2736 = vsel %vm2734, %v2733, %v2702
      %v2737 = vsel %vm1060, %v2666, %v2708
      %v2738 = vsel %vm1060, %v2668, %v2710
      %v2739 = vsel %vm2731, %v2737, %v2716
      %v2740 = vsel %vm2731, %v2738, %v2718
      %v2741 = vsel %vm2734, %v2739, %v2724
      %v2742 = vsel %vm2734, %v2740, %v2726
      %s2743 = scalar_lea.vmem [#allocation2], 60
      %v2744 = vld [vmem:[%s2743] ss:$4 sm:$0xff]
      %s2745 = scalar_lea.vmem [#allocation2], 92
      %v2746 = vld [vmem:[%s2745] ss:$4 sm:$0xf]
      %s2747 = scalar_lea.vmem [#allocation2], 61
      %v2748 = vld [vmem:[%s2747] ss:$4 sm:$0xff]
      %s2749 = scalar_lea.vmem [#allocation2], 93
      %v2750 = vld [vmem:[%s2749] ss:$4 sm:$0xf]
      %s2751 = scalar_lea.vmem [#allocation2], 62
      %v2752 = vld [vmem:[%s2751] ss:$4 sm:$0xff]
      %s2753 = scalar_lea.vmem [#allocation2], 94
      %v2754 = vld [vmem:[%s2753] ss:$4 sm:$0xf]
      %s2755 = scalar_lea.vmem [#allocation2], 63
      %v2756 = vld [vmem:[%s2755] ss:$4 sm:$0xff]
      %s2757 = scalar_lea.vmem [#allocation2], 95
      %v2758 = vld [vmem:[%s2757] ss:$4 sm:$0xf]
      %s2759 = scalar_lea.vmem [#allocation2], 64
      %v2760 = vld [vmem:[%s2759] ss:$4 sm:$0xff]
      %s2761 = scalar_lea.vmem [#allocation2], 96
      %v2762 = vld [vmem:[%s2761] ss:$4 sm:$0xf]
      %s2763 = scalar_lea.vmem [#allocation2], 65
      %v2764 = vld [vmem:[%s2763] ss:$4 sm:$0xff]
      %s2765 = scalar_lea.vmem [#allocation2], 97
      %v2766 = vld [vmem:[%s2765] ss:$4 sm:$0xf]
      %s2767 = scalar_lea.vmem [#allocation2], 66
      %v2768 = vld [vmem:[%s2767] ss:$4 sm:$0xff]
      %s2769 = scalar_lea.vmem [#allocation2], 98
      %v2770 = vld [vmem:[%s2769] ss:$4 sm:$0xf]
      %s2771 = scalar_lea.vmem [#allocation2], 67
      %v2772 = vld [vmem:[%s2771] ss:$4 sm:$0xff]
      %s2773 = scalar_lea.vmem [#allocation2], 99
      %v2774 = vld [vmem:[%s2773] ss:$4 sm:$0xf]
      %2777 = vrot.lane.b32.xlu0 %v2748, 32
      %v2778 = vpop.permute.xlu0 %2777
      %2779 = vrot.lane.b32.xlu0 %v2750, 32
      %v2780 = vpop.permute.xlu0 %2779
      %2785 = vrot.lane.b32.xlu0 %v2752, 64
      %v2786 = vpop.permute.xlu0 %2785
      %2787 = vrot.lane.b32.xlu0 %v2754, 64
      %v2788 = vpop.permute.xlu0 %2787
      %2793 = vrot.lane.b32.xlu0 %v2756, 96
      %v2794 = vpop.permute.xlu0 %2793
      %2795 = vrot.lane.b32.xlu0 %v2758, 96
      %v2796 = vpop.permute.xlu0 %2795
      %2801 = vrot.lane.b32.xlu0 %v2764, 32
      %v2802 = vpop.permute.xlu0 %2801
      %2803 = vrot.lane.b32.xlu0 %v2766, 32
      %v2804 = vpop.permute.xlu0 %2803
      %2809 = vrot.lane.b32.xlu0 %v2768, 64
      %v2810 = vpop.permute.xlu0 %2809
      %2811 = vrot.lane.b32.xlu0 %v2770, 64
      %v2812 = vpop.permute.xlu0 %2811
      %2817 = vrot.lane.b32.xlu0 %v2772, 96
      %v2818 = vpop.permute.xlu0 %2817
      %2819 = vrot.lane.b32.xlu0 %v2774, 96
      %v2820 = vpop.permute.xlu0 %2819
      %v2823 = vsel %vm1060, %v2744, %v2778
      %v2824 = vsel %vm1060, %v2746, %v2780
      %v2825 = vsel %vm2731, %v2823, %v2786
      %v2826 = vsel %vm2731, %v2824, %v2788
      %v2827 = vsel %vm2734, %v2825, %v2794
      %v2828 = vsel %vm2734, %v2826, %v2796
      %v2829 = vsel %vm1060, %v2760, %v2802
      %v2830 = vsel %vm1060, %v2762, %v2804
      %v2831 = vsel %vm2731, %v2829, %v2810
      %v2832 = vsel %vm2731, %v2830, %v2812
      %v2833 = vsel %vm2734, %v2831, %v2818
      %v2834 = vsel %vm2734, %v2832, %v2820
      %s2835 = scalar_lea.vmem [#allocation2], 120
      %v2836 = vld [vmem:[%s2835] ss:$4 sm:$0xff]
      %s2837 = scalar_lea.vmem [#allocation2], 152
      %v2838 = vld [vmem:[%s2837] ss:$4 sm:$0xf]
      %s2839 = scalar_lea.vmem [#allocation2], 121
      %v2840 = vld [vmem:[%s2839] ss:$4 sm:$0xff]
      %s2841 = scalar_lea.vmem [#allocation2], 153
      %v2842 = vld [vmem:[%s2841] ss:$4 sm:$0xf]
      %s2843 = scalar_lea.vmem [#allocation2], 122
      %v2844 = vld [vmem:[%s2843] ss:$4 sm:$0xff]
      %s2845 = scalar_lea.vmem [#allocation2], 154
      %v2846 = vld [vmem:[%s2845] ss:$4 sm:$0xf]
      %s2847 = scalar_lea.vmem [#allocation2], 123
      %v2848 = vld [vmem:[%s2847] ss:$4 sm:$0xff]
      %s2849 = scalar_lea.vmem [#allocation2], 155
      %v2850 = vld [vmem:[%s2849] ss:$4 sm:$0xf]
      %s2851 = scalar_lea.vmem [#allocation2], 124
      %v2852 = vld [vmem:[%s2851] ss:$4 sm:$0xff]
      %s2853 = scalar_lea.vmem [#allocation2], 156
      %v2854 = vld [vmem:[%s2853] ss:$4 sm:$0xf]
      %s2855 = scalar_lea.vmem [#allocation2], 125
      %v2856 = vld [vmem:[%s2855] ss:$4 sm:$0xff]
      %s2857 = scalar_lea.vmem [#allocation2], 157
      %v2858 = vld [vmem:[%s2857] ss:$4 sm:$0xf]
      %s2859 = scalar_lea.vmem [#allocation2], 126
      %v2860 = vld [vmem:[%s2859] ss:$4 sm:$0xff]
      %s2861 = scalar_lea.vmem [#allocation2], 158
      %v2862 = vld [vmem:[%s2861] ss:$4 sm:$0xf]
      %s2863 = scalar_lea.vmem [#allocation2], 127
      %v2864 = vld [vmem:[%s2863] ss:$4 sm:$0xff]
      %s2865 = scalar_lea.vmem [#allocation2], 159
      %v2866 = vld [vmem:[%s2865] ss:$4 sm:$0xf]
      %2869 = vrot.lane.b32.xlu0 %v2840, 32
      %v2870 = vpop.permute.xlu0 %2869
      %2871 = vrot.lane.b32.xlu0 %v2842, 32
      %v2872 = vpop.permute.xlu0 %2871
      %2877 = vrot.lane.b32.xlu0 %v2844, 64
      %v2878 = vpop.permute.xlu0 %2877
      %2879 = vrot.lane.b32.xlu0 %v2846, 64
      %v2880 = vpop.permute.xlu0 %2879
      %2885 = vrot.lane.b32.xlu0 %v2848, 96
      %v2886 = vpop.permute.xlu0 %2885
      %2887 = vrot.lane.b32.xlu0 %v2850, 96
      %v2888 = vpop.permute.xlu0 %2887
      %2893 = vrot.lane.b32.xlu0 %v2856, 32
      %v2894 = vpop.permute.xlu0 %2893
      %2895 = vrot.lane.b32.xlu0 %v2858, 32
      %v2896 = vpop.permute.xlu0 %2895
      %2901 = vrot.lane.b32.xlu0 %v2860, 64
      %v2902 = vpop.permute.xlu0 %2901
      %2903 = vrot.lane.b32.xlu0 %v2862, 64
      %v2904 = vpop.permute.xlu0 %2903
      %2909 = vrot.lane.b32.xlu0 %v2864, 96
      %v2910 = vpop.permute.xlu0 %2909
      %2911 = vrot.lane.b32.xlu0 %v2866, 96
      %v2912 = vpop.permute.xlu0 %2911
      %v2915 = vsel %vm1060, %v2836, %v2870
      %v2916 = vsel %vm1060, %v2838, %v2872
      %v2917 = vsel %vm2731, %v2915, %v2878
      %v2918 = vsel %vm2731, %v2916, %v2880
      %v2919 = vsel %vm2734, %v2917, %v2886
      %v2920 = vsel %vm2734, %v2918, %v2888
      %v2921 = vsel %vm1060, %v2852, %v2894
      %v2922 = vsel %vm1060, %v2854, %v2896
      %v2923 = vsel %vm2731, %v2921, %v2902
      %v2924 = vsel %vm2731, %v2922, %v2904
      %v2925 = vsel %vm2734, %v2923, %v2910
      %v2926 = vsel %vm2734, %v2924, %v2912
      %s2927 = scalar_lea.vmem [#allocation2], 180
      %v2928 = vld [vmem:[%s2927] ss:$4 sm:$0xff]
      %s2929 = scalar_lea.vmem [#allocation2], 212
      %v2930 = vld [vmem:[%s2929] ss:$4 sm:$0xf]
      %s2931 = scalar_lea.vmem [#allocation2], 181
      %v2932 = vld [vmem:[%s2931] ss:$4 sm:$0xff]
      %s2933 = scalar_lea.vmem [#allocation2], 213
      %v2934 = vld [vmem:[%s2933] ss:$4 sm:$0xf]
      %s2935 = scalar_lea.vmem [#allocation2], 182
      %v2936 = vld [vmem:[%s2935] ss:$4 sm:$0xff]
      %s2937 = scalar_lea.vmem [#allocation2], 214
      %v2938 = vld [vmem:[%s2937] ss:$4 sm:$0xf]
      %s2939 = scalar_lea.vmem [#allocation2], 183
      %v2940 = vld [vmem:[%s2939] ss:$4 sm:$0xff]
      %s2941 = scalar_lea.vmem [#allocation2], 215
      %v2942 = vld [vmem:[%s2941] ss:$4 sm:$0xf]
      %s2943 = scalar_lea.vmem [#allocation2], 184
      %v2944 = vld [vmem:[%s2943] ss:$4 sm:$0xff]
      %s2945 = scalar_lea.vmem [#allocation2], 216
      %v2946 = vld [vmem:[%s2945] ss:$4 sm:$0xf]
      %s2947 = scalar_lea.vmem [#allocation2], 185
      %v2948 = vld [vmem:[%s2947] ss:$4 sm:$0xff]
      %s2949 = scalar_lea.vmem [#allocation2], 217
      %v2950 = vld [vmem:[%s2949] ss:$4 sm:$0xf]
      %s2951 = scalar_lea.vmem [#allocation2], 186
      %v2952 = vld [vmem:[%s2951] ss:$4 sm:$0xff]
      %s2953 = scalar_lea.vmem [#allocation2], 218
      %v2954 = vld [vmem:[%s2953] ss:$4 sm:$0xf]
      %s2955 = scalar_lea.vmem [#allocation2], 187
      %v2956 = vld [vmem:[%s2955] ss:$4 sm:$0xff]
      %s2957 = scalar_lea.vmem [#allocation2], 219
      %v2958 = vld [vmem:[%s2957] ss:$4 sm:$0xf]
      %2961 = vrot.lane.b32.xlu0 %v2932, 32
      %v2962 = vpop.permute.xlu0 %2961
      %2963 = vrot.lane.b32.xlu0 %v2934, 32
      %v2964 = vpop.permute.xlu0 %2963
      %2969 = vrot.lane.b32.xlu0 %v2936, 64
      %v2970 = vpop.permute.xlu0 %2969
      %2971 = vrot.lane.b32.xlu0 %v2938, 64
      %v2972 = vpop.permute.xlu0 %2971
      %2977 = vrot.lane.b32.xlu0 %v2940, 96
      %v2978 = vpop.permute.xlu0 %2977
      %2979 = vrot.lane.b32.xlu0 %v2942, 96
      %v2980 = vpop.permute.xlu0 %2979
      %2985 = vrot.lane.b32.xlu0 %v2948, 32
      %v2986 = vpop.permute.xlu0 %2985
      %2987 = vrot.lane.b32.xlu0 %v2950, 32
      %v2988 = vpop.permute.xlu0 %2987
      %2993 = vrot.lane.b32.xlu0 %v2952, 64
      %v2994 = vpop.permute.xlu0 %2993
      %2995 = vrot.lane.b32.xlu0 %v2954, 64
      %v2996 = vpop.permute.xlu0 %2995
      %3001 = vrot.lane.b32.xlu0 %v2956, 96
      %v3002 = vpop.permute.xlu0 %3001
      %3003 = vrot.lane.b32.xlu0 %v2958, 96
      %v3004 = vpop.permute.xlu0 %3003
      %v3007 = vsel %vm1060, %v2928, %v2962
      %v3008 = vsel %vm1060, %v2930, %v2964
      %v3009 = vsel %vm2731, %v3007, %v2970
      %v3010 = vsel %vm2731, %v3008, %v2972
      %v3011 = vsel %vm2734, %v3009, %v2978
      %v3012 = vsel %vm2734, %v3010, %v2980
      %v3013 = vsel %vm1060, %v2944, %v2986
      %v3014 = vsel %vm1060, %v2946, %v2988
      %v3015 = vsel %vm2731, %v3013, %v2994
      %v3016 = vsel %vm2731, %v3014, %v2996
      %v3017 = vsel %vm2734, %v3015, %v3002
      %v3018 = vsel %vm2734, %v3016, %v3004
      %s3019 = scalar_lea.vmem [#allocation2], 240
      %v3020 = vld [vmem:[%s3019] ss:$4 sm:$0xff]
      %s3021 = scalar_lea.vmem [#allocation2], 272
      %v3022 = vld [vmem:[%s3021] ss:$4 sm:$0xf]
      %s3023 = scalar_lea.vmem [#allocation2], 241
      %v3024 = vld [vmem:[%s3023] ss:$4 sm:$0xff]
      %s3025 = scalar_lea.vmem [#allocation2], 273
      %v3026 = vld [vmem:[%s3025] ss:$4 sm:$0xf]
      %s3027 = scalar_lea.vmem [#allocation2], 242
      %v3028 = vld [vmem:[%s3027] ss:$4 sm:$0xff]
      %s3029 = scalar_lea.vmem [#allocation2], 274
      %v3030 = vld [vmem:[%s3029] ss:$4 sm:$0xf]
      %s3031 = scalar_lea.vmem [#allocation2], 243
      %v3032 = vld [vmem:[%s3031] ss:$4 sm:$0xff]
      %s3033 = scalar_lea.vmem [#allocation2], 275
      %v3034 = vld [vmem:[%s3033] ss:$4 sm:$0xf]
      %s3035 = scalar_lea.vmem [#allocation2], 244
      %v3036 = vld [vmem:[%s3035] ss:$4 sm:$0xff]
      %s3037 = scalar_lea.vmem [#allocation2], 276
      %v3038 = vld [vmem:[%s3037] ss:$4 sm:$0xf]
      %s3039 = scalar_lea.vmem [#allocation2], 245
      %v3040 = vld [vmem:[%s3039] ss:$4 sm:$0xff]
      %s3041 = scalar_lea.vmem [#allocation2], 277
      %v3042 = vld [vmem:[%s3041] ss:$4 sm:$0xf]
      %s3043 = scalar_lea.vmem [#allocation2], 246
      %v3044 = vld [vmem:[%s3043] ss:$4 sm:$0xff]
      %s3045 = scalar_lea.vmem [#allocation2], 278
      %v3046 = vld [vmem:[%s3045] ss:$4 sm:$0xf]
      %s3047 = scalar_lea.vmem [#allocation2], 247
      %v3048 = vld [vmem:[%s3047] ss:$4 sm:$0xff]
      %s3049 = scalar_lea.vmem [#allocation2], 279
      %v3050 = vld [vmem:[%s3049] ss:$4 sm:$0xf]
      %3053 = vrot.lane.b32.xlu0 %v3024, 32
      %v3054 = vpop.permute.xlu0 %3053
      %3055 = vrot.lane.b32.xlu0 %v3026, 32
      %v3056 = vpop.permute.xlu0 %3055
      %3061 = vrot.lane.b32.xlu0 %v3028, 64
      %v3062 = vpop.permute.xlu0 %3061
      %3063 = vrot.lane.b32.xlu0 %v3030, 64
      %v3064 = vpop.permute.xlu0 %3063
      %3069 = vrot.lane.b32.xlu0 %v3032, 96
      %v3070 = vpop.permute.xlu0 %3069
      %3071 = vrot.lane.b32.xlu0 %v3034, 96
      %v3072 = vpop.permute.xlu0 %3071
      %3077 = vrot.lane.b32.xlu0 %v3040, 32
      %v3078 = vpop.permute.xlu0 %3077
      %3079 = vrot.lane.b32.xlu0 %v3042, 32
      %v3080 = vpop.permute.xlu0 %3079
      %3085 = vrot.lane.b32.xlu0 %v3044, 64
      %v3086 = vpop.permute.xlu0 %3085
      %3087 = vrot.lane.b32.xlu0 %v3046, 64
      %v3088 = vpop.permute.xlu0 %3087
      %3093 = vrot.lane.b32.xlu0 %v3048, 96
      %v3094 = vpop.permute.xlu0 %3093
      %3095 = vrot.lane.b32.xlu0 %v3050, 96
      %v3096 = vpop.permute.xlu0 %3095
      %v3099 = vsel %vm1060, %v3020, %v3054
      %v3100 = vsel %vm1060, %v3022, %v3056
      %v3101 = vsel %vm2731, %v3099, %v3062
      %v3102 = vsel %vm2731, %v3100, %v3064
      %v3103 = vsel %vm2734, %v3101, %v3070
      %v3104 = vsel %vm2734, %v3102, %v3072
      %v3105 = vsel %vm1060, %v3036, %v3078
      %v3106 = vsel %vm1060, %v3038, %v3080
      %v3107 = vsel %vm2731, %v3105, %v3086
      %v3108 = vsel %vm2731, %v3106, %v3088
      %v3109 = vsel %vm2734, %v3107, %v3094
      %v3110 = vsel %vm2734, %v3108, %v3096
      %s3111 = scalar_lea.vmem [#allocation2], 300
      %v3112 = vld [vmem:[%s3111] ss:$4 sm:$0xff]
      %s3113 = scalar_lea.vmem [#allocation2], 332
      %v3114 = vld [vmem:[%s3113] ss:$4 sm:$0xf]
      %s3115 = scalar_lea.vmem [#allocation2], 301
      %v3116 = vld [vmem:[%s3115] ss:$4 sm:$0xff]
      %s3117 = scalar_lea.vmem [#allocation2], 333
      %v3118 = vld [vmem:[%s3117] ss:$4 sm:$0xf]
      %s3119 = scalar_lea.vmem [#allocation2], 302
      %v3120 = vld [vmem:[%s3119] ss:$4 sm:$0xff]
      %s3121 = scalar_lea.vmem [#allocation2], 334
      %v3122 = vld [vmem:[%s3121] ss:$4 sm:$0xf]
      %s3123 = scalar_lea.vmem [#allocation2], 303
      %v3124 = vld [vmem:[%s3123] ss:$4 sm:$0xff]
      %s3125 = scalar_lea.vmem [#allocation2], 335
      %v3126 = vld [vmem:[%s3125] ss:$4 sm:$0xf]
      %s3127 = scalar_lea.vmem [#allocation2], 304
      %v3128 = vld [vmem:[%s3127] ss:$4 sm:$0xff]
      %s3129 = scalar_lea.vmem [#allocation2], 336
      %v3130 = vld [vmem:[%s3129] ss:$4 sm:$0xf]
      %s3131 = scalar_lea.vmem [#allocation2], 305
      %v3132 = vld [vmem:[%s3131] ss:$4 sm:$0xff]
      %s3133 = scalar_lea.vmem [#allocation2], 337
      %v3134 = vld [vmem:[%s3133] ss:$4 sm:$0xf]
      %s3135 = scalar_lea.vmem [#allocation2], 306
      %v3136 = vld [vmem:[%s3135] ss:$4 sm:$0xff]
      %s3137 = scalar_lea.vmem [#allocation2], 338
      %v3138 = vld [vmem:[%s3137] ss:$4 sm:$0xf]
      %s3139 = scalar_lea.vmem [#allocation2], 307
      %v3140 = vld [vmem:[%s3139] ss:$4 sm:$0xff]
      %s3141 = scalar_lea.vmem [#allocation2], 339
      %v3142 = vld [vmem:[%s3141] ss:$4 sm:$0xf]
      %3145 = vrot.lane.b32.xlu0 %v3116, 32
      %v3146 = vpop.permute.xlu0 %3145
      %3147 = vrot.lane.b32.xlu0 %v3118, 32
      %v3148 = vpop.permute.xlu0 %3147
      %3153 = vrot.lane.b32.xlu0 %v3120, 64
      %v3154 = vpop.permute.xlu0 %3153
      %3155 = vrot.lane.b32.xlu0 %v3122, 64
      %v3156 = vpop.permute.xlu0 %3155
      %3161 = vrot.lane.b32.xlu0 %v3124, 96
      %v3162 = vpop.permute.xlu0 %3161
      %3163 = vrot.lane.b32.xlu0 %v3126, 96
      %v3164 = vpop.permute.xlu0 %3163
      %3169 = vrot.lane.b32.xlu0 %v3132, 32
      %v3170 = vpop.permute.xlu0 %3169
      %3171 = vrot.lane.b32.xlu0 %v3134, 32
      %v3172 = vpop.permute.xlu0 %3171
      %3177 = vrot.lane.b32.xlu0 %v3136, 64
      %v3178 = vpop.permute.xlu0 %3177
      %3179 = vrot.lane.b32.xlu0 %v3138, 64
      %v3180 = vpop.permute.xlu0 %3179
      %3185 = vrot.lane.b32.xlu0 %v3140, 96
      %v3186 = vpop.permute.xlu0 %3185
      %3187 = vrot.lane.b32.xlu0 %v3142, 96
      %v3188 = vpop.permute.xlu0 %3187
      %v3191 = vsel %vm1060, %v3112, %v3146
      %v3192 = vsel %vm1060, %v3114, %v3148
      %v3193 = vsel %vm2731, %v3191, %v3154
      %v3194 = vsel %vm2731, %v3192, %v3156
      %v3195 = vsel %vm2734, %v3193, %v3162
      %v3196 = vsel %vm2734, %v3194, %v3164
      %v3197 = vsel %vm1060, %v3128, %v3170
      %v3198 = vsel %vm1060, %v3130, %v3172
      %v3199 = vsel %vm2731, %v3197, %v3178
      %v3200 = vsel %vm2731, %v3198, %v3180
      %v3201 = vsel %vm2734, %v3199, %v3186
      %v3202 = vsel %vm2734, %v3200, %v3188
      %s3203 = scalar_lea.vmem [#allocation2], 360
      %v3204 = vld [vmem:[%s3203] ss:$4 sm:$0xff]
      %s3205 = scalar_lea.vmem [#allocation2], 392
      %v3206 = vld [vmem:[%s3205] ss:$4 sm:$0xf]
      %s3207 = scalar_lea.vmem [#allocation2], 361
      %v3208 = vld [vmem:[%s3207] ss:$4 sm:$0xff]
      %s3209 = scalar_lea.vmem [#allocation2], 393
      %v3210 = vld [vmem:[%s3209] ss:$4 sm:$0xf]
      %s3211 = scalar_lea.vmem [#allocation2], 362
      %v3212 = vld [vmem:[%s3211] ss:$4 sm:$0xff]
      %s3213 = scalar_lea.vmem [#allocation2], 394
      %v3214 = vld [vmem:[%s3213] ss:$4 sm:$0xf]
      %s3215 = scalar_lea.vmem [#allocation2], 363
      %v3216 = vld [vmem:[%s3215] ss:$4 sm:$0xff]
      %s3217 = scalar_lea.vmem [#allocation2], 395
      %v3218 = vld [vmem:[%s3217] ss:$4 sm:$0xf]
      %s3219 = scalar_lea.vmem [#allocation2], 364
      %v3220 = vld [vmem:[%s3219] ss:$4 sm:$0xff]
      %s3221 = scalar_lea.vmem [#allocation2], 396
      %v3222 = vld [vmem:[%s3221] ss:$4 sm:$0xf]
      %s3223 = scalar_lea.vmem [#allocation2], 365
      %v3224 = vld [vmem:[%s3223] ss:$4 sm:$0xff]
      %s3225 = scalar_lea.vmem [#allocation2], 397
      %v3226 = vld [vmem:[%s3225] ss:$4 sm:$0xf]
      %s3227 = scalar_lea.vmem [#allocation2], 366
      %v3228 = vld [vmem:[%s3227] ss:$4 sm:$0xff]
      %s3229 = scalar_lea.vmem [#allocation2], 398
      %v3230 = vld [vmem:[%s3229] ss:$4 sm:$0xf]
      %s3231 = scalar_lea.vmem [#allocation2], 367
      %v3232 = vld [vmem:[%s3231] ss:$4 sm:$0xff]
      %s3233 = scalar_lea.vmem [#allocation2], 399
      %v3234 = vld [vmem:[%s3233] ss:$4 sm:$0xf]
      %3237 = vrot.lane.b32.xlu0 %v3208, 32
      %v3238 = vpop.permute.xlu0 %3237
      %3239 = vrot.lane.b32.xlu0 %v3210, 32
      %v3240 = vpop.permute.xlu0 %3239
      %3245 = vrot.lane.b32.xlu0 %v3212, 64
      %v3246 = vpop.permute.xlu0 %3245
      %3247 = vrot.lane.b32.xlu0 %v3214, 64
      %v3248 = vpop.permute.xlu0 %3247
      %3253 = vrot.lane.b32.xlu0 %v3216, 96
      %v3254 = vpop.permute.xlu0 %3253
      %3255 = vrot.lane.b32.xlu0 %v3218, 96
      %v3256 = vpop.permute.xlu0 %3255
      %3261 = vrot.lane.b32.xlu0 %v3224, 32
      %v3262 = vpop.permute.xlu0 %3261
      %3263 = vrot.lane.b32.xlu0 %v3226, 32
      %v3264 = vpop.permute.xlu0 %3263
      %3269 = vrot.lane.b32.xlu0 %v3228, 64
      %v3270 = vpop.permute.xlu0 %3269
      %3271 = vrot.lane.b32.xlu0 %v3230, 64
      %v3272 = vpop.permute.xlu0 %3271
      %3277 = vrot.lane.b32.xlu0 %v3232, 96
      %v3278 = vpop.permute.xlu0 %3277
      %3279 = vrot.lane.b32.xlu0 %v3234, 96
      %v3280 = vpop.permute.xlu0 %3279
      %v3283 = vsel %vm1060, %v3204, %v3238
      %v3284 = vsel %vm1060, %v3206, %v3240
      %v3285 = vsel %vm2731, %v3283, %v3246
      %v3286 = vsel %vm2731, %v3284, %v3248
      %v3287 = vsel %vm2734, %v3285, %v3254
      %v3288 = vsel %vm2734, %v3286, %v3256
      %v3289 = vsel %vm1060, %v3220, %v3262
      %v3290 = vsel %vm1060, %v3222, %v3264
      %v3291 = vsel %vm2731, %v3289, %v3270
      %v3292 = vsel %vm2731, %v3290, %v3272
      %v3293 = vsel %vm2734, %v3291, %v3278
      %v3294 = vsel %vm2734, %v3292, %v3280
      %s3295 = scalar_lea.vmem [#allocation2], 420
      %v3296 = vld [vmem:[%s3295] ss:$4 sm:$0xff]
      %s3297 = scalar_lea.vmem [#allocation2], 452
      %v3298 = vld [vmem:[%s3297] ss:$4 sm:$0xf]
      %s3299 = scalar_lea.vmem [#allocation2], 421
      %v3300 = vld [vmem:[%s3299] ss:$4 sm:$0xff]
      %s3301 = scalar_lea.vmem [#allocation2], 453
      %v3302 = vld [vmem:[%s3301] ss:$4 sm:$0xf]
      %s3303 = scalar_lea.vmem [#allocation2], 422
      %v3304 = vld [vmem:[%s3303] ss:$4 sm:$0xff]
      %s3305 = scalar_lea.vmem [#allocation2], 454
      %v3306 = vld [vmem:[%s3305] ss:$4 sm:$0xf]
      %s3307 = scalar_lea.vmem [#allocation2], 423
      %v3308 = vld [vmem:[%s3307] ss:$4 sm:$0xff]
      %s3309 = scalar_lea.vmem [#allocation2], 455
      %v3310 = vld [vmem:[%s3309] ss:$4 sm:$0xf]
      %s3311 = scalar_lea.vmem [#allocation2], 424
      %v3312 = vld [vmem:[%s3311] ss:$4 sm:$0xff]
      %s3313 = scalar_lea.vmem [#allocation2], 456
      %v3314 = vld [vmem:[%s3313] ss:$4 sm:$0xf]
      %s3315 = scalar_lea.vmem [#allocation2], 425
      %v3316 = vld [vmem:[%s3315] ss:$4 sm:$0xff]
      %s3317 = scalar_lea.vmem [#allocation2], 457
      %v3318 = vld [vmem:[%s3317] ss:$4 sm:$0xf]
      %s3319 = scalar_lea.vmem [#allocation2], 426
      %v3320 = vld [vmem:[%s3319] ss:$4 sm:$0xff]
      %s3321 = scalar_lea.vmem [#allocation2], 458
      %v3322 = vld [vmem:[%s3321] ss:$4 sm:$0xf]
      %s3323 = scalar_lea.vmem [#allocation2], 427
      %v3324 = vld [vmem:[%s3323] ss:$4 sm:$0xff]
      %s3325 = scalar_lea.vmem [#allocation2], 459
      %v3326 = vld [vmem:[%s3325] ss:$4 sm:$0xf]
      %3329 = vrot.lane.b32.xlu0 %v3300, 32
      %v3330 = vpop.permute.xlu0 %3329
      %3331 = vrot.lane.b32.xlu0 %v3302, 32
      %v3332 = vpop.permute.xlu0 %3331
      %3337 = vrot.lane.b32.xlu0 %v3304, 64
      %v3338 = vpop.permute.xlu0 %3337
      %3339 = vrot.lane.b32.xlu0 %v3306, 64
      %v3340 = vpop.permute.xlu0 %3339
      %3345 = vrot.lane.b32.xlu0 %v3308, 96
      %v3346 = vpop.permute.xlu0 %3345
      %3347 = vrot.lane.b32.xlu0 %v3310, 96
      %v3348 = vpop.permute.xlu0 %3347
      %3353 = vrot.lane.b32.xlu0 %v3316, 32
      %v3354 = vpop.permute.xlu0 %3353
      %3355 = vrot.lane.b32.xlu0 %v3318, 32
      %v3356 = vpop.permute.xlu0 %3355
      %3361 = vrot.lane.b32.xlu0 %v3320, 64
      %v3362 = vpop.permute.xlu0 %3361
      %3363 = vrot.lane.b32.xlu0 %v3322, 64
      %v3364 = vpop.permute.xlu0 %3363
      %3369 = vrot.lane.b32.xlu0 %v3324, 96
      %v3370 = vpop.permute.xlu0 %3369
      %3371 = vrot.lane.b32.xlu0 %v3326, 96
      %v3372 = vpop.permute.xlu0 %3371
      %v3375 = vsel %vm1060, %v3296, %v3330
      %v3376 = vsel %vm1060, %v3298, %v3332
      %v3377 = vsel %vm2731, %v3375, %v3338
      %v3378 = vsel %vm2731, %v3376, %v3340
      %v3379 = vsel %vm2734, %v3377, %v3346
      %v3380 = vsel %vm2734, %v3378, %v3348
      %v3381 = vsel %vm1060, %v3312, %v3354
      %v3382 = vsel %vm1060, %v3314, %v3356
      %v3383 = vsel %vm2731, %v3381, %v3362
      %v3384 = vsel %vm2731, %v3382, %v3364
      %v3385 = vsel %vm2734, %v3383, %v3370
      %v3386 = vsel %vm2734, %v3384, %v3372
      %v3391 = vrot.slane %v2827, 4
      %v3392 = vrot.slane %v2833, 4
      %v3393 = vrot.slane %v2828, 4
      %v3394 = vsel %vm875, %v3391, %v3393
      %v3395 = vrot.slane %v2834, 4
      %v3396 = vsel %vm875, %v3392, %v3395
      %v3405 = vrot.slane %v3011, 4
      %v3406 = vrot.slane %v3017, 4
      %v3407 = vrot.slane %v3012, 4
      %v3408 = vsel %vm875, %v3405, %v3407
      %v3409 = vrot.slane %v3018, 4
      %v3410 = vsel %vm875, %v3406, %v3409
      %v3419 = vrot.slane %v3195, 4
      %v3420 = vrot.slane %v3201, 4
      %v3421 = vrot.slane %v3196, 4
      %v3422 = vsel %vm875, %v3419, %v3421
      %v3423 = vrot.slane %v3202, 4
      %v3424 = vsel %vm875, %v3420, %v3423
      %v3433 = vrot.slane %v3379, 4
      %v3434 = vrot.slane %v3385, 4
      %v3435 = vrot.slane %v3380, 4
      %v3436 = vsel %vm875, %v3433, %v3435
      %v3437 = vrot.slane %v3386, 4
      %v3438 = vsel %vm875, %v3434, %v3437
      %v3443 = vsel %vm875, %v2736, %v3391
      %v3444 = vsel %vm875, %v2742, %v3392
      %v3445 = vsel %vm875, %v2920, %v3405
      %v3446 = vsel %vm875, %v2926, %v3406
      %v3447 = vsel %vm875, %v3104, %v3419
      %v3448 = vsel %vm875, %v3110, %v3420
      %v3449 = vsel %vm875, %v3288, %v3433
      %v3450 = vsel %vm875, %v3294, %v3434
      %v3451 = vpack.c.bf16 %v3443, %v2735
      %v3452 = vpack.c.bf16 %v3444, %v2741
      %v3453 = vpack.c.bf16 %v2919, %v3394
      %v3454 = vpack.c.bf16 %v2925, %v3396
      %v3455 = vpack.c.bf16 %v3408, %v3445
      %v3456 = vpack.c.bf16 %v3410, %v3446
      %v3457 = vpack.c.bf16 %v3447, %v3103
      %v3458 = vpack.c.bf16 %v3448, %v3109
      %v3459 = vpack.c.bf16 %v3287, %v3422
      %v3460 = vpack.c.bf16 %v3293, %v3424
      %v3461 = vpack.c.bf16 %v3436, %v3449
      %v3462 = vpack.c.bf16 %v3438, %v3450
      %v3464 = vlaneseq
      %v3465 = vshrl.u32 %v3464, 7
      %v3466 = vsub.s32 0, %v3465
      %v3467 = vrot.slane %v2649, %v3466
      %v3501 = vunpack.c.l.b16 %v2616
      %v3502 = vunpack.c.l.b16 %v2617
      %v3503 = vunpack.c.l.b16 %v2618
      %v3504 = vunpack.c.l.b16 %v2619
      %v3505 = vunpack.c.l.b16 %v2620
      %v3506 = vunpack.c.l.b16 %v2621
      %v3507 = vunpack.c.l.b16 %v2622
      %v3508 = vunpack.c.l.b16 %v2623
      %v3509 = vunpack.c.l.b16 %v2624
      %v3510 = vunpack.c.l.b16 %v2625
      %v3511 = vunpack.c.l.b16 %v2626
      %v3512 = vunpack.c.l.b16 %v2627
      %v3513 = vunpack.c.l.b16 %v2628
      %v3514 = vunpack.c.l.b16 %v2629
      %v3515 = vunpack.c.l.b16 %v2630
      %v3516 = vunpack.c.l.b16 %v2631
      %v3517 = vunpack.c.l.b16 %v2632
      %v3518 = vunpack.c.l.b16 %v2633
      %v3519 = vunpack.c.l.b16 %v2634
      %v3520 = vunpack.c.l.b16 %v2635
      %v3521 = vunpack.c.l.b16 %v2636
      %v3522 = vunpack.c.l.b16 %v2637
      %v3523 = vunpack.c.l.b16 %v2638
      %v3524 = vunpack.c.l.b16 %v2639
      %v3525 = vunpack.c.l.b16 %v2640
      %v3526 = vunpack.c.l.b16 %v2641
      %v3527 = vunpack.c.l.b16 %v2642
      %v3528 = vunpack.c.l.b16 %v2643
      %v3529 = vunpack.c.l.b16 %v2644
      %v3530 = vunpack.c.l.b16 %v2645
      %v3531 = vunpack.c.l.b16 %v2646
      %v3532 = vunpack.c.l.b16 %v2647
      %v3533 = vpack.c.b16 %v3502, %v3501
      %v3534 = vpack.c.b16 %v3504, %v3503
      %v3535 = vpack.c.b16 %v3506, %v3505
      %v3536 = vpack.c.b16 %v3508, %v3507
      %v3537 = vpack.c.b16 %v3510, %v3509
      %v3538 = vpack.c.b16 %v3512, %v3511
      %v3539 = vpack.c.b16 %v3514, %v3513
      %v3540 = vpack.c.b16 %v3516, %v3515
      %v3541 = vpack.c.b16 %v3518, %v3517
      %v3542 = vpack.c.b16 %v3520, %v3519
      %v3543 = vpack.c.b16 %v3522, %v3521
      %v3544 = vpack.c.b16 %v3524, %v3523
      %v3545 = vpack.c.b16 %v3526, %v3525
      %v3546 = vpack.c.b16 %v3528, %v3527
      %v3547 = vpack.c.b16 %v3530, %v3529
      %v3548 = vpack.c.b16 %v3532, %v3531
      %3565 = vmatprep.subr.bf16.mxu0 0
      %3566 = vmatpush1.bf16.msra.mxu0 %v3540
      %3567 = vmatprep.subr.bf16.mxu0 0
      %3568 = vmatpush1.bf16.msra.mxu0 %v3539
      %3569 = vmatprep.subr.bf16.mxu0 0
      %3570 = vmatpush1.bf16.msra.mxu0 %v3538
      %3571 = vmatprep.subr.bf16.mxu0 0
      %3572 = vmatpush1.bf16.msra.mxu0 %v3537
      %3573 = vmatprep.subr.bf16.mxu0 0
      %3574 = vmatpush1.bf16.msra.mxu0 %v3536
      %3575 = vmatprep.subr.bf16.mxu0 0
      %3576 = vmatpush1.bf16.msra.mxu0 %v3535
      %3577 = vmatprep.subr.bf16.mxu0 0
      %3578 = vmatpush1.bf16.msra.mxu0 %v3534
      %3579 = vmatprep.subr.bf16.mxu0 0
      %3580 = vmatpush1.bf16.msra.mxu0 %v3533
      %3581 = vmatprep.subr.bf16.mxu0 0
      %3582 = vmatpush2.bf16.msra.mxu0 %v3548
      %3583 = vmatprep.subr.bf16.mxu0 0
      %3584 = vmatpush2.bf16.msra.mxu0 %v3547
      %3585 = vmatprep.subr.bf16.mxu0 0
      %3586 = vmatpush2.bf16.msra.mxu0 %v3546
      %3587 = vmatprep.subr.bf16.mxu0 0
      %3588 = vmatpush2.bf16.msra.mxu0 %v3545
      %3589 = vmatprep.subr.bf16.mxu0 0
      %3590 = vmatpush2.bf16.msra.mxu0 %v3544
      %3591 = vmatprep.subr.bf16.mxu0 0
      %3592 = vmatpush2.bf16.msra.mxu0 %v3543
      %3593 = vmatprep.subr.bf16.mxu0 0
      %3594 = vmatpush2.bf16.msra.mxu0 %v3542
      %3595 = vmatprep.subr.bf16.mxu0 0
      %3596 = vmatpush2.bf16.msra.mxu0 %v3541
      %3597 = vmatprep.mubr.bf16.mxu0 %v3452
      %3598 = vmatmul.mubr.bf16.gmra.mxu0 %v3451
      %v3599 = vpop.f32.mrf.mxu0
      %v3600 = vadd.f32 %v3467, %v3599
      %v3601 = vpop.f32.mrf.mxu0
      %v3602 = vpop.f32.mrf.mxu0
      %v3603 = vadd.f32 %v3467, %v3602
      %v3604 = vpop.f32.mrf.mxu0
      %3605 = vmatprep.mubr.bf16.mxu0 %v3454
      %3606 = vmatmul.mubr.bf16.gmra.mxu0 %v3453
      %v3607 = vpop.f32.mrf.mxu0
      %v3608 = vadd.f32 %v3467, %v3607
      %v3609 = vpop.f32.mrf.mxu0
      %v3610 = vpop.f32.mrf.mxu0
      %v3611 = vadd.f32 %v3467, %v3610
      %v3612 = vpop.f32.mrf.mxu0
      %3613 = vmatprep.mubr.bf16.mxu0 %v3456
      %3614 = vmatmul.mubr.bf16.gmra.mxu0 %v3455
      %v3615 = vpop.f32.mrf.mxu0
      %v3616 = vadd.f32 %v3467, %v3615
      %v3617 = vpop.f32.mrf.mxu0
      %v3618 = vpop.f32.mrf.mxu0
      %v3619 = vadd.f32 %v3467, %v3618
      %v3620 = vpop.f32.mrf.mxu0
      %3621 = vmatprep.mubr.bf16.mxu0 %v3458
      %3622 = vmatmul.mubr.bf16.gmra.mxu0 %v3457
      %v3623 = vpop.f32.mrf.mxu0
      %v3624 = vadd.f32 %v3467, %v3623
      %v3625 = vpop.f32.mrf.mxu0
      %v3626 = vpop.f32.mrf.mxu0
      %v3627 = vadd.f32 %v3467, %v3626
      %v3628 = vpop.f32.mrf.mxu0
      %3629 = vmatprep.mubr.bf16.mxu0 %v3460
      %3630 = vmatmul.mubr.bf16.gmra.mxu0 %v3459
      %v3631 = vpop.f32.mrf.mxu0
      %v3632 = vadd.f32 %v3467, %v3631
      %v3633 = vpop.f32.mrf.mxu0
      %v3634 = vpop.f32.mrf.mxu0
      %v3635 = vadd.f32 %v3467, %v3634
      %v3636 = vpop.f32.mrf.mxu0
      %3637 = vmatprep.mubr.bf16.mxu0 %v3462
      %3638 = vmatmul.mubr.bf16.gmra.mxu0 %v3461
      %v3639 = vpop.f32.mrf.mxu0
      %v3640 = vadd.f32 %v3467, %v3639
      %v3641 = vpop.f32.mrf.mxu0
      %v3642 = vpop.f32.mrf.mxu0
      %v3643 = vadd.f32 %v3467, %v3642
      %v3644 = vpop.f32.mrf.mxu0
      %3645 = vdwg.mxu0
      %v3646 = vmax.f32 %v3600, 0.0
      %v3647 = vmax.f32 %v3603, 0.0
      %v3648 = vmax.f32 %v3608, 0.0
      %v3649 = vmax.f32 %v3611, 0.0
      %v3650 = vmax.f32 %v3616, 0.0
      %v3651 = vmax.f32 %v3619, 0.0
      %v3652 = vmax.f32 %v3624, 0.0
      %v3653 = vmax.f32 %v3627, 0.0
      %v3654 = vmax.f32 %v3632, 0.0
      %v3655 = vmax.f32 %v3635, 0.0
      %v3656 = vmax.f32 %v3640, 0.0
      %v3657 = vmax.f32 %v3643, 0.0
      %3658 = vst.msk [vmem:[#allocation3] sm:$0xff] %vm1060, %v3646
      %3659 = vst.msk [vmem:[#allocation3 + $0x8] sm:$0xff] %vm1060, %v3647
      %3660 = vst.msk [vmem:[#allocation3 + $0x10] sm:$0xff] %vm1060, %v3648
      %3661 = vst.msk [vmem:[#allocation3 + $0x18] sm:$0xff] %vm1060, %v3649
      %3662 = vst.msk [vmem:[#allocation3 + $0x20] sm:$0xff] %vm1060, %v3650
      %3663 = vst.msk [vmem:[#allocation3 + $0x28] sm:$0xff] %vm1060, %v3651
      %3664 = vst.msk [vmem:[#allocation3 + $0x30] sm:$0xff] %vm1060, %v3652
      %3665 = vst.msk [vmem:[#allocation3 + $0x38] sm:$0xff] %vm1060, %v3653
      %3666 = vst.msk [vmem:[#allocation3 + $0x40] sm:$0xff] %vm1060, %v3654
      %3667 = vst.msk [vmem:[#allocation3 + $0x48] sm:$0xff] %vm1060, %v3655
      %3668 = vst.msk [vmem:[#allocation3 + $0x50] sm:$0xff] %vm1060, %v3656
      %3669 = vst.msk [vmem:[#allocation3 + $0x58] sm:$0xff] %vm1060, %v3657
      %s3670 = scalar_lea.vmem %s2, 256
      %v3671 = vld [vmem:[%s3670] sm:$0xf]
      %v3672 = vld [vmem:[%s3670 + $0x4] sm:$0xf]
      %v3673 = vld [vmem:[%s3670 + $0x8] sm:$0xf]
      %v3674 = vld [vmem:[%s3670 + $0xc] sm:$0xf]
      %v3675 = vld [vmem:[%s3670 + $0x10] sm:$0xf]
      %v3676 = vld [vmem:[%s3670 + $0x14] sm:$0xf]
      %v3677 = vld [vmem:[%s3670 + $0x18] sm:$0xf]
      %v3678 = vld [vmem:[%s3670 + $0x1c] sm:$0xf]
      %v3679 = vld [vmem:[%s3670 + $0x20] sm:$0xf]
      %v3680 = vld [vmem:[%s3670 + $0x24] sm:$0xf]
      %v3681 = vld [vmem:[%s3670 + $0x28] sm:$0xf]
      %v3682 = vld [vmem:[%s3670 + $0x2c] sm:$0xf]
      %v3683 = vld [vmem:[%s3670 + $0x30] sm:$0xf]
      %v3684 = vld [vmem:[%s3670 + $0x34] sm:$0xf]
      %v3685 = vld [vmem:[%s3670 + $0x38] sm:$0xf]
      %v3686 = vld [vmem:[%s3670 + $0x3c] sm:$0xf]
      %v3687 = vld [vmem:[%s3670 + $0x40] sm:$0xf]
      %v3688 = vld [vmem:[%s3670 + $0x44] sm:$0xf]
      %v3689 = vld [vmem:[%s3670 + $0x48] sm:$0xf]
      %v3690 = vld [vmem:[%s3670 + $0x4c] sm:$0xf]
      %v3691 = vld [vmem:[%s3670 + $0x50] sm:$0xf]
      %v3692 = vld [vmem:[%s3670 + $0x54] sm:$0xf]
      %v3693 = vld [vmem:[%s3670 + $0x58] sm:$0xf]
      %v3694 = vld [vmem:[%s3670 + $0x5c] sm:$0xf]
      %v3695 = vld [vmem:[%s3670 + $0x60] sm:$0xf]
      %v3696 = vld [vmem:[%s3670 + $0x64] sm:$0xf]
      %v3697 = vld [vmem:[%s3670 + $0x68] sm:$0xf]
      %v3698 = vld [vmem:[%s3670 + $0x6c] sm:$0xf]
      %v3699 = vld [vmem:[%s3670 + $0x70] sm:$0xf]
      %v3700 = vld [vmem:[%s3670 + $0x74] sm:$0xf]
      %v3701 = vld [vmem:[%s3670 + $0x78] sm:$0xf]
      %v3702 = vld [vmem:[%s3670 + $0x7c] sm:$0xf]
      %s3703 = scalar_lea.vmem %s3, 3
      %v3704 = vld [vmem:[%s3703] sm:$0x1]
      %v3705 = vld [vmem:[#allocation3] ss:$4 sm:$0x3]
      %s3706 = scalar_lea.vmem [#allocation3], 1
      %v3707 = vld [vmem:[%s3706] ss:$4 sm:$0x3]
      %s3708 = scalar_lea.vmem [#allocation3], 2
      %v3709 = vld [vmem:[%s3708] ss:$4 sm:$0x3]
      %s3710 = scalar_lea.vmem [#allocation3], 3
      %v3711 = vld [vmem:[%s3710] ss:$4 sm:$0x3]
      %s3712 = scalar_lea.vmem [#allocation3], 4
      %v3713 = vld [vmem:[%s3712] ss:$4 sm:$0x3]
      %s3714 = scalar_lea.vmem [#allocation3], 5
      %v3715 = vld [vmem:[%s3714] ss:$4 sm:$0x3]
      %s3716 = scalar_lea.vmem [#allocation3], 6
      %v3717 = vld [vmem:[%s3716] ss:$4 sm:$0x3]
      %s3718 = scalar_lea.vmem [#allocation3], 7
      %v3719 = vld [vmem:[%s3718] ss:$4 sm:$0x3]
      %3721 = vrot.lane.b32.xlu0 %v3707, 32
      %v3722 = vpop.permute.xlu0 %3721
      %3725 = vrot.lane.b32.xlu0 %v3709, 64
      %v3726 = vpop.permute.xlu0 %3725
      %3729 = vrot.lane.b32.xlu0 %v3711, 96
      %v3730 = vpop.permute.xlu0 %3729
      %3733 = vrot.lane.b32.xlu0 %v3715, 32
      %v3734 = vpop.permute.xlu0 %3733
      %3737 = vrot.lane.b32.xlu0 %v3717, 64
      %v3738 = vpop.permute.xlu0 %3737
      %3741 = vrot.lane.b32.xlu0 %v3719, 96
      %v3742 = vpop.permute.xlu0 %3741
      %v3744 = vsel %vm1060, %v3705, %v3722
      %v3745 = vsel %vm2731, %v3744, %v3726
      %v3746 = vsel %vm2734, %v3745, %v3730
      %v3747 = vsel %vm1060, %v3713, %v3734
      %v3748 = vsel %vm2731, %v3747, %v3738
      %v3749 = vsel %vm2734, %v3748, %v3742
      %s3750 = scalar_lea.vmem [#allocation3], 12
      %v3751 = vld [vmem:[%s3750] ss:$4 sm:$0x3]
      %s3752 = scalar_lea.vmem [#allocation3], 13
      %v3753 = vld [vmem:[%s3752] ss:$4 sm:$0x3]
      %s3754 = scalar_lea.vmem [#allocation3], 14
      %v3755 = vld [vmem:[%s3754] ss:$4 sm:$0x3]
      %s3756 = scalar_lea.vmem [#allocation3], 15
      %v3757 = vld [vmem:[%s3756] ss:$4 sm:$0x3]
      %s3758 = scalar_lea.vmem [#allocation3], 16
      %v3759 = vld [vmem:[%s3758] ss:$4 sm:$0x3]
      %s3760 = scalar_lea.vmem [#allocation3], 17
      %v3761 = vld [vmem:[%s3760] ss:$4 sm:$0x3]
      %s3762 = scalar_lea.vmem [#allocation3], 18
      %v3763 = vld [vmem:[%s3762] ss:$4 sm:$0x3]
      %s3764 = scalar_lea.vmem [#allocation3], 19
      %v3765 = vld [vmem:[%s3764] ss:$4 sm:$0x3]
      %3767 = vrot.lane.b32.xlu0 %v3753, 32
      %v3768 = vpop.permute.xlu0 %3767
      %3771 = vrot.lane.b32.xlu0 %v3755, 64
      %v3772 = vpop.permute.xlu0 %3771
      %3775 = vrot.lane.b32.xlu0 %v3757, 96
      %v3776 = vpop.permute.xlu0 %3775
      %3779 = vrot.lane.b32.xlu0 %v3761, 32
      %v3780 = vpop.permute.xlu0 %3779
      %3783 = vrot.lane.b32.xlu0 %v3763, 64
      %v3784 = vpop.permute.xlu0 %3783
      %3787 = vrot.lane.b32.xlu0 %v3765, 96
      %v3788 = vpop.permute.xlu0 %3787
      %v3790 = vsel %vm1060, %v3751, %v3768
      %v3791 = vsel %vm2731, %v3790, %v3772
      %v3792 = vsel %vm2734, %v3791, %v3776
      %v3793 = vsel %vm1060, %v3759, %v3780
      %v3794 = vsel %vm2731, %v3793, %v3784
      %v3795 = vsel %vm2734, %v3794, %v3788
      %s3796 = scalar_lea.vmem [#allocation3], 24
      %v3797 = vld [vmem:[%s3796] ss:$4 sm:$0x3]
      %s3798 = scalar_lea.vmem [#allocation3], 25
      %v3799 = vld [vmem:[%s3798] ss:$4 sm:$0x3]
      %s3800 = scalar_lea.vmem [#allocation3], 26
      %v3801 = vld [vmem:[%s3800] ss:$4 sm:$0x3]
      %s3802 = scalar_lea.vmem [#allocation3], 27
      %v3803 = vld [vmem:[%s3802] ss:$4 sm:$0x3]
      %s3804 = scalar_lea.vmem [#allocation3], 28
      %v3805 = vld [vmem:[%s3804] ss:$4 sm:$0x3]
      %s3806 = scalar_lea.vmem [#allocation3], 29
      %v3807 = vld [vmem:[%s3806] ss:$4 sm:$0x3]
      %s3808 = scalar_lea.vmem [#allocation3], 30
      %v3809 = vld [vmem:[%s3808] ss:$4 sm:$0x3]
      %s3810 = scalar_lea.vmem [#allocation3], 31
      %v3811 = vld [vmem:[%s3810] ss:$4 sm:$0x3]
      %3813 = vrot.lane.b32.xlu0 %v3799, 32
      %v3814 = vpop.permute.xlu0 %3813
      %3817 = vrot.lane.b32.xlu0 %v3801, 64
      %v3818 = vpop.permute.xlu0 %3817
      %3821 = vrot.lane.b32.xlu0 %v3803, 96
      %v3822 = vpop.permute.xlu0 %3821
      %3825 = vrot.lane.b32.xlu0 %v3807, 32
      %v3826 = vpop.permute.xlu0 %3825
      %3829 = vrot.lane.b32.xlu0 %v3809, 64
      %v3830 = vpop.permute.xlu0 %3829
      %3833 = vrot.lane.b32.xlu0 %v3811, 96
      %v3834 = vpop.permute.xlu0 %3833
      %v3836 = vsel %vm1060, %v3797, %v3814
      %v3837 = vsel %vm2731, %v3836, %v3818
      %v3838 = vsel %vm2734, %v3837, %v3822
      %v3839 = vsel %vm1060, %v3805, %v3826
      %v3840 = vsel %vm2731, %v3839, %v3830
      %v3841 = vsel %vm2734, %v3840, %v3834
      %s3842 = scalar_lea.vmem [#allocation3], 36
      %v3843 = vld [vmem:[%s3842] ss:$4 sm:$0x3]
      %s3844 = scalar_lea.vmem [#allocation3], 37
      %v3845 = vld [vmem:[%s3844] ss:$4 sm:$0x3]
      %s3846 = scalar_lea.vmem [#allocation3], 38
      %v3847 = vld [vmem:[%s3846] ss:$4 sm:$0x3]
      %s3848 = scalar_lea.vmem [#allocation3], 39
      %v3849 = vld [vmem:[%s3848] ss:$4 sm:$0x3]
      %s3850 = scalar_lea.vmem [#allocation3], 40
      %v3851 = vld [vmem:[%s3850] ss:$4 sm:$0x3]
      %s3852 = scalar_lea.vmem [#allocation3], 41
      %v3853 = vld [vmem:[%s3852] ss:$4 sm:$0x3]
      %s3854 = scalar_lea.vmem [#allocation3], 42
      %v3855 = vld [vmem:[%s3854] ss:$4 sm:$0x3]
      %s3856 = scalar_lea.vmem [#allocation3], 43
      %v3857 = vld [vmem:[%s3856] ss:$4 sm:$0x3]
      %3859 = vrot.lane.b32.xlu0 %v3845, 32
      %v3860 = vpop.permute.xlu0 %3859
      %3863 = vrot.lane.b32.xlu0 %v3847, 64
      %v3864 = vpop.permute.xlu0 %3863
      %3867 = vrot.lane.b32.xlu0 %v3849, 96
      %v3868 = vpop.permute.xlu0 %3867
      %3871 = vrot.lane.b32.xlu0 %v3853, 32
      %v3872 = vpop.permute.xlu0 %3871
      %3875 = vrot.lane.b32.xlu0 %v3855, 64
      %v3876 = vpop.permute.xlu0 %3875
      %3879 = vrot.lane.b32.xlu0 %v3857, 96
      %v3880 = vpop.permute.xlu0 %3879
      %v3882 = vsel %vm1060, %v3843, %v3860
      %v3883 = vsel %vm2731, %v3882, %v3864
      %v3884 = vsel %vm2734, %v3883, %v3868
      %v3885 = vsel %vm1060, %v3851, %v3872
      %v3886 = vsel %vm2731, %v3885, %v3876
      %v3887 = vsel %vm2734, %v3886, %v3880
      %s3888 = scalar_lea.vmem [#allocation3], 48
      %v3889 = vld [vmem:[%s3888] ss:$4 sm:$0x3]
      %s3890 = scalar_lea.vmem [#allocation3], 49
      %v3891 = vld [vmem:[%s3890] ss:$4 sm:$0x3]
      %s3892 = scalar_lea.vmem [#allocation3], 50
      %v3893 = vld [vmem:[%s3892] ss:$4 sm:$0x3]
      %s3894 = scalar_lea.vmem [#allocation3], 51
      %v3895 = vld [vmem:[%s3894] ss:$4 sm:$0x3]
      %s3896 = scalar_lea.vmem [#allocation3], 52
      %v3897 = vld [vmem:[%s3896] ss:$4 sm:$0x3]
      %s3898 = scalar_lea.vmem [#allocation3], 53
      %v3899 = vld [vmem:[%s3898] ss:$4 sm:$0x3]
      %s3900 = scalar_lea.vmem [#allocation3], 54
      %v3901 = vld [vmem:[%s3900] ss:$4 sm:$0x3]
      %s3902 = scalar_lea.vmem [#allocation3], 55
      %v3903 = vld [vmem:[%s3902] ss:$4 sm:$0x3]
      %3905 = vrot.lane.b32.xlu0 %v3891, 32
      %v3906 = vpop.permute.xlu0 %3905
      %3909 = vrot.lane.b32.xlu0 %v3893, 64
      %v3910 = vpop.permute.xlu0 %3909
      %3913 = vrot.lane.b32.xlu0 %v3895, 96
      %v3914 = vpop.permute.xlu0 %3913
      %3917 = vrot.lane.b32.xlu0 %v3899, 32
      %v3918 = vpop.permute.xlu0 %3917
      %3921 = vrot.lane.b32.xlu0 %v3901, 64
      %v3922 = vpop.permute.xlu0 %3921
      %3925 = vrot.lane.b32.xlu0 %v3903, 96
      %v3926 = vpop.permute.xlu0 %3925
      %v3928 = vsel %vm1060, %v3889, %v3906
      %v3929 = vsel %vm2731, %v3928, %v3910
      %v3930 = vsel %vm2734, %v3929, %v3914
      %v3931 = vsel %vm1060, %v3897, %v3918
      %v3932 = vsel %vm2731, %v3931, %v3922
      %v3933 = vsel %vm2734, %v3932, %v3926
      %s3934 = scalar_lea.vmem [#allocation3], 60
      %v3935 = vld [vmem:[%s3934] ss:$4 sm:$0x3]
      %s3936 = scalar_lea.vmem [#allocation3], 61
      %v3937 = vld [vmem:[%s3936] ss:$4 sm:$0x3]
      %s3938 = scalar_lea.vmem [#allocation3], 62
      %v3939 = vld [vmem:[%s3938] ss:$4 sm:$0x3]
      %s3940 = scalar_lea.vmem [#allocation3], 63
      %v3941 = vld [vmem:[%s3940] ss:$4 sm:$0x3]
      %s3942 = scalar_lea.vmem [#allocation3], 64
      %v3943 = vld [vmem:[%s3942] ss:$4 sm:$0x3]
      %s3944 = scalar_lea.vmem [#allocation3], 65
      %v3945 = vld [vmem:[%s3944] ss:$4 sm:$0x3]
      %s3946 = scalar_lea.vmem [#allocation3], 66
      %v3947 = vld [vmem:[%s3946] ss:$4 sm:$0x3]
      %s3948 = scalar_lea.vmem [#allocation3], 67
      %v3949 = vld [vmem:[%s3948] ss:$4 sm:$0x3]
      %3951 = vrot.lane.b32.xlu0 %v3937, 32
      %v3952 = vpop.permute.xlu0 %3951
      %3955 = vrot.lane.b32.xlu0 %v3939, 64
      %v3956 = vpop.permute.xlu0 %3955
      %3959 = vrot.lane.b32.xlu0 %v3941, 96
      %v3960 = vpop.permute.xlu0 %3959
      %3963 = vrot.lane.b32.xlu0 %v3945, 32
      %v3964 = vpop.permute.xlu0 %3963
      %3967 = vrot.lane.b32.xlu0 %v3947, 64
      %v3968 = vpop.permute.xlu0 %3967
      %3971 = vrot.lane.b32.xlu0 %v3949, 96
      %v3972 = vpop.permute.xlu0 %3971
      %v3974 = vsel %vm1060, %v3935, %v3952
      %v3975 = vsel %vm2731, %v3974, %v3956
      %v3976 = vsel %vm2734, %v3975, %v3960
      %v3977 = vsel %vm1060, %v3943, %v3964
      %v3978 = vsel %vm2731, %v3977, %v3968
      %v3979 = vsel %vm2734, %v3978, %v3972
      %s3980 = scalar_lea.vmem [#allocation3], 72
      %v3981 = vld [vmem:[%s3980] ss:$4 sm:$0x3]
      %s3982 = scalar_lea.vmem [#allocation3], 73
      %v3983 = vld [vmem:[%s3982] ss:$4 sm:$0x3]
      %s3984 = scalar_lea.vmem [#allocation3], 74
      %v3985 = vld [vmem:[%s3984] ss:$4 sm:$0x3]
      %s3986 = scalar_lea.vmem [#allocation3], 75
      %v3987 = vld [vmem:[%s3986] ss:$4 sm:$0x3]
      %s3988 = scalar_lea.vmem [#allocation3], 76
      %v3989 = vld [vmem:[%s3988] ss:$4 sm:$0x3]
      %s3990 = scalar_lea.vmem [#allocation3], 77
      %v3991 = vld [vmem:[%s3990] ss:$4 sm:$0x3]
      %s3992 = scalar_lea.vmem [#allocation3], 78
      %v3993 = vld [vmem:[%s3992] ss:$4 sm:$0x3]
      %s3994 = scalar_lea.vmem [#allocation3], 79
      %v3995 = vld [vmem:[%s3994] ss:$4 sm:$0x3]
      %3997 = vrot.lane.b32.xlu0 %v3983, 32
      %v3998 = vpop.permute.xlu0 %3997
      %4001 = vrot.lane.b32.xlu0 %v3985, 64
      %v4002 = vpop.permute.xlu0 %4001
      %4005 = vrot.lane.b32.xlu0 %v3987, 96
      %v4006 = vpop.permute.xlu0 %4005
      %4009 = vrot.lane.b32.xlu0 %v3991, 32
      %v4010 = vpop.permute.xlu0 %4009
      %4013 = vrot.lane.b32.xlu0 %v3993, 64
      %v4014 = vpop.permute.xlu0 %4013
      %4017 = vrot.lane.b32.xlu0 %v3995, 96
      %v4018 = vpop.permute.xlu0 %4017
      %v4020 = vsel %vm1060, %v3981, %v3998
      %v4021 = vsel %vm2731, %v4020, %v4002
      %v4022 = vsel %vm2734, %v4021, %v4006
      %v4023 = vsel %vm1060, %v3989, %v4010
      %v4024 = vsel %vm2731, %v4023, %v4014
      %v4025 = vsel %vm2734, %v4024, %v4018
      %s4026 = scalar_lea.vmem [#allocation3], 84
      %v4027 = vld [vmem:[%s4026] ss:$4 sm:$0x3]
      %s4028 = scalar_lea.vmem [#allocation3], 85
      %v4029 = vld [vmem:[%s4028] ss:$4 sm:$0x3]
      %s4030 = scalar_lea.vmem [#allocation3], 86
      %v4031 = vld [vmem:[%s4030] ss:$4 sm:$0x3]
      %s4032 = scalar_lea.vmem [#allocation3], 87
      %v4033 = vld [vmem:[%s4032] ss:$4 sm:$0x3]
      %s4034 = scalar_lea.vmem [#allocation3], 88
      %v4035 = vld [vmem:[%s4034] ss:$4 sm:$0x3]
      %s4036 = scalar_lea.vmem [#allocation3], 89
      %v4037 = vld [vmem:[%s4036] ss:$4 sm:$0x3]
      %s4038 = scalar_lea.vmem [#allocation3], 90
      %v4039 = vld [vmem:[%s4038] ss:$4 sm:$0x3]
      %s4040 = scalar_lea.vmem [#allocation3], 91
      %v4041 = vld [vmem:[%s4040] ss:$4 sm:$0x3]
      %4043 = vrot.lane.b32.xlu0 %v4029, 32
      %v4044 = vpop.permute.xlu0 %4043
      %4047 = vrot.lane.b32.xlu0 %v4031, 64
      %v4048 = vpop.permute.xlu0 %4047
      %4051 = vrot.lane.b32.xlu0 %v4033, 96
      %v4052 = vpop.permute.xlu0 %4051
      %4055 = vrot.lane.b32.xlu0 %v4037, 32
      %v4056 = vpop.permute.xlu0 %4055
      %4059 = vrot.lane.b32.xlu0 %v4039, 64
      %v4060 = vpop.permute.xlu0 %4059
      %4063 = vrot.lane.b32.xlu0 %v4041, 96
      %v4064 = vpop.permute.xlu0 %4063
      %v4066 = vsel %vm1060, %v4027, %v4044
      %v4067 = vsel %vm2731, %v4066, %v4048
      %v4068 = vsel %vm2734, %v4067, %v4052
      %v4069 = vsel %vm1060, %v4035, %v4056
      %v4070 = vsel %vm2731, %v4069, %v4060
      %v4071 = vsel %vm2734, %v4070, %v4064
      %v4074 = vrot.slane %v3792, 6
      %v4075 = vrot.slane %v3795, 6
      %v4080 = vrot.slane %v3838, 4
      %v4081 = vrot.slane %v3841, 4
      %v4086 = vrot.slane %v3884, 2
      %v4087 = vrot.slane %v3887, 2
      %v4092 = vrot.slane %v3976, 6
      %v4093 = vrot.slane %v3979, 6
      %v4098 = vrot.slane %v4022, 4
      %v4099 = vrot.slane %v4025, 4
      %v4104 = vrot.slane %v4068, 2
      %v4105 = vrot.slane %v4071, 2
      %v4108 = vsel %vm941, %v3746, %v4074
      %v4109 = vsel %vm941, %v3749, %v4075
      %v4110 = vsel %vm875, %v4108, %v4080
      %v4111 = vsel %vm875, %v4109, %v4081
      %v4112 = vsel %vm809, %v4110, %v4086
      %v4113 = vsel %vm809, %v4111, %v4087
      %v4114 = vsel %vm941, %v3930, %v4092
      %v4115 = vsel %vm941, %v3933, %v4093
      %v4116 = vsel %vm875, %v4114, %v4098
      %v4117 = vsel %vm875, %v4115, %v4099
      %v4118 = vsel %vm809, %v4116, %v4104
      %v4119 = vsel %vm809, %v4117, %v4105
      %v4120 = vpack.c.bf16 %v4118, %v4112
      %v4121 = vpack.c.bf16 %v4119, %v4113
      %v4123 = vlaneseq
      %v4124 = vshrl.u32 %v4123, 7
      %v4125 = vsub.s32 0, %v4124
      %v4126 = vrot.slane %v3704, %v4125
      %v4160 = vunpack.c.l.b16 %v3671
      %v4161 = vunpack.c.l.b16 %v3672
      %v4162 = vunpack.c.l.b16 %v3673
      %v4163 = vunpack.c.l.b16 %v3674
      %v4164 = vunpack.c.l.b16 %v3675
      %v4165 = vunpack.c.l.b16 %v3676
      %v4166 = vunpack.c.l.b16 %v3677
      %v4167 = vunpack.c.l.b16 %v3678
      %v4168 = vunpack.c.l.b16 %v3679
      %v4169 = vunpack.c.l.b16 %v3680
      %v4170 = vunpack.c.l.b16 %v3681
      %v4171 = vunpack.c.l.b16 %v3682
      %v4172 = vunpack.c.l.b16 %v3683
      %v4173 = vunpack.c.l.b16 %v3684
      %v4174 = vunpack.c.l.b16 %v3685
      %v4175 = vunpack.c.l.b16 %v3686
      %v4176 = vunpack.c.l.b16 %v3687
      %v4177 = vunpack.c.l.b16 %v3688
      %v4178 = vunpack.c.l.b16 %v3689
      %v4179 = vunpack.c.l.b16 %v3690
      %v4180 = vunpack.c.l.b16 %v3691
      %v4181 = vunpack.c.l.b16 %v3692
      %v4182 = vunpack.c.l.b16 %v3693
      %v4183 = vunpack.c.l.b16 %v3694
      %v4184 = vunpack.c.l.b16 %v3695
      %v4185 = vunpack.c.l.b16 %v3696
      %v4186 = vunpack.c.l.b16 %v3697
      %v4187 = vunpack.c.l.b16 %v3698
      %v4188 = vunpack.c.l.b16 %v3699
      %v4189 = vunpack.c.l.b16 %v3700
      %v4190 = vunpack.c.l.b16 %v3701
      %v4191 = vunpack.c.l.b16 %v3702
      %v4192 = vpack.c.b16 %v4161, %v4160
      %v4193 = vpack.c.b16 %v4163, %v4162
      %v4194 = vpack.c.b16 %v4165, %v4164
      %v4195 = vpack.c.b16 %v4167, %v4166
      %v4196 = vpack.c.b16 %v4169, %v4168
      %v4197 = vpack.c.b16 %v4171, %v4170
      %v4198 = vpack.c.b16 %v4173, %v4172
      %v4199 = vpack.c.b16 %v4175, %v4174
      %v4200 = vpack.c.b16 %v4177, %v4176
      %v4201 = vpack.c.b16 %v4179, %v4178
      %v4202 = vpack.c.b16 %v4181, %v4180
      %v4203 = vpack.c.b16 %v4183, %v4182
      %v4204 = vpack.c.b16 %v4185, %v4184
      %v4205 = vpack.c.b16 %v4187, %v4186
      %v4206 = vpack.c.b16 %v4189, %v4188
      %v4207 = vpack.c.b16 %v4191, %v4190
      %4224 = vmatprep.subr.bf16.mxu0 0
      %4225 = vmatpush1.bf16.msra.mxu0 %v4199
      %4226 = vmatprep.subr.bf16.mxu0 0
      %4227 = vmatpush1.bf16.msra.mxu0 %v4198
      %4228 = vmatprep.subr.bf16.mxu0 0
      %4229 = vmatpush1.bf16.msra.mxu0 %v4197
      %4230 = vmatprep.subr.bf16.mxu0 0
      %4231 = vmatpush1.bf16.msra.mxu0 %v4196
      %4232 = vmatprep.subr.bf16.mxu0 0
      %4233 = vmatpush1.bf16.msra.mxu0 %v4195
      %4234 = vmatprep.subr.bf16.mxu0 0
      %4235 = vmatpush1.bf16.msra.mxu0 %v4194
      %4236 = vmatprep.subr.bf16.mxu0 0
      %4237 = vmatpush1.bf16.msra.mxu0 %v4193
      %4238 = vmatprep.subr.bf16.mxu0 0
      %4239 = vmatpush1.bf16.msra.mxu0 %v4192
      %4240 = vmatprep.subr.bf16.mxu0 0
      %4241 = vmatpush2.bf16.msra.mxu0 %v4207
      %4242 = vmatprep.subr.bf16.mxu0 0
      %4243 = vmatpush2.bf16.msra.mxu0 %v4206
      %4244 = vmatprep.subr.bf16.mxu0 0
      %4245 = vmatpush2.bf16.msra.mxu0 %v4205
      %4246 = vmatprep.subr.bf16.mxu0 0
      %4247 = vmatpush2.bf16.msra.mxu0 %v4204
      %4248 = vmatprep.subr.bf16.mxu0 0
      %4249 = vmatpush2.bf16.msra.mxu0 %v4203
      %4250 = vmatprep.subr.bf16.mxu0 0
      %4251 = vmatpush2.bf16.msra.mxu0 %v4202
      %4252 = vmatprep.subr.bf16.mxu0 0
      %4253 = vmatpush2.bf16.msra.mxu0 %v4201
      %4254 = vmatprep.subr.bf16.mxu0 0
      %4255 = vmatpush2.bf16.msra.mxu0 %v4200
      %4256 = vmatprep.mubr.bf16.mxu0 %v4121
      %4257 = vmatmul.mubr.bf16.gmra.mxu0 %v4120
      %v4258 = vpop.f32.mrf.mxu0
      %v4259 = vadd.f32 %v4126, %v4258
      %v4260 = vpop.f32.mrf.mxu0
      %v4261 = vpop.f32.mrf.mxu0
      %v4262 = vadd.f32 %v4126, %v4261
      %v4263 = vpop.f32.mrf.mxu0
      %4264 = vdwg.mxu0
      %v4265 = vmax.f32 %v4259, 0.0
      %v4266 = vmax.f32 %v4262, 0.0
      %vm4267 = vcmask 254976
      %v4268 = vsel %vm4267, %v4265, 0.0
      %v4269 = vrot.slane %v4268, 4
      %v4270 = vadd.f32 %v4268, %v4269
      %v4271 = vrot.slane %v4270, 2
      %v4272 = vadd.f32 %v4270, %v4271
      %v4273 = vrot.slane %v4272, 1
      %v4274 = vadd.f32 %v4272, %v4273
      %v4276 = vrot.slane %v4265, 2
      %v4278 = vsel %vm4267, %v4276, 0.0
      %v4279 = vrot.slane %v4278, 4
      %v4280 = vadd.f32 %v4278, %v4279
      %v4281 = vrot.slane %v4280, 2
      %v4282 = vadd.f32 %v4280, %v4281
      %v4283 = vrot.slane %v4282, 1
      %v4284 = vadd.f32 %v4282, %v4283
      %v4285 = vrot.slane %v4265, 4
      %v4287 = vsel %vm4267, %v4285, 0.0
      %v4288 = vrot.slane %v4287, 4
      %v4289 = vadd.f32 %v4287, %v4288
      %v4290 = vrot.slane %v4289, 2
      %v4291 = vadd.f32 %v4289, %v4290
      %v4292 = vrot.slane %v4291, 1
      %v4293 = vadd.f32 %v4291, %v4292
      %v4294 = vrot.slane %v4265, 6
      %v4296 = vsel %vm4267, %v4294, 0.0
      %v4297 = vrot.slane %v4296, 4
      %v4298 = vadd.f32 %v4296, %v4297
      %v4299 = vrot.slane %v4298, 2
      %v4300 = vadd.f32 %v4298, %v4299
      %v4301 = vrot.slane %v4300, 1
      %v4302 = vadd.f32 %v4300, %v4301
      %v4303 = vsel %vm4267, %v4266, 0.0
      %v4304 = vrot.slane %v4303, 4
      %v4305 = vadd.f32 %v4303, %v4304
      %v4306 = vrot.slane %v4305, 2
      %v4307 = vadd.f32 %v4305, %v4306
      %v4308 = vrot.slane %v4307, 1
      %v4309 = vadd.f32 %v4307, %v4308
      %v4311 = vrot.slane %v4266, 2
      %v4313 = vsel %vm4267, %v4311, 0.0
      %v4314 = vrot.slane %v4313, 4
      %v4315 = vadd.f32 %v4313, %v4314
      %v4316 = vrot.slane %v4315, 2
      %v4317 = vadd.f32 %v4315, %v4316
      %v4318 = vrot.slane %v4317, 1
      %v4319 = vadd.f32 %v4317, %v4318
      %v4320 = vrot.slane %v4266, 4
      %v4322 = vsel %vm4267, %v4320, 0.0
      %v4323 = vrot.slane %v4322, 4
      %v4324 = vadd.f32 %v4322, %v4323
      %v4325 = vrot.slane %v4324, 2
      %v4326 = vadd.f32 %v4324, %v4325
      %v4327 = vrot.slane %v4326, 1
      %v4328 = vadd.f32 %v4326, %v4327
      %v4329 = vrot.slane %v4266, 6
      %v4331 = vsel %vm4267, %v4329, 0.0
      %v4332 = vrot.slane %v4331, 4
      %v4333 = vadd.f32 %v4331, %v4332
      %v4334 = vrot.slane %v4333, 2
      %v4335 = vadd.f32 %v4333, %v4334
      %v4336 = vrot.slane %v4335, 1
      %v4337 = vadd.f32 %v4335, %v4336
      %v4338 = vsel %vm974, %v4274, %v4284
      %v4339 = vsel %vm941, %v4338, %v4293
      %v4340 = vsel %vm908, %v4339, %v4302
      %v4341 = vsel %vm875, %v4340, %v4309
      %v4342 = vsel %vm842, %v4341, %v4319
      %v4343 = vsel %vm809, %v4342, %v4328
      %v4344 = vsel %vm272, %v4343, %v4337
      %v4345 = vpack.c.bf16 %v4344, %v4344
      %v4346 = vld [vmem:[%s4] sm:$0xf]
      %v4347 = vld [vmem:[%s4 + $0x4] sm:$0xf]
      %v4348 = vld [vmem:[%s4 + $0x8] sm:$0xf]
      %v4349 = vld [vmem:[%s4 + $0xc] sm:$0xf]
      %v4350 = vld [vmem:[%s5] sm:$0x1]
      %v4352 = vlaneseq
      %v4353 = vshrl.u32 %v4352, 7
      %v4354 = vsub.s32 0, %v4353
      %v4355 = vrot.slane %v4350, %v4354
      %v4361 = vunpack.c.l.b16 %v4346
      %v4362 = vunpack.c.l.b16 %v4347
      %v4363 = vunpack.c.l.b16 %v4348
      %v4364 = vunpack.c.l.b16 %v4349
      %v4365 = vpack.c.b16 %v4362, %v4361
      %v4366 = vpack.c.b16 %v4364, %v4363
      %v4370 = vsel %vm1060, %v4345, 0
      %4372 = vmatprep.subr.bf16.mxu0 0
      %4373 = vmatpush1.bf16.msra.mxu0 0
      %4374 = vmatprep.subr.bf16.mxu0 0
      %4375 = vmatpush1.bf16.msra.mxu0 0
      %4376 = vmatprep.subr.bf16.mxu0 0
      %4377 = vmatpush1.bf16.msra.mxu0 0
      %4378 = vmatprep.subr.bf16.mxu0 0
      %4379 = vmatpush1.bf16.msra.mxu0 0
      %4380 = vmatprep.subr.bf16.mxu0 0
      %4381 = vmatpush1.bf16.msra.mxu0 0
      %4382 = vmatprep.subr.bf16.mxu0 0
      %4383 = vmatpush1.bf16.msra.mxu0 0
      %4384 = vmatprep.subr.bf16.mxu0 0
      %4385 = vmatpush1.bf16.msra.mxu0 %v4366
      %4386 = vmatprep.subr.bf16.mxu0 0
      %4387 = vmatpush1.bf16.msra.mxu0 %v4365
      %4388 = vmatprep.subr.bf16.mxu0 0
      %4389 = vmatpush2.bf16.msra.mxu0 0
      %4390 = vmatprep.subr.bf16.mxu0 0
      %4391 = vmatpush2.bf16.msra.mxu0 0
      %4392 = vmatprep.subr.bf16.mxu0 0
      %4393 = vmatpush2.bf16.msra.mxu0 0
      %4394 = vmatprep.subr.bf16.mxu0 0
      %4395 = vmatpush2.bf16.msra.mxu0 0
      %4396 = vmatprep.subr.bf16.mxu0 0
      %4397 = vmatpush2.bf16.msra.mxu0 0
      %4398 = vmatprep.subr.bf16.mxu0 0
      %4399 = vmatpush2.bf16.msra.mxu0 0
      %4400 = vmatprep.subr.bf16.mxu0 0
      %4401 = vmatpush2.bf16.msra.mxu0 0
      %4402 = vmatprep.subr.bf16.mxu0 0
      %4403 = vmatpush2.bf16.msra.mxu0 0
      %4404 = vmatprep.mubr.bf16.mxu0 0
      %4405 = vmatmul.mubr.bf16.gmra.mxu0 %v4370
      %v4406 = vpop.f32.mrf.mxu0
      %v4407 = vadd.f32 %v4355, %v4406
      %v4408 = vpop.f32.mrf.mxu0
      %v4409 = vpop.f32.mrf.mxu0
      %v4410 = vpop.f32.mrf.mxu0
      %4411 = vdwg.mxu0
      %v4412 = vmax.f32 %v4407, 0.0
      %v4413 = vpack.c.bf16 %v4412, %v4412
      %s4414 = scalar_lea.vmem %s4, 16
      %v4415 = vld [vmem:[%s4414] sm:$0xf]
      %v4416 = vld [vmem:[%s4414 + $0x4] sm:$0xf]
      %v4417 = vld [vmem:[%s4414 + $0x8] sm:$0xf]
      %v4418 = vld [vmem:[%s4414 + $0xc] sm:$0xf]
      %s4419 = scalar_lea.vmem %s5, 1
      %v4420 = vld [vmem:[%s4419] sm:$0x1]
      %v4422 = vlaneseq
      %v4423 = vshrl.u32 %v4422, 7
      %v4424 = vsub.s32 0, %v4423
      %v4425 = vrot.slane %v4420, %v4424
      %v4431 = vunpack.c.l.b16 %v4415
      %v4432 = vunpack.c.l.b16 %v4416
      %v4433 = vunpack.c.l.b16 %v4417
      %v4434 = vunpack.c.l.b16 %v4418
      %v4435 = vpack.c.b16 %v4432, %v4431
      %v4436 = vpack.c.b16 %v4434, %v4433
      %v4440 = vsel %vm1060, %v4413, 0
      %4442 = vmatprep.subr.bf16.mxu0 0
      %4443 = vmatpush1.bf16.msra.mxu0 0
      %4444 = vmatprep.subr.bf16.mxu0 0
      %4445 = vmatpush1.bf16.msra.mxu0 0
      %4446 = vmatprep.subr.bf16.mxu0 0
      %4447 = vmatpush1.bf16.msra.mxu0 0
      %4448 = vmatprep.subr.bf16.mxu0 0
      %4449 = vmatpush1.bf16.msra.mxu0 0
      %4450 = vmatprep.subr.bf16.mxu0 0
      %4451 = vmatpush1.bf16.msra.mxu0 0
      %4452 = vmatprep.subr.bf16.mxu0 0
      %4453 = vmatpush1.bf16.msra.mxu0 0
      %4454 = vmatprep.subr.bf16.mxu0 0
      %4455 = vmatpush1.bf16.msra.mxu0 %v4436
      %4456 = vmatprep.subr.bf16.mxu0 0
      %4457 = vmatpush1.bf16.msra.mxu0 %v4435
      %4458 = vmatprep.subr.bf16.mxu0 0
      %4459 = vmatpush2.bf16.msra.mxu0 0
      %4460 = vmatprep.subr.bf16.mxu0 0
      %4461 = vmatpush2.bf16.msra.mxu0 0
      %4462 = vmatprep.subr.bf16.mxu0 0
      %4463 = vmatpush2.bf16.msra.mxu0 0
      %4464 = vmatprep.subr.bf16.mxu0 0
      %4465 = vmatpush2.bf16.msra.mxu0 0
      %4466 = vmatprep.subr.bf16.mxu0 0
      %4467 = vmatpush2.bf16.msra.mxu0 0
      %4468 = vmatprep.subr.bf16.mxu0 0
      %4469 = vmatpush2.bf16.msra.mxu0 0
      %4470 = vmatprep.subr.bf16.mxu0 0
      %4471 = vmatpush2.bf16.msra.mxu0 0
      %4472 = vmatprep.subr.bf16.mxu0 0
      %4473 = vmatpush2.bf16.msra.mxu0 0
      %4474 = vmatprep.mubr.bf16.mxu0 0
      %4475 = vmatmul.mubr.bf16.gmra.mxu0 %v4440
      %v4476 = vpop.f32.mrf.mxu0
      %v4477 = vadd.f32 %v4425, %v4476
      %v4478 = vpop.f32.mrf.mxu0
      %v4479 = vpop.f32.mrf.mxu0
      %v4480 = vpop.f32.mrf.mxu0
      %4481 = vdwg.mxu0
      %v4482 = vmax.f32 %v4477, 0.0
      %v4483 = vpack.c.bf16 %v4482, %v4482
      %s4484 = scalar_lea.vmem %s4, 32
      %v4485 = vld [vmem:[%s4484] sm:$0xf]
      %v4486 = vld [vmem:[%s4484 + $0x4] sm:$0xf]
      %v4487 = vld [vmem:[%s4484 + $0x8] sm:$0xf]
      %v4488 = vld [vmem:[%s4484 + $0xc] sm:$0xf]
      %s4489 = scalar_lea.vmem %s5, 2
      %v4490 = vld [vmem:[%s4489] sm:$0x1]
      %v4492 = vlaneseq
      %v4493 = vshrl.u32 %v4492, 7
      %v4494 = vsub.s32 0, %v4493
      %v4495 = vrot.slane %v4490, %v4494
      %v4501 = vunpack.c.l.b16 %v4485
      %v4502 = vunpack.c.l.b16 %v4486
      %v4503 = vunpack.c.l.b16 %v4487
      %v4504 = vunpack.c.l.b16 %v4488
      %v4505 = vpack.c.b16 %v4502, %v4501
      %v4506 = vpack.c.b16 %v4504, %v4503
      %v4510 = vsel %vm1060, %v4483, 0
      %4512 = vmatprep.subr.bf16.mxu0 0
      %4513 = vmatpush1.bf16.msra.mxu0 0
      %4514 = vmatprep.subr.bf16.mxu0 0
      %4515 = vmatpush1.bf16.msra.mxu0 0
      %4516 = vmatprep.subr.bf16.mxu0 0
      %4517 = vmatpush1.bf16.msra.mxu0 0
      %4518 = vmatprep.subr.bf16.mxu0 0
      %4519 = vmatpush1.bf16.msra.mxu0 0
      %4520 = vmatprep.subr.bf16.mxu0 0
      %4521 = vmatpush1.bf16.msra.mxu0 0
      %4522 = vmatprep.subr.bf16.mxu0 0
      %4523 = vmatpush1.bf16.msra.mxu0 0
      %4524 = vmatprep.subr.bf16.mxu0 0
      %4525 = vmatpush1.bf16.msra.mxu0 %v4506
      %4526 = vmatprep.subr.bf16.mxu0 0
      %4527 = vmatpush1.bf16.msra.mxu0 %v4505
      %4528 = vmatprep.subr.bf16.mxu0 0
      %4529 = vmatpush2.bf16.msra.mxu0 0
      %4530 = vmatprep.subr.bf16.mxu0 0
      %4531 = vmatpush2.bf16.msra.mxu0 0
      %4532 = vmatprep.subr.bf16.mxu0 0
      %4533 = vmatpush2.bf16.msra.mxu0 0
      %4534 = vmatprep.subr.bf16.mxu0 0
      %4535 = vmatpush2.bf16.msra.mxu0 0
      %4536 = vmatprep.subr.bf16.mxu0 0
      %4537 = vmatpush2.bf16.msra.mxu0 0
      %4538 = vmatprep.subr.bf16.mxu0 0
      %4539 = vmatpush2.bf16.msra.mxu0 0
      %4540 = vmatprep.subr.bf16.mxu0 0
      %4541 = vmatpush2.bf16.msra.mxu0 0
      %4542 = vmatprep.subr.bf16.mxu0 0
      %4543 = vmatpush2.bf16.msra.mxu0 0
      %4544 = vmatprep.mubr.bf16.mxu0 0
      %4545 = vmatmul.mubr.bf16.gmra.mxu0 %v4510
      %v4546 = vpop.f32.mrf.mxu0
      %v4547 = vadd.f32 %v4495, %v4546
      %v4548 = vpop.f32.mrf.mxu0
      %v4549 = vpop.f32.mrf.mxu0
      %v4550 = vpop.f32.mrf.mxu0
      %4551 = vdwg.mxu0
      %4552 = vst [vmem:[%s254] sm:$0xff] %v4547
      %p4553 = scmp.lt.s32.totalorder %s17, 1
      %s4554 = scalar_select %p4553, %s17, 1
      %s4555 = smul.addr %s4554, 8
      %s4556 = scalar_lea.vmem %s6, %s4555
      // Predicated region
      $region45: #{simple_model_forward.1} parent=43 // pred_check
        %p4557 = pneg %p166
      $region46: #{simple_model_forward.1} parent=43 // pred_check_branch
        %4559 = sbr.rel (%p4557) target = $region48
      $region47: #{simple_model_forward.1} parent=43 // pred_region
        _
      $region48: #{simple_model_forward.1} parent=43 // pred_fallthru
        _
    $region44: #{simple_model_forward.1} parent=5 // pred_fallthru
      _
    %p4560 = scmp.le.s32.totalorder 2, %s12
    // Predicated region
    $region49: #{simple_model_forward.1} parent=5 // pred_check
      %p4561 = pneg %p4560
    $region50: #{simple_model_forward.1} parent=5 // pred_check_branch
      %4563 = sbr.rel (%p4561) target = $region52
    $region51: #{simple_model_forward.1} parent=5 // pred_region
      %s4564 = ssub.s32 %s12, 2
      // Predicated region
      $region53: #{simple_model_forward.1} parent=51 // pred_check
        %p4565 = pneg %p172
      $region54: #{simple_model_forward.1} parent=51 // pred_check_branch
        %4567 = sbr.rel (%p4565) target = $region56
      $region55: #{simple_model_forward.1} parent=51 // pred_region
        %p4568 = scmp.lt.s32.totalorder %s18, 1
        %s4569 = scalar_select %p4568, %s18, 1
        %s4570 = smul.addr %s4569, 8
        %s4571 = scalar_lea.vmem %s6, %s4570
      $region56: #{simple_model_forward.1} parent=51 // pred_fallthru
        _
    $region52: #{simple_model_forward.1} parent=5 // pred_fallthru
      _
  $region6: #{simple_model_forward.1} parent=0 // loop_footer
    %s16 = sadd.s32 1, %s12
  $region7: #{simple_model_forward.1} parent=0 // loop_footer_branch
    %11 = sbr.rel target = $region3
  $region8: #{simple_model_forward.1} parent=0 // loop_exit
    _

</llo_original>
